<compile_context>
chip_gen: v6e
topology: v6e:2x2x1
jax: 0.10.0
libtpu: 0.0.40
codegen_flags: <defaults>
</compile_context>

<pallas_src>
import functools

import jax
import jax.numpy as jnp
from jax.experimental import pallas as pl
from jax.experimental.pallas import tpu as pltpu


def _basic_block_kernel(x_ref, w1_ref, b1_ref, w2_ref, b2_ref, o_ref,
                        xpad_ref, hpad_ref, *, row_tile, left):
    """Fused BasicBlock forward for one batch element.

    x_ref  : (1, H, W, Cp)   f32   input block
    w1_ref : (3, 3, Cp, Cp)  bf16  conv1 weights (bn1 scale folded in), whole-array VMEM
    b1_ref : (1, Cp)         f32   bn1 bias, whole-array VMEM
    w2_ref : (3, 3, Cp, Cp)  bf16  conv2 weights (bn2 scale folded in), whole-array VMEM
    b2_ref : (1, Cp)         f32   bn2 bias, whole-array VMEM
    o_ref  : (1, H, W, Cp)   f32   output block
    xpad_ref / hpad_ref : (H+2, Wp, Cp) bf16 VMEM scratch; interior at
        rows [1, H+1), cols [left, left+W); halo strips hold zeros.
    """
    _, H, W, Cp = o_ref.shape
    TH = row_tile
    n_tiles = H // TH
    Wp = xpad_ref.shape[1]
    M = TH * W

    # --- Zero ONLY the halo strips (interiors are fully overwritten below). ---
    # Done every grid iteration (cheap) so it stays correct under megacore
    # sharding of the batch axis.
    z_row = jnp.zeros((1, Wp, Cp), xpad_ref.dtype)
    z_left = jnp.zeros((H, left, Cp), xpad_ref.dtype)
    z_right = jnp.zeros((H, Wp - left - W, Cp), xpad_ref.dtype)
    for buf in (xpad_ref, hpad_ref):
        buf[0:1, :, :] = z_row
        buf[H + 1:H + 2, :, :] = z_row
        buf[1:H + 1, 0:left, :] = z_left
        buf[1:H + 1, left + W:Wp, :] = z_right

    # Bias broadcasts hoisted out of the row-tile loops (broadcast_in_dim is
    # not CSE'd by JAX); the bias also seeds the matmul accumulator.
    b1_full = jnp.broadcast_to(b1_ref[...], (M, Cp))
    b2_full = jnp.broadcast_to(b2_ref[...], (M, Cp))

    def _conv3x3(src_ref, w_ref, bias_full, r0):
        # 3x3 conv over one row tile as 9 MXU matmuls (bf16 operands, f32 acc),
        # accumulator initialized from the (already broadcast) BN bias.
        acc = bias_full
        for dh in range(3):
            for dw in range(3):
                c0 = left - 1 + dw
                patch = src_ref[pl.ds(r0 + dh, TH), c0:c0 + W, :]
                acc = acc + jnp.dot(patch.reshape(M, Cp), w_ref[dh, dw],
                                    preferred_element_type=jnp.float32)
        return acc

    # Stage A: stage the input tile into the zero-haloed bf16 VMEM buffer.
    @pl.loop(0, n_tiles)
    def _stage_in(t):
        r0 = pl.multiple_of(t * TH, TH)
        xpad_ref[pl.ds(r0 + 1, TH), left:left + W, :] = (
            x_ref[0, pl.ds(r0, TH), :, :].astype(xpad_ref.dtype))

    # Stage B: conv1 + bn1 bias + relu -> haloed bf16 h buffer (stays in VMEM).
    @pl.loop(0, n_tiles)
    def _conv1(t):
        r0 = pl.multiple_of(t * TH, TH)
        h = jnp.maximum(_conv3x3(xpad_ref, w1_ref, b1_full, r0), 0.0)
        hpad_ref[pl.ds(r0 + 1, TH), left:left + W, :] = (
            h.reshape(TH, W, Cp).astype(hpad_ref.dtype))

    # Stage C: conv2 + bn2 bias + residual add (f32 x) + relu -> output.
    @pl.loop(0, n_tiles)
    def _conv2(t):
        r0 = pl.multiple_of(t * TH, TH)
        out = _conv3x3(hpad_ref, w2_ref, b2_full, r0)
        out = out + x_ref[0, pl.ds(r0, TH), :, :].reshape(M, Cp)
        out = jnp.maximum(out, 0.0)
        o_ref[0, pl.ds(r0, TH), :, :] = out.reshape(TH, W, Cp).astype(o_ref.dtype)


def _round_up(v, m):
    return (v + m - 1) // m * m


def _vmem_limit_bytes():
    # Generation-aware VMEM budget: ~3/4 of physical capacity, capped at
    # 96 MiB (v5e/v6e: 128 MiB physical -> 96 MiB; v7x: 64 MiB -> 48 MiB).
    try:
        cap = int(pltpu.get_tpu_info().vmem_capacity_bytes)
    except Exception:
        cap = 0
    if cap <= 0:
        cap = 64 * 1024 * 1024
    return max(32 * 1024 * 1024, min(cap * 3 // 4, 96 * 1024 * 1024))


def basic_block_forward(x, params, *, eps=1e-5, compute_dtype=jnp.bfloat16):
    """x: (N, H, W, C) NHWC float32. Returns (N, H, W, C) float32."""
    N, H, W, C = x.shape

    # Fold inference-mode BN into a per-output-channel scale (into the conv
    # weights) and a bias (accumulator init in-kernel).
    s1 = params["bn1_gamma"] * jax.lax.rsqrt(params["bn1_var"] + eps)
    b1 = params["bn1_beta"] - params["bn1_mean"] * s1
    s2 = params["bn2_gamma"] * jax.lax.rsqrt(params["bn2_var"] + eps)
    b2 = params["bn2_beta"] - params["bn2_mean"] * s2
    w1 = params["w1"] * s1[None, None, None, :]
    w2 = params["w2"] * s2[None, None, None, :]

    # Lane-dense channels: pad C up to a multiple of 128 (padded channels stay
    # exactly zero through the whole block and are sliced off at the end).
    Cp = _round_up(C, 128)
    pc = Cp - C
    if pc:
        x_in = jnp.pad(x, ((0, 0), (0, 0), (0, 0), (0, pc)))
        w1 = jnp.pad(w1, ((0, 0), (0, 0), (0, pc), (0, pc)))
        w2 = jnp.pad(w2, ((0, 0), (0, 0), (0, pc), (0, pc)))
        b1 = jnp.pad(b1, (0, pc))
        b2 = jnp.pad(b2, (0, pc))
    else:
        x_in = x

    w1 = w1.astype(compute_dtype)
    w2 = w2.astype(compute_dtype)
    b1 = b1.reshape(1, Cp).astype(jnp.float32)
    b2 = b2.reshape(1, Cp).astype(jnp.float32)

    # Sublane-aligned halo: interior columns live at [LEFT, LEFT+W); scratch W
    # dim rounded up to a multiple of 8 (>=1 right halo column).
    LEFT = 8
    Wp = _round_up(LEFT + W + 1, 8)

    # Row tile: target an MXU M dimension (TH*W) of ~256 (256-wide MXU on
    # v6e/v7x; still >=128 for v5e's 128x128 MXU), subject to H % TH == 0.
    TH = max(1, min(H, max(1, 256 // W)))
    while H % TH:
        TH -= 1

    kernel = functools.partial(_basic_block_kernel, row_tile=TH, left=LEFT)

    out = pl.pallas_call(
        kernel,
        out_shape=jax.ShapeDtypeStruct((N, H, W, Cp), x.dtype),
        grid=(N,),
        in_specs=[
            pl.BlockSpec((1, H, W, Cp), lambda n: (n, 0, 0, 0)),      # x
            pl.BlockSpec(memory_space=pltpu.MemorySpace.VMEM),        # w1 (bf16)
            pl.BlockSpec(memory_space=pltpu.MemorySpace.VMEM),        # bn1 bias
            pl.BlockSpec(memory_space=pltpu.MemorySpace.VMEM),        # w2 (bf16)
            pl.BlockSpec(memory_space=pltpu.MemorySpace.VMEM),        # bn2 bias
        ],
        out_specs=pl.BlockSpec((1, H, W, Cp), lambda n: (n, 0, 0, 0)),
        scratch_shapes=[
            pltpu.VMEM((H + 2, Wp, Cp), compute_dtype),   # zero-haloed x (bf16)
            pltpu.VMEM((H + 2, Wp, Cp), compute_dtype),   # zero-haloed h (bf16)
        ],
        compiler_params=pltpu.CompilerParams(
            dimension_semantics=("parallel",),
            vmem_limit_bytes=_vmem_limit_bytes(),
        ),
    )(x_in, w1, b1, w2, b2)

    return out[..., :C] if pc else out


def make_params(key, inplanes, planes):
    k1, k2 = jax.random.split(key)
    # conv weights in HWIO layout: (3, 3, Cin, Cout)
    w1 = jax.random.normal(k1, (3, 3, inplanes, planes), jnp.float32) * 0.1
    w2 = jax.random.normal(k2, (3, 3, planes, planes), jnp.float32) * 0.1
    c = jnp.arange(planes, dtype=jnp.float32)
    return {
        "w1": w1, "w2": w2,
        "bn1_gamma": 1.0 + 0.05 * c, "bn1_beta": 0.01 * c,
        "bn1_mean": 0.02 * c,        "bn1_var": 1.0 + 0.03 * c,
        "bn2_gamma": 1.0 - 0.02 * c, "bn2_beta": -0.01 * c,
        "bn2_mean": -0.01 * c,       "bn2_var": 1.0 + 0.05 * c,
    }


def _reference_forward(x, params, eps=1e-5):
    """Pure-JAX (XLA) reference of the PyTorch BasicBlock forward (NHWC)."""
    def bn(y, g, b, m, v):
        return (y - m) * jax.lax.rsqrt(v + eps) * g + b

    def conv(a, w):
        return jax.lax.conv_general_dilated(
            a, w, window_strides=(1, 1), padding="SAME",
            dimension_numbers=("NHWC", "HWIO", "NHWC"))

    h = jax.nn.relu(bn(conv(x, params["w1"]), params["bn1_gamma"],
                       params["bn1_beta"], params["bn1_mean"], params["bn1_var"]))
    out = bn(conv(h, params["w2"]), params["bn2_gamma"],
             params["bn2_beta"], params["bn2_mean"], params["bn2_var"]) + x
    return jax.nn.relu(out)


if __name__ == "__main__":
    N, C, H, W = 2, 4, 16, 16          # inplanes = planes = 4, stride = 1
    key = jax.random.PRNGKey(0)
    kx, kp = jax.random.split(key)
    x = jax.random.normal(kx, (N, H, W, C), jnp.float32)   # NHWC
    params = make_params(kp, C, C)

    out = jax.block_until_ready(jax.jit(basic_block_forward)(x, params))
    assert out.shape == (N, H, W, C)
    assert bool(jnp.all(jnp.isfinite(out)))

    ref = _reference_forward(x, params)
    assert bool(jnp.allclose(out, ref, atol=5e-2, rtol=5e-2)), (
        "max abs err = %f" % float(jnp.max(jnp.abs(out - ref))))
    print("KERNEL_OK")
</pallas_src>

<mosaic_0001>
module attributes {stable_mosaic.version = 11 : i64} {
  func.func @_basic_block_kernel(%arg0: i32, %arg1: memref<1x16x16x128xf32, #tpu.memory_space<vmem>>, %arg2: memref<3x3x128x128xbf16, #tpu.memory_space<vmem>>, %arg3: memref<1x128xf32, #tpu.memory_space<vmem>>, %arg4: memref<3x3x128x128xbf16, #tpu.memory_space<vmem>>, %arg5: memref<1x128xf32, #tpu.memory_space<vmem>>, %arg6: memref<1x16x16x128xf32, #tpu.memory_space<vmem>>, %arg7: memref<18x32x128xbf16, #tpu.memory_space<vmem>>, %arg8: memref<18x32x128xbf16, #tpu.memory_space<vmem>>) attributes {dimension_semantics = [#tpu.dimension_semantics<parallel>], iteration_bounds = array<i64: 2>, scalar_prefetch = 0 : i64, scratch_operands = 2 : i64, tpu.core_type = #tpu.core_type<tc>, window_params = [{transform_indices = @transform_0, window_bounds = array<i64: 1, 16, 16, 128>}, {pipeline_mode = #tpu.pipeline_mode<synchronous>, transform_indices = @transform_1, window_bounds = array<i64: 3, 3, 128, 128>}, {pipeline_mode = #tpu.pipeline_mode<synchronous>, transform_indices = @transform_2, window_bounds = array<i64: 1, 128>}, {pipeline_mode = #tpu.pipeline_mode<synchronous>, transform_indices = @transform_3, window_bounds = array<i64: 3, 3, 128, 128>}, {pipeline_mode = #tpu.pipeline_mode<synchronous>, transform_indices = @transform_4, window_bounds = array<i64: 1, 128>}, {transform_indices = @transform_5, window_bounds = array<i64: 1, 16, 16, 128>}]} {
    %cst = arith.constant 0.000000e+00 : bf16
    %0 = vector.broadcast %cst : bf16 to vector<1x32x128xbf16>
    %cst_0 = arith.constant 0.000000e+00 : bf16
    %1 = vector.broadcast %cst_0 : bf16 to vector<16x8x128xbf16>
    %cst_1 = arith.constant 0.000000e+00 : bf16
    %2 = vector.broadcast %cst_1 : bf16 to vector<16x8x128xbf16>
    %c0 = arith.constant 0 : index
    %c0_2 = arith.constant 0 : index
    %c0_3 = arith.constant 0 : index
    %3 = vector.load %arg7[%c0, %c0_2, %c0_3] : memref<18x32x128xbf16, #tpu.memory_space<vmem>>, vector<1x32x128xbf16>
    tpu.vector_store %arg7[%c0, %c0_2, %c0_3], %0 {strides = array<i32>} : memref<18x32x128xbf16, #tpu.memory_space<vmem>>, vector<1x32x128xbf16>,
    %c17 = arith.constant 17 : index
    %c0_4 = arith.constant 0 : index
    %c0_5 = arith.constant 0 : index
    %4 = vector.load %arg7[%c17, %c0_4, %c0_5] : memref<18x32x128xbf16, #tpu.memory_space<vmem>>, vector<1x32x128xbf16>
    tpu.vector_store %arg7[%c17, %c0_4, %c0_5], %0 {strides = array<i32>} : memref<18x32x128xbf16, #tpu.memory_space<vmem>>, vector<1x32x128xbf16>,
    %c1 = arith.constant 1 : index
    %c0_6 = arith.constant 0 : index
    %c0_7 = arith.constant 0 : index
    %5 = vector.load %arg7[%c1, %c0_6, %c0_7] : memref<18x32x128xbf16, #tpu.memory_space<vmem>>, vector<16x8x128xbf16>
    tpu.vector_store %arg7[%c1, %c0_6, %c0_7], %1 {strides = array<i32>} : memref<18x32x128xbf16, #tpu.memory_space<vmem>>, vector<16x8x128xbf16>,
    %c1_8 = arith.constant 1 : index
    %c24 = arith.constant 24 : index
    %c0_9 = arith.constant 0 : index
    %6 = vector.load %arg7[%c1_8, %c24, %c0_9] : memref<18x32x128xbf16, #tpu.memory_space<vmem>>, vector<16x8x128xbf16>
    tpu.vector_store %arg7[%c1_8, %c24, %c0_9], %2 {strides = array<i32>} : memref<18x32x128xbf16, #tpu.memory_space<vmem>>, vector<16x8x128xbf16>,
    %c0_10 = arith.constant 0 : index
    %c0_11 = arith.constant 0 : index
    %c0_12 = arith.constant 0 : index
    %7 = vector.load %arg8[%c0_10, %c0_11, %c0_12] : memref<18x32x128xbf16, #tpu.memory_space<vmem>>, vector<1x32x128xbf16>
    tpu.vector_store %arg8[%c0_10, %c0_11, %c0_12], %0 {strides = array<i32>} : memref<18x32x128xbf16, #tpu.memory_space<vmem>>, vector<1x32x128xbf16>,
    %c17_13 = arith.constant 17 : index
    %c0_14 = arith.constant 0 : index
    %c0_15 = arith.constant 0 : index
    %8 = vector.load %arg8[%c17_13, %c0_14, %c0_15] : memref<18x32x128xbf16, #tpu.memory_space<vmem>>, vector<1x32x128xbf16>
    tpu.vector_store %arg8[%c17_13, %c0_14, %c0_15], %0 {strides = array<i32>} : memref<18x32x128xbf16, #tpu.memory_space<vmem>>, vector<1x32x128xbf16>,
    %c1_16 = arith.constant 1 : index
    %c0_17 = arith.constant 0 : index
    %c0_18 = arith.constant 0 : index
    %9 = vector.load %arg8[%c1_16, %c0_17, %c0_18] : memref<18x32x128xbf16, #tpu.memory_space<vmem>>, vector<16x8x128xbf16>
    tpu.vector_store %arg8[%c1_16, %c0_17, %c0_18], %1 {strides = array<i32>} : memref<18x32x128xbf16, #tpu.memory_space<vmem>>, vector<16x8x128xbf16>,
    %c1_19 = arith.constant 1 : index
    %c24_20 = arith.constant 24 : index
    %c0_21 = arith.constant 0 : index
    %10 = vector.load %arg8[%c1_19, %c24_20, %c0_21] : memref<18x32x128xbf16, #tpu.memory_space<vmem>>, vector<16x8x128xbf16>
    tpu.vector_store %arg8[%c1_19, %c24_20, %c0_21], %2 {strides = array<i32>} : memref<18x32x128xbf16, #tpu.memory_space<vmem>>, vector<16x8x128xbf16>,
    %c0_22 = arith.constant 0 : index
    %c0_23 = arith.constant 0 : index
    %11 = vector.load %arg3[%c0_22, %c0_23] : memref<1x128xf32, #tpu.memory_space<vmem>>, vector<1x128xf32>
    %12 = vector.shape_cast %11 : vector<1x128xf32> to vector<1x128xf32>
    %13 = vector.broadcast %12 : vector<1x128xf32> to vector<256x128xf32>
    %c0_24 = arith.constant 0 : index
    %c0_25 = arith.constant 0 : index
    %14 = vector.load %arg5[%c0_24, %c0_25] : memref<1x128xf32, #tpu.memory_space<vmem>>, vector<1x128xf32>
    %15 = vector.shape_cast %14 : vector<1x128xf32> to vector<1x128xf32>
    %16 = vector.broadcast %15 : vector<1x128xf32> to vector<256x128xf32>
    %c0_i32 = arith.constant 0 : i32
    %c1_i32 = arith.constant 1 : i32
    %17 = arith.muli %c0_i32, %c1_i32 : i32
    %c0_i32_26 = arith.constant 0 : i32
    %18 = arith.addi %c0_i32_26, %17 : i32
    %c16_i32 = arith.constant 16 : i32
    %19 = arith.muli %18, %c16_i32 : i32
    %20 = tpu.assume_multiple %19, 16 : i32
    %c0_27 = arith.constant 0 : index
    %21 = arith.index_cast %20 : i32 to index
    %c0_28 = arith.constant 0 : index
    %c0_29 = arith.constant 0 : index
    %22 = vector.load %arg1[%c0_27, %21, %c0_28, %c0_29] : memref<1x16x16x128xf32, #tpu.memory_space<vmem>>, vector<1x16x16x128xf32>
    %23 = vector.shape_cast %22 : vector<1x16x16x128xf32> to vector<16x16x128xf32>
    %24 = arith.truncf %23 : vector<16x16x128xf32> to vector<16x16x128xbf16>
    %c1_i32_30 = arith.constant 1 : i32
    %25 = arith.addi %20, %c1_i32_30 : i32
    %26 = arith.index_cast %25 : i32 to index
    %c8 = arith.constant 8 : index
    %c0_31 = arith.constant 0 : index
    %27 = vector.load %arg7[%26, %c8, %c0_31] : memref<18x32x128xbf16, #tpu.memory_space<vmem>>, vector<16x16x128xbf16>
    tpu.vector_store %arg7[%26, %c8, %c0_31], %24 {strides = array<i32>} : memref<18x32x128xbf16, #tpu.memory_space<vmem>>, vector<16x16x128xbf16>,
    %c1_i32_32 = arith.constant 1 : i32
    %c0_i32_33 = arith.constant 0 : i32
    %c1_i32_34 = arith.constant 1 : i32
    %28 = arith.muli %c0_i32_33, %c1_i32_34 : i32
    %c0_i32_35 = arith.constant 0 : i32
    %29 = arith.addi %c0_i32_35, %28 : i32
    %c16_i32_36 = arith.constant 16 : i32
    %30 = arith.muli %29, %c16_i32_36 : i32
    %31 = tpu.assume_multiple %30, 16 : i32
    %c0_i32_37 = arith.constant 0 : i32
    %32 = arith.addi %31, %c0_i32_37 : i32
    %33 = arith.index_cast %32 : i32 to index
    %c7 = arith.constant 7 : index
    %c0_38 = arith.constant 0 : index
    %34 = vector.load %arg7[%33, %c7, %c0_38] : memref<18x32x128xbf16, #tpu.memory_space<vmem>>, vector<16x16x128xbf16>
    %35 = vector.shape_cast %34 : vector<16x16x128xbf16> to vector<256x128xbf16>
    %c0_39 = arith.constant 0 : index
    %c0_40 = arith.constant 0 : index
    %c0_41 = arith.constant 0 : index
    %c0_42 = arith.constant 0 : index
    %36 = vector.load %arg2[%c0_39, %c0_40, %c0_41, %c0_42] : memref<3x3x128x128xbf16, #tpu.memory_space<vmem>>, vector<1x1x128x128xbf16>
    %37 = vector.shape_cast %36 : vector<1x1x128x128xbf16> to vector<128x128xbf16>
    %cst_43 = arith.constant dense<0.000000e+00> : vector<256x128xf32>
    %38 = tpu.matmul %35, %37, %cst_43 {dimension_numbers = #tpu.dot_dimension_numbers<[1], [0], [0], [1], [0, 0, 1, 1], [], []>} : vector<256x128xbf16>, vector<128x128xbf16>, vector<256x128xf32> -> vector<256x128xf32>
    %39 = arith.addf %13, %38 : vector<256x128xf32>
    %c0_i32_44 = arith.constant 0 : i32
    %40 = arith.addi %31, %c0_i32_44 : i32
    %41 = arith.index_cast %40 : i32 to index
    %c8_45 = arith.constant 8 : index
    %c0_46 = arith.constant 0 : index
    %42 = vector.load %arg7[%41, %c8_45, %c0_46] : memref<18x32x128xbf16, #tpu.memory_space<vmem>>, vector<16x16x128xbf16>
    %43 = vector.shape_cast %42 : vector<16x16x128xbf16> to vector<256x128xbf16>
    %c0_47 = arith.constant 0 : index
    %c1_48 = arith.constant 1 : index
    %c0_49 = arith.constant 0 : index
    %c0_50 = arith.constant 0 : index
    %44 = vector.load %arg2[%c0_47, %c1_48, %c0_49, %c0_50] : memref<3x3x128x128xbf16, #tpu.memory_space<vmem>>, vector<1x1x128x128xbf16>
    %45 = vector.shape_cast %44 : vector<1x1x128x128xbf16> to vector<128x128xbf16>
    %cst_51 = arith.constant dense<0.000000e+00> : vector<256x128xf32>
    %46 = tpu.matmul %43, %45, %cst_51 {dimension_numbers = #tpu.dot_dimension_numbers<[1], [0], [0], [1], [0, 0, 1, 1], [], []>} : vector<256x128xbf16>, vector<128x128xbf16>, vector<256x128xf32> -> vector<256x128xf32>
    %47 = arith.addf %39, %46 : vector<256x128xf32>
    %c0_i32_52 = arith.constant 0 : i32
    %48 = arith.addi %31, %c0_i32_52 : i32
    %49 = arith.index_cast %48 : i32 to index
    %c9 = arith.constant 9 : index
    %c0_53 = arith.constant 0 : index
    %50 = vector.load %arg7[%49, %c9, %c0_53] : memref<18x32x128xbf16, #tpu.memory_space<vmem>>, vector<16x16x128xbf16>
    %51 = vector.shape_cast %50 : vector<16x16x128xbf16> to vector<256x128xbf16>
    %c0_54 = arith.constant 0 : index
    %c2 = arith.constant 2 : index
    %c0_55 = arith.constant 0 : index
    %c0_56 = arith.constant 0 : index
    %52 = vector.load %arg2[%c0_54, %c2, %c0_55, %c0_56] : memref<3x3x128x128xbf16, #tpu.memory_space<vmem>>, vector<1x1x128x128xbf16>
    %53 = vector.shape_cast %52 : vector<1x1x128x128xbf16> to vector<128x128xbf16>
    %cst_57 = arith.constant dense<0.000000e+00> : vector<256x128xf32>
    %54 = tpu.matmul %51, %53, %cst_57 {dimension_numbers = #tpu.dot_dimension_numbers<[1], [0], [0], [1], [0, 0, 1, 1], [], []>} : vector<256x128xbf16>, vector<128x128xbf16>, vector<256x128xf32> -> vector<256x128xf32>
    %55 = arith.addf %47, %54 : vector<256x128xf32>
    %c1_i32_58 = arith.constant 1 : i32
    %56 = arith.addi %31, %c1_i32_58 : i32
    %57 = arith.index_cast %56 : i32 to index
    %c7_59 = arith.constant 7 : index
    %c0_60 = arith.constant 0 : index
    %58 = vector.load %arg7[%57, %c7_59, %c0_60] : memref<18x32x128xbf16, #tpu.memory_space<vmem>>, vector<16x16x128xbf16>
    %59 = vector.shape_cast %58 : vector<16x16x128xbf16> to vector<256x128xbf16>
    %c1_61 = arith.constant 1 : index
    %c0_62 = arith.constant 0 : index
    %c0_63 = arith.constant 0 : index
    %c0_64 = arith.constant 0 : index
    %60 = vector.load %arg2[%c1_61, %c0_62, %c0_63, %c0_64] : memref<3x3x128x128xbf16, #tpu.memory_space<vmem>>, vector<1x1x128x128xbf16>
    %61 = vector.shape_cast %60 : vector<1x1x128x128xbf16> to vector<128x128xbf16>
    %cst_65 = arith.constant dense<0.000000e+00> : vector<256x128xf32>
    %62 = tpu.matmul %59, %61, %cst_65 {dimension_numbers = #tpu.dot_dimension_numbers<[1], [0], [0], [1], [0, 0, 1, 1], [], []>} : vector<256x128xbf16>, vector<128x128xbf16>, vector<256x128xf32> -> vector<256x128xf32>
    %63 = arith.addf %55, %62 : vector<256x128xf32>
    %c1_i32_66 = arith.constant 1 : i32
    %64 = arith.addi %31, %c1_i32_66 : i32
    %65 = arith.index_cast %64 : i32 to index
    %c8_67 = arith.constant 8 : index
    %c0_68 = arith.constant 0 : index
    %66 = vector.load %arg7[%65, %c8_67, %c0_68] : memref<18x32x128xbf16, #tpu.memory_space<vmem>>, vector<16x16x128xbf16>
    %67 = vector.shape_cast %66 : vector<16x16x128xbf16> to vector<256x128xbf16>
    %c1_69 = arith.constant 1 : index
    %c1_70 = arith.constant 1 : index
    %c0_71 = arith.constant 0 : index
    %c0_72 = arith.constant 0 : index
    %68 = vector.load %arg2[%c1_69, %c1_70, %c0_71, %c0_72] : memref<3x3x128x128xbf16, #tpu.memory_space<vmem>>, vector<1x1x128x128xbf16>
    %69 = vector.shape_cast %68 : vector<1x1x128x128xbf16> to vector<128x128xbf16>
    %cst_73 = arith.constant dense<0.000000e+00> : vector<256x128xf32>
    %70 = tpu.matmul %67, %69, %cst_73 {dimension_numbers = #tpu.dot_dimension_numbers<[1], [0], [0], [1], [0, 0, 1, 1], [], []>} : vector<256x128xbf16>, vector<128x128xbf16>, vector<256x128xf32> -> vector<256x128xf32>
    %71 = arith.addf %63, %70 : vector<256x128xf32>
    %c1_i32_74 = arith.constant 1 : i32
    %72 = arith.addi %31, %c1_i32_74 : i32
    %73 = arith.index_cast %72 : i32 to index
    %c9_75 = arith.constant 9 : index
    %c0_76 = arith.constant 0 : index
    %74 = vector.load %arg7[%73, %c9_75, %c0_76] : memref<18x32x128xbf16, #tpu.memory_space<vmem>>, vector<16x16x128xbf16>
    %75 = vector.shape_cast %74 : vector<16x16x128xbf16> to vector<256x128xbf16>
    %c1_77 = arith.constant 1 : index
    %c2_78 = arith.constant 2 : index
    %c0_79 = arith.constant 0 : index
    %c0_80 = arith.constant 0 : index
    %76 = vector.load %arg2[%c1_77, %c2_78, %c0_79, %c0_80] : memref<3x3x128x128xbf16, #tpu.memory_space<vmem>>, vector<1x1x128x128xbf16>
    %77 = vector.shape_cast %76 : vector<1x1x128x128xbf16> to vector<128x128xbf16>
    %cst_81 = arith.constant dense<0.000000e+00> : vector<256x128xf32>
    %78 = tpu.matmul %75, %77, %cst_81 {dimension_numbers = #tpu.dot_dimension_numbers<[1], [0], [0], [1], [0, 0, 1, 1], [], []>} : vector<256x128xbf16>, vector<128x128xbf16>, vector<256x128xf32> -> vector<256x128xf32>
    %79 = arith.addf %71, %78 : vector<256x128xf32>
    %c2_i32 = arith.constant 2 : i32
    %80 = arith.addi %31, %c2_i32 : i32
    %81 = arith.index_cast %80 : i32 to index
    %c7_82 = arith.constant 7 : index
    %c0_83 = arith.constant 0 : index
    %82 = vector.load %arg7[%81, %c7_82, %c0_83] : memref<18x32x128xbf16, #tpu.memory_space<vmem>>, vector<16x16x128xbf16>
    %83 = vector.shape_cast %82 : vector<16x16x128xbf16> to vector<256x128xbf16>
    %c2_84 = arith.constant 2 : index
    %c0_85 = arith.constant 0 : index
    %c0_86 = arith.constant 0 : index
    %c0_87 = arith.constant 0 : index
    %84 = vector.load %arg2[%c2_84, %c0_85, %c0_86, %c0_87] : memref<3x3x128x128xbf16, #tpu.memory_space<vmem>>, vector<1x1x128x128xbf16>
    %85 = vector.shape_cast %84 : vector<1x1x128x128xbf16> to vector<128x128xbf16>
    %cst_88 = arith.constant dense<0.000000e+00> : vector<256x128xf32>
    %86 = tpu.matmul %83, %85, %cst_88 {dimension_numbers = #tpu.dot_dimension_numbers<[1], [0], [0], [1], [0, 0, 1, 1], [], []>} : vector<256x128xbf16>, vector<128x128xbf16>, vector<256x128xf32> -> vector<256x128xf32>
    %87 = arith.addf %79, %86 : vector<256x128xf32>
    %c2_i32_89 = arith.constant 2 : i32
    %88 = arith.addi %31, %c2_i32_89 : i32
    %89 = arith.index_cast %88 : i32 to index
    %c8_90 = arith.constant 8 : index
    %c0_91 = arith.constant 0 : index
    %90 = vector.load %arg7[%89, %c8_90, %c0_91] : memref<18x32x128xbf16, #tpu.memory_space<vmem>>, vector<16x16x128xbf16>
    %91 = vector.shape_cast %90 : vector<16x16x128xbf16> to vector<256x128xbf16>
    %c2_92 = arith.constant 2 : index
    %c1_93 = arith.constant 1 : index
    %c0_94 = arith.constant 0 : index
    %c0_95 = arith.constant 0 : index
    %92 = vector.load %arg2[%c2_92, %c1_93, %c0_94, %c0_95] : memref<3x3x128x128xbf16, #tpu.memory_space<vmem>>, vector<1x1x128x128xbf16>
    %93 = vector.shape_cast %92 : vector<1x1x128x128xbf16> to vector<128x128xbf16>
    %cst_96 = arith.constant dense<0.000000e+00> : vector<256x128xf32>
    %94 = tpu.matmul %91, %93, %cst_96 {dimension_numbers = #tpu.dot_dimension_numbers<[1], [0], [0], [1], [0, 0, 1, 1], [], []>} : vector<256x128xbf16>, vector<128x128xbf16>, vector<256x128xf32> -> vector<256x128xf32>
    %95 = arith.addf %87, %94 : vector<256x128xf32>
    %c2_i32_97 = arith.constant 2 : i32
    %96 = arith.addi %31, %c2_i32_97 : i32
    %97 = arith.index_cast %96 : i32 to index
    %c9_98 = arith.constant 9 : index
    %c0_99 = arith.constant 0 : index
    %98 = vector.load %arg7[%97, %c9_98, %c0_99] : memref<18x32x128xbf16, #tpu.memory_space<vmem>>, vector<16x16x128xbf16>
    %99 = vector.shape_cast %98 : vector<16x16x128xbf16> to vector<256x128xbf16>
    %c2_100 = arith.constant 2 : index
    %c2_101 = arith.constant 2 : index
    %c0_102 = arith.constant 0 : index
    %c0_103 = arith.constant 0 : index
    %100 = vector.load %arg2[%c2_100, %c2_101, %c0_102, %c0_103] : memref<3x3x128x128xbf16, #tpu.memory_space<vmem>>, vector<1x1x128x128xbf16>
    %101 = vector.shape_cast %100 : vector<1x1x128x128xbf16> to vector<128x128xbf16>
    %cst_104 = arith.constant dense<0.000000e+00> : vector<256x128xf32>
    %102 = tpu.matmul %99, %101, %cst_104 {dimension_numbers = #tpu.dot_dimension_numbers<[1], [0], [0], [1], [0, 0, 1, 1], [], []>} : vector<256x128xbf16>, vector<128x128xbf16>, vector<256x128xf32> -> vector<256x128xf32>
    %103 = arith.addf %95, %102 : vector<256x128xf32>
    %cst_105 = arith.constant 0.000000e+00 : f32
    %104 = vector.broadcast %cst_105 : f32 to vector<256x128xf32>
    %105 = arith.maximumf %103, %104 : vector<256x128xf32>
    %106 = vector.shape_cast %105 : vector<256x128xf32> to vector<16x16x128xf32>
    %107 = arith.truncf %106 : vector<16x16x128xf32> to vector<16x16x128xbf16>
    %c1_i32_106 = arith.constant 1 : i32
    %108 = arith.addi %31, %c1_i32_106 : i32
    %109 = arith.index_cast %108 : i32 to index
    %c8_107 = arith.constant 8 : index
    %c0_108 = arith.constant 0 : index
    %110 = vector.load %arg8[%109, %c8_107, %c0_108] : memref<18x32x128xbf16, #tpu.memory_space<vmem>>, vector<16x16x128xbf16>
    tpu.vector_store %arg8[%109, %c8_107, %c0_108], %107 {strides = array<i32>} : memref<18x32x128xbf16, #tpu.memory_space<vmem>>, vector<16x16x128xbf16>,
    %c1_i32_109 = arith.constant 1 : i32
    %c0_i32_110 = arith.constant 0 : i32
    %c1_i32_111 = arith.constant 1 : i32
    %111 = arith.muli %c0_i32_110, %c1_i32_111 : i32
    %c0_i32_112 = arith.constant 0 : i32
    %112 = arith.addi %c0_i32_112, %111 : i32
    %c16_i32_113 = arith.constant 16 : i32
    %113 = arith.muli %112, %c16_i32_113 : i32
    %114 = tpu.assume_multiple %113, 16 : i32
    %c0_i32_114 = arith.constant 0 : i32
    %115 = arith.addi %114, %c0_i32_114 : i32
    %116 = arith.index_cast %115 : i32 to index
    %c7_115 = arith.constant 7 : index
    %c0_116 = arith.constant 0 : index
    %117 = vector.load %arg8[%116, %c7_115, %c0_116] : memref<18x32x128xbf16, #tpu.memory_space<vmem>>, vector<16x16x128xbf16>
    %118 = vector.shape_cast %117 : vector<16x16x128xbf16> to vector<256x128xbf16>
    %c0_117 = arith.constant 0 : index
    %c0_118 = arith.constant 0 : index
    %c0_119 = arith.constant 0 : index
    %c0_120 = arith.constant 0 : index
    %119 = vector.load %arg4[%c0_117, %c0_118, %c0_119, %c0_120] : memref<3x3x128x128xbf16, #tpu.memory_space<vmem>>, vector<1x1x128x128xbf16>
    %120 = vector.shape_cast %119 : vector<1x1x128x128xbf16> to vector<128x128xbf16>
    %cst_121 = arith.constant dense<0.000000e+00> : vector<256x128xf32>
    %121 = tpu.matmul %118, %120, %cst_121 {dimension_numbers = #tpu.dot_dimension_numbers<[1], [0], [0], [1], [0, 0, 1, 1], [], []>} : vector<256x128xbf16>, vector<128x128xbf16>, vector<256x128xf32> -> vector<256x128xf32>
    %122 = arith.addf %16, %121 : vector<256x128xf32>
    %c0_i32_122 = arith.constant 0 : i32
    %123 = arith.addi %114, %c0_i32_122 : i32
    %124 = arith.index_cast %123 : i32 to index
    %c8_123 = arith.constant 8 : index
    %c0_124 = arith.constant 0 : index
    %125 = vector.load %arg8[%124, %c8_123, %c0_124] : memref<18x32x128xbf16, #tpu.memory_space<vmem>>, vector<16x16x128xbf16>
    %126 = vector.shape_cast %125 : vector<16x16x128xbf16> to vector<256x128xbf16>
    %c0_125 = arith.constant 0 : index
    %c1_126 = arith.constant 1 : index
    %c0_127 = arith.constant 0 : index
    %c0_128 = arith.constant 0 : index
    %127 = vector.load %arg4[%c0_125, %c1_126, %c0_127, %c0_128] : memref<3x3x128x128xbf16, #tpu.memory_space<vmem>>, vector<1x1x128x128xbf16>
    %128 = vector.shape_cast %127 : vector<1x1x128x128xbf16> to vector<128x128xbf16>
    %cst_129 = arith.constant dense<0.000000e+00> : vector<256x128xf32>
    %129 = tpu.matmul %126, %128, %cst_129 {dimension_numbers = #tpu.dot_dimension_numbers<[1], [0], [0], [1], [0, 0, 1, 1], [], []>} : vector<256x128xbf16>, vector<128x128xbf16>, vector<256x128xf32> -> vector<256x128xf32>
    %130 = arith.addf %122, %129 : vector<256x128xf32>
    %c0_i32_130 = arith.constant 0 : i32
    %131 = arith.addi %114, %c0_i32_130 : i32
    %132 = arith.index_cast %131 : i32 to index
    %c9_131 = arith.constant 9 : index
    %c0_132 = arith.constant 0 : index
    %133 = vector.load %arg8[%132, %c9_131, %c0_132] : memref<18x32x128xbf16, #tpu.memory_space<vmem>>, vector<16x16x128xbf16>
    %134 = vector.shape_cast %133 : vector<16x16x128xbf16> to vector<256x128xbf16>
    %c0_133 = arith.constant 0 : index
    %c2_134 = arith.constant 2 : index
    %c0_135 = arith.constant 0 : index
    %c0_136 = arith.constant 0 : index
    %135 = vector.load %arg4[%c0_133, %c2_134, %c0_135, %c0_136] : memref<3x3x128x128xbf16, #tpu.memory_space<vmem>>, vector<1x1x128x128xbf16>
    %136 = vector.shape_cast %135 : vector<1x1x128x128xbf16> to vector<128x128xbf16>
    %cst_137 = arith.constant dense<0.000000e+00> : vector<256x128xf32>
    %137 = tpu.matmul %134, %136, %cst_137 {dimension_numbers = #tpu.dot_dimension_numbers<[1], [0], [0], [1], [0, 0, 1, 1], [], []>} : vector<256x128xbf16>, vector<128x128xbf16>, vector<256x128xf32> -> vector<256x128xf32>
    %138 = arith.addf %130, %137 : vector<256x128xf32>
    %c1_i32_138 = arith.constant 1 : i32
    %139 = arith.addi %114, %c1_i32_138 : i32
    %140 = arith.index_cast %139 : i32 to index
    %c7_139 = arith.constant 7 : index
    %c0_140 = arith.constant 0 : index
    %141 = vector.load %arg8[%140, %c7_139, %c0_140] : memref<18x32x128xbf16, #tpu.memory_space<vmem>>, vector<16x16x128xbf16>
    %142 = vector.shape_cast %141 : vector<16x16x128xbf16> to vector<256x128xbf16>
    %c1_141 = arith.constant 1 : index
    %c0_142 = arith.constant 0 : index
    %c0_143 = arith.constant 0 : index
    %c0_144 = arith.constant 0 : index
    %143 = vector.load %arg4[%c1_141, %c0_142, %c0_143, %c0_144] : memref<3x3x128x128xbf16, #tpu.memory_space<vmem>>, vector<1x1x128x128xbf16>
    %144 = vector.shape_cast %143 : vector<1x1x128x128xbf16> to vector<128x128xbf16>
    %cst_145 = arith.constant dense<0.000000e+00> : vector<256x128xf32>
    %145 = tpu.matmul %142, %144, %cst_145 {dimension_numbers = #tpu.dot_dimension_numbers<[1], [0], [0], [1], [0, 0, 1, 1], [], []>} : vector<256x128xbf16>, vector<128x128xbf16>, vector<256x128xf32> -> vector<256x128xf32>
    %146 = arith.addf %138, %145 : vector<256x128xf32>
    %c1_i32_146 = arith.constant 1 : i32
    %147 = arith.addi %114, %c1_i32_146 : i32
    %148 = arith.index_cast %147 : i32 to index
    %c8_147 = arith.constant 8 : index
    %c0_148 = arith.constant 0 : index
    %149 = vector.load %arg8[%148, %c8_147, %c0_148] : memref<18x32x128xbf16, #tpu.memory_space<vmem>>, vector<16x16x128xbf16>
    %150 = vector.shape_cast %149 : vector<16x16x128xbf16> to vector<256x128xbf16>
    %c1_149 = arith.constant 1 : index
    %c1_150 = arith.constant 1 : index
    %c0_151 = arith.constant 0 : index
    %c0_152 = arith.constant 0 : index
    %151 = vector.load %arg4[%c1_149, %c1_150, %c0_151, %c0_152] : memref<3x3x128x128xbf16, #tpu.memory_space<vmem>>, vector<1x1x128x128xbf16>
    %152 = vector.shape_cast %151 : vector<1x1x128x128xbf16> to vector<128x128xbf16>
    %cst_153 = arith.constant dense<0.000000e+00> : vector<256x128xf32>
    %153 = tpu.matmul %150, %152, %cst_153 {dimension_numbers = #tpu.dot_dimension_numbers<[1], [0], [0], [1], [0, 0, 1, 1], [], []>} : vector<256x128xbf16>, vector<128x128xbf16>, vector<256x128xf32> -> vector<256x128xf32>
    %154 = arith.addf %146, %153 : vector<256x128xf32>
    %c1_i32_154 = arith.constant 1 : i32
    %155 = arith.addi %114, %c1_i32_154 : i32
    %156 = arith.index_cast %155 : i32 to index
    %c9_155 = arith.constant 9 : index
    %c0_156 = arith.constant 0 : index
    %157 = vector.load %arg8[%156, %c9_155, %c0_156] : memref<18x32x128xbf16, #tpu.memory_space<vmem>>, vector<16x16x128xbf16>
    %158 = vector.shape_cast %157 : vector<16x16x128xbf16> to vector<256x128xbf16>
    %c1_157 = arith.constant 1 : index
    %c2_158 = arith.constant 2 : index
    %c0_159 = arith.constant 0 : index
    %c0_160 = arith.constant 0 : index
    %159 = vector.load %arg4[%c1_157, %c2_158, %c0_159, %c0_160] : memref<3x3x128x128xbf16, #tpu.memory_space<vmem>>, vector<1x1x128x128xbf16>
    %160 = vector.shape_cast %159 : vector<1x1x128x128xbf16> to vector<128x128xbf16>
    %cst_161 = arith.constant dense<0.000000e+00> : vector<256x128xf32>
    %161 = tpu.matmul %158, %160, %cst_161 {dimension_numbers = #tpu.dot_dimension_numbers<[1], [0], [0], [1], [0, 0, 1, 1], [], []>} : vector<256x128xbf16>, vector<128x128xbf16>, vector<256x128xf32> -> vector<256x128xf32>
    %162 = arith.addf %154, %161 : vector<256x128xf32>
    %c2_i32_162 = arith.constant 2 : i32
    %163 = arith.addi %114, %c2_i32_162 : i32
    %164 = arith.index_cast %163 : i32 to index
    %c7_163 = arith.constant 7 : index
    %c0_164 = arith.constant 0 : index
    %165 = vector.load %arg8[%164, %c7_163, %c0_164] : memref<18x32x128xbf16, #tpu.memory_space<vmem>>, vector<16x16x128xbf16>
    %166 = vector.shape_cast %165 : vector<16x16x128xbf16> to vector<256x128xbf16>
    %c2_165 = arith.constant 2 : index
    %c0_166 = arith.constant 0 : index
    %c0_167 = arith.constant 0 : index
    %c0_168 = arith.constant 0 : index
    %167 = vector.load %arg4[%c2_165, %c0_166, %c0_167, %c0_168] : memref<3x3x128x128xbf16, #tpu.memory_space<vmem>>, vector<1x1x128x128xbf16>
    %168 = vector.shape_cast %167 : vector<1x1x128x128xbf16> to vector<128x128xbf16>
    %cst_169 = arith.constant dense<0.000000e+00> : vector<256x128xf32>
    %169 = tpu.matmul %166, %168, %cst_169 {dimension_numbers = #tpu.dot_dimension_numbers<[1], [0], [0], [1], [0, 0, 1, 1], [], []>} : vector<256x128xbf16>, vector<128x128xbf16>, vector<256x128xf32> -> vector<256x128xf32>
    %170 = arith.addf %162, %169 : vector<256x128xf32>
    %c2_i32_170 = arith.constant 2 : i32
    %171 = arith.addi %114, %c2_i32_170 : i32
    %172 = arith.index_cast %171 : i32 to index
    %c8_171 = arith.constant 8 : index
    %c0_172 = arith.constant 0 : index
    %173 = vector.load %arg8[%172, %c8_171, %c0_172] : memref<18x32x128xbf16, #tpu.memory_space<vmem>>, vector<16x16x128xbf16>
    %174 = vector.shape_cast %173 : vector<16x16x128xbf16> to vector<256x128xbf16>
    %c2_173 = arith.constant 2 : index
    %c1_174 = arith.constant 1 : index
    %c0_175 = arith.constant 0 : index
    %c0_176 = arith.constant 0 : index
    %175 = vector.load %arg4[%c2_173, %c1_174, %c0_175, %c0_176] : memref<3x3x128x128xbf16, #tpu.memory_space<vmem>>, vector<1x1x128x128xbf16>
    %176 = vector.shape_cast %175 : vector<1x1x128x128xbf16> to vector<128x128xbf16>
    %cst_177 = arith.constant dense<0.000000e+00> : vector<256x128xf32>
    %177 = tpu.matmul %174, %176, %cst_177 {dimension_numbers = #tpu.dot_dimension_numbers<[1], [0], [0], [1], [0, 0, 1, 1], [], []>} : vector<256x128xbf16>, vector<128x128xbf16>, vector<256x128xf32> -> vector<256x128xf32>
    %178 = arith.addf %170, %177 : vector<256x128xf32>
    %c2_i32_178 = arith.constant 2 : i32
    %179 = arith.addi %114, %c2_i32_178 : i32
    %180 = arith.index_cast %179 : i32 to index
    %c9_179 = arith.constant 9 : index
    %c0_180 = arith.constant 0 : index
    %181 = vector.load %arg8[%180, %c9_179, %c0_180] : memref<18x32x128xbf16, #tpu.memory_space<vmem>>, vector<16x16x128xbf16>
    %182 = vector.shape_cast %181 : vector<16x16x128xbf16> to vector<256x128xbf16>
    %c2_181 = arith.constant 2 : index
    %c2_182 = arith.constant 2 : index
    %c0_183 = arith.constant 0 : index
    %c0_184 = arith.constant 0 : index
    %183 = vector.load %arg4[%c2_181, %c2_182, %c0_183, %c0_184] : memref<3x3x128x128xbf16, #tpu.memory_space<vmem>>, vector<1x1x128x128xbf16>
    %184 = vector.shape_cast %183 : vector<1x1x128x128xbf16> to vector<128x128xbf16>
    %cst_185 = arith.constant dense<0.000000e+00> : vector<256x128xf32>
    %185 = tpu.matmul %182, %184, %cst_185 {dimension_numbers = #tpu.dot_dimension_numbers<[1], [0], [0], [1], [0, 0, 1, 1], [], []>} : vector<256x128xbf16>, vector<128x128xbf16>, vector<256x128xf32> -> vector<256x128xf32>
    %186 = arith.addf %178, %185 : vector<256x128xf32>
    %c0_186 = arith.constant 0 : index
    %187 = arith.index_cast %114 : i32 to index
    %c0_187 = arith.constant 0 : index
    %c0_188 = arith.constant 0 : index
    %188 = vector.load %arg1[%c0_186, %187, %c0_187, %c0_188] : memref<1x16x16x128xf32, #tpu.memory_space<vmem>>, vector<1x16x16x128xf32>
    %189 = vector.shape_cast %188 : vector<1x16x16x128xf32> to vector<16x16x128xf32>
    %190 = vector.shape_cast %189 : vector<16x16x128xf32> to vector<256x128xf32>
    %191 = arith.addf %186, %190 : vector<256x128xf32>
    %cst_189 = arith.constant 0.000000e+00 : f32
    %192 = vector.broadcast %cst_189 : f32 to vector<256x128xf32>
    %193 = arith.maximumf %191, %192 : vector<256x128xf32>
    %194 = vector.shape_cast %193 : vector<256x128xf32> to vector<16x16x128xf32>
    %c0_190 = arith.constant 0 : index
    %195 = arith.index_cast %114 : i32 to index
    %c0_191 = arith.constant 0 : index
    %c0_192 = arith.constant 0 : index
    %196 = vector.load %arg6[%c0_190, %195, %c0_191, %c0_192] : memref<1x16x16x128xf32, #tpu.memory_space<vmem>>, vector<1x16x16x128xf32>
    %197 = vector.shape_cast %196 : vector<1x16x16x128xf32> to vector<16x16x128xf32>
    %198 = vector.shape_cast %194 : vector<16x16x128xf32> to vector<1x16x16x128xf32>
    tpu.vector_store %arg6[%c0_190, %195, %c0_191, %c0_192], %198 {strides = array<i32>} : memref<1x16x16x128xf32, #tpu.memory_space<vmem>>, vector<1x16x16x128xf32>,
    %c1_i32_193 = arith.constant 1 : i32
    return
  }
  func.func @transform_0(%arg0: i32) -> (i32, i32, i32, i32) {
    %c0_i32 = arith.constant 0 : i32
    %c0_i32_0 = arith.constant 0 : i32
    %c0_i32_1 = arith.constant 0 : i32
    %c0_i32_2 = arith.constant 0 : i32
    return %arg0, %c0_i32, %c0_i32_0, %c0_i32_1 : i32, i32, i32, i32
  }
  func.func @transform_1(%arg0: i32) -> (i32, i32, i32, i32) {
    %c0_i32 = arith.constant 0 : i32
    %c0_i32_0 = arith.constant 0 : i32
    %c0_i32_1 = arith.constant 0 : i32
    %c0_i32_2 = arith.constant 0 : i32
    %c0_i32_3 = arith.constant 0 : i32
    return %c0_i32, %c0_i32_0, %c0_i32_1, %c0_i32_2 : i32, i32, i32, i32
  }
  func.func @transform_2(%arg0: i32) -> (i32, i32) {
    %c0_i32 = arith.constant 0 : i32
    %c0_i32_0 = arith.constant 0 : i32
    %c0_i32_1 = arith.constant 0 : i32
    return %c0_i32, %c0_i32_0 : i32, i32
  }
  func.func @transform_3(%arg0: i32) -> (i32, i32, i32, i32) {
    %c0_i32 = arith.constant 0 : i32
    %c0_i32_0 = arith.constant 0 : i32
    %c0_i32_1 = arith.constant 0 : i32
    %c0_i32_2 = arith.constant 0 : i32
    %c0_i32_3 = arith.constant 0 : i32
    return %c0_i32, %c0_i32_0, %c0_i32_1, %c0_i32_2 : i32, i32, i32, i32
  }
  func.func @transform_4(%arg0: i32) -> (i32, i32) {
    %c0_i32 = arith.constant 0 : i32
    %c0_i32_0 = arith.constant 0 : i32
    %c0_i32_1 = arith.constant 0 : i32
    return %c0_i32, %c0_i32_0 : i32, i32
  }
  func.func @transform_5(%arg0: i32) -> (i32, i32, i32, i32) {
    %c0_i32 = arith.constant 0 : i32
    %c0_i32_0 = arith.constant 0 : i32
    %c0_i32_1 = arith.constant 0 : i32
    %c0_i32_2 = arith.constant 0 : i32
    return %arg0, %c0_i32, %c0_i32_0, %c0_i32_1 : i32, i32, i32, i32
  }
}

</mosaic_0001>

<llo_original>
// kernel: basic_block_forward.1
$region0: #{basic_block_forward.1}
  #allocation0 [shape = 'u32[]', space=smem, size = 0x4, offset = 0x4, fixed_abs, tag = 'smem constant byte address 0x4 - core index']
  #allocation1 [shape = 'u32[144,128]{1,0:T(1,128)}', space=vmem, size = 0x12000, scoped, tag = 'internal scratch']
  #allocation2 [shape = 'bf16[18,32,128]{2,1,0:T(8,128)(2,1)}', space=vmem, size = 0x24000, scoped, tag = 'scratch operand']
  #allocation3 [shape = 'bf16[18,32,128]{2,1,0:T(8,128)(2,1)}', space=vmem, size = 0x24000, scoped, tag = 'scratch operand']
  %s0 = inlined_call_operand.vmem [shape: f32[2,16,16,128], index: 0, kind: input, shape index: {}]
  %s1 = inlined_call_operand.vmem [shape: bf16[3,3,128,128], index: 1, kind: input, shape index: {}]
  %s2 = inlined_call_operand.vmem [shape: f32[1,128], index: 2, kind: input, shape index: {}]
  %s3 = inlined_call_operand.vmem [shape: bf16[3,3,128,128], index: 3, kind: input, shape index: {}]
  %s4 = inlined_call_operand.vmem [shape: f32[1,128], index: 4, kind: input, shape index: {}]
  %s5 = inlined_call_operand.vmem [shape: f32[2,16,16,128], index: 5, kind: output, shape index: {}]
  %s6 = sld [smem:[#allocation0]]
  $region53: #{basic_block_forward.1} parent=0
    _
  %s8 = ssub.s32 1, %s6
  %s9 = scalar_select 0, %s8, %s6
  loop: start=0, step=1, limit=4
  $region2: #{basic_block_forward.1} parent=0 // loop_pre_header
    _
  $region3: #{basic_block_forward.1} parent=0 // loop_header
    %s11 = sphi 0, %s15
    %p12 = scmp.ge.s32.totalorder %s11, 4
    %s21 = sphi 0, %s23
    %s24 = sphi 0, %s21
    %s25 = sphi 0, %s24
    %s41 = sphi 0, %s25
    %s45 = sphi 0, %s45
    %s47 = sphi 0, %s45
    %s48 = sphi 0, %s47
    %s62 = sphi 0, %s48
    %s66 = sphi 0, %s66
    %s68 = sphi 0, %s66
    %s69 = sphi 0, %s68
    %s83 = sphi 0, %s69
    %s87 = sphi 0, %s87
    %s89 = sphi 0, %s87
    %s90 = sphi 0, %s89
    %s104 = sphi 0, %s90
    %s108 = sphi 0, %s108
    %s110 = sphi 0, %s108
    %s111 = sphi 0, %s110
    %s125 = sphi 0, %s111
    %s131 = sphi 0, %s133
    %s134 = sphi 0, %s131
    %s135 = sphi 0, %s134
    %s151 = sphi 0, %s135
  $region4: #{basic_block_forward.1} parent=0 // loop_header_branch
    %14 = sbr.rel (%p12) target = $region8
  $region5: #{basic_block_forward.1} parent=0 // loop_body
    %s16 = ssub.s32 %s11, 1
    %s17 = ssub.s32 %s11, 2
    %s18 = sadd.s32 %s11, 1
    %s19 = ssub.s32 %s11, %s18
    %p20 = scmp.eq.s32.totalorder %s19, 0
    %s22 = sadd.s32 %s21, 1
    %s23 = scalar_select %p20, %s21, %s22
    %p26 = pneg %p20
    %p27 = scmp.eq.s32.totalorder %s11, 1
    %p28 = por %p26, %p27
    %p29 = scmp.ne.s32.totalorder %s21, %s24
    %p30 = scmp.eq.s32.totalorder %s11, 0
    %p31 = por %p29, %p30
    %p32 = scmp.ne.s32.totalorder %s21, %s24
    %p33 = scmp.eq.s32.totalorder %s16, 1
    %p34 = por %p32, %p33
    %p35 = scmp.ne.s32.totalorder %s24, %s25
    %p36 = scmp.eq.s32.totalorder %s16, 0
    %p37 = por %p35, %p36
    %p38 = scmp.ne.s32.totalorder %s24, %s25
    %p39 = scmp.eq.s32.totalorder %s17, 1
    %p40 = por %p38, %p39
    %p42 = scmp.ne.s32.totalorder %s25, %s41
    %p43 = scmp.eq.s32.totalorder %s17, 0
    %p44 = por %p42, %p43
    %s46 = sadd.s32 %s45, 1
    %p49 = scmp.eq.s32.totalorder %s11, 1
    %p50 = scmp.ne.s32.totalorder %s45, %s47
    %p51 = scmp.eq.s32.totalorder %s11, 0
    %p52 = por %p50, %p51
    %p53 = scmp.ne.s32.totalorder %s45, %s47
    %p54 = scmp.eq.s32.totalorder %s16, 1
    %p55 = por %p53, %p54
    %p56 = scmp.ne.s32.totalorder %s47, %s48
    %p57 = scmp.eq.s32.totalorder %s16, 0
    %p58 = por %p56, %p57
    %p59 = scmp.ne.s32.totalorder %s47, %s48
    %p60 = scmp.eq.s32.totalorder %s17, 1
    %p61 = por %p59, %p60
    %p63 = scmp.ne.s32.totalorder %s48, %s62
    %p64 = scmp.eq.s32.totalorder %s17, 0
    %p65 = por %p63, %p64
    %s67 = sadd.s32 %s66, 1
    %p70 = scmp.eq.s32.totalorder %s11, 1
    %p71 = scmp.ne.s32.totalorder %s66, %s68
    %p72 = scmp.eq.s32.totalorder %s11, 0
    %p73 = por %p71, %p72
    %p74 = scmp.ne.s32.totalorder %s66, %s68
    %p75 = scmp.eq.s32.totalorder %s16, 1
    %p76 = por %p74, %p75
    %p77 = scmp.ne.s32.totalorder %s68, %s69
    %p78 = scmp.eq.s32.totalorder %s16, 0
    %p79 = por %p77, %p78
    %p80 = scmp.ne.s32.totalorder %s68, %s69
    %p81 = scmp.eq.s32.totalorder %s17, 1
    %p82 = por %p80, %p81
    %p84 = scmp.ne.s32.totalorder %s69, %s83
    %p85 = scmp.eq.s32.totalorder %s17, 0
    %p86 = por %p84, %p85
    %s88 = sadd.s32 %s87, 1
    %p91 = scmp.eq.s32.totalorder %s11, 1
    %p92 = scmp.ne.s32.totalorder %s87, %s89
    %p93 = scmp.eq.s32.totalorder %s11, 0
    %p94 = por %p92, %p93
    %p95 = scmp.ne.s32.totalorder %s87, %s89
    %p96 = scmp.eq.s32.totalorder %s16, 1
    %p97 = por %p95, %p96
    %p98 = scmp.ne.s32.totalorder %s89, %s90
    %p99 = scmp.eq.s32.totalorder %s16, 0
    %p100 = por %p98, %p99
    %p101 = scmp.ne.s32.totalorder %s89, %s90
    %p102 = scmp.eq.s32.totalorder %s17, 1
    %p103 = por %p101, %p102
    %p105 = scmp.ne.s32.totalorder %s90, %s104
    %p106 = scmp.eq.s32.totalorder %s17, 0
    %p107 = por %p105, %p106
    %s109 = sadd.s32 %s108, 1
    %p112 = scmp.eq.s32.totalorder %s11, 1
    %p113 = scmp.ne.s32.totalorder %s108, %s110
    %p114 = scmp.eq.s32.totalorder %s11, 0
    %p115 = por %p113, %p114
    %p116 = scmp.ne.s32.totalorder %s108, %s110
    %p117 = scmp.eq.s32.totalorder %s16, 1
    %p118 = por %p116, %p117
    %p119 = scmp.ne.s32.totalorder %s110, %s111
    %p120 = scmp.eq.s32.totalorder %s16, 0
    %p121 = por %p119, %p120
    %p122 = scmp.ne.s32.totalorder %s110, %s111
    %p123 = scmp.eq.s32.totalorder %s17, 1
    %p124 = por %p122, %p123
    %p126 = scmp.ne.s32.totalorder %s111, %s125
    %p127 = scmp.eq.s32.totalorder %s17, 0
    %p128 = por %p126, %p127
    %s129 = ssub.s32 %s11, %s18
    %p130 = scmp.eq.s32.totalorder %s129, 0
    %s132 = sadd.s32 %s131, 1
    %s133 = scalar_select %p130, %s131, %s132
    %p136 = pneg %p130
    %p137 = scmp.eq.s32.totalorder %s11, 1
    %p138 = por %p136, %p137
    %p139 = scmp.ne.s32.totalorder %s131, %s134
    %p140 = scmp.eq.s32.totalorder %s11, 0
    %p141 = por %p139, %p140
    %p142 = scmp.ne.s32.totalorder %s131, %s134
    %p143 = scmp.eq.s32.totalorder %s16, 1
    %p144 = por %p142, %p143
    %p145 = scmp.ne.s32.totalorder %s134, %s135
    %p146 = scmp.eq.s32.totalorder %s16, 0
    %p147 = por %p145, %p146
    %p148 = scmp.ne.s32.totalorder %s134, %s135
    %p149 = scmp.eq.s32.totalorder %s17, 1
    %p150 = por %p148, %p149
    %p152 = scmp.ne.s32.totalorder %s135, %s151
    %p153 = scmp.eq.s32.totalorder %s17, 0
    %p154 = por %p152, %p153
    %p155 = scmp.le.s32.totalorder 1, %s11
    %p156 = scmp.lt.s32.totalorder %s11, 3
    %p157 = pnand %p155, %p156
    %p158 = pneg %p157
    // Predicated region
    $region9: #{basic_block_forward.1} parent=5 // pred_check
      _
    $region10: #{basic_block_forward.1} parent=5 // pred_check_branch
      %160 = sbr.rel (%p157) target = $region12
    $region11: #{basic_block_forward.1} parent=5 // pred_region
      %s161 = ssub.s32 %s11, 1
      // Predicated region
      $region13: #{basic_block_forward.1} parent=11 // pred_check
        %p162 = pneg %p58
      $region14: #{basic_block_forward.1} parent=11 // pred_check_branch
        %164 = sbr.rel (%p162) target = $region16
      $region15: #{basic_block_forward.1} parent=11 // pred_region
        _
      $region16: #{basic_block_forward.1} parent=11 // pred_fallthru
        _
      // Predicated region
      $region17: #{basic_block_forward.1} parent=11 // pred_check
        %p165 = pneg %p79
      $region18: #{basic_block_forward.1} parent=11 // pred_check_branch
        %167 = sbr.rel (%p165) target = $region20
      $region19: #{basic_block_forward.1} parent=11 // pred_region
        _
      $region20: #{basic_block_forward.1} parent=11 // pred_fallthru
        _
      // Predicated region
      $region21: #{basic_block_forward.1} parent=11 // pred_check
        %p168 = pneg %p100
      $region22: #{basic_block_forward.1} parent=11 // pred_check_branch
        %170 = sbr.rel (%p168) target = $region24
      $region23: #{basic_block_forward.1} parent=11 // pred_region
        _
      $region24: #{basic_block_forward.1} parent=11 // pred_fallthru
        _
      // Predicated region
      $region25: #{basic_block_forward.1} parent=11 // pred_check
        %p171 = pneg %p121
      $region26: #{basic_block_forward.1} parent=11 // pred_check_branch
        %173 = sbr.rel (%p171) target = $region28
      $region27: #{basic_block_forward.1} parent=11 // pred_region
        _
      $region28: #{basic_block_forward.1} parent=11 // pred_fallthru
        _
    $region12: #{basic_block_forward.1} parent=5 // pred_fallthru
      _
    %p174 = scmp.lt.s32.totalorder %s11, 2
    // Predicated region
    $region29: #{basic_block_forward.1} parent=5 // pred_check
      %p175 = pneg %p174
    $region30: #{basic_block_forward.1} parent=5 // pred_check_branch
      %177 = sbr.rel (%p175) target = $region32
    $region31: #{basic_block_forward.1} parent=5 // pred_region
      // Predicated region
      $region33: #{basic_block_forward.1} parent=31 // pred_check
        %p178 = pneg %p31
      $region34: #{basic_block_forward.1} parent=31 // pred_check_branch
        %180 = sbr.rel (%p178) target = $region36
      $region35: #{basic_block_forward.1} parent=31 // pred_region
        %p181 = scmp.lt.s32.totalorder %s11, 1
        %s182 = scalar_select %p181, %s11, 1
        %s183 = smul.addr %s182, 32
        %s184 = smul.addr %s183, 8
        %s185 = scalar_lea.vmem %s0, %s184
      $region36: #{basic_block_forward.1} parent=31 // pred_fallthru
        _
    $region32: #{basic_block_forward.1} parent=5 // pred_fallthru
      _
    %p186 = scmp.le.s32.totalorder 1, %s11
    %p187 = scmp.lt.s32.totalorder %s11, 3
    %p188 = pnand %p186, %p187
    %p189 = pneg %p188
    // Predicated region
    $region37: #{basic_block_forward.1} parent=5 // pred_check
      _
    $region38: #{basic_block_forward.1} parent=5 // pred_check_branch
      %191 = sbr.rel (%p188) target = $region40
    $region39: #{basic_block_forward.1} parent=5 // pred_region
      %s192 = ssub.s32 %s11, 1
      %p193 = scmp.lt.s32.totalorder %s16, 1
      %s194 = scalar_select %p193, %s16, 1
      %s195 = smul.addr %s194, 32
      %s196 = smul.addr %s195, 8
      %s197 = scalar_lea.vmem %s0, %s196
      %p198 = pneg %p37
      %p199 = pneg %p34
      %p200 = pneg %p58
      %p201 = pneg %p55
      %p202 = pneg %p79
      %p203 = pneg %p76
      %p204 = pneg %p100
      %p205 = pneg %p97
      %p206 = pneg %p121
      %p207 = pneg %p118
      %p208 = pneg %p147
      %p209 = pneg %p144
      %p210 = scmp.lt.s32.totalorder %s16, 1
      %s211 = scalar_select %p210, %s16, 1
      %s212 = smul.addr %s211, 32
      %s213 = smul.addr %s212, 8
      %s214 = scalar_lea.vmem %s5, %s213
      %p215 = scmp.lt.s32.totalorder %s16, 1
      %s216 = scalar_select %p215, %s16, 1
      %s217 = smul.addr %s216, 32
      %s218 = smul.addr %s217, 8
      %s219 = scalar_lea.vmem %s0, %s218
      %p220 = scmp.lt.s32.totalorder %s16, 1
      %s221 = scalar_select %p220, %s16, 1
      %s222 = smul.addr %s221, 32
      %s223 = smul.addr %s222, 8
      %s224 = scalar_lea.vmem %s5, %s223
      %226 = vst [vmem:[#allocation2] sm:$0xf] 0
      %227 = vst [vmem:[#allocation2 + $0x4] sm:$0xf] 0
      %228 = vst [vmem:[#allocation2 + $0x8] sm:$0xf] 0
      %229 = vst [vmem:[#allocation2 + $0xc] sm:$0xf] 0
      %s230 = scalar_lea.vmem [#allocation2], 272
      %231 = vst [vmem:[%s230] sm:$0xf] 0
      %232 = vst [vmem:[%s230 + $0x4] sm:$0xf] 0
      %233 = vst [vmem:[%s230 + $0x8] sm:$0xf] 0
      %234 = vst [vmem:[%s230 + $0xc] sm:$0xf] 0
      %s235 = scalar_lea.vmem [#allocation2], 16
      %236 = vst [vmem:[%s235] sm:$0xf] 0
      %237 = vst [vmem:[%s235 + $0x10] sm:$0xf] 0
      %238 = vst [vmem:[%s235 + $0x20] sm:$0xf] 0
      %239 = vst [vmem:[%s235 + $0x30] sm:$0xf] 0
      %240 = vst [vmem:[%s235 + $0x40] sm:$0xf] 0
      %241 = vst [vmem:[%s235 + $0x50] sm:$0xf] 0
      %242 = vst [vmem:[%s235 + $0x60] sm:$0xf] 0
      %243 = vst [vmem:[%s235 + $0x70] sm:$0xf] 0
      %244 = vst [vmem:[%s235 + $0x80] sm:$0xf] 0
      %245 = vst [vmem:[%s235 + $0x90] sm:$0xf] 0
      %246 = vst [vmem:[%s235 + $0xa0] sm:$0xf] 0
      %247 = vst [vmem:[%s235 + $0xb0] sm:$0xf] 0
      %248 = vst [vmem:[%s235 + $0xc0] sm:$0xf] 0
      %249 = vst [vmem:[%s235 + $0xd0] sm:$0xf] 0
      %250 = vst [vmem:[%s235 + $0xe0] sm:$0xf] 0
      %251 = vst [vmem:[%s235 + $0xf0] sm:$0xf] 0
      %252 = vst [vmem:[%s235 + $0xc] sm:$0xf] 0
      %253 = vst [vmem:[%s235 + $0x1c] sm:$0xf] 0
      %254 = vst [vmem:[%s235 + $0x2c] sm:$0xf] 0
      %255 = vst [vmem:[%s235 + $0x3c] sm:$0xf] 0
      %256 = vst [vmem:[%s235 + $0x4c] sm:$0xf] 0
      %257 = vst [vmem:[%s235 + $0x5c] sm:$0xf] 0
      %258 = vst [vmem:[%s235 + $0x6c] sm:$0xf] 0
      %259 = vst [vmem:[%s235 + $0x7c] sm:$0xf] 0
      %260 = vst [vmem:[%s235 + $0x8c] sm:$0xf] 0
      %261 = vst [vmem:[%s235 + $0x9c] sm:$0xf] 0
      %262 = vst [vmem:[%s235 + $0xac] sm:$0xf] 0
      %263 = vst [vmem:[%s235 + $0xbc] sm:$0xf] 0
      %264 = vst [vmem:[%s235 + $0xcc] sm:$0xf] 0
      %265 = vst [vmem:[%s235 + $0xdc] sm:$0xf] 0
      %266 = vst [vmem:[%s235 + $0xec] sm:$0xf] 0
      %267 = vst [vmem:[%s235 + $0xfc] sm:$0xf] 0
      %268 = vst [vmem:[#allocation3] sm:$0xf] 0
      %269 = vst [vmem:[#allocation3 + $0x4] sm:$0xf] 0
      %270 = vst [vmem:[#allocation3 + $0x8] sm:$0xf] 0
      %271 = vst [vmem:[#allocation3 + $0xc] sm:$0xf] 0
      %s272 = scalar_lea.vmem [#allocation3], 272
      %273 = vst [vmem:[%s272] sm:$0xf] 0
      %274 = vst [vmem:[%s272 + $0x4] sm:$0xf] 0
      %275 = vst [vmem:[%s272 + $0x8] sm:$0xf] 0
      %276 = vst [vmem:[%s272 + $0xc] sm:$0xf] 0
      %s277 = scalar_lea.vmem [#allocation3], 16
      %278 = vst [vmem:[%s277] sm:$0xf] 0
      %279 = vst [vmem:[%s277 + $0x10] sm:$0xf] 0
      %280 = vst [vmem:[%s277 + $0x20] sm:$0xf] 0
      %281 = vst [vmem:[%s277 + $0x30] sm:$0xf] 0
      %282 = vst [vmem:[%s277 + $0x40] sm:$0xf] 0
      %283 = vst [vmem:[%s277 + $0x50] sm:$0xf] 0
      %284 = vst [vmem:[%s277 + $0x60] sm:$0xf] 0
      %285 = vst [vmem:[%s277 + $0x70] sm:$0xf] 0
      %286 = vst [vmem:[%s277 + $0x80] sm:$0xf] 0
      %287 = vst [vmem:[%s277 + $0x90] sm:$0xf] 0
      %288 = vst [vmem:[%s277 + $0xa0] sm:$0xf] 0
      %289 = vst [vmem:[%s277 + $0xb0] sm:$0xf] 0
      %290 = vst [vmem:[%s277 + $0xc0] sm:$0xf] 0
      %291 = vst [vmem:[%s277 + $0xd0] sm:$0xf] 0
      %292 = vst [vmem:[%s277 + $0xe0] sm:$0xf] 0
      %293 = vst [vmem:[%s277 + $0xf0] sm:$0xf] 0
      %294 = vst [vmem:[%s277 + $0xc] sm:$0xf] 0
      %295 = vst [vmem:[%s277 + $0x1c] sm:$0xf] 0
      %296 = vst [vmem:[%s277 + $0x2c] sm:$0xf] 0
      %297 = vst [vmem:[%s277 + $0x3c] sm:$0xf] 0
      %298 = vst [vmem:[%s277 + $0x4c] sm:$0xf] 0
      %299 = vst [vmem:[%s277 + $0x5c] sm:$0xf] 0
      %300 = vst [vmem:[%s277 + $0x6c] sm:$0xf] 0
      %301 = vst [vmem:[%s277 + $0x7c] sm:$0xf] 0
      %302 = vst [vmem:[%s277 + $0x8c] sm:$0xf] 0
      %303 = vst [vmem:[%s277 + $0x9c] sm:$0xf] 0
      %304 = vst [vmem:[%s277 + $0xac] sm:$0xf] 0
      %305 = vst [vmem:[%s277 + $0xbc] sm:$0xf] 0
      %306 = vst [vmem:[%s277 + $0xcc] sm:$0xf] 0
      %307 = vst [vmem:[%s277 + $0xdc] sm:$0xf] 0
      %308 = vst [vmem:[%s277 + $0xec] sm:$0xf] 0
      %309 = vst [vmem:[%s277 + $0xfc] sm:$0xf] 0
      %v310 = vld [vmem:[%s2] sm:$0x1]
      %v312 = vlaneseq
      %v313 = vshrl.u32 %v312, 7
      %v314 = vsub.s32 0, %v313
      %v315 = vrot.slane %v310, %v314
      %v317 = vld [vmem:[%s4] sm:$0x1]
      %v319 = vlaneseq
      %v320 = vshrl.u32 %v319, 7
      %v321 = vsub.s32 0, %v320
      %v322 = vrot.slane %v317, %v321
      %s324 = smul.u32 0, 16
      %s325 = scalar_lea.vmem %s219, %s324
      %v326 = vld [vmem:[%s325] sm:$0xff]
      %v327 = vld [vmem:[%s325 + $0x8] sm:$0xff]
      %v328 = vld [vmem:[%s325 + $0x10] sm:$0xff]
      %v329 = vld [vmem:[%s325 + $0x18] sm:$0xff]
      %v330 = vld [vmem:[%s325 + $0x20] sm:$0xff]
      %v331 = vld [vmem:[%s325 + $0x28] sm:$0xff]
      %v332 = vld [vmem:[%s325 + $0x30] sm:$0xff]
      %v333 = vld [vmem:[%s325 + $0x38] sm:$0xff]
      %v334 = vld [vmem:[%s325 + $0x40] sm:$0xff]
      %v335 = vld [vmem:[%s325 + $0x48] sm:$0xff]
      %v336 = vld [vmem:[%s325 + $0x50] sm:$0xff]
      %v337 = vld [vmem:[%s325 + $0x58] sm:$0xff]
      %v338 = vld [vmem:[%s325 + $0x60] sm:$0xff]
      %v339 = vld [vmem:[%s325 + $0x68] sm:$0xff]
      %v340 = vld [vmem:[%s325 + $0x70] sm:$0xff]
      %v341 = vld [vmem:[%s325 + $0x78] sm:$0xff]
      %v342 = vld [vmem:[%s325 + $0x80] sm:$0xff]
      %v343 = vld [vmem:[%s325 + $0x88] sm:$0xff]
      %v344 = vld [vmem:[%s325 + $0x90] sm:$0xff]
      %v345 = vld [vmem:[%s325 + $0x98] sm:$0xff]
      %v346 = vld [vmem:[%s325 + $0xa0] sm:$0xff]
      %v347 = vld [vmem:[%s325 + $0xa8] sm:$0xff]
      %v348 = vld [vmem:[%s325 + $0xb0] sm:$0xff]
      %v349 = vld [vmem:[%s325 + $0xb8] sm:$0xff]
      %v350 = vld [vmem:[%s325 + $0xc0] sm:$0xff]
      %v351 = vld [vmem:[%s325 + $0xc8] sm:$0xff]
      %v352 = vld [vmem:[%s325 + $0xd0] sm:$0xff]
      %v353 = vld [vmem:[%s325 + $0xd8] sm:$0xff]
      %v354 = vld [vmem:[%s325 + $0xe0] sm:$0xff]
      %v355 = vld [vmem:[%s325 + $0xe8] sm:$0xff]
      %v356 = vld [vmem:[%s325 + $0xf0] sm:$0xff]
      %v357 = vld [vmem:[%s325 + $0xf8] sm:$0xff]
      %v358 = vpack.c.bf16 %v327, %v326
      %v359 = vpack.c.bf16 %v329, %v328
      %v360 = vpack.c.bf16 %v331, %v330
      %v361 = vpack.c.bf16 %v333, %v332
      %v362 = vpack.c.bf16 %v335, %v334
      %v363 = vpack.c.bf16 %v337, %v336
      %v364 = vpack.c.bf16 %v339, %v338
      %v365 = vpack.c.bf16 %v341, %v340
      %v366 = vpack.c.bf16 %v343, %v342
      %v367 = vpack.c.bf16 %v345, %v344
      %v368 = vpack.c.bf16 %v347, %v346
      %v369 = vpack.c.bf16 %v349, %v348
      %v370 = vpack.c.bf16 %v351, %v350
      %v371 = vpack.c.bf16 %v353, %v352
      %v372 = vpack.c.bf16 %v355, %v354
      %v373 = vpack.c.bf16 %v357, %v356
      %s374 = sadd.s32 0, 1
      %v391 = vunpack.c.l.b16 %v358
      %v392 = vunpack.c.h.b16 %v358
      %v393 = vunpack.c.l.b16 %v359
      %v394 = vunpack.c.h.b16 %v359
      %v395 = vunpack.c.l.b16 %v360
      %v396 = vunpack.c.h.b16 %v360
      %v397 = vunpack.c.l.b16 %v361
      %v398 = vunpack.c.h.b16 %v361
      %v399 = vunpack.c.l.b16 %v362
      %v400 = vunpack.c.h.b16 %v362
      %v401 = vunpack.c.l.b16 %v363
      %v402 = vunpack.c.h.b16 %v363
      %v403 = vunpack.c.l.b16 %v364
      %v404 = vunpack.c.h.b16 %v364
      %v405 = vunpack.c.l.b16 %v365
      %v406 = vunpack.c.h.b16 %v365
      %v407 = vunpack.c.l.b16 %v366
      %v408 = vunpack.c.h.b16 %v366
      %v409 = vunpack.c.l.b16 %v367
      %v410 = vunpack.c.h.b16 %v367
      %v411 = vunpack.c.l.b16 %v368
      %v412 = vunpack.c.h.b16 %v368
      %v413 = vunpack.c.l.b16 %v369
      %v414 = vunpack.c.h.b16 %v369
      %v415 = vunpack.c.l.b16 %v370
      %v416 = vunpack.c.h.b16 %v370
      %v417 = vunpack.c.l.b16 %v371
      %v418 = vunpack.c.h.b16 %v371
      %v419 = vunpack.c.l.b16 %v372
      %v420 = vunpack.c.h.b16 %v372
      %v421 = vunpack.c.l.b16 %v373
      %v422 = vunpack.c.h.b16 %v373
      %v423 = vpack.c.b16 %v391, %v391
      %v424 = vpack.c.b16 %v392, %v392
      %v425 = vpack.c.b16 %v393, %v393
      %v426 = vpack.c.b16 %v394, %v394
      %v427 = vpack.c.b16 %v395, %v395
      %v428 = vpack.c.b16 %v396, %v396
      %v429 = vpack.c.b16 %v397, %v397
      %v430 = vpack.c.b16 %v398, %v398
      %v431 = vpack.c.b16 %v399, %v399
      %v432 = vpack.c.b16 %v400, %v400
      %v433 = vpack.c.b16 %v401, %v401
      %v434 = vpack.c.b16 %v402, %v402
      %v435 = vpack.c.b16 %v403, %v403
      %v436 = vpack.c.b16 %v404, %v404
      %v437 = vpack.c.b16 %v405, %v405
      %v438 = vpack.c.b16 %v406, %v406
      %v439 = vpack.c.b16 %v407, %v407
      %v440 = vpack.c.b16 %v408, %v408
      %v441 = vpack.c.b16 %v409, %v409
      %v442 = vpack.c.b16 %v410, %v410
      %v443 = vpack.c.b16 %v411, %v411
      %v444 = vpack.c.b16 %v412, %v412
      %v445 = vpack.c.b16 %v413, %v413
      %v446 = vpack.c.b16 %v414, %v414
      %v447 = vpack.c.b16 %v415, %v415
      %v448 = vpack.c.b16 %v416, %v416
      %v449 = vpack.c.b16 %v417, %v417
      %v450 = vpack.c.b16 %v418, %v418
      %v451 = vpack.c.b16 %v419, %v419
      %v452 = vpack.c.b16 %v420, %v420
      %v453 = vpack.c.b16 %v421, %v421
      %v454 = vpack.c.b16 %v422, %v422
      %s487 = smul.u32 %s374, 4
      %s488 = smul.addr %s487, 4
      %s489 = scalar_lea.vmem [#allocation2], %s488
      %490 = vst [vmem:[%s489 + $0x4] sm:$0xf] %v423
      %491 = vst [vmem:[%s489 + $0x8] sm:$0xf] %v424
      %492 = vst [vmem:[%s489 + $0x14] sm:$0xf] %v425
      %493 = vst [vmem:[%s489 + $0x18] sm:$0xf] %v426
      %494 = vst [vmem:[%s489 + $0x24] sm:$0xf] %v427
      %495 = vst [vmem:[%s489 + $0x28] sm:$0xf] %v428
      %496 = vst [vmem:[%s489 + $0x34] sm:$0xf] %v429
      %497 = vst [vmem:[%s489 + $0x38] sm:$0xf] %v430
      %498 = vst [vmem:[%s489 + $0x44] sm:$0xf] %v431
      %499 = vst [vmem:[%s489 + $0x48] sm:$0xf] %v432
      %500 = vst [vmem:[%s489 + $0x54] sm:$0xf] %v433
      %501 = vst [vmem:[%s489 + $0x58] sm:$0xf] %v434
      %502 = vst [vmem:[%s489 + $0x64] sm:$0xf] %v435
      %503 = vst [vmem:[%s489 + $0x68] sm:$0xf] %v436
      %504 = vst [vmem:[%s489 + $0x74] sm:$0xf] %v437
      %505 = vst [vmem:[%s489 + $0x78] sm:$0xf] %v438
      %506 = vst [vmem:[%s489 + $0x84] sm:$0xf] %v439
      %507 = vst [vmem:[%s489 + $0x88] sm:$0xf] %v440
      %508 = vst [vmem:[%s489 + $0x94] sm:$0xf] %v441
      %509 = vst [vmem:[%s489 + $0x98] sm:$0xf] %v442
      %510 = vst [vmem:[%s489 + $0xa4] sm:$0xf] %v443
      %511 = vst [vmem:[%s489 + $0xa8] sm:$0xf] %v444
      %512 = vst [vmem:[%s489 + $0xb4] sm:$0xf] %v445
      %513 = vst [vmem:[%s489 + $0xb8] sm:$0xf] %v446
      %514 = vst [vmem:[%s489 + $0xc4] sm:$0xf] %v447
      %515 = vst [vmem:[%s489 + $0xc8] sm:$0xf] %v448
      %516 = vst [vmem:[%s489 + $0xd4] sm:$0xf] %v449
      %517 = vst [vmem:[%s489 + $0xd8] sm:$0xf] %v450
      %518 = vst [vmem:[%s489 + $0xe4] sm:$0xf] %v451
      %519 = vst [vmem:[%s489 + $0xe8] sm:$0xf] %v452
      %520 = vst [vmem:[%s489 + $0xf4] sm:$0xf] %v453
      %521 = vst [vmem:[%s489 + $0xf8] sm:$0xf] %v454
      %s522 = smul.u32 0, 4
      %s523 = smul.addr %s522, 4
      %s524 = scalar_lea.vmem [#allocation2], %s523
      %v525 = vld [vmem:[%s524] sm:$0x8]
      %v526 = vld [vmem:[%s524 + $0x4] sm:$0xf]
      %v527 = vld [vmem:[%s524 + $0x8] sm:$0xf]
      %v528 = vld [vmem:[%s524 + $0x10] sm:$0x8]
      %v529 = vld [vmem:[%s524 + $0x14] sm:$0xf]
      %v530 = vld [vmem:[%s524 + $0x18] sm:$0xf]
      %v531 = vld [vmem:[%s524 + $0x20] sm:$0x8]
      %v532 = vld [vmem:[%s524 + $0x24] sm:$0xf]
      %v533 = vld [vmem:[%s524 + $0x28] sm:$0xf]
      %v534 = vld [vmem:[%s524 + $0x30] sm:$0x8]
      %v535 = vld [vmem:[%s524 + $0x34] sm:$0xf]
      %v536 = vld [vmem:[%s524 + $0x38] sm:$0xf]
      %v537 = vld [vmem:[%s524 + $0x40] sm:$0x8]
      %v538 = vld [vmem:[%s524 + $0x44] sm:$0xf]
      %v539 = vld [vmem:[%s524 + $0x48] sm:$0xf]
      %v540 = vld [vmem:[%s524 + $0x50] sm:$0x8]
      %v541 = vld [vmem:[%s524 + $0x54] sm:$0xf]
      %v542 = vld [vmem:[%s524 + $0x58] sm:$0xf]
      %v543 = vld [vmem:[%s524 + $0x60] sm:$0x8]
      %v544 = vld [vmem:[%s524 + $0x64] sm:$0xf]
      %v545 = vld [vmem:[%s524 + $0x68] sm:$0xf]
      %v546 = vld [vmem:[%s524 + $0x70] sm:$0x8]
      %v547 = vld [vmem:[%s524 + $0x74] sm:$0xf]
      %v548 = vld [vmem:[%s524 + $0x78] sm:$0xf]
      %v549 = vld [vmem:[%s524 + $0x80] sm:$0x8]
      %v550 = vld [vmem:[%s524 + $0x84] sm:$0xf]
      %v551 = vld [vmem:[%s524 + $0x88] sm:$0xf]
      %v552 = vld [vmem:[%s524 + $0x90] sm:$0x8]
      %v553 = vld [vmem:[%s524 + $0x94] sm:$0xf]
      %v554 = vld [vmem:[%s524 + $0x98] sm:$0xf]
      %v555 = vld [vmem:[%s524 + $0xa0] sm:$0x8]
      %v556 = vld [vmem:[%s524 + $0xa4] sm:$0xf]
      %v557 = vld [vmem:[%s524 + $0xa8] sm:$0xf]
      %v558 = vld [vmem:[%s524 + $0xb0] sm:$0x8]
      %v559 = vld [vmem:[%s524 + $0xb4] sm:$0xf]
      %v560 = vld [vmem:[%s524 + $0xb8] sm:$0xf]
      %v561 = vld [vmem:[%s524 + $0xc0] sm:$0x8]
      %v562 = vld [vmem:[%s524 + $0xc4] sm:$0xf]
      %v563 = vld [vmem:[%s524 + $0xc8] sm:$0xf]
      %v564 = vld [vmem:[%s524 + $0xd0] sm:$0x8]
      %v565 = vld [vmem:[%s524 + $0xd4] sm:$0xf]
      %v566 = vld [vmem:[%s524 + $0xd8] sm:$0xf]
      %v567 = vld [vmem:[%s524 + $0xe0] sm:$0x8]
      %v568 = vld [vmem:[%s524 + $0xe4] sm:$0xf]
      %v569 = vld [vmem:[%s524 + $0xe8] sm:$0xf]
      %v570 = vld [vmem:[%s524 + $0xf0] sm:$0x8]
      %v571 = vld [vmem:[%s524 + $0xf4] sm:$0xf]
      %v572 = vld [vmem:[%s524 + $0xf8] sm:$0xf]
      %vm573 = vsmask.f32 256
      %vm574 = vsmask.f32 4368
      %vm575 = vmor %vm573, %vm574
      %v577 = vshrl.u32 %v525, 16
      %v579 = vrot.slane %v577, 7
      %v580 = vrot.slane %v579, 4
      %v582 = vshrl.u32 %v526, 16
      %v584 = vrot.slane %v582, 7
      %v585 = vshll.u32 %v526, 16
      %v587 = vor.u32 %v584, %v585
      %v588 = vsel %vm575, %v580, %v587
      %v589 = vrot.slane %v584, 4
      %v591 = vshrl.u32 %v527, 16
      %v593 = vrot.slane %v591, 7
      %v594 = vshll.u32 %v527, 16
      %v596 = vor.u32 %v593, %v594
      %v597 = vsel %vm575, %v589, %v596
      %v599 = vshrl.u32 %v528, 16
      %v601 = vrot.slane %v599, 7
      %v602 = vrot.slane %v601, 4
      %v604 = vshrl.u32 %v529, 16
      %v606 = vrot.slane %v604, 7
      %v607 = vshll.u32 %v529, 16
      %v609 = vor.u32 %v606, %v607
      %v610 = vsel %vm575, %v602, %v609
      %v611 = vrot.slane %v606, 4
      %v613 = vshrl.u32 %v530, 16
      %v615 = vrot.slane %v613, 7
      %v616 = vshll.u32 %v530, 16
      %v618 = vor.u32 %v615, %v616
      %v619 = vsel %vm575, %v611, %v618
      %v621 = vshrl.u32 %v531, 16
      %v623 = vrot.slane %v621, 7
      %v624 = vrot.slane %v623, 4
      %v626 = vshrl.u32 %v532, 16
      %v628 = vrot.slane %v626, 7
      %v629 = vshll.u32 %v532, 16
      %v631 = vor.u32 %v628, %v629
      %v632 = vsel %vm575, %v624, %v631
      %v633 = vrot.slane %v628, 4
      %v635 = vshrl.u32 %v533, 16
      %v637 = vrot.slane %v635, 7
      %v638 = vshll.u32 %v533, 16
      %v640 = vor.u32 %v637, %v638
      %v641 = vsel %vm575, %v633, %v640
      %v643 = vshrl.u32 %v534, 16
      %v645 = vrot.slane %v643, 7
      %v646 = vrot.slane %v645, 4
      %v648 = vshrl.u32 %v535, 16
      %v650 = vrot.slane %v648, 7
      %v651 = vshll.u32 %v535, 16
      %v653 = vor.u32 %v650, %v651
      %v654 = vsel %vm575, %v646, %v653
      %v655 = vrot.slane %v650, 4
      %v657 = vshrl.u32 %v536, 16
      %v659 = vrot.slane %v657, 7
      %v660 = vshll.u32 %v536, 16
      %v662 = vor.u32 %v659, %v660
      %v663 = vsel %vm575, %v655, %v662
      %v665 = vshrl.u32 %v537, 16
      %v667 = vrot.slane %v665, 7
      %v668 = vrot.slane %v667, 4
      %v670 = vshrl.u32 %v538, 16
      %v672 = vrot.slane %v670, 7
      %v673 = vshll.u32 %v538, 16
      %v675 = vor.u32 %v672, %v673
      %v676 = vsel %vm575, %v668, %v675
      %v677 = vrot.slane %v672, 4
      %v679 = vshrl.u32 %v539, 16
      %v681 = vrot.slane %v679, 7
      %v682 = vshll.u32 %v539, 16
      %v684 = vor.u32 %v681, %v682
      %v685 = vsel %vm575, %v677, %v684
      %v687 = vshrl.u32 %v540, 16
      %v689 = vrot.slane %v687, 7
      %v690 = vrot.slane %v689, 4
      %v692 = vshrl.u32 %v541, 16
      %v694 = vrot.slane %v692, 7
      %v695 = vshll.u32 %v541, 16
      %v697 = vor.u32 %v694, %v695
      %v698 = vsel %vm575, %v690, %v697
      %v699 = vrot.slane %v694, 4
      %v701 = vshrl.u32 %v542, 16
      %v703 = vrot.slane %v701, 7
      %v704 = vshll.u32 %v542, 16
      %v706 = vor.u32 %v703, %v704
      %v707 = vsel %vm575, %v699, %v706
      %v709 = vshrl.u32 %v543, 16
      %v711 = vrot.slane %v709, 7
      %v712 = vrot.slane %v711, 4
      %v714 = vshrl.u32 %v544, 16
      %v716 = vrot.slane %v714, 7
      %v717 = vshll.u32 %v544, 16
      %v719 = vor.u32 %v716, %v717
      %v720 = vsel %vm575, %v712, %v719
      %v721 = vrot.slane %v716, 4
      %v723 = vshrl.u32 %v545, 16
      %v725 = vrot.slane %v723, 7
      %v726 = vshll.u32 %v545, 16
      %v728 = vor.u32 %v725, %v726
      %v729 = vsel %vm575, %v721, %v728
      %v731 = vshrl.u32 %v546, 16
      %v733 = vrot.slane %v731, 7
      %v734 = vrot.slane %v733, 4
      %v736 = vshrl.u32 %v547, 16
      %v738 = vrot.slane %v736, 7
      %v739 = vshll.u32 %v547, 16
      %v741 = vor.u32 %v738, %v739
      %v742 = vsel %vm575, %v734, %v741
      %v743 = vrot.slane %v738, 4
      %v745 = vshrl.u32 %v548, 16
      %v747 = vrot.slane %v745, 7
      %v748 = vshll.u32 %v548, 16
      %v750 = vor.u32 %v747, %v748
      %v751 = vsel %vm575, %v743, %v750
      %v753 = vshrl.u32 %v549, 16
      %v755 = vrot.slane %v753, 7
      %v756 = vrot.slane %v755, 4
      %v758 = vshrl.u32 %v550, 16
      %v760 = vrot.slane %v758, 7
      %v761 = vshll.u32 %v550, 16
      %v763 = vor.u32 %v760, %v761
      %v764 = vsel %vm575, %v756, %v763
      %v765 = vrot.slane %v760, 4
      %v767 = vshrl.u32 %v551, 16
      %v769 = vrot.slane %v767, 7
      %v770 = vshll.u32 %v551, 16
      %v772 = vor.u32 %v769, %v770
      %v773 = vsel %vm575, %v765, %v772
      %v775 = vshrl.u32 %v552, 16
      %v777 = vrot.slane %v775, 7
      %v778 = vrot.slane %v777, 4
      %v780 = vshrl.u32 %v553, 16
      %v782 = vrot.slane %v780, 7
      %v783 = vshll.u32 %v553, 16
      %v785 = vor.u32 %v782, %v783
      %v786 = vsel %vm575, %v778, %v785
      %v787 = vrot.slane %v782, 4
      %v789 = vshrl.u32 %v554, 16
      %v791 = vrot.slane %v789, 7
      %v792 = vshll.u32 %v554, 16
      %v794 = vor.u32 %v791, %v792
      %v795 = vsel %vm575, %v787, %v794
      %v797 = vshrl.u32 %v555, 16
      %v799 = vrot.slane %v797, 7
      %v800 = vrot.slane %v799, 4
      %v802 = vshrl.u32 %v556, 16
      %v804 = vrot.slane %v802, 7
      %v805 = vshll.u32 %v556, 16
      %v807 = vor.u32 %v804, %v805
      %v808 = vsel %vm575, %v800, %v807
      %v809 = vrot.slane %v804, 4
      %v811 = vshrl.u32 %v557, 16
      %v813 = vrot.slane %v811, 7
      %v814 = vshll.u32 %v557, 16
      %v816 = vor.u32 %v813, %v814
      %v817 = vsel %vm575, %v809, %v816
      %v819 = vshrl.u32 %v558, 16
      %v821 = vrot.slane %v819, 7
      %v822 = vrot.slane %v821, 4
      %v824 = vshrl.u32 %v559, 16
      %v826 = vrot.slane %v824, 7
      %v827 = vshll.u32 %v559, 16
      %v829 = vor.u32 %v826, %v827
      %v830 = vsel %vm575, %v822, %v829
      %v831 = vrot.slane %v826, 4
      %v833 = vshrl.u32 %v560, 16
      %v835 = vrot.slane %v833, 7
      %v836 = vshll.u32 %v560, 16
      %v838 = vor.u32 %v835, %v836
      %v839 = vsel %vm575, %v831, %v838
      %v841 = vshrl.u32 %v561, 16
      %v843 = vrot.slane %v841, 7
      %v844 = vrot.slane %v843, 4
      %v846 = vshrl.u32 %v562, 16
      %v848 = vrot.slane %v846, 7
      %v849 = vshll.u32 %v562, 16
      %v851 = vor.u32 %v848, %v849
      %v852 = vsel %vm575, %v844, %v851
      %v853 = vrot.slane %v848, 4
      %v855 = vshrl.u32 %v563, 16
      %v857 = vrot.slane %v855, 7
      %v858 = vshll.u32 %v563, 16
      %v860 = vor.u32 %v857, %v858
      %v861 = vsel %vm575, %v853, %v860
      %v863 = vshrl.u32 %v564, 16
      %v865 = vrot.slane %v863, 7
      %v866 = vrot.slane %v865, 4
      %v868 = vshrl.u32 %v565, 16
      %v870 = vrot.slane %v868, 7
      %v871 = vshll.u32 %v565, 16
      %v873 = vor.u32 %v870, %v871
      %v874 = vsel %vm575, %v866, %v873
      %v875 = vrot.slane %v870, 4
      %v877 = vshrl.u32 %v566, 16
      %v879 = vrot.slane %v877, 7
      %v880 = vshll.u32 %v566, 16
      %v882 = vor.u32 %v879, %v880
      %v883 = vsel %vm575, %v875, %v882
      %v885 = vshrl.u32 %v567, 16
      %v887 = vrot.slane %v885, 7
      %v888 = vrot.slane %v887, 4
      %v890 = vshrl.u32 %v568, 16
      %v892 = vrot.slane %v890, 7
      %v893 = vshll.u32 %v568, 16
      %v895 = vor.u32 %v892, %v893
      %v896 = vsel %vm575, %v888, %v895
      %v897 = vrot.slane %v892, 4
      %v899 = vshrl.u32 %v569, 16
      %v901 = vrot.slane %v899, 7
      %v902 = vshll.u32 %v569, 16
      %v904 = vor.u32 %v901, %v902
      %v905 = vsel %vm575, %v897, %v904
      %v907 = vshrl.u32 %v570, 16
      %v909 = vrot.slane %v907, 7
      %v910 = vrot.slane %v909, 4
      %v912 = vshrl.u32 %v571, 16
      %v914 = vrot.slane %v912, 7
      %v915 = vshll.u32 %v571, 16
      %v917 = vor.u32 %v914, %v915
      %v918 = vsel %vm575, %v910, %v917
      %v919 = vrot.slane %v914, 4
      %v921 = vshrl.u32 %v572, 16
      %v923 = vrot.slane %v921, 7
      %v924 = vshll.u32 %v572, 16
      %v926 = vor.u32 %v923, %v924
      %v927 = vsel %vm575, %v919, %v926
      %v928 = vld [vmem:[%s1] sm:$0xf]
      %v929 = vld [vmem:[%s1 + $0x4] sm:$0xf]
      %v930 = vld [vmem:[%s1 + $0x8] sm:$0xf]
      %v931 = vld [vmem:[%s1 + $0xc] sm:$0xf]
      %v932 = vld [vmem:[%s1 + $0x10] sm:$0xf]
      %v933 = vld [vmem:[%s1 + $0x14] sm:$0xf]
      %v934 = vld [vmem:[%s1 + $0x18] sm:$0xf]
      %v935 = vld [vmem:[%s1 + $0x1c] sm:$0xf]
      %v936 = vld [vmem:[%s1 + $0x20] sm:$0xf]
      %v937 = vld [vmem:[%s1 + $0x24] sm:$0xf]
      %v938 = vld [vmem:[%s1 + $0x28] sm:$0xf]
      %v939 = vld [vmem:[%s1 + $0x2c] sm:$0xf]
      %v940 = vld [vmem:[%s1 + $0x30] sm:$0xf]
      %v941 = vld [vmem:[%s1 + $0x34] sm:$0xf]
      %v942 = vld [vmem:[%s1 + $0x38] sm:$0xf]
      %v943 = vld [vmem:[%s1 + $0x3c] sm:$0xf]
      %v944 = vunpack.c.l.b16 %v588
      %v945 = vunpack.c.l.b16 %v597
      %v946 = vunpack.c.l.b16 %v610
      %v947 = vunpack.c.l.b16 %v619
      %v948 = vunpack.c.l.b16 %v632
      %v949 = vunpack.c.l.b16 %v641
      %v950 = vunpack.c.l.b16 %v654
      %v951 = vunpack.c.l.b16 %v663
      %v952 = vunpack.c.l.b16 %v676
      %v953 = vunpack.c.l.b16 %v685
      %v954 = vunpack.c.l.b16 %v698
      %v955 = vunpack.c.l.b16 %v707
      %v956 = vunpack.c.l.b16 %v720
      %v957 = vunpack.c.l.b16 %v729
      %v958 = vunpack.c.l.b16 %v742
      %v959 = vunpack.c.l.b16 %v751
      %v960 = vunpack.c.l.b16 %v764
      %v961 = vunpack.c.l.b16 %v773
      %v962 = vunpack.c.l.b16 %v786
      %v963 = vunpack.c.l.b16 %v795
      %v964 = vunpack.c.l.b16 %v808
      %v965 = vunpack.c.l.b16 %v817
      %v966 = vunpack.c.l.b16 %v830
      %v967 = vunpack.c.l.b16 %v839
      %v968 = vunpack.c.l.b16 %v852
      %v969 = vunpack.c.l.b16 %v861
      %v970 = vunpack.c.l.b16 %v874
      %v971 = vunpack.c.l.b16 %v883
      %v972 = vunpack.c.l.b16 %v896
      %v973 = vunpack.c.l.b16 %v905
      %v974 = vunpack.c.l.b16 %v918
      %v975 = vunpack.c.l.b16 %v927
      %v976 = vpack.c.b16 %v945, %v944
      %v977 = vpack.c.b16 %v947, %v946
      %v978 = vpack.c.b16 %v949, %v948
      %v979 = vpack.c.b16 %v951, %v950
      %v980 = vpack.c.b16 %v953, %v952
      %v981 = vpack.c.b16 %v955, %v954
      %v982 = vpack.c.b16 %v957, %v956
      %v983 = vpack.c.b16 %v959, %v958
      %v984 = vpack.c.b16 %v961, %v960
      %v985 = vpack.c.b16 %v963, %v962
      %v986 = vpack.c.b16 %v965, %v964
      %v987 = vpack.c.b16 %v967, %v966
      %v988 = vpack.c.b16 %v969, %v968
      %v989 = vpack.c.b16 %v971, %v970
      %v990 = vpack.c.b16 %v973, %v972
      %v991 = vpack.c.b16 %v975, %v974
      %v1024 = vunpack.c.l.b16 %v928
      %v1025 = vunpack.c.l.b16 %v929
      %v1026 = vunpack.c.l.b16 %v930
      %v1027 = vunpack.c.l.b16 %v931
      %v1028 = vunpack.c.l.b16 %v932
      %v1029 = vunpack.c.l.b16 %v933
      %v1030 = vunpack.c.l.b16 %v934
      %v1031 = vunpack.c.l.b16 %v935
      %v1032 = vunpack.c.l.b16 %v936
      %v1033 = vunpack.c.l.b16 %v937
      %v1034 = vunpack.c.l.b16 %v938
      %v1035 = vunpack.c.l.b16 %v939
      %v1036 = vunpack.c.l.b16 %v940
      %v1037 = vunpack.c.l.b16 %v941
      %v1038 = vunpack.c.l.b16 %v942
      %v1039 = vunpack.c.l.b16 %v943
      %v1040 = vpack.c.b16 %v1025, %v1024
      %v1041 = vpack.c.b16 %v1027, %v1026
      %v1042 = vpack.c.b16 %v1029, %v1028
      %v1043 = vpack.c.b16 %v1031, %v1030
      %v1044 = vpack.c.b16 %v1033, %v1032
      %v1045 = vpack.c.b16 %v1035, %v1034
      %v1046 = vpack.c.b16 %v1037, %v1036
      %v1047 = vpack.c.b16 %v1039, %v1038
      %1056 = vmatprep.subr.bf16.mxu0 0
      %1057 = vmatpush1.bf16.msra.mxu0 %v1047
      %1058 = vmatprep.subr.bf16.mxu0 0
      %1059 = vmatpush1.bf16.msra.mxu0 %v1046
      %1060 = vmatprep.subr.bf16.mxu0 0
      %1061 = vmatpush1.bf16.msra.mxu0 %v1045
      %1062 = vmatprep.subr.bf16.mxu0 0
      %1063 = vmatpush1.bf16.msra.mxu0 %v1044
      %1064 = vmatprep.subr.bf16.mxu0 0
      %1065 = vmatpush1.bf16.msra.mxu0 %v1043
      %1066 = vmatprep.subr.bf16.mxu0 0
      %1067 = vmatpush1.bf16.msra.mxu0 %v1042
      %1068 = vmatprep.subr.bf16.mxu0 0
      %1069 = vmatpush1.bf16.msra.mxu0 %v1041
      %1070 = vmatprep.subr.bf16.mxu0 0
      %1071 = vmatpush1.bf16.msra.mxu0 %v1040
      %1072 = vmatprep.subr.bf16.mxu0 0
      %1073 = vmatpush2.bf16.msra.mxu0 0
      %1074 = vmatprep.subr.bf16.mxu0 0
      %1075 = vmatpush2.bf16.msra.mxu0 0
      %1076 = vmatprep.subr.bf16.mxu0 0
      %1077 = vmatpush2.bf16.msra.mxu0 0
      %1078 = vmatprep.subr.bf16.mxu0 0
      %1079 = vmatpush2.bf16.msra.mxu0 0
      %1080 = vmatprep.subr.bf16.mxu0 0
      %1081 = vmatpush2.bf16.msra.mxu0 0
      %1082 = vmatprep.subr.bf16.mxu0 0
      %1083 = vmatpush2.bf16.msra.mxu0 0
      %1084 = vmatprep.subr.bf16.mxu0 0
      %1085 = vmatpush2.bf16.msra.mxu0 0
      %1086 = vmatprep.subr.bf16.mxu0 0
      %1087 = vmatpush2.bf16.msra.mxu0 0
      %1088 = vmatprep.mubr.bf16.mxu0 0
      %1089 = vmatmul.mubr.bf16.gmra.mxu0 %v976
      %v1090 = vpop.f32.mrf.mxu0
      %v1091 = vadd.f32 0.0, %v1090
      %v1092 = vpop.f32.mrf.mxu0
      %v1093 = vpop.f32.mrf.mxu0
      %v1094 = vadd.f32 0.0, %v1093
      %v1095 = vpop.f32.mrf.mxu0
      %1096 = vmatprep.mubr.bf16.mxu0 0
      %1097 = vmatmul.mubr.bf16.gmra.mxu0 %v977
      %v1098 = vpop.f32.mrf.mxu0
      %v1099 = vadd.f32 0.0, %v1098
      %v1100 = vpop.f32.mrf.mxu0
      %v1101 = vpop.f32.mrf.mxu0
      %v1102 = vadd.f32 0.0, %v1101
      %v1103 = vpop.f32.mrf.mxu0
      %1104 = vmatprep.mubr.bf16.mxu0 0
      %1105 = vmatmul.mubr.bf16.gmra.mxu0 %v978
      %v1106 = vpop.f32.mrf.mxu0
      %v1107 = vadd.f32 0.0, %v1106
      %v1108 = vpop.f32.mrf.mxu0
      %v1109 = vpop.f32.mrf.mxu0
      %v1110 = vadd.f32 0.0, %v1109
      %v1111 = vpop.f32.mrf.mxu0
      %1112 = vmatprep.mubr.bf16.mxu0 0
      %1113 = vmatmul.mubr.bf16.gmra.mxu0 %v979
      %v1114 = vpop.f32.mrf.mxu0
      %v1115 = vadd.f32 0.0, %v1114
      %v1116 = vpop.f32.mrf.mxu0
      %v1117 = vpop.f32.mrf.mxu0
      %v1118 = vadd.f32 0.0, %v1117
      %v1119 = vpop.f32.mrf.mxu0
      %1120 = vmatprep.mubr.bf16.mxu0 0
      %1121 = vmatmul.mubr.bf16.gmra.mxu0 %v980
      %v1122 = vpop.f32.mrf.mxu0
      %v1123 = vadd.f32 0.0, %v1122
      %v1124 = vpop.f32.mrf.mxu0
      %v1125 = vpop.f32.mrf.mxu0
      %v1126 = vadd.f32 0.0, %v1125
      %v1127 = vpop.f32.mrf.mxu0
      %1128 = vmatprep.mubr.bf16.mxu0 0
      %1129 = vmatmul.mubr.bf16.gmra.mxu0 %v981
      %v1130 = vpop.f32.mrf.mxu0
      %v1131 = vadd.f32 0.0, %v1130
      %v1132 = vpop.f32.mrf.mxu0
      %v1133 = vpop.f32.mrf.mxu0
      %v1134 = vadd.f32 0.0, %v1133
      %v1135 = vpop.f32.mrf.mxu0
      %1136 = vmatprep.mubr.bf16.mxu0 0
      %1137 = vmatmul.mubr.bf16.gmra.mxu0 %v982
      %v1138 = vpop.f32.mrf.mxu0
      %v1139 = vadd.f32 0.0, %v1138
      %v1140 = vpop.f32.mrf.mxu0
      %v1141 = vpop.f32.mrf.mxu0
      %v1142 = vadd.f32 0.0, %v1141
      %v1143 = vpop.f32.mrf.mxu0
      %1144 = vmatprep.mubr.bf16.mxu0 0
      %1145 = vmatmul.mubr.bf16.gmra.mxu0 %v983
      %v1146 = vpop.f32.mrf.mxu0
      %v1147 = vadd.f32 0.0, %v1146
      %v1148 = vpop.f32.mrf.mxu0
      %v1149 = vpop.f32.mrf.mxu0
      %v1150 = vadd.f32 0.0, %v1149
      %v1151 = vpop.f32.mrf.mxu0
      %1152 = vmatprep.mubr.bf16.mxu0 0
      %1153 = vmatmul.mubr.bf16.gmra.mxu0 %v984
      %v1154 = vpop.f32.mrf.mxu0
      %v1155 = vadd.f32 0.0, %v1154
      %v1156 = vpop.f32.mrf.mxu0
      %v1157 = vpop.f32.mrf.mxu0
      %v1158 = vadd.f32 0.0, %v1157
      %v1159 = vpop.f32.mrf.mxu0
      %1160 = vmatprep.mubr.bf16.mxu0 0
      %1161 = vmatmul.mubr.bf16.gmra.mxu0 %v985
      %v1162 = vpop.f32.mrf.mxu0
      %v1163 = vadd.f32 0.0, %v1162
      %v1164 = vpop.f32.mrf.mxu0
      %v1165 = vpop.f32.mrf.mxu0
      %v1166 = vadd.f32 0.0, %v1165
      %v1167 = vpop.f32.mrf.mxu0
      %1168 = vmatprep.mubr.bf16.mxu0 0
      %1169 = vmatmul.mubr.bf16.gmra.mxu0 %v986
      %v1170 = vpop.f32.mrf.mxu0
      %v1171 = vadd.f32 0.0, %v1170
      %v1172 = vpop.f32.mrf.mxu0
      %v1173 = vpop.f32.mrf.mxu0
      %v1174 = vadd.f32 0.0, %v1173
      %v1175 = vpop.f32.mrf.mxu0
      %1176 = vmatprep.mubr.bf16.mxu0 0
      %1177 = vmatmul.mubr.bf16.gmra.mxu0 %v987
      %v1178 = vpop.f32.mrf.mxu0
      %v1179 = vadd.f32 0.0, %v1178
      %v1180 = vpop.f32.mrf.mxu0
      %v1181 = vpop.f32.mrf.mxu0
      %v1182 = vadd.f32 0.0, %v1181
      %v1183 = vpop.f32.mrf.mxu0
      %1184 = vmatprep.mubr.bf16.mxu0 0
      %1185 = vmatmul.mubr.bf16.gmra.mxu0 %v988
      %v1186 = vpop.f32.mrf.mxu0
      %v1187 = vadd.f32 0.0, %v1186
      %v1188 = vpop.f32.mrf.mxu0
      %v1189 = vpop.f32.mrf.mxu0
      %v1190 = vadd.f32 0.0, %v1189
      %v1191 = vpop.f32.mrf.mxu0
      %1192 = vmatprep.mubr.bf16.mxu0 0
      %1193 = vmatmul.mubr.bf16.gmra.mxu0 %v989
      %v1194 = vpop.f32.mrf.mxu0
      %v1195 = vadd.f32 0.0, %v1194
      %v1196 = vpop.f32.mrf.mxu0
      %v1197 = vpop.f32.mrf.mxu0
      %v1198 = vadd.f32 0.0, %v1197
      %v1199 = vpop.f32.mrf.mxu0
      %1200 = vmatprep.mubr.bf16.mxu0 0
      %1201 = vmatmul.mubr.bf16.gmra.mxu0 %v990
      %v1202 = vpop.f32.mrf.mxu0
      %v1203 = vadd.f32 0.0, %v1202
      %v1204 = vpop.f32.mrf.mxu0
      %v1205 = vpop.f32.mrf.mxu0
      %v1206 = vadd.f32 0.0, %v1205
      %v1207 = vpop.f32.mrf.mxu0
      %1208 = vmatprep.mubr.bf16.mxu0 0
      %1209 = vmatmul.mubr.bf16.gmra.mxu0 %v991
      %v1210 = vpop.f32.mrf.mxu0
      %v1211 = vadd.f32 0.0, %v1210
      %v1212 = vpop.f32.mrf.mxu0
      %v1213 = vpop.f32.mrf.mxu0
      %v1214 = vadd.f32 0.0, %v1213
      %v1215 = vpop.f32.mrf.mxu0
      %1216 = vdwg.mxu0
      %v1217 = vadd.f32 %v315, %v1091
      %v1218 = vadd.f32 %v315, %v1094
      %v1219 = vadd.f32 %v315, %v1099
      %v1220 = vadd.f32 %v315, %v1102
      %v1221 = vadd.f32 %v315, %v1107
      %v1222 = vadd.f32 %v315, %v1110
      %v1223 = vadd.f32 %v315, %v1115
      %v1224 = vadd.f32 %v315, %v1118
      %v1225 = vadd.f32 %v315, %v1123
      %v1226 = vadd.f32 %v315, %v1126
      %v1227 = vadd.f32 %v315, %v1131
      %v1228 = vadd.f32 %v315, %v1134
      %v1229 = vadd.f32 %v315, %v1139
      %v1230 = vadd.f32 %v315, %v1142
      %v1231 = vadd.f32 %v315, %v1147
      %v1232 = vadd.f32 %v315, %v1150
      %v1233 = vadd.f32 %v315, %v1155
      %v1234 = vadd.f32 %v315, %v1158
      %v1235 = vadd.f32 %v315, %v1163
      %v1236 = vadd.f32 %v315, %v1166
      %v1237 = vadd.f32 %v315, %v1171
      %v1238 = vadd.f32 %v315, %v1174
      %v1239 = vadd.f32 %v315, %v1179
      %v1240 = vadd.f32 %v315, %v1182
      %v1241 = vadd.f32 %v315, %v1187
      %v1242 = vadd.f32 %v315, %v1190
      %v1243 = vadd.f32 %v315, %v1195
      %v1244 = vadd.f32 %v315, %v1198
      %v1245 = vadd.f32 %v315, %v1203
      %v1246 = vadd.f32 %v315, %v1206
      %v1247 = vadd.f32 %v315, %v1211
      %v1248 = vadd.f32 %v315, %v1214
      %s1249 = scalar_lea.vmem %s1, 64
      %v1250 = vld [vmem:[%s1249] sm:$0xf]
      %v1251 = vld [vmem:[%s1249 + $0x4] sm:$0xf]
      %v1252 = vld [vmem:[%s1249 + $0x8] sm:$0xf]
      %v1253 = vld [vmem:[%s1249 + $0xc] sm:$0xf]
      %v1254 = vld [vmem:[%s1249 + $0x10] sm:$0xf]
      %v1255 = vld [vmem:[%s1249 + $0x14] sm:$0xf]
      %v1256 = vld [vmem:[%s1249 + $0x18] sm:$0xf]
      %v1257 = vld [vmem:[%s1249 + $0x1c] sm:$0xf]
      %v1258 = vld [vmem:[%s1249 + $0x20] sm:$0xf]
      %v1259 = vld [vmem:[%s1249 + $0x24] sm:$0xf]
      %v1260 = vld [vmem:[%s1249 + $0x28] sm:$0xf]
      %v1261 = vld [vmem:[%s1249 + $0x2c] sm:$0xf]
      %v1262 = vld [vmem:[%s1249 + $0x30] sm:$0xf]
      %v1263 = vld [vmem:[%s1249 + $0x34] sm:$0xf]
      %v1264 = vld [vmem:[%s1249 + $0x38] sm:$0xf]
      %v1265 = vld [vmem:[%s1249 + $0x3c] sm:$0xf]
      %v1298 = vunpack.c.l.b16 %v526
      %v1299 = vunpack.c.l.b16 %v527
      %v1300 = vunpack.c.l.b16 %v529
      %v1301 = vunpack.c.l.b16 %v530
      %v1302 = vunpack.c.l.b16 %v532
      %v1303 = vunpack.c.l.b16 %v533
      %v1304 = vunpack.c.l.b16 %v535
      %v1305 = vunpack.c.l.b16 %v536
      %v1306 = vunpack.c.l.b16 %v538
      %v1307 = vunpack.c.l.b16 %v539
      %v1308 = vunpack.c.l.b16 %v541
      %v1309 = vunpack.c.l.b16 %v542
      %v1310 = vunpack.c.l.b16 %v544
      %v1311 = vunpack.c.l.b16 %v545
      %v1312 = vunpack.c.l.b16 %v547
      %v1313 = vunpack.c.l.b16 %v548
      %v1314 = vunpack.c.l.b16 %v550
      %v1315 = vunpack.c.l.b16 %v551
      %v1316 = vunpack.c.l.b16 %v553
      %v1317 = vunpack.c.l.b16 %v554
      %v1318 = vunpack.c.l.b16 %v556
      %v1319 = vunpack.c.l.b16 %v557
      %v1320 = vunpack.c.l.b16 %v559
      %v1321 = vunpack.c.l.b16 %v560
      %v1322 = vunpack.c.l.b16 %v562
      %v1323 = vunpack.c.l.b16 %v563
      %v1324 = vunpack.c.l.b16 %v565
      %v1325 = vunpack.c.l.b16 %v566
      %v1326 = vunpack.c.l.b16 %v568
      %v1327 = vunpack.c.l.b16 %v569
      %v1328 = vunpack.c.l.b16 %v571
      %v1329 = vunpack.c.l.b16 %v572
      %v1330 = vpack.c.b16 %v1299, %v1298
      %v1331 = vpack.c.b16 %v1301, %v1300
      %v1332 = vpack.c.b16 %v1303, %v1302
      %v1333 = vpack.c.b16 %v1305, %v1304
      %v1334 = vpack.c.b16 %v1307, %v1306
      %v1335 = vpack.c.b16 %v1309, %v1308
      %v1336 = vpack.c.b16 %v1311, %v1310
      %v1337 = vpack.c.b16 %v1313, %v1312
      %v1338 = vpack.c.b16 %v1315, %v1314
      %v1339 = vpack.c.b16 %v1317, %v1316
      %v1340 = vpack.c.b16 %v1319, %v1318
      %v1341 = vpack.c.b16 %v1321, %v1320
      %v1342 = vpack.c.b16 %v1323, %v1322
      %v1343 = vpack.c.b16 %v1325, %v1324
      %v1344 = vpack.c.b16 %v1327, %v1326
      %v1345 = vpack.c.b16 %v1329, %v1328
      %v1378 = vunpack.c.l.b16 %v1250
      %v1379 = vunpack.c.l.b16 %v1251
      %v1380 = vunpack.c.l.b16 %v1252
      %v1381 = vunpack.c.l.b16 %v1253
      %v1382 = vunpack.c.l.b16 %v1254
      %v1383 = vunpack.c.l.b16 %v1255
      %v1384 = vunpack.c.l.b16 %v1256
      %v1385 = vunpack.c.l.b16 %v1257
      %v1386 = vunpack.c.l.b16 %v1258
      %v1387 = vunpack.c.l.b16 %v1259
      %v1388 = vunpack.c.l.b16 %v1260
      %v1389 = vunpack.c.l.b16 %v1261
      %v1390 = vunpack.c.l.b16 %v1262
      %v1391 = vunpack.c.l.b16 %v1263
      %v1392 = vunpack.c.l.b16 %v1264
      %v1393 = vunpack.c.l.b16 %v1265
      %v1394 = vpack.c.b16 %v1379, %v1378
      %v1395 = vpack.c.b16 %v1381, %v1380
      %v1396 = vpack.c.b16 %v1383, %v1382
      %v1397 = vpack.c.b16 %v1385, %v1384
      %v1398 = vpack.c.b16 %v1387, %v1386
      %v1399 = vpack.c.b16 %v1389, %v1388
      %v1400 = vpack.c.b16 %v1391, %v1390
      %v1401 = vpack.c.b16 %v1393, %v1392
      %1410 = vmatprep.subr.bf16.mxu0 0
      %1411 = vmatpush1.bf16.msra.mxu0 %v1401
      %1412 = vmatprep.subr.bf16.mxu0 0
      %1413 = vmatpush1.bf16.msra.mxu0 %v1400
      %1414 = vmatprep.subr.bf16.mxu0 0
      %1415 = vmatpush1.bf16.msra.mxu0 %v1399
      %1416 = vmatprep.subr.bf16.mxu0 0
      %1417 = vmatpush1.bf16.msra.mxu0 %v1398
      %1418 = vmatprep.subr.bf16.mxu0 0
      %1419 = vmatpush1.bf16.msra.mxu0 %v1397
      %1420 = vmatprep.subr.bf16.mxu0 0
      %1421 = vmatpush1.bf16.msra.mxu0 %v1396
      %1422 = vmatprep.subr.bf16.mxu0 0
      %1423 = vmatpush1.bf16.msra.mxu0 %v1395
      %1424 = vmatprep.subr.bf16.mxu0 0
      %1425 = vmatpush1.bf16.msra.mxu0 %v1394
      %1426 = vmatprep.subr.bf16.mxu0 0
      %1427 = vmatpush2.bf16.msra.mxu0 0
      %1428 = vmatprep.subr.bf16.mxu0 0
      %1429 = vmatpush2.bf16.msra.mxu0 0
      %1430 = vmatprep.subr.bf16.mxu0 0
      %1431 = vmatpush2.bf16.msra.mxu0 0
      %1432 = vmatprep.subr.bf16.mxu0 0
      %1433 = vmatpush2.bf16.msra.mxu0 0
      %1434 = vmatprep.subr.bf16.mxu0 0
      %1435 = vmatpush2.bf16.msra.mxu0 0
      %1436 = vmatprep.subr.bf16.mxu0 0
      %1437 = vmatpush2.bf16.msra.mxu0 0
      %1438 = vmatprep.subr.bf16.mxu0 0
      %1439 = vmatpush2.bf16.msra.mxu0 0
      %1440 = vmatprep.subr.bf16.mxu0 0
      %1441 = vmatpush2.bf16.msra.mxu0 0
      %1442 = vmatprep.mubr.bf16.mxu0 0
      %1443 = vmatmul.mubr.bf16.gmra.mxu0 %v1330
      %v1444 = vpop.f32.mrf.mxu0
      %v1445 = vadd.f32 0.0, %v1444
      %v1446 = vpop.f32.mrf.mxu0
      %v1447 = vpop.f32.mrf.mxu0
      %v1448 = vadd.f32 0.0, %v1447
      %v1449 = vpop.f32.mrf.mxu0
      %1450 = vmatprep.mubr.bf16.mxu0 0
      %1451 = vmatmul.mubr.bf16.gmra.mxu0 %v1331
      %v1452 = vpop.f32.mrf.mxu0
      %v1453 = vadd.f32 0.0, %v1452
      %v1454 = vpop.f32.mrf.mxu0
      %v1455 = vpop.f32.mrf.mxu0
      %v1456 = vadd.f32 0.0, %v1455
      %v1457 = vpop.f32.mrf.mxu0
      %1458 = vmatprep.mubr.bf16.mxu0 0
      %1459 = vmatmul.mubr.bf16.gmra.mxu0 %v1332
      %v1460 = vpop.f32.mrf.mxu0
      %v1461 = vadd.f32 0.0, %v1460
      %v1462 = vpop.f32.mrf.mxu0
      %v1463 = vpop.f32.mrf.mxu0
      %v1464 = vadd.f32 0.0, %v1463
      %v1465 = vpop.f32.mrf.mxu0
      %1466 = vmatprep.mubr.bf16.mxu0 0
      %1467 = vmatmul.mubr.bf16.gmra.mxu0 %v1333
      %v1468 = vpop.f32.mrf.mxu0
      %v1469 = vadd.f32 0.0, %v1468
      %v1470 = vpop.f32.mrf.mxu0
      %v1471 = vpop.f32.mrf.mxu0
      %v1472 = vadd.f32 0.0, %v1471
      %v1473 = vpop.f32.mrf.mxu0
      %1474 = vmatprep.mubr.bf16.mxu0 0
      %1475 = vmatmul.mubr.bf16.gmra.mxu0 %v1334
      %v1476 = vpop.f32.mrf.mxu0
      %v1477 = vadd.f32 0.0, %v1476
      %v1478 = vpop.f32.mrf.mxu0
      %v1479 = vpop.f32.mrf.mxu0
      %v1480 = vadd.f32 0.0, %v1479
      %v1481 = vpop.f32.mrf.mxu0
      %1482 = vmatprep.mubr.bf16.mxu0 0
      %1483 = vmatmul.mubr.bf16.gmra.mxu0 %v1335
      %v1484 = vpop.f32.mrf.mxu0
      %v1485 = vadd.f32 0.0, %v1484
      %v1486 = vpop.f32.mrf.mxu0
      %v1487 = vpop.f32.mrf.mxu0
      %v1488 = vadd.f32 0.0, %v1487
      %v1489 = vpop.f32.mrf.mxu0
      %1490 = vmatprep.mubr.bf16.mxu0 0
      %1491 = vmatmul.mubr.bf16.gmra.mxu0 %v1336
      %v1492 = vpop.f32.mrf.mxu0
      %v1493 = vadd.f32 0.0, %v1492
      %v1494 = vpop.f32.mrf.mxu0
      %v1495 = vpop.f32.mrf.mxu0
      %v1496 = vadd.f32 0.0, %v1495
      %v1497 = vpop.f32.mrf.mxu0
      %1498 = vmatprep.mubr.bf16.mxu0 0
      %1499 = vmatmul.mubr.bf16.gmra.mxu0 %v1337
      %v1500 = vpop.f32.mrf.mxu0
      %v1501 = vadd.f32 0.0, %v1500
      %v1502 = vpop.f32.mrf.mxu0
      %v1503 = vpop.f32.mrf.mxu0
      %v1504 = vadd.f32 0.0, %v1503
      %v1505 = vpop.f32.mrf.mxu0
      %1506 = vmatprep.mubr.bf16.mxu0 0
      %1507 = vmatmul.mubr.bf16.gmra.mxu0 %v1338
      %v1508 = vpop.f32.mrf.mxu0
      %v1509 = vadd.f32 0.0, %v1508
      %v1510 = vpop.f32.mrf.mxu0
      %v1511 = vpop.f32.mrf.mxu0
      %v1512 = vadd.f32 0.0, %v1511
      %v1513 = vpop.f32.mrf.mxu0
      %1514 = vmatprep.mubr.bf16.mxu0 0
      %1515 = vmatmul.mubr.bf16.gmra.mxu0 %v1339
      %v1516 = vpop.f32.mrf.mxu0
      %v1517 = vadd.f32 0.0, %v1516
      %v1518 = vpop.f32.mrf.mxu0
      %v1519 = vpop.f32.mrf.mxu0
      %v1520 = vadd.f32 0.0, %v1519
      %v1521 = vpop.f32.mrf.mxu0
      %1522 = vmatprep.mubr.bf16.mxu0 0
      %1523 = vmatmul.mubr.bf16.gmra.mxu0 %v1340
      %v1524 = vpop.f32.mrf.mxu0
      %v1525 = vadd.f32 0.0, %v1524
      %v1526 = vpop.f32.mrf.mxu0
      %v1527 = vpop.f32.mrf.mxu0
      %v1528 = vadd.f32 0.0, %v1527
      %v1529 = vpop.f32.mrf.mxu0
      %1530 = vmatprep.mubr.bf16.mxu0 0
      %1531 = vmatmul.mubr.bf16.gmra.mxu0 %v1341
      %v1532 = vpop.f32.mrf.mxu0
      %v1533 = vadd.f32 0.0, %v1532
      %v1534 = vpop.f32.mrf.mxu0
      %v1535 = vpop.f32.mrf.mxu0
      %v1536 = vadd.f32 0.0, %v1535
      %v1537 = vpop.f32.mrf.mxu0
      %1538 = vmatprep.mubr.bf16.mxu0 0
      %1539 = vmatmul.mubr.bf16.gmra.mxu0 %v1342
      %v1540 = vpop.f32.mrf.mxu0
      %v1541 = vadd.f32 0.0, %v1540
      %v1542 = vpop.f32.mrf.mxu0
      %v1543 = vpop.f32.mrf.mxu0
      %v1544 = vadd.f32 0.0, %v1543
      %v1545 = vpop.f32.mrf.mxu0
      %1546 = vmatprep.mubr.bf16.mxu0 0
      %1547 = vmatmul.mubr.bf16.gmra.mxu0 %v1343
      %v1548 = vpop.f32.mrf.mxu0
      %v1549 = vadd.f32 0.0, %v1548
      %v1550 = vpop.f32.mrf.mxu0
      %v1551 = vpop.f32.mrf.mxu0
      %v1552 = vadd.f32 0.0, %v1551
      %v1553 = vpop.f32.mrf.mxu0
      %1554 = vmatprep.mubr.bf16.mxu0 0
      %1555 = vmatmul.mubr.bf16.gmra.mxu0 %v1344
      %v1556 = vpop.f32.mrf.mxu0
      %v1557 = vadd.f32 0.0, %v1556
      %v1558 = vpop.f32.mrf.mxu0
      %v1559 = vpop.f32.mrf.mxu0
      %v1560 = vadd.f32 0.0, %v1559
      %v1561 = vpop.f32.mrf.mxu0
      %1562 = vmatprep.mubr.bf16.mxu0 0
      %1563 = vmatmul.mubr.bf16.gmra.mxu0 %v1345
      %v1564 = vpop.f32.mrf.mxu0
      %v1565 = vadd.f32 0.0, %v1564
      %v1566 = vpop.f32.mrf.mxu0
      %v1567 = vpop.f32.mrf.mxu0
      %v1568 = vadd.f32 0.0, %v1567
      %v1569 = vpop.f32.mrf.mxu0
      %1570 = vdwg.mxu0
      %v1571 = vadd.f32 %v1217, %v1445
      %v1572 = vadd.f32 %v1218, %v1448
      %v1573 = vadd.f32 %v1219, %v1453
      %v1574 = vadd.f32 %v1220, %v1456
      %v1575 = vadd.f32 %v1221, %v1461
      %v1576 = vadd.f32 %v1222, %v1464
      %v1577 = vadd.f32 %v1223, %v1469
      %v1578 = vadd.f32 %v1224, %v1472
      %v1579 = vadd.f32 %v1225, %v1477
      %v1580 = vadd.f32 %v1226, %v1480
      %v1581 = vadd.f32 %v1227, %v1485
      %v1582 = vadd.f32 %v1228, %v1488
      %v1583 = vadd.f32 %v1229, %v1493
      %v1584 = vadd.f32 %v1230, %v1496
      %v1585 = vadd.f32 %v1231, %v1501
      %v1586 = vadd.f32 %v1232, %v1504
      %v1587 = vadd.f32 %v1233, %v1509
      %v1588 = vadd.f32 %v1234, %v1512
      %v1589 = vadd.f32 %v1235, %v1517
      %v1590 = vadd.f32 %v1236, %v1520
      %v1591 = vadd.f32 %v1237, %v1525
      %v1592 = vadd.f32 %v1238, %v1528
      %v1593 = vadd.f32 %v1239, %v1533
      %v1594 = vadd.f32 %v1240, %v1536
      %v1595 = vadd.f32 %v1241, %v1541
      %v1596 = vadd.f32 %v1242, %v1544
      %v1597 = vadd.f32 %v1243, %v1549
      %v1598 = vadd.f32 %v1244, %v1552
      %v1599 = vadd.f32 %v1245, %v1557
      %v1600 = vadd.f32 %v1246, %v1560
      %v1601 = vadd.f32 %v1247, %v1565
      %v1602 = vadd.f32 %v1248, %v1568
      %v1603 = vld [vmem:[%s524 + $0x4] sm:$0xf]
      %v1604 = vld [vmem:[%s524 + $0x8] sm:$0xf]
      %v1605 = vld [vmem:[%s524 + $0xc] sm:$0x1]
      %v1606 = vld [vmem:[%s524 + $0x14] sm:$0xf]
      %v1607 = vld [vmem:[%s524 + $0x18] sm:$0xf]
      %v1608 = vld [vmem:[%s524 + $0x1c] sm:$0x1]
      %v1609 = vld [vmem:[%s524 + $0x24] sm:$0xf]
      %v1610 = vld [vmem:[%s524 + $0x28] sm:$0xf]
      %v1611 = vld [vmem:[%s524 + $0x2c] sm:$0x1]
      %v1612 = vld [vmem:[%s524 + $0x34] sm:$0xf]
      %v1613 = vld [vmem:[%s524 + $0x38] sm:$0xf]
      %v1614 = vld [vmem:[%s524 + $0x3c] sm:$0x1]
      %v1615 = vld [vmem:[%s524 + $0x44] sm:$0xf]
      %v1616 = vld [vmem:[%s524 + $0x48] sm:$0xf]
      %v1617 = vld [vmem:[%s524 + $0x4c] sm:$0x1]
      %v1618 = vld [vmem:[%s524 + $0x54] sm:$0xf]
      %v1619 = vld [vmem:[%s524 + $0x58] sm:$0xf]
      %v1620 = vld [vmem:[%s524 + $0x5c] sm:$0x1]
      %v1621 = vld [vmem:[%s524 + $0x64] sm:$0xf]
      %v1622 = vld [vmem:[%s524 + $0x68] sm:$0xf]
      %v1623 = vld [vmem:[%s524 + $0x6c] sm:$0x1]
      %v1624 = vld [vmem:[%s524 + $0x74] sm:$0xf]
      %v1625 = vld [vmem:[%s524 + $0x78] sm:$0xf]
      %v1626 = vld [vmem:[%s524 + $0x7c] sm:$0x1]
      %v1627 = vld [vmem:[%s524 + $0x84] sm:$0xf]
      %v1628 = vld [vmem:[%s524 + $0x88] sm:$0xf]
      %v1629 = vld [vmem:[%s524 + $0x8c] sm:$0x1]
      %v1630 = vld [vmem:[%s524 + $0x94] sm:$0xf]
      %v1631 = vld [vmem:[%s524 + $0x98] sm:$0xf]
      %v1632 = vld [vmem:[%s524 + $0x9c] sm:$0x1]
      %v1633 = vld [vmem:[%s524 + $0xa4] sm:$0xf]
      %v1634 = vld [vmem:[%s524 + $0xa8] sm:$0xf]
      %v1635 = vld [vmem:[%s524 + $0xac] sm:$0x1]
      %v1636 = vld [vmem:[%s524 + $0xb4] sm:$0xf]
      %v1637 = vld [vmem:[%s524 + $0xb8] sm:$0xf]
      %v1638 = vld [vmem:[%s524 + $0xbc] sm:$0x1]
      %v1639 = vld [vmem:[%s524 + $0xc4] sm:$0xf]
      %v1640 = vld [vmem:[%s524 + $0xc8] sm:$0xf]
      %v1641 = vld [vmem:[%s524 + $0xcc] sm:$0x1]
      %v1642 = vld [vmem:[%s524 + $0xd4] sm:$0xf]
      %v1643 = vld [vmem:[%s524 + $0xd8] sm:$0xf]
      %v1644 = vld [vmem:[%s524 + $0xdc] sm:$0x1]
      %v1645 = vld [vmem:[%s524 + $0xe4] sm:$0xf]
      %v1646 = vld [vmem:[%s524 + $0xe8] sm:$0xf]
      %v1647 = vld [vmem:[%s524 + $0xec] sm:$0x1]
      %v1648 = vld [vmem:[%s524 + $0xf4] sm:$0xf]
      %v1649 = vld [vmem:[%s524 + $0xf8] sm:$0xf]
      %v1650 = vld [vmem:[%s524 + $0xfc] sm:$0x1]
      %vm1651 = vsmask.f32 3328
      %vm1652 = vsmask.f32 7440
      %vm1653 = vmor %vm1651, %vm1652
      %v1655 = vshrl.u32 %v1603, 16
      %v1657 = vrot.slane %v1655, 4
      %v1658 = vshll.u32 %v1603, 16
      %v1660 = vrot.slane %v1658, 5
      %v1661 = vor.u32 %v1657, %v1660
      %v1662 = vrot.slane %v1661, 4
      %v1664 = vshll.u32 %v1604, 16
      %v1666 = vrot.slane %v1664, 5
      %v1667 = vsel %vm1653, %v1662, %v1666
      %v1668 = vshrl.u32 %v1604, 16
      %v1670 = vrot.slane %v1668, 4
      %v1671 = vor.u32 %v1670, %v1666
      %v1672 = vrot.slane %v1671, 4
      %v1674 = vshll.u32 %v1605, 16
      %v1676 = vrot.slane %v1674, 5
      %v1677 = vsel %vm1653, %v1672, %v1676
      %v1679 = vshrl.u32 %v1606, 16
      %v1681 = vrot.slane %v1679, 4
      %v1682 = vshll.u32 %v1606, 16
      %v1684 = vrot.slane %v1682, 5
      %v1685 = vor.u32 %v1681, %v1684
      %v1686 = vrot.slane %v1685, 4
      %v1688 = vshll.u32 %v1607, 16
      %v1690 = vrot.slane %v1688, 5
      %v1691 = vsel %vm1653, %v1686, %v1690
      %v1692 = vshrl.u32 %v1607, 16
      %v1694 = vrot.slane %v1692, 4
      %v1695 = vor.u32 %v1694, %v1690
      %v1696 = vrot.slane %v1695, 4
      %v1698 = vshll.u32 %v1608, 16
      %v1700 = vrot.slane %v1698, 5
      %v1701 = vsel %vm1653, %v1696, %v1700
      %v1703 = vshrl.u32 %v1609, 16
      %v1705 = vrot.slane %v1703, 4
      %v1706 = vshll.u32 %v1609, 16
      %v1708 = vrot.slane %v1706, 5
      %v1709 = vor.u32 %v1705, %v1708
      %v1710 = vrot.slane %v1709, 4
      %v1712 = vshll.u32 %v1610, 16
      %v1714 = vrot.slane %v1712, 5
      %v1715 = vsel %vm1653, %v1710, %v1714
      %v1716 = vshrl.u32 %v1610, 16
      %v1718 = vrot.slane %v1716, 4
      %v1719 = vor.u32 %v1718, %v1714
      %v1720 = vrot.slane %v1719, 4
      %v1722 = vshll.u32 %v1611, 16
      %v1724 = vrot.slane %v1722, 5
      %v1725 = vsel %vm1653, %v1720, %v1724
      %v1727 = vshrl.u32 %v1612, 16
      %v1729 = vrot.slane %v1727, 4
      %v1730 = vshll.u32 %v1612, 16
      %v1732 = vrot.slane %v1730, 5
      %v1733 = vor.u32 %v1729, %v1732
      %v1734 = vrot.slane %v1733, 4
      %v1736 = vshll.u32 %v1613, 16
      %v1738 = vrot.slane %v1736, 5
      %v1739 = vsel %vm1653, %v1734, %v1738
      %v1740 = vshrl.u32 %v1613, 16
      %v1742 = vrot.slane %v1740, 4
      %v1743 = vor.u32 %v1742, %v1738
      %v1744 = vrot.slane %v1743, 4
      %v1746 = vshll.u32 %v1614, 16
      %v1748 = vrot.slane %v1746, 5
      %v1749 = vsel %vm1653, %v1744, %v1748
      %v1751 = vshrl.u32 %v1615, 16
      %v1753 = vrot.slane %v1751, 4
      %v1754 = vshll.u32 %v1615, 16
      %v1756 = vrot.slane %v1754, 5
      %v1757 = vor.u32 %v1753, %v1756
      %v1758 = vrot.slane %v1757, 4
      %v1760 = vshll.u32 %v1616, 16
      %v1762 = vrot.slane %v1760, 5
      %v1763 = vsel %vm1653, %v1758, %v1762
      %v1764 = vshrl.u32 %v1616, 16
      %v1766 = vrot.slane %v1764, 4
      %v1767 = vor.u32 %v1766, %v1762
      %v1768 = vrot.slane %v1767, 4
      %v1770 = vshll.u32 %v1617, 16
      %v1772 = vrot.slane %v1770, 5
      %v1773 = vsel %vm1653, %v1768, %v1772
      %v1775 = vshrl.u32 %v1618, 16
      %v1777 = vrot.slane %v1775, 4
      %v1778 = vshll.u32 %v1618, 16
      %v1780 = vrot.slane %v1778, 5
      %v1781 = vor.u32 %v1777, %v1780
      %v1782 = vrot.slane %v1781, 4
      %v1784 = vshll.u32 %v1619, 16
      %v1786 = vrot.slane %v1784, 5
      %v1787 = vsel %vm1653, %v1782, %v1786
      %v1788 = vshrl.u32 %v1619, 16
      %v1790 = vrot.slane %v1788, 4
      %v1791 = vor.u32 %v1790, %v1786
      %v1792 = vrot.slane %v1791, 4
      %v1794 = vshll.u32 %v1620, 16
      %v1796 = vrot.slane %v1794, 5
      %v1797 = vsel %vm1653, %v1792, %v1796
      %v1799 = vshrl.u32 %v1621, 16
      %v1801 = vrot.slane %v1799, 4
      %v1802 = vshll.u32 %v1621, 16
      %v1804 = vrot.slane %v1802, 5
      %v1805 = vor.u32 %v1801, %v1804
      %v1806 = vrot.slane %v1805, 4
      %v1808 = vshll.u32 %v1622, 16
      %v1810 = vrot.slane %v1808, 5
      %v1811 = vsel %vm1653, %v1806, %v1810
      %v1812 = vshrl.u32 %v1622, 16
      %v1814 = vrot.slane %v1812, 4
      %v1815 = vor.u32 %v1814, %v1810
      %v1816 = vrot.slane %v1815, 4
      %v1818 = vshll.u32 %v1623, 16
      %v1820 = vrot.slane %v1818, 5
      %v1821 = vsel %vm1653, %v1816, %v1820
      %v1823 = vshrl.u32 %v1624, 16
      %v1825 = vrot.slane %v1823, 4
      %v1826 = vshll.u32 %v1624, 16
      %v1828 = vrot.slane %v1826, 5
      %v1829 = vor.u32 %v1825, %v1828
      %v1830 = vrot.slane %v1829, 4
      %v1832 = vshll.u32 %v1625, 16
      %v1834 = vrot.slane %v1832, 5
      %v1835 = vsel %vm1653, %v1830, %v1834
      %v1836 = vshrl.u32 %v1625, 16
      %v1838 = vrot.slane %v1836, 4
      %v1839 = vor.u32 %v1838, %v1834
      %v1840 = vrot.slane %v1839, 4
      %v1842 = vshll.u32 %v1626, 16
      %v1844 = vrot.slane %v1842, 5
      %v1845 = vsel %vm1653, %v1840, %v1844
      %v1847 = vshrl.u32 %v1627, 16
      %v1849 = vrot.slane %v1847, 4
      %v1850 = vshll.u32 %v1627, 16
      %v1852 = vrot.slane %v1850, 5
      %v1853 = vor.u32 %v1849, %v1852
      %v1854 = vrot.slane %v1853, 4
      %v1856 = vshll.u32 %v1628, 16
      %v1858 = vrot.slane %v1856, 5
      %v1859 = vsel %vm1653, %v1854, %v1858
      %v1860 = vshrl.u32 %v1628, 16
      %v1862 = vrot.slane %v1860, 4
      %v1863 = vor.u32 %v1862, %v1858
      %v1864 = vrot.slane %v1863, 4
      %v1866 = vshll.u32 %v1629, 16
      %v1868 = vrot.slane %v1866, 5
      %v1869 = vsel %vm1653, %v1864, %v1868
      %v1871 = vshrl.u32 %v1630, 16
      %v1873 = vrot.slane %v1871, 4
      %v1874 = vshll.u32 %v1630, 16
      %v1876 = vrot.slane %v1874, 5
      %v1877 = vor.u32 %v1873, %v1876
      %v1878 = vrot.slane %v1877, 4
      %v1880 = vshll.u32 %v1631, 16
      %v1882 = vrot.slane %v1880, 5
      %v1883 = vsel %vm1653, %v1878, %v1882
      %v1884 = vshrl.u32 %v1631, 16
      %v1886 = vrot.slane %v1884, 4
      %v1887 = vor.u32 %v1886, %v1882
      %v1888 = vrot.slane %v1887, 4
      %v1890 = vshll.u32 %v1632, 16
      %v1892 = vrot.slane %v1890, 5
      %v1893 = vsel %vm1653, %v1888, %v1892
      %v1895 = vshrl.u32 %v1633, 16
      %v1897 = vrot.slane %v1895, 4
      %v1898 = vshll.u32 %v1633, 16
      %v1900 = vrot.slane %v1898, 5
      %v1901 = vor.u32 %v1897, %v1900
      %v1902 = vrot.slane %v1901, 4
      %v1904 = vshll.u32 %v1634, 16
      %v1906 = vrot.slane %v1904, 5
      %v1907 = vsel %vm1653, %v1902, %v1906
      %v1908 = vshrl.u32 %v1634, 16
      %v1910 = vrot.slane %v1908, 4
      %v1911 = vor.u32 %v1910, %v1906
      %v1912 = vrot.slane %v1911, 4
      %v1914 = vshll.u32 %v1635, 16
      %v1916 = vrot.slane %v1914, 5
      %v1917 = vsel %vm1653, %v1912, %v1916
      %v1919 = vshrl.u32 %v1636, 16
      %v1921 = vrot.slane %v1919, 4
      %v1922 = vshll.u32 %v1636, 16
      %v1924 = vrot.slane %v1922, 5
      %v1925 = vor.u32 %v1921, %v1924
      %v1926 = vrot.slane %v1925, 4
      %v1928 = vshll.u32 %v1637, 16
      %v1930 = vrot.slane %v1928, 5
      %v1931 = vsel %vm1653, %v1926, %v1930
      %v1932 = vshrl.u32 %v1637, 16
      %v1934 = vrot.slane %v1932, 4
      %v1935 = vor.u32 %v1934, %v1930
      %v1936 = vrot.slane %v1935, 4
      %v1938 = vshll.u32 %v1638, 16
      %v1940 = vrot.slane %v1938, 5
      %v1941 = vsel %vm1653, %v1936, %v1940
      %v1943 = vshrl.u32 %v1639, 16
      %v1945 = vrot.slane %v1943, 4
      %v1946 = vshll.u32 %v1639, 16
      %v1948 = vrot.slane %v1946, 5
      %v1949 = vor.u32 %v1945, %v1948
      %v1950 = vrot.slane %v1949, 4
      %v1952 = vshll.u32 %v1640, 16
      %v1954 = vrot.slane %v1952, 5
      %v1955 = vsel %vm1653, %v1950, %v1954
      %v1956 = vshrl.u32 %v1640, 16
      %v1958 = vrot.slane %v1956, 4
      %v1959 = vor.u32 %v1958, %v1954
      %v1960 = vrot.slane %v1959, 4
      %v1962 = vshll.u32 %v1641, 16
      %v1964 = vrot.slane %v1962, 5
      %v1965 = vsel %vm1653, %v1960, %v1964
      %v1967 = vshrl.u32 %v1642, 16
      %v1969 = vrot.slane %v1967, 4
      %v1970 = vshll.u32 %v1642, 16
      %v1972 = vrot.slane %v1970, 5
      %v1973 = vor.u32 %v1969, %v1972
      %v1974 = vrot.slane %v1973, 4
      %v1976 = vshll.u32 %v1643, 16
      %v1978 = vrot.slane %v1976, 5
      %v1979 = vsel %vm1653, %v1974, %v1978
      %v1980 = vshrl.u32 %v1643, 16
      %v1982 = vrot.slane %v1980, 4
      %v1983 = vor.u32 %v1982, %v1978
      %v1984 = vrot.slane %v1983, 4
      %v1986 = vshll.u32 %v1644, 16
      %v1988 = vrot.slane %v1986, 5
      %v1989 = vsel %vm1653, %v1984, %v1988
      %v1991 = vshrl.u32 %v1645, 16
      %v1993 = vrot.slane %v1991, 4
      %v1994 = vshll.u32 %v1645, 16
      %v1996 = vrot.slane %v1994, 5
      %v1997 = vor.u32 %v1993, %v1996
      %v1998 = vrot.slane %v1997, 4
      %v2000 = vshll.u32 %v1646, 16
      %v2002 = vrot.slane %v2000, 5
      %v2003 = vsel %vm1653, %v1998, %v2002
      %v2004 = vshrl.u32 %v1646, 16
      %v2006 = vrot.slane %v2004, 4
      %v2007 = vor.u32 %v2006, %v2002
      %v2008 = vrot.slane %v2007, 4
      %v2010 = vshll.u32 %v1647, 16
      %v2012 = vrot.slane %v2010, 5
      %v2013 = vsel %vm1653, %v2008, %v2012
      %v2015 = vshrl.u32 %v1648, 16
      %v2017 = vrot.slane %v2015, 4
      %v2018 = vshll.u32 %v1648, 16
      %v2020 = vrot.slane %v2018, 5
      %v2021 = vor.u32 %v2017, %v2020
      %v2022 = vrot.slane %v2021, 4
      %v2024 = vshll.u32 %v1649, 16
      %v2026 = vrot.slane %v2024, 5
      %v2027 = vsel %vm1653, %v2022, %v2026
      %v2028 = vshrl.u32 %v1649, 16
      %v2030 = vrot.slane %v2028, 4
      %v2031 = vor.u32 %v2030, %v2026
      %v2032 = vrot.slane %v2031, 4
      %v2034 = vshll.u32 %v1650, 16
      %v2036 = vrot.slane %v2034, 5
      %v2037 = vsel %vm1653, %v2032, %v2036
      %s2038 = scalar_lea.vmem %s1, 128
      %v2039 = vld [vmem:[%s2038] sm:$0xf]
      %v2040 = vld [vmem:[%s2038 + $0x4] sm:$0xf]
      %v2041 = vld [vmem:[%s2038 + $0x8] sm:$0xf]
      %v2042 = vld [vmem:[%s2038 + $0xc] sm:$0xf]
      %v2043 = vld [vmem:[%s2038 + $0x10] sm:$0xf]
      %v2044 = vld [vmem:[%s2038 + $0x14] sm:$0xf]
      %v2045 = vld [vmem:[%s2038 + $0x18] sm:$0xf]
      %v2046 = vld [vmem:[%s2038 + $0x1c] sm:$0xf]
      %v2047 = vld [vmem:[%s2038 + $0x20] sm:$0xf]
      %v2048 = vld [vmem:[%s2038 + $0x24] sm:$0xf]
      %v2049 = vld [vmem:[%s2038 + $0x28] sm:$0xf]
      %v2050 = vld [vmem:[%s2038 + $0x2c] sm:$0xf]
      %v2051 = vld [vmem:[%s2038 + $0x30] sm:$0xf]
      %v2052 = vld [vmem:[%s2038 + $0x34] sm:$0xf]
      %v2053 = vld [vmem:[%s2038 + $0x38] sm:$0xf]
      %v2054 = vld [vmem:[%s2038 + $0x3c] sm:$0xf]
      %v2055 = vunpack.c.l.b16 %v1667
      %v2056 = vunpack.c.l.b16 %v1677
      %v2057 = vunpack.c.l.b16 %v1691
      %v2058 = vunpack.c.l.b16 %v1701
      %v2059 = vunpack.c.l.b16 %v1715
      %v2060 = vunpack.c.l.b16 %v1725
      %v2061 = vunpack.c.l.b16 %v1739
      %v2062 = vunpack.c.l.b16 %v1749
      %v2063 = vunpack.c.l.b16 %v1763
      %v2064 = vunpack.c.l.b16 %v1773
      %v2065 = vunpack.c.l.b16 %v1787
      %v2066 = vunpack.c.l.b16 %v1797
      %v2067 = vunpack.c.l.b16 %v1811
      %v2068 = vunpack.c.l.b16 %v1821
      %v2069 = vunpack.c.l.b16 %v1835
      %v2070 = vunpack.c.l.b16 %v1845
      %v2071 = vunpack.c.l.b16 %v1859
      %v2072 = vunpack.c.l.b16 %v1869
      %v2073 = vunpack.c.l.b16 %v1883
      %v2074 = vunpack.c.l.b16 %v1893
      %v2075 = vunpack.c.l.b16 %v1907
      %v2076 = vunpack.c.l.b16 %v1917
      %v2077 = vunpack.c.l.b16 %v1931
      %v2078 = vunpack.c.l.b16 %v1941
      %v2079 = vunpack.c.l.b16 %v1955
      %v2080 = vunpack.c.l.b16 %v1965
      %v2081 = vunpack.c.l.b16 %v1979
      %v2082 = vunpack.c.l.b16 %v1989
      %v2083 = vunpack.c.l.b16 %v2003
      %v2084 = vunpack.c.l.b16 %v2013
      %v2085 = vunpack.c.l.b16 %v2027
      %v2086 = vunpack.c.l.b16 %v2037
      %v2087 = vpack.c.b16 %v2056, %v2055
      %v2088 = vpack.c.b16 %v2058, %v2057
      %v2089 = vpack.c.b16 %v2060, %v2059
      %v2090 = vpack.c.b16 %v2062, %v2061
      %v2091 = vpack.c.b16 %v2064, %v2063
      %v2092 = vpack.c.b16 %v2066, %v2065
      %v2093 = vpack.c.b16 %v2068, %v2067
      %v2094 = vpack.c.b16 %v2070, %v2069
      %v2095 = vpack.c.b16 %v2072, %v2071
      %v2096 = vpack.c.b16 %v2074, %v2073
      %v2097 = vpack.c.b16 %v2076, %v2075
      %v2098 = vpack.c.b16 %v2078, %v2077
      %v2099 = vpack.c.b16 %v2080, %v2079
      %v2100 = vpack.c.b16 %v2082, %v2081
      %v2101 = vpack.c.b16 %v2084, %v2083
      %v2102 = vpack.c.b16 %v2086, %v2085
      %v2135 = vunpack.c.l.b16 %v2039
      %v2136 = vunpack.c.l.b16 %v2040
      %v2137 = vunpack.c.l.b16 %v2041
      %v2138 = vunpack.c.l.b16 %v2042
      %v2139 = vunpack.c.l.b16 %v2043
      %v2140 = vunpack.c.l.b16 %v2044
      %v2141 = vunpack.c.l.b16 %v2045
      %v2142 = vunpack.c.l.b16 %v2046
      %v2143 = vunpack.c.l.b16 %v2047
      %v2144 = vunpack.c.l.b16 %v2048
      %v2145 = vunpack.c.l.b16 %v2049
      %v2146 = vunpack.c.l.b16 %v2050
      %v2147 = vunpack.c.l.b16 %v2051
      %v2148 = vunpack.c.l.b16 %v2052
      %v2149 = vunpack.c.l.b16 %v2053
      %v2150 = vunpack.c.l.b16 %v2054
      %v2151 = vpack.c.b16 %v2136, %v2135
      %v2152 = vpack.c.b16 %v2138, %v2137
      %v2153 = vpack.c.b16 %v2140, %v2139
      %v2154 = vpack.c.b16 %v2142, %v2141
      %v2155 = vpack.c.b16 %v2144, %v2143
      %v2156 = vpack.c.b16 %v2146, %v2145
      %v2157 = vpack.c.b16 %v2148, %v2147
      %v2158 = vpack.c.b16 %v2150, %v2149
      %2167 = vmatprep.subr.bf16.mxu0 0
      %2168 = vmatpush1.bf16.msra.mxu0 %v2158
      %2169 = vmatprep.subr.bf16.mxu0 0
      %2170 = vmatpush1.bf16.msra.mxu0 %v2157
      %2171 = vmatprep.subr.bf16.mxu0 0
      %2172 = vmatpush1.bf16.msra.mxu0 %v2156
      %2173 = vmatprep.subr.bf16.mxu0 0
      %2174 = vmatpush1.bf16.msra.mxu0 %v2155
      %2175 = vmatprep.subr.bf16.mxu0 0
      %2176 = vmatpush1.bf16.msra.mxu0 %v2154
      %2177 = vmatprep.subr.bf16.mxu0 0
      %2178 = vmatpush1.bf16.msra.mxu0 %v2153
      %2179 = vmatprep.subr.bf16.mxu0 0
      %2180 = vmatpush1.bf16.msra.mxu0 %v2152
      %2181 = vmatprep.subr.bf16.mxu0 0
      %2182 = vmatpush1.bf16.msra.mxu0 %v2151
      %2183 = vmatprep.subr.bf16.mxu0 0
      %2184 = vmatpush2.bf16.msra.mxu0 0
      %2185 = vmatprep.subr.bf16.mxu0 0
      %2186 = vmatpush2.bf16.msra.mxu0 0
      %2187 = vmatprep.subr.bf16.mxu0 0
      %2188 = vmatpush2.bf16.msra.mxu0 0
      %2189 = vmatprep.subr.bf16.mxu0 0
      %2190 = vmatpush2.bf16.msra.mxu0 0
      %2191 = vmatprep.subr.bf16.mxu0 0
      %2192 = vmatpush2.bf16.msra.mxu0 0
      %2193 = vmatprep.subr.bf16.mxu0 0
      %2194 = vmatpush2.bf16.msra.mxu0 0
      %2195 = vmatprep.subr.bf16.mxu0 0
      %2196 = vmatpush2.bf16.msra.mxu0 0
      %2197 = vmatprep.subr.bf16.mxu0 0
      %2198 = vmatpush2.bf16.msra.mxu0 0
      %2199 = vmatprep.mubr.bf16.mxu0 0
      %2200 = vmatmul.mubr.bf16.gmra.mxu0 %v2087
      %v2201 = vpop.f32.mrf.mxu0
      %v2202 = vadd.f32 0.0, %v2201
      %v2203 = vpop.f32.mrf.mxu0
      %v2204 = vpop.f32.mrf.mxu0
      %v2205 = vadd.f32 0.0, %v2204
      %v2206 = vpop.f32.mrf.mxu0
      %2207 = vmatprep.mubr.bf16.mxu0 0
      %2208 = vmatmul.mubr.bf16.gmra.mxu0 %v2088
      %v2209 = vpop.f32.mrf.mxu0
      %v2210 = vadd.f32 0.0, %v2209
      %v2211 = vpop.f32.mrf.mxu0
      %v2212 = vpop.f32.mrf.mxu0
      %v2213 = vadd.f32 0.0, %v2212
      %v2214 = vpop.f32.mrf.mxu0
      %2215 = vmatprep.mubr.bf16.mxu0 0
      %2216 = vmatmul.mubr.bf16.gmra.mxu0 %v2089
      %v2217 = vpop.f32.mrf.mxu0
      %v2218 = vadd.f32 0.0, %v2217
      %v2219 = vpop.f32.mrf.mxu0
      %v2220 = vpop.f32.mrf.mxu0
      %v2221 = vadd.f32 0.0, %v2220
      %v2222 = vpop.f32.mrf.mxu0
      %2223 = vmatprep.mubr.bf16.mxu0 0
      %2224 = vmatmul.mubr.bf16.gmra.mxu0 %v2090
      %v2225 = vpop.f32.mrf.mxu0
      %v2226 = vadd.f32 0.0, %v2225
      %v2227 = vpop.f32.mrf.mxu0
      %v2228 = vpop.f32.mrf.mxu0
      %v2229 = vadd.f32 0.0, %v2228
      %v2230 = vpop.f32.mrf.mxu0
      %2231 = vmatprep.mubr.bf16.mxu0 0
      %2232 = vmatmul.mubr.bf16.gmra.mxu0 %v2091
      %v2233 = vpop.f32.mrf.mxu0
      %v2234 = vadd.f32 0.0, %v2233
      %v2235 = vpop.f32.mrf.mxu0
      %v2236 = vpop.f32.mrf.mxu0
      %v2237 = vadd.f32 0.0, %v2236
      %v2238 = vpop.f32.mrf.mxu0
      %2239 = vmatprep.mubr.bf16.mxu0 0
      %2240 = vmatmul.mubr.bf16.gmra.mxu0 %v2092
      %v2241 = vpop.f32.mrf.mxu0
      %v2242 = vadd.f32 0.0, %v2241
      %v2243 = vpop.f32.mrf.mxu0
      %v2244 = vpop.f32.mrf.mxu0
      %v2245 = vadd.f32 0.0, %v2244
      %v2246 = vpop.f32.mrf.mxu0
      %2247 = vmatprep.mubr.bf16.mxu0 0
      %2248 = vmatmul.mubr.bf16.gmra.mxu0 %v2093
      %v2249 = vpop.f32.mrf.mxu0
      %v2250 = vadd.f32 0.0, %v2249
      %v2251 = vpop.f32.mrf.mxu0
      %v2252 = vpop.f32.mrf.mxu0
      %v2253 = vadd.f32 0.0, %v2252
      %v2254 = vpop.f32.mrf.mxu0
      %2255 = vmatprep.mubr.bf16.mxu0 0
      %2256 = vmatmul.mubr.bf16.gmra.mxu0 %v2094
      %v2257 = vpop.f32.mrf.mxu0
      %v2258 = vadd.f32 0.0, %v2257
      %v2259 = vpop.f32.mrf.mxu0
      %v2260 = vpop.f32.mrf.mxu0
      %v2261 = vadd.f32 0.0, %v2260
      %v2262 = vpop.f32.mrf.mxu0
      %2263 = vmatprep.mubr.bf16.mxu0 0
      %2264 = vmatmul.mubr.bf16.gmra.mxu0 %v2095
      %v2265 = vpop.f32.mrf.mxu0
      %v2266 = vadd.f32 0.0, %v2265
      %v2267 = vpop.f32.mrf.mxu0
      %v2268 = vpop.f32.mrf.mxu0
      %v2269 = vadd.f32 0.0, %v2268
      %v2270 = vpop.f32.mrf.mxu0
      %2271 = vmatprep.mubr.bf16.mxu0 0
      %2272 = vmatmul.mubr.bf16.gmra.mxu0 %v2096
      %v2273 = vpop.f32.mrf.mxu0
      %v2274 = vadd.f32 0.0, %v2273
      %v2275 = vpop.f32.mrf.mxu0
      %v2276 = vpop.f32.mrf.mxu0
      %v2277 = vadd.f32 0.0, %v2276
      %v2278 = vpop.f32.mrf.mxu0
      %2279 = vmatprep.mubr.bf16.mxu0 0
      %2280 = vmatmul.mubr.bf16.gmra.mxu0 %v2097
      %v2281 = vpop.f32.mrf.mxu0
      %v2282 = vadd.f32 0.0, %v2281
      %v2283 = vpop.f32.mrf.mxu0
      %v2284 = vpop.f32.mrf.mxu0
      %v2285 = vadd.f32 0.0, %v2284
      %v2286 = vpop.f32.mrf.mxu0
      %2287 = vmatprep.mubr.bf16.mxu0 0
      %2288 = vmatmul.mubr.bf16.gmra.mxu0 %v2098
      %v2289 = vpop.f32.mrf.mxu0
      %v2290 = vadd.f32 0.0, %v2289
      %v2291 = vpop.f32.mrf.mxu0
      %v2292 = vpop.f32.mrf.mxu0
      %v2293 = vadd.f32 0.0, %v2292
      %v2294 = vpop.f32.mrf.mxu0
      %2295 = vmatprep.mubr.bf16.mxu0 0
      %2296 = vmatmul.mubr.bf16.gmra.mxu0 %v2099
      %v2297 = vpop.f32.mrf.mxu0
      %v2298 = vadd.f32 0.0, %v2297
      %v2299 = vpop.f32.mrf.mxu0
      %v2300 = vpop.f32.mrf.mxu0
      %v2301 = vadd.f32 0.0, %v2300
      %v2302 = vpop.f32.mrf.mxu0
      %2303 = vmatprep.mubr.bf16.mxu0 0
      %2304 = vmatmul.mubr.bf16.gmra.mxu0 %v2100
      %v2305 = vpop.f32.mrf.mxu0
      %v2306 = vadd.f32 0.0, %v2305
      %v2307 = vpop.f32.mrf.mxu0
      %v2308 = vpop.f32.mrf.mxu0
      %v2309 = vadd.f32 0.0, %v2308
      %v2310 = vpop.f32.mrf.mxu0
      %2311 = vmatprep.mubr.bf16.mxu0 0
      %2312 = vmatmul.mubr.bf16.gmra.mxu0 %v2101
      %v2313 = vpop.f32.mrf.mxu0
      %v2314 = vadd.f32 0.0, %v2313
      %v2315 = vpop.f32.mrf.mxu0
      %v2316 = vpop.f32.mrf.mxu0
      %v2317 = vadd.f32 0.0, %v2316
      %v2318 = vpop.f32.mrf.mxu0
      %2319 = vmatprep.mubr.bf16.mxu0 0
      %2320 = vmatmul.mubr.bf16.gmra.mxu0 %v2102
      %v2321 = vpop.f32.mrf.mxu0
      %v2322 = vadd.f32 0.0, %v2321
      %v2323 = vpop.f32.mrf.mxu0
      %v2324 = vpop.f32.mrf.mxu0
      %v2325 = vadd.f32 0.0, %v2324
      %v2326 = vpop.f32.mrf.mxu0
      %2327 = vdwg.mxu0
      %v2328 = vadd.f32 %v1571, %v2202
      %v2329 = vadd.f32 %v1572, %v2205
      %v2330 = vadd.f32 %v1573, %v2210
      %v2331 = vadd.f32 %v1574, %v2213
      %v2332 = vadd.f32 %v1575, %v2218
      %v2333 = vadd.f32 %v1576, %v2221
      %v2334 = vadd.f32 %v1577, %v2226
      %v2335 = vadd.f32 %v1578, %v2229
      %v2336 = vadd.f32 %v1579, %v2234
      %v2337 = vadd.f32 %v1580, %v2237
      %v2338 = vadd.f32 %v1581, %v2242
      %v2339 = vadd.f32 %v1582, %v2245
      %v2340 = vadd.f32 %v1583, %v2250
      %v2341 = vadd.f32 %v1584, %v2253
      %v2342 = vadd.f32 %v1585, %v2258
      %v2343 = vadd.f32 %v1586, %v2261
      %v2344 = vadd.f32 %v1587, %v2266
      %v2345 = vadd.f32 %v1588, %v2269
      %v2346 = vadd.f32 %v1589, %v2274
      %v2347 = vadd.f32 %v1590, %v2277
      %v2348 = vadd.f32 %v1591, %v2282
      %v2349 = vadd.f32 %v1592, %v2285
      %v2350 = vadd.f32 %v1593, %v2290
      %v2351 = vadd.f32 %v1594, %v2293
      %v2352 = vadd.f32 %v1595, %v2298
      %v2353 = vadd.f32 %v1596, %v2301
      %v2354 = vadd.f32 %v1597, %v2306
      %v2355 = vadd.f32 %v1598, %v2309
      %v2356 = vadd.f32 %v1599, %v2314
      %v2357 = vadd.f32 %v1600, %v2317
      %v2358 = vadd.f32 %v1601, %v2322
      %v2359 = vadd.f32 %v1602, %v2325
      %v2360 = vld [vmem:[%s489] sm:$0x8]
      %v2361 = vld [vmem:[%s489 + $0x4] sm:$0xf]
      %v2362 = vld [vmem:[%s489 + $0x8] sm:$0xf]
      %v2363 = vld [vmem:[%s489 + $0x10] sm:$0x8]
      %v2364 = vld [vmem:[%s489 + $0x14] sm:$0xf]
      %v2365 = vld [vmem:[%s489 + $0x18] sm:$0xf]
      %v2366 = vld [vmem:[%s489 + $0x20] sm:$0x8]
      %v2367 = vld [vmem:[%s489 + $0x24] sm:$0xf]
      %v2368 = vld [vmem:[%s489 + $0x28] sm:$0xf]
      %v2369 = vld [vmem:[%s489 + $0x30] sm:$0x8]
      %v2370 = vld [vmem:[%s489 + $0x34] sm:$0xf]
      %v2371 = vld [vmem:[%s489 + $0x38] sm:$0xf]
      %v2372 = vld [vmem:[%s489 + $0x40] sm:$0x8]
      %v2373 = vld [vmem:[%s489 + $0x44] sm:$0xf]
      %v2374 = vld [vmem:[%s489 + $0x48] sm:$0xf]
      %v2375 = vld [vmem:[%s489 + $0x50] sm:$0x8]
      %v2376 = vld [vmem:[%s489 + $0x54] sm:$0xf]
      %v2377 = vld [vmem:[%s489 + $0x58] sm:$0xf]
      %v2378 = vld [vmem:[%s489 + $0x60] sm:$0x8]
      %v2379 = vld [vmem:[%s489 + $0x64] sm:$0xf]
      %v2380 = vld [vmem:[%s489 + $0x68] sm:$0xf]
      %v2381 = vld [vmem:[%s489 + $0x70] sm:$0x8]
      %v2382 = vld [vmem:[%s489 + $0x74] sm:$0xf]
      %v2383 = vld [vmem:[%s489 + $0x78] sm:$0xf]
      %v2384 = vld [vmem:[%s489 + $0x80] sm:$0x8]
      %v2385 = vld [vmem:[%s489 + $0x84] sm:$0xf]
      %v2386 = vld [vmem:[%s489 + $0x88] sm:$0xf]
      %v2387 = vld [vmem:[%s489 + $0x90] sm:$0x8]
      %v2388 = vld [vmem:[%s489 + $0x94] sm:$0xf]
      %v2389 = vld [vmem:[%s489 + $0x98] sm:$0xf]
      %v2390 = vld [vmem:[%s489 + $0xa0] sm:$0x8]
      %v2391 = vld [vmem:[%s489 + $0xa4] sm:$0xf]
      %v2392 = vld [vmem:[%s489 + $0xa8] sm:$0xf]
      %v2393 = vld [vmem:[%s489 + $0xb0] sm:$0x8]
      %v2394 = vld [vmem:[%s489 + $0xb4] sm:$0xf]
      %v2395 = vld [vmem:[%s489 + $0xb8] sm:$0xf]
      %v2396 = vld [vmem:[%s489 + $0xc0] sm:$0x8]
      %v2397 = vld [vmem:[%s489 + $0xc4] sm:$0xf]
      %v2398 = vld [vmem:[%s489 + $0xc8] sm:$0xf]
      %v2399 = vld [vmem:[%s489 + $0xd0] sm:$0x8]
      %v2400 = vld [vmem:[%s489 + $0xd4] sm:$0xf]
      %v2401 = vld [vmem:[%s489 + $0xd8] sm:$0xf]
      %v2402 = vld [vmem:[%s489 + $0xe0] sm:$0x8]
      %v2403 = vld [vmem:[%s489 + $0xe4] sm:$0xf]
      %v2404 = vld [vmem:[%s489 + $0xe8] sm:$0xf]
      %v2405 = vld [vmem:[%s489 + $0xf0] sm:$0x8]
      %v2406 = vld [vmem:[%s489 + $0xf4] sm:$0xf]
      %v2407 = vld [vmem:[%s489 + $0xf8] sm:$0xf]
      %v2409 = vshrl.u32 %v2360, 16
      %v2411 = vrot.slane %v2409, 7
      %v2412 = vrot.slane %v2411, 4
      %v2414 = vshrl.u32 %v2361, 16
      %v2416 = vrot.slane %v2414, 7
      %v2417 = vshll.u32 %v2361, 16
      %v2419 = vor.u32 %v2416, %v2417
      %v2420 = vsel %vm575, %v2412, %v2419
      %v2421 = vrot.slane %v2416, 4
      %v2423 = vshrl.u32 %v2362, 16
      %v2425 = vrot.slane %v2423, 7
      %v2426 = vshll.u32 %v2362, 16
      %v2428 = vor.u32 %v2425, %v2426
      %v2429 = vsel %vm575, %v2421, %v2428
      %v2431 = vshrl.u32 %v2363, 16
      %v2433 = vrot.slane %v2431, 7
      %v2434 = vrot.slane %v2433, 4
      %v2436 = vshrl.u32 %v2364, 16
      %v2438 = vrot.slane %v2436, 7
      %v2439 = vshll.u32 %v2364, 16
      %v2441 = vor.u32 %v2438, %v2439
      %v2442 = vsel %vm575, %v2434, %v2441
      %v2443 = vrot.slane %v2438, 4
      %v2445 = vshrl.u32 %v2365, 16
      %v2447 = vrot.slane %v2445, 7
      %v2448 = vshll.u32 %v2365, 16
      %v2450 = vor.u32 %v2447, %v2448
      %v2451 = vsel %vm575, %v2443, %v2450
      %v2453 = vshrl.u32 %v2366, 16
      %v2455 = vrot.slane %v2453, 7
      %v2456 = vrot.slane %v2455, 4
      %v2458 = vshrl.u32 %v2367, 16
      %v2460 = vrot.slane %v2458, 7
      %v2461 = vshll.u32 %v2367, 16
      %v2463 = vor.u32 %v2460, %v2461
      %v2464 = vsel %vm575, %v2456, %v2463
      %v2465 = vrot.slane %v2460, 4
      %v2467 = vshrl.u32 %v2368, 16
      %v2469 = vrot.slane %v2467, 7
      %v2470 = vshll.u32 %v2368, 16
      %v2472 = vor.u32 %v2469, %v2470
      %v2473 = vsel %vm575, %v2465, %v2472
      %v2475 = vshrl.u32 %v2369, 16
      %v2477 = vrot.slane %v2475, 7
      %v2478 = vrot.slane %v2477, 4
      %v2480 = vshrl.u32 %v2370, 16
      %v2482 = vrot.slane %v2480, 7
      %v2483 = vshll.u32 %v2370, 16
      %v2485 = vor.u32 %v2482, %v2483
      %v2486 = vsel %vm575, %v2478, %v2485
      %v2487 = vrot.slane %v2482, 4
      %v2489 = vshrl.u32 %v2371, 16
      %v2491 = vrot.slane %v2489, 7
      %v2492 = vshll.u32 %v2371, 16
      %v2494 = vor.u32 %v2491, %v2492
      %v2495 = vsel %vm575, %v2487, %v2494
      %v2497 = vshrl.u32 %v2372, 16
      %v2499 = vrot.slane %v2497, 7
      %v2500 = vrot.slane %v2499, 4
      %v2502 = vshrl.u32 %v2373, 16
      %v2504 = vrot.slane %v2502, 7
      %v2505 = vshll.u32 %v2373, 16
      %v2507 = vor.u32 %v2504, %v2505
      %v2508 = vsel %vm575, %v2500, %v2507
      %v2509 = vrot.slane %v2504, 4
      %v2511 = vshrl.u32 %v2374, 16
      %v2513 = vrot.slane %v2511, 7
      %v2514 = vshll.u32 %v2374, 16
      %v2516 = vor.u32 %v2513, %v2514
      %v2517 = vsel %vm575, %v2509, %v2516
      %v2519 = vshrl.u32 %v2375, 16
      %v2521 = vrot.slane %v2519, 7
      %v2522 = vrot.slane %v2521, 4
      %v2524 = vshrl.u32 %v2376, 16
      %v2526 = vrot.slane %v2524, 7
      %v2527 = vshll.u32 %v2376, 16
      %v2529 = vor.u32 %v2526, %v2527
      %v2530 = vsel %vm575, %v2522, %v2529
      %v2531 = vrot.slane %v2526, 4
      %v2533 = vshrl.u32 %v2377, 16
      %v2535 = vrot.slane %v2533, 7
      %v2536 = vshll.u32 %v2377, 16
      %v2538 = vor.u32 %v2535, %v2536
      %v2539 = vsel %vm575, %v2531, %v2538
      %v2541 = vshrl.u32 %v2378, 16
      %v2543 = vrot.slane %v2541, 7
      %v2544 = vrot.slane %v2543, 4
      %v2546 = vshrl.u32 %v2379, 16
      %v2548 = vrot.slane %v2546, 7
      %v2549 = vshll.u32 %v2379, 16
      %v2551 = vor.u32 %v2548, %v2549
      %v2552 = vsel %vm575, %v2544, %v2551
      %v2553 = vrot.slane %v2548, 4
      %v2555 = vshrl.u32 %v2380, 16
      %v2557 = vrot.slane %v2555, 7
      %v2558 = vshll.u32 %v2380, 16
      %v2560 = vor.u32 %v2557, %v2558
      %v2561 = vsel %vm575, %v2553, %v2560
      %v2563 = vshrl.u32 %v2381, 16
      %v2565 = vrot.slane %v2563, 7
      %v2566 = vrot.slane %v2565, 4
      %v2568 = vshrl.u32 %v2382, 16
      %v2570 = vrot.slane %v2568, 7
      %v2571 = vshll.u32 %v2382, 16
      %v2573 = vor.u32 %v2570, %v2571
      %v2574 = vsel %vm575, %v2566, %v2573
      %v2575 = vrot.slane %v2570, 4
      %v2577 = vshrl.u32 %v2383, 16
      %v2579 = vrot.slane %v2577, 7
      %v2580 = vshll.u32 %v2383, 16
      %v2582 = vor.u32 %v2579, %v2580
      %v2583 = vsel %vm575, %v2575, %v2582
      %v2585 = vshrl.u32 %v2384, 16
      %v2587 = vrot.slane %v2585, 7
      %v2588 = vrot.slane %v2587, 4
      %v2590 = vshrl.u32 %v2385, 16
      %v2592 = vrot.slane %v2590, 7
      %v2593 = vshll.u32 %v2385, 16
      %v2595 = vor.u32 %v2592, %v2593
      %v2596 = vsel %vm575, %v2588, %v2595
      %v2597 = vrot.slane %v2592, 4
      %v2599 = vshrl.u32 %v2386, 16
      %v2601 = vrot.slane %v2599, 7
      %v2602 = vshll.u32 %v2386, 16
      %v2604 = vor.u32 %v2601, %v2602
      %v2605 = vsel %vm575, %v2597, %v2604
      %v2607 = vshrl.u32 %v2387, 16
      %v2609 = vrot.slane %v2607, 7
      %v2610 = vrot.slane %v2609, 4
      %v2612 = vshrl.u32 %v2388, 16
      %v2614 = vrot.slane %v2612, 7
      %v2615 = vshll.u32 %v2388, 16
      %v2617 = vor.u32 %v2614, %v2615
      %v2618 = vsel %vm575, %v2610, %v2617
      %v2619 = vrot.slane %v2614, 4
      %v2621 = vshrl.u32 %v2389, 16
      %v2623 = vrot.slane %v2621, 7
      %v2624 = vshll.u32 %v2389, 16
      %v2626 = vor.u32 %v2623, %v2624
      %v2627 = vsel %vm575, %v2619, %v2626
      %v2629 = vshrl.u32 %v2390, 16
      %v2631 = vrot.slane %v2629, 7
      %v2632 = vrot.slane %v2631, 4
      %v2634 = vshrl.u32 %v2391, 16
      %v2636 = vrot.slane %v2634, 7
      %v2637 = vshll.u32 %v2391, 16
      %v2639 = vor.u32 %v2636, %v2637
      %v2640 = vsel %vm575, %v2632, %v2639
      %v2641 = vrot.slane %v2636, 4
      %v2643 = vshrl.u32 %v2392, 16
      %v2645 = vrot.slane %v2643, 7
      %v2646 = vshll.u32 %v2392, 16
      %v2648 = vor.u32 %v2645, %v2646
      %v2649 = vsel %vm575, %v2641, %v2648
      %v2651 = vshrl.u32 %v2393, 16
      %v2653 = vrot.slane %v2651, 7
      %v2654 = vrot.slane %v2653, 4
      %v2656 = vshrl.u32 %v2394, 16
      %v2658 = vrot.slane %v2656, 7
      %v2659 = vshll.u32 %v2394, 16
      %v2661 = vor.u32 %v2658, %v2659
      %v2662 = vsel %vm575, %v2654, %v2661
      %v2663 = vrot.slane %v2658, 4
      %v2665 = vshrl.u32 %v2395, 16
      %v2667 = vrot.slane %v2665, 7
      %v2668 = vshll.u32 %v2395, 16
      %v2670 = vor.u32 %v2667, %v2668
      %v2671 = vsel %vm575, %v2663, %v2670
      %v2673 = vshrl.u32 %v2396, 16
      %v2675 = vrot.slane %v2673, 7
      %v2676 = vrot.slane %v2675, 4
      %v2678 = vshrl.u32 %v2397, 16
      %v2680 = vrot.slane %v2678, 7
      %v2681 = vshll.u32 %v2397, 16
      %v2683 = vor.u32 %v2680, %v2681
      %v2684 = vsel %vm575, %v2676, %v2683
      %v2685 = vrot.slane %v2680, 4
      %v2687 = vshrl.u32 %v2398, 16
      %v2689 = vrot.slane %v2687, 7
      %v2690 = vshll.u32 %v2398, 16
      %v2692 = vor.u32 %v2689, %v2690
      %v2693 = vsel %vm575, %v2685, %v2692
      %v2695 = vshrl.u32 %v2399, 16
      %v2697 = vrot.slane %v2695, 7
      %v2698 = vrot.slane %v2697, 4
      %v2700 = vshrl.u32 %v2400, 16
      %v2702 = vrot.slane %v2700, 7
      %v2703 = vshll.u32 %v2400, 16
      %v2705 = vor.u32 %v2702, %v2703
      %v2706 = vsel %vm575, %v2698, %v2705
      %v2707 = vrot.slane %v2702, 4
      %v2709 = vshrl.u32 %v2401, 16
      %v2711 = vrot.slane %v2709, 7
      %v2712 = vshll.u32 %v2401, 16
      %v2714 = vor.u32 %v2711, %v2712
      %v2715 = vsel %vm575, %v2707, %v2714
      %v2717 = vshrl.u32 %v2402, 16
      %v2719 = vrot.slane %v2717, 7
      %v2720 = vrot.slane %v2719, 4
      %v2722 = vshrl.u32 %v2403, 16
      %v2724 = vrot.slane %v2722, 7
      %v2725 = vshll.u32 %v2403, 16
      %v2727 = vor.u32 %v2724, %v2725
      %v2728 = vsel %vm575, %v2720, %v2727
      %v2729 = vrot.slane %v2724, 4
      %v2731 = vshrl.u32 %v2404, 16
      %v2733 = vrot.slane %v2731, 7
      %v2734 = vshll.u32 %v2404, 16
      %v2736 = vor.u32 %v2733, %v2734
      %v2737 = vsel %vm575, %v2729, %v2736
      %v2739 = vshrl.u32 %v2405, 16
      %v2741 = vrot.slane %v2739, 7
      %v2742 = vrot.slane %v2741, 4
      %v2744 = vshrl.u32 %v2406, 16
      %v2746 = vrot.slane %v2744, 7
      %v2747 = vshll.u32 %v2406, 16
      %v2749 = vor.u32 %v2746, %v2747
      %v2750 = vsel %vm575, %v2742, %v2749
      %v2751 = vrot.slane %v2746, 4
      %v2753 = vshrl.u32 %v2407, 16
      %v2755 = vrot.slane %v2753, 7
      %v2756 = vshll.u32 %v2407, 16
      %v2758 = vor.u32 %v2755, %v2756
      %v2759 = vsel %vm575, %v2751, %v2758
      %s2760 = scalar_lea.vmem %s1, 192
      %v2761 = vld [vmem:[%s2760] sm:$0xf]
      %v2762 = vld [vmem:[%s2760 + $0x4] sm:$0xf]
      %v2763 = vld [vmem:[%s2760 + $0x8] sm:$0xf]
      %v2764 = vld [vmem:[%s2760 + $0xc] sm:$0xf]
      %v2765 = vld [vmem:[%s2760 + $0x10] sm:$0xf]
      %v2766 = vld [vmem:[%s2760 + $0x14] sm:$0xf]
      %v2767 = vld [vmem:[%s2760 + $0x18] sm:$0xf]
      %v2768 = vld [vmem:[%s2760 + $0x1c] sm:$0xf]
      %v2769 = vld [vmem:[%s2760 + $0x20] sm:$0xf]
      %v2770 = vld [vmem:[%s2760 + $0x24] sm:$0xf]
      %v2771 = vld [vmem:[%s2760 + $0x28] sm:$0xf]
      %v2772 = vld [vmem:[%s2760 + $0x2c] sm:$0xf]
      %v2773 = vld [vmem:[%s2760 + $0x30] sm:$0xf]
      %v2774 = vld [vmem:[%s2760 + $0x34] sm:$0xf]
      %v2775 = vld [vmem:[%s2760 + $0x38] sm:$0xf]
      %v2776 = vld [vmem:[%s2760 + $0x3c] sm:$0xf]
      %v2777 = vunpack.c.l.b16 %v2420
      %v2778 = vunpack.c.l.b16 %v2429
      %v2779 = vunpack.c.l.b16 %v2442
      %v2780 = vunpack.c.l.b16 %v2451
      %v2781 = vunpack.c.l.b16 %v2464
      %v2782 = vunpack.c.l.b16 %v2473
      %v2783 = vunpack.c.l.b16 %v2486
      %v2784 = vunpack.c.l.b16 %v2495
      %v2785 = vunpack.c.l.b16 %v2508
      %v2786 = vunpack.c.l.b16 %v2517
      %v2787 = vunpack.c.l.b16 %v2530
      %v2788 = vunpack.c.l.b16 %v2539
      %v2789 = vunpack.c.l.b16 %v2552
      %v2790 = vunpack.c.l.b16 %v2561
      %v2791 = vunpack.c.l.b16 %v2574
      %v2792 = vunpack.c.l.b16 %v2583
      %v2793 = vunpack.c.l.b16 %v2596
      %v2794 = vunpack.c.l.b16 %v2605
      %v2795 = vunpack.c.l.b16 %v2618
      %v2796 = vunpack.c.l.b16 %v2627
      %v2797 = vunpack.c.l.b16 %v2640
      %v2798 = vunpack.c.l.b16 %v2649
      %v2799 = vunpack.c.l.b16 %v2662
      %v2800 = vunpack.c.l.b16 %v2671
      %v2801 = vunpack.c.l.b16 %v2684
      %v2802 = vunpack.c.l.b16 %v2693
      %v2803 = vunpack.c.l.b16 %v2706
      %v2804 = vunpack.c.l.b16 %v2715
      %v2805 = vunpack.c.l.b16 %v2728
      %v2806 = vunpack.c.l.b16 %v2737
      %v2807 = vunpack.c.l.b16 %v2750
      %v2808 = vunpack.c.l.b16 %v2759
      %v2809 = vpack.c.b16 %v2778, %v2777
      %v2810 = vpack.c.b16 %v2780, %v2779
      %v2811 = vpack.c.b16 %v2782, %v2781
      %v2812 = vpack.c.b16 %v2784, %v2783
      %v2813 = vpack.c.b16 %v2786, %v2785
      %v2814 = vpack.c.b16 %v2788, %v2787
      %v2815 = vpack.c.b16 %v2790, %v2789
      %v2816 = vpack.c.b16 %v2792, %v2791
      %v2817 = vpack.c.b16 %v2794, %v2793
      %v2818 = vpack.c.b16 %v2796, %v2795
      %v2819 = vpack.c.b16 %v2798, %v2797
      %v2820 = vpack.c.b16 %v2800, %v2799
      %v2821 = vpack.c.b16 %v2802, %v2801
      %v2822 = vpack.c.b16 %v2804, %v2803
      %v2823 = vpack.c.b16 %v2806, %v2805
      %v2824 = vpack.c.b16 %v2808, %v2807
      %v2857 = vunpack.c.l.b16 %v2761
      %v2858 = vunpack.c.l.b16 %v2762
      %v2859 = vunpack.c.l.b16 %v2763
      %v2860 = vunpack.c.l.b16 %v2764
      %v2861 = vunpack.c.l.b16 %v2765
      %v2862 = vunpack.c.l.b16 %v2766
      %v2863 = vunpack.c.l.b16 %v2767
      %v2864 = vunpack.c.l.b16 %v2768
      %v2865 = vunpack.c.l.b16 %v2769
      %v2866 = vunpack.c.l.b16 %v2770
      %v2867 = vunpack.c.l.b16 %v2771
      %v2868 = vunpack.c.l.b16 %v2772
      %v2869 = vunpack.c.l.b16 %v2773
      %v2870 = vunpack.c.l.b16 %v2774
      %v2871 = vunpack.c.l.b16 %v2775
      %v2872 = vunpack.c.l.b16 %v2776
      %v2873 = vpack.c.b16 %v2858, %v2857
      %v2874 = vpack.c.b16 %v2860, %v2859
      %v2875 = vpack.c.b16 %v2862, %v2861
      %v2876 = vpack.c.b16 %v2864, %v2863
      %v2877 = vpack.c.b16 %v2866, %v2865
      %v2878 = vpack.c.b16 %v2868, %v2867
      %v2879 = vpack.c.b16 %v2870, %v2869
      %v2880 = vpack.c.b16 %v2872, %v2871
      %2889 = vmatprep.subr.bf16.mxu0 0
      %2890 = vmatpush1.bf16.msra.mxu0 %v2880
      %2891 = vmatprep.subr.bf16.mxu0 0
      %2892 = vmatpush1.bf16.msra.mxu0 %v2879
      %2893 = vmatprep.subr.bf16.mxu0 0
      %2894 = vmatpush1.bf16.msra.mxu0 %v2878
      %2895 = vmatprep.subr.bf16.mxu0 0
      %2896 = vmatpush1.bf16.msra.mxu0 %v2877
      %2897 = vmatprep.subr.bf16.mxu0 0
      %2898 = vmatpush1.bf16.msra.mxu0 %v2876
      %2899 = vmatprep.subr.bf16.mxu0 0
      %2900 = vmatpush1.bf16.msra.mxu0 %v2875
      %2901 = vmatprep.subr.bf16.mxu0 0
      %2902 = vmatpush1.bf16.msra.mxu0 %v2874
      %2903 = vmatprep.subr.bf16.mxu0 0
      %2904 = vmatpush1.bf16.msra.mxu0 %v2873
      %2905 = vmatprep.subr.bf16.mxu0 0
      %2906 = vmatpush2.bf16.msra.mxu0 0
      %2907 = vmatprep.subr.bf16.mxu0 0
      %2908 = vmatpush2.bf16.msra.mxu0 0
      %2909 = vmatprep.subr.bf16.mxu0 0
      %2910 = vmatpush2.bf16.msra.mxu0 0
      %2911 = vmatprep.subr.bf16.mxu0 0
      %2912 = vmatpush2.bf16.msra.mxu0 0
      %2913 = vmatprep.subr.bf16.mxu0 0
      %2914 = vmatpush2.bf16.msra.mxu0 0
      %2915 = vmatprep.subr.bf16.mxu0 0
      %2916 = vmatpush2.bf16.msra.mxu0 0
      %2917 = vmatprep.subr.bf16.mxu0 0
      %2918 = vmatpush2.bf16.msra.mxu0 0
      %2919 = vmatprep.subr.bf16.mxu0 0
      %2920 = vmatpush2.bf16.msra.mxu0 0
      %2921 = vmatprep.mubr.bf16.mxu0 0
      %2922 = vmatmul.mubr.bf16.gmra.mxu0 %v2809
      %v2923 = vpop.f32.mrf.mxu0
      %v2924 = vadd.f32 0.0, %v2923
      %v2925 = vpop.f32.mrf.mxu0
      %v2926 = vpop.f32.mrf.mxu0
      %v2927 = vadd.f32 0.0, %v2926
      %v2928 = vpop.f32.mrf.mxu0
      %2929 = vmatprep.mubr.bf16.mxu0 0
      %2930 = vmatmul.mubr.bf16.gmra.mxu0 %v2810
      %v2931 = vpop.f32.mrf.mxu0
      %v2932 = vadd.f32 0.0, %v2931
      %v2933 = vpop.f32.mrf.mxu0
      %v2934 = vpop.f32.mrf.mxu0
      %v2935 = vadd.f32 0.0, %v2934
      %v2936 = vpop.f32.mrf.mxu0
      %2937 = vmatprep.mubr.bf16.mxu0 0
      %2938 = vmatmul.mubr.bf16.gmra.mxu0 %v2811
      %v2939 = vpop.f32.mrf.mxu0
      %v2940 = vadd.f32 0.0, %v2939
      %v2941 = vpop.f32.mrf.mxu0
      %v2942 = vpop.f32.mrf.mxu0
      %v2943 = vadd.f32 0.0, %v2942
      %v2944 = vpop.f32.mrf.mxu0
      %2945 = vmatprep.mubr.bf16.mxu0 0
      %2946 = vmatmul.mubr.bf16.gmra.mxu0 %v2812
      %v2947 = vpop.f32.mrf.mxu0
      %v2948 = vadd.f32 0.0, %v2947
      %v2949 = vpop.f32.mrf.mxu0
      %v2950 = vpop.f32.mrf.mxu0
      %v2951 = vadd.f32 0.0, %v2950
      %v2952 = vpop.f32.mrf.mxu0
      %2953 = vmatprep.mubr.bf16.mxu0 0
      %2954 = vmatmul.mubr.bf16.gmra.mxu0 %v2813
      %v2955 = vpop.f32.mrf.mxu0
      %v2956 = vadd.f32 0.0, %v2955
      %v2957 = vpop.f32.mrf.mxu0
      %v2958 = vpop.f32.mrf.mxu0
      %v2959 = vadd.f32 0.0, %v2958
      %v2960 = vpop.f32.mrf.mxu0
      %2961 = vmatprep.mubr.bf16.mxu0 0
      %2962 = vmatmul.mubr.bf16.gmra.mxu0 %v2814
      %v2963 = vpop.f32.mrf.mxu0
      %v2964 = vadd.f32 0.0, %v2963
      %v2965 = vpop.f32.mrf.mxu0
      %v2966 = vpop.f32.mrf.mxu0
      %v2967 = vadd.f32 0.0, %v2966
      %v2968 = vpop.f32.mrf.mxu0
      %2969 = vmatprep.mubr.bf16.mxu0 0
      %2970 = vmatmul.mubr.bf16.gmra.mxu0 %v2815
      %v2971 = vpop.f32.mrf.mxu0
      %v2972 = vadd.f32 0.0, %v2971
      %v2973 = vpop.f32.mrf.mxu0
      %v2974 = vpop.f32.mrf.mxu0
      %v2975 = vadd.f32 0.0, %v2974
      %v2976 = vpop.f32.mrf.mxu0
      %2977 = vmatprep.mubr.bf16.mxu0 0
      %2978 = vmatmul.mubr.bf16.gmra.mxu0 %v2816
      %v2979 = vpop.f32.mrf.mxu0
      %v2980 = vadd.f32 0.0, %v2979
      %v2981 = vpop.f32.mrf.mxu0
      %v2982 = vpop.f32.mrf.mxu0
      %v2983 = vadd.f32 0.0, %v2982
      %v2984 = vpop.f32.mrf.mxu0
      %2985 = vmatprep.mubr.bf16.mxu0 0
      %2986 = vmatmul.mubr.bf16.gmra.mxu0 %v2817
      %v2987 = vpop.f32.mrf.mxu0
      %v2988 = vadd.f32 0.0, %v2987
      %v2989 = vpop.f32.mrf.mxu0
      %v2990 = vpop.f32.mrf.mxu0
      %v2991 = vadd.f32 0.0, %v2990
      %v2992 = vpop.f32.mrf.mxu0
      %2993 = vmatprep.mubr.bf16.mxu0 0
      %2994 = vmatmul.mubr.bf16.gmra.mxu0 %v2818
      %v2995 = vpop.f32.mrf.mxu0
      %v2996 = vadd.f32 0.0, %v2995
      %v2997 = vpop.f32.mrf.mxu0
      %v2998 = vpop.f32.mrf.mxu0
      %v2999 = vadd.f32 0.0, %v2998
      %v3000 = vpop.f32.mrf.mxu0
      %3001 = vmatprep.mubr.bf16.mxu0 0
      %3002 = vmatmul.mubr.bf16.gmra.mxu0 %v2819
      %v3003 = vpop.f32.mrf.mxu0
      %v3004 = vadd.f32 0.0, %v3003
      %v3005 = vpop.f32.mrf.mxu0
      %v3006 = vpop.f32.mrf.mxu0
      %v3007 = vadd.f32 0.0, %v3006
      %v3008 = vpop.f32.mrf.mxu0
      %3009 = vmatprep.mubr.bf16.mxu0 0
      %3010 = vmatmul.mubr.bf16.gmra.mxu0 %v2820
      %v3011 = vpop.f32.mrf.mxu0
      %v3012 = vadd.f32 0.0, %v3011
      %v3013 = vpop.f32.mrf.mxu0
      %v3014 = vpop.f32.mrf.mxu0
      %v3015 = vadd.f32 0.0, %v3014
      %v3016 = vpop.f32.mrf.mxu0
      %3017 = vmatprep.mubr.bf16.mxu0 0
      %3018 = vmatmul.mubr.bf16.gmra.mxu0 %v2821
      %v3019 = vpop.f32.mrf.mxu0
      %v3020 = vadd.f32 0.0, %v3019
      %v3021 = vpop.f32.mrf.mxu0
      %v3022 = vpop.f32.mrf.mxu0
      %v3023 = vadd.f32 0.0, %v3022
      %v3024 = vpop.f32.mrf.mxu0
      %3025 = vmatprep.mubr.bf16.mxu0 0
      %3026 = vmatmul.mubr.bf16.gmra.mxu0 %v2822
      %v3027 = vpop.f32.mrf.mxu0
      %v3028 = vadd.f32 0.0, %v3027
      %v3029 = vpop.f32.mrf.mxu0
      %v3030 = vpop.f32.mrf.mxu0
      %v3031 = vadd.f32 0.0, %v3030
      %v3032 = vpop.f32.mrf.mxu0
      %3033 = vmatprep.mubr.bf16.mxu0 0
      %3034 = vmatmul.mubr.bf16.gmra.mxu0 %v2823
      %v3035 = vpop.f32.mrf.mxu0
      %v3036 = vadd.f32 0.0, %v3035
      %v3037 = vpop.f32.mrf.mxu0
      %v3038 = vpop.f32.mrf.mxu0
      %v3039 = vadd.f32 0.0, %v3038
      %v3040 = vpop.f32.mrf.mxu0
      %3041 = vmatprep.mubr.bf16.mxu0 0
      %3042 = vmatmul.mubr.bf16.gmra.mxu0 %v2824
      %v3043 = vpop.f32.mrf.mxu0
      %v3044 = vadd.f32 0.0, %v3043
      %v3045 = vpop.f32.mrf.mxu0
      %v3046 = vpop.f32.mrf.mxu0
      %v3047 = vadd.f32 0.0, %v3046
      %v3048 = vpop.f32.mrf.mxu0
      %3049 = vdwg.mxu0
      %v3050 = vadd.f32 %v2328, %v2924
      %v3051 = vadd.f32 %v2329, %v2927
      %v3052 = vadd.f32 %v2330, %v2932
      %v3053 = vadd.f32 %v2331, %v2935
      %v3054 = vadd.f32 %v2332, %v2940
      %v3055 = vadd.f32 %v2333, %v2943
      %v3056 = vadd.f32 %v2334, %v2948
      %v3057 = vadd.f32 %v2335, %v2951
      %v3058 = vadd.f32 %v2336, %v2956
      %v3059 = vadd.f32 %v2337, %v2959
      %v3060 = vadd.f32 %v2338, %v2964
      %v3061 = vadd.f32 %v2339, %v2967
      %v3062 = vadd.f32 %v2340, %v2972
      %v3063 = vadd.f32 %v2341, %v2975
      %v3064 = vadd.f32 %v2342, %v2980
      %v3065 = vadd.f32 %v2343, %v2983
      %v3066 = vadd.f32 %v2344, %v2988
      %v3067 = vadd.f32 %v2345, %v2991
      %v3068 = vadd.f32 %v2346, %v2996
      %v3069 = vadd.f32 %v2347, %v2999
      %v3070 = vadd.f32 %v2348, %v3004
      %v3071 = vadd.f32 %v2349, %v3007
      %v3072 = vadd.f32 %v2350, %v3012
      %v3073 = vadd.f32 %v2351, %v3015
      %v3074 = vadd.f32 %v2352, %v3020
      %v3075 = vadd.f32 %v2353, %v3023
      %v3076 = vadd.f32 %v2354, %v3028
      %v3077 = vadd.f32 %v2355, %v3031
      %v3078 = vadd.f32 %v2356, %v3036
      %v3079 = vadd.f32 %v2357, %v3039
      %v3080 = vadd.f32 %v2358, %v3044
      %v3081 = vadd.f32 %v2359, %v3047
      %s3082 = scalar_lea.vmem %s1, 256
      %v3083 = vld [vmem:[%s3082] sm:$0xf]
      %v3084 = vld [vmem:[%s3082 + $0x4] sm:$0xf]
      %v3085 = vld [vmem:[%s3082 + $0x8] sm:$0xf]
      %v3086 = vld [vmem:[%s3082 + $0xc] sm:$0xf]
      %v3087 = vld [vmem:[%s3082 + $0x10] sm:$0xf]
      %v3088 = vld [vmem:[%s3082 + $0x14] sm:$0xf]
      %v3089 = vld [vmem:[%s3082 + $0x18] sm:$0xf]
      %v3090 = vld [vmem:[%s3082 + $0x1c] sm:$0xf]
      %v3091 = vld [vmem:[%s3082 + $0x20] sm:$0xf]
      %v3092 = vld [vmem:[%s3082 + $0x24] sm:$0xf]
      %v3093 = vld [vmem:[%s3082 + $0x28] sm:$0xf]
      %v3094 = vld [vmem:[%s3082 + $0x2c] sm:$0xf]
      %v3095 = vld [vmem:[%s3082 + $0x30] sm:$0xf]
      %v3096 = vld [vmem:[%s3082 + $0x34] sm:$0xf]
      %v3097 = vld [vmem:[%s3082 + $0x38] sm:$0xf]
      %v3098 = vld [vmem:[%s3082 + $0x3c] sm:$0xf]
      %v3131 = vunpack.c.l.b16 %v2361
      %v3132 = vunpack.c.l.b16 %v2362
      %v3133 = vunpack.c.l.b16 %v2364
      %v3134 = vunpack.c.l.b16 %v2365
      %v3135 = vunpack.c.l.b16 %v2367
      %v3136 = vunpack.c.l.b16 %v2368
      %v3137 = vunpack.c.l.b16 %v2370
      %v3138 = vunpack.c.l.b16 %v2371
      %v3139 = vunpack.c.l.b16 %v2373
      %v3140 = vunpack.c.l.b16 %v2374
      %v3141 = vunpack.c.l.b16 %v2376
      %v3142 = vunpack.c.l.b16 %v2377
      %v3143 = vunpack.c.l.b16 %v2379
      %v3144 = vunpack.c.l.b16 %v2380
      %v3145 = vunpack.c.l.b16 %v2382
      %v3146 = vunpack.c.l.b16 %v2383
      %v3147 = vunpack.c.l.b16 %v2385
      %v3148 = vunpack.c.l.b16 %v2386
      %v3149 = vunpack.c.l.b16 %v2388
      %v3150 = vunpack.c.l.b16 %v2389
      %v3151 = vunpack.c.l.b16 %v2391
      %v3152 = vunpack.c.l.b16 %v2392
      %v3153 = vunpack.c.l.b16 %v2394
      %v3154 = vunpack.c.l.b16 %v2395
      %v3155 = vunpack.c.l.b16 %v2397
      %v3156 = vunpack.c.l.b16 %v2398
      %v3157 = vunpack.c.l.b16 %v2400
      %v3158 = vunpack.c.l.b16 %v2401
      %v3159 = vunpack.c.l.b16 %v2403
      %v3160 = vunpack.c.l.b16 %v2404
      %v3161 = vunpack.c.l.b16 %v2406
      %v3162 = vunpack.c.l.b16 %v2407
      %v3163 = vpack.c.b16 %v3132, %v3131
      %v3164 = vpack.c.b16 %v3134, %v3133
      %v3165 = vpack.c.b16 %v3136, %v3135
      %v3166 = vpack.c.b16 %v3138, %v3137
      %v3167 = vpack.c.b16 %v3140, %v3139
      %v3168 = vpack.c.b16 %v3142, %v3141
      %v3169 = vpack.c.b16 %v3144, %v3143
      %v3170 = vpack.c.b16 %v3146, %v3145
      %v3171 = vpack.c.b16 %v3148, %v3147
      %v3172 = vpack.c.b16 %v3150, %v3149
      %v3173 = vpack.c.b16 %v3152, %v3151
      %v3174 = vpack.c.b16 %v3154, %v3153
      %v3175 = vpack.c.b16 %v3156, %v3155
      %v3176 = vpack.c.b16 %v3158, %v3157
      %v3177 = vpack.c.b16 %v3160, %v3159
      %v3178 = vpack.c.b16 %v3162, %v3161
      %v3211 = vunpack.c.l.b16 %v3083
      %v3212 = vunpack.c.l.b16 %v3084
      %v3213 = vunpack.c.l.b16 %v3085
      %v3214 = vunpack.c.l.b16 %v3086
      %v3215 = vunpack.c.l.b16 %v3087
      %v3216 = vunpack.c.l.b16 %v3088
      %v3217 = vunpack.c.l.b16 %v3089
      %v3218 = vunpack.c.l.b16 %v3090
      %v3219 = vunpack.c.l.b16 %v3091
      %v3220 = vunpack.c.l.b16 %v3092
      %v3221 = vunpack.c.l.b16 %v3093
      %v3222 = vunpack.c.l.b16 %v3094
      %v3223 = vunpack.c.l.b16 %v3095
      %v3224 = vunpack.c.l.b16 %v3096
      %v3225 = vunpack.c.l.b16 %v3097
      %v3226 = vunpack.c.l.b16 %v3098
      %v3227 = vpack.c.b16 %v3212, %v3211
      %v3228 = vpack.c.b16 %v3214, %v3213
      %v3229 = vpack.c.b16 %v3216, %v3215
      %v3230 = vpack.c.b16 %v3218, %v3217
      %v3231 = vpack.c.b16 %v3220, %v3219
      %v3232 = vpack.c.b16 %v3222, %v3221
      %v3233 = vpack.c.b16 %v3224, %v3223
      %v3234 = vpack.c.b16 %v3226, %v3225
      %3243 = vmatprep.subr.bf16.mxu0 0
      %3244 = vmatpush1.bf16.msra.mxu0 %v3234
      %3245 = vmatprep.subr.bf16.mxu0 0
      %3246 = vmatpush1.bf16.msra.mxu0 %v3233
      %3247 = vmatprep.subr.bf16.mxu0 0
      %3248 = vmatpush1.bf16.msra.mxu0 %v3232
      %3249 = vmatprep.subr.bf16.mxu0 0
      %3250 = vmatpush1.bf16.msra.mxu0 %v3231
      %3251 = vmatprep.subr.bf16.mxu0 0
      %3252 = vmatpush1.bf16.msra.mxu0 %v3230
      %3253 = vmatprep.subr.bf16.mxu0 0
      %3254 = vmatpush1.bf16.msra.mxu0 %v3229
      %3255 = vmatprep.subr.bf16.mxu0 0
      %3256 = vmatpush1.bf16.msra.mxu0 %v3228
      %3257 = vmatprep.subr.bf16.mxu0 0
      %3258 = vmatpush1.bf16.msra.mxu0 %v3227
      %3259 = vmatprep.subr.bf16.mxu0 0
      %3260 = vmatpush2.bf16.msra.mxu0 0
      %3261 = vmatprep.subr.bf16.mxu0 0
      %3262 = vmatpush2.bf16.msra.mxu0 0
      %3263 = vmatprep.subr.bf16.mxu0 0
      %3264 = vmatpush2.bf16.msra.mxu0 0
      %3265 = vmatprep.subr.bf16.mxu0 0
      %3266 = vmatpush2.bf16.msra.mxu0 0
      %3267 = vmatprep.subr.bf16.mxu0 0
      %3268 = vmatpush2.bf16.msra.mxu0 0
      %3269 = vmatprep.subr.bf16.mxu0 0
      %3270 = vmatpush2.bf16.msra.mxu0 0
      %3271 = vmatprep.subr.bf16.mxu0 0
      %3272 = vmatpush2.bf16.msra.mxu0 0
      %3273 = vmatprep.subr.bf16.mxu0 0
      %3274 = vmatpush2.bf16.msra.mxu0 0
      %3275 = vmatprep.mubr.bf16.mxu0 0
      %3276 = vmatmul.mubr.bf16.gmra.mxu0 %v3163
      %v3277 = vpop.f32.mrf.mxu0
      %v3278 = vadd.f32 0.0, %v3277
      %v3279 = vpop.f32.mrf.mxu0
      %v3280 = vpop.f32.mrf.mxu0
      %v3281 = vadd.f32 0.0, %v3280
      %v3282 = vpop.f32.mrf.mxu0
      %3283 = vmatprep.mubr.bf16.mxu0 0
      %3284 = vmatmul.mubr.bf16.gmra.mxu0 %v3164
      %v3285 = vpop.f32.mrf.mxu0
      %v3286 = vadd.f32 0.0, %v3285
      %v3287 = vpop.f32.mrf.mxu0
      %v3288 = vpop.f32.mrf.mxu0
      %v3289 = vadd.f32 0.0, %v3288
      %v3290 = vpop.f32.mrf.mxu0
      %3291 = vmatprep.mubr.bf16.mxu0 0
      %3292 = vmatmul.mubr.bf16.gmra.mxu0 %v3165
      %v3293 = vpop.f32.mrf.mxu0
      %v3294 = vadd.f32 0.0, %v3293
      %v3295 = vpop.f32.mrf.mxu0
      %v3296 = vpop.f32.mrf.mxu0
      %v3297 = vadd.f32 0.0, %v3296
      %v3298 = vpop.f32.mrf.mxu0
      %3299 = vmatprep.mubr.bf16.mxu0 0
      %3300 = vmatmul.mubr.bf16.gmra.mxu0 %v3166
      %v3301 = vpop.f32.mrf.mxu0
      %v3302 = vadd.f32 0.0, %v3301
      %v3303 = vpop.f32.mrf.mxu0
      %v3304 = vpop.f32.mrf.mxu0
      %v3305 = vadd.f32 0.0, %v3304
      %v3306 = vpop.f32.mrf.mxu0
      %3307 = vmatprep.mubr.bf16.mxu0 0
      %3308 = vmatmul.mubr.bf16.gmra.mxu0 %v3167
      %v3309 = vpop.f32.mrf.mxu0
      %v3310 = vadd.f32 0.0, %v3309
      %v3311 = vpop.f32.mrf.mxu0
      %v3312 = vpop.f32.mrf.mxu0
      %v3313 = vadd.f32 0.0, %v3312
      %v3314 = vpop.f32.mrf.mxu0
      %3315 = vmatprep.mubr.bf16.mxu0 0
      %3316 = vmatmul.mubr.bf16.gmra.mxu0 %v3168
      %v3317 = vpop.f32.mrf.mxu0
      %v3318 = vadd.f32 0.0, %v3317
      %v3319 = vpop.f32.mrf.mxu0
      %v3320 = vpop.f32.mrf.mxu0
      %v3321 = vadd.f32 0.0, %v3320
      %v3322 = vpop.f32.mrf.mxu0
      %3323 = vmatprep.mubr.bf16.mxu0 0
      %3324 = vmatmul.mubr.bf16.gmra.mxu0 %v3169
      %v3325 = vpop.f32.mrf.mxu0
      %v3326 = vadd.f32 0.0, %v3325
      %v3327 = vpop.f32.mrf.mxu0
      %v3328 = vpop.f32.mrf.mxu0
      %v3329 = vadd.f32 0.0, %v3328
      %v3330 = vpop.f32.mrf.mxu0
      %3331 = vmatprep.mubr.bf16.mxu0 0
      %3332 = vmatmul.mubr.bf16.gmra.mxu0 %v3170
      %v3333 = vpop.f32.mrf.mxu0
      %v3334 = vadd.f32 0.0, %v3333
      %v3335 = vpop.f32.mrf.mxu0
      %v3336 = vpop.f32.mrf.mxu0
      %v3337 = vadd.f32 0.0, %v3336
      %v3338 = vpop.f32.mrf.mxu0
      %3339 = vmatprep.mubr.bf16.mxu0 0
      %3340 = vmatmul.mubr.bf16.gmra.mxu0 %v3171
      %v3341 = vpop.f32.mrf.mxu0
      %v3342 = vadd.f32 0.0, %v3341
      %v3343 = vpop.f32.mrf.mxu0
      %v3344 = vpop.f32.mrf.mxu0
      %v3345 = vadd.f32 0.0, %v3344
      %v3346 = vpop.f32.mrf.mxu0
      %3347 = vmatprep.mubr.bf16.mxu0 0
      %3348 = vmatmul.mubr.bf16.gmra.mxu0 %v3172
      %v3349 = vpop.f32.mrf.mxu0
      %v3350 = vadd.f32 0.0, %v3349
      %v3351 = vpop.f32.mrf.mxu0
      %v3352 = vpop.f32.mrf.mxu0
      %v3353 = vadd.f32 0.0, %v3352
      %v3354 = vpop.f32.mrf.mxu0
      %3355 = vmatprep.mubr.bf16.mxu0 0
      %3356 = vmatmul.mubr.bf16.gmra.mxu0 %v3173
      %v3357 = vpop.f32.mrf.mxu0
      %v3358 = vadd.f32 0.0, %v3357
      %v3359 = vpop.f32.mrf.mxu0
      %v3360 = vpop.f32.mrf.mxu0
      %v3361 = vadd.f32 0.0, %v3360
      %v3362 = vpop.f32.mrf.mxu0
      %3363 = vmatprep.mubr.bf16.mxu0 0
      %3364 = vmatmul.mubr.bf16.gmra.mxu0 %v3174
      %v3365 = vpop.f32.mrf.mxu0
      %v3366 = vadd.f32 0.0, %v3365
      %v3367 = vpop.f32.mrf.mxu0
      %v3368 = vpop.f32.mrf.mxu0
      %v3369 = vadd.f32 0.0, %v3368
      %v3370 = vpop.f32.mrf.mxu0
      %3371 = vmatprep.mubr.bf16.mxu0 0
      %3372 = vmatmul.mubr.bf16.gmra.mxu0 %v3175
      %v3373 = vpop.f32.mrf.mxu0
      %v3374 = vadd.f32 0.0, %v3373
      %v3375 = vpop.f32.mrf.mxu0
      %v3376 = vpop.f32.mrf.mxu0
      %v3377 = vadd.f32 0.0, %v3376
      %v3378 = vpop.f32.mrf.mxu0
      %3379 = vmatprep.mubr.bf16.mxu0 0
      %3380 = vmatmul.mubr.bf16.gmra.mxu0 %v3176
      %v3381 = vpop.f32.mrf.mxu0
      %v3382 = vadd.f32 0.0, %v3381
      %v3383 = vpop.f32.mrf.mxu0
      %v3384 = vpop.f32.mrf.mxu0
      %v3385 = vadd.f32 0.0, %v3384
      %v3386 = vpop.f32.mrf.mxu0
      %3387 = vmatprep.mubr.bf16.mxu0 0
      %3388 = vmatmul.mubr.bf16.gmra.mxu0 %v3177
      %v3389 = vpop.f32.mrf.mxu0
      %v3390 = vadd.f32 0.0, %v3389
      %v3391 = vpop.f32.mrf.mxu0
      %v3392 = vpop.f32.mrf.mxu0
      %v3393 = vadd.f32 0.0, %v3392
      %v3394 = vpop.f32.mrf.mxu0
      %3395 = vmatprep.mubr.bf16.mxu0 0
      %3396 = vmatmul.mubr.bf16.gmra.mxu0 %v3178
      %v3397 = vpop.f32.mrf.mxu0
      %v3398 = vadd.f32 0.0, %v3397
      %v3399 = vpop.f32.mrf.mxu0
      %v3400 = vpop.f32.mrf.mxu0
      %v3401 = vadd.f32 0.0, %v3400
      %v3402 = vpop.f32.mrf.mxu0
      %3403 = vdwg.mxu0
      %v3404 = vadd.f32 %v3050, %v3278
      %v3405 = vadd.f32 %v3051, %v3281
      %v3406 = vadd.f32 %v3052, %v3286
      %v3407 = vadd.f32 %v3053, %v3289
      %v3408 = vadd.f32 %v3054, %v3294
      %v3409 = vadd.f32 %v3055, %v3297
      %v3410 = vadd.f32 %v3056, %v3302
      %v3411 = vadd.f32 %v3057, %v3305
      %v3412 = vadd.f32 %v3058, %v3310
      %v3413 = vadd.f32 %v3059, %v3313
      %v3414 = vadd.f32 %v3060, %v3318
      %v3415 = vadd.f32 %v3061, %v3321
      %v3416 = vadd.f32 %v3062, %v3326
      %v3417 = vadd.f32 %v3063, %v3329
      %v3418 = vadd.f32 %v3064, %v3334
      %v3419 = vadd.f32 %v3065, %v3337
      %v3420 = vadd.f32 %v3066, %v3342
      %v3421 = vadd.f32 %v3067, %v3345
      %v3422 = vadd.f32 %v3068, %v3350
      %v3423 = vadd.f32 %v3069, %v3353
      %v3424 = vadd.f32 %v3070, %v3358
      %v3425 = vadd.f32 %v3071, %v3361
      %v3426 = vadd.f32 %v3072, %v3366
      %v3427 = vadd.f32 %v3073, %v3369
      %v3428 = vadd.f32 %v3074, %v3374
      %v3429 = vadd.f32 %v3075, %v3377
      %v3430 = vadd.f32 %v3076, %v3382
      %v3431 = vadd.f32 %v3077, %v3385
      %v3432 = vadd.f32 %v3078, %v3390
      %v3433 = vadd.f32 %v3079, %v3393
      %v3434 = vadd.f32 %v3080, %v3398
      %v3435 = vadd.f32 %v3081, %v3401
      %v3436 = vld [vmem:[%s489 + $0x4] sm:$0xf]
      %v3437 = vld [vmem:[%s489 + $0x8] sm:$0xf]
      %v3438 = vld [vmem:[%s489 + $0xc] sm:$0x1]
      %v3439 = vld [vmem:[%s489 + $0x14] sm:$0xf]
      %v3440 = vld [vmem:[%s489 + $0x18] sm:$0xf]
      %v3441 = vld [vmem:[%s489 + $0x1c] sm:$0x1]
      %v3442 = vld [vmem:[%s489 + $0x24] sm:$0xf]
      %v3443 = vld [vmem:[%s489 + $0x28] sm:$0xf]
      %v3444 = vld [vmem:[%s489 + $0x2c] sm:$0x1]
      %v3445 = vld [vmem:[%s489 + $0x34] sm:$0xf]
      %v3446 = vld [vmem:[%s489 + $0x38] sm:$0xf]
      %v3447 = vld [vmem:[%s489 + $0x3c] sm:$0x1]
      %v3448 = vld [vmem:[%s489 + $0x44] sm:$0xf]
      %v3449 = vld [vmem:[%s489 + $0x48] sm:$0xf]
      %v3450 = vld [vmem:[%s489 + $0x4c] sm:$0x1]
      %v3451 = vld [vmem:[%s489 + $0x54] sm:$0xf]
      %v3452 = vld [vmem:[%s489 + $0x58] sm:$0xf]
      %v3453 = vld [vmem:[%s489 + $0x5c] sm:$0x1]
      %v3454 = vld [vmem:[%s489 + $0x64] sm:$0xf]
      %v3455 = vld [vmem:[%s489 + $0x68] sm:$0xf]
      %v3456 = vld [vmem:[%s489 + $0x6c] sm:$0x1]
      %v3457 = vld [vmem:[%s489 + $0x74] sm:$0xf]
      %v3458 = vld [vmem:[%s489 + $0x78] sm:$0xf]
      %v3459 = vld [vmem:[%s489 + $0x7c] sm:$0x1]
      %v3460 = vld [vmem:[%s489 + $0x84] sm:$0xf]
      %v3461 = vld [vmem:[%s489 + $0x88] sm:$0xf]
      %v3462 = vld [vmem:[%s489 + $0x8c] sm:$0x1]
      %v3463 = vld [vmem:[%s489 + $0x94] sm:$0xf]
      %v3464 = vld [vmem:[%s489 + $0x98] sm:$0xf]
      %v3465 = vld [vmem:[%s489 + $0x9c] sm:$0x1]
      %v3466 = vld [vmem:[%s489 + $0xa4] sm:$0xf]
      %v3467 = vld [vmem:[%s489 + $0xa8] sm:$0xf]
      %v3468 = vld [vmem:[%s489 + $0xac] sm:$0x1]
      %v3469 = vld [vmem:[%s489 + $0xb4] sm:$0xf]
      %v3470 = vld [vmem:[%s489 + $0xb8] sm:$0xf]
      %v3471 = vld [vmem:[%s489 + $0xbc] sm:$0x1]
      %v3472 = vld [vmem:[%s489 + $0xc4] sm:$0xf]
      %v3473 = vld [vmem:[%s489 + $0xc8] sm:$0xf]
      %v3474 = vld [vmem:[%s489 + $0xcc] sm:$0x1]
      %v3475 = vld [vmem:[%s489 + $0xd4] sm:$0xf]
      %v3476 = vld [vmem:[%s489 + $0xd8] sm:$0xf]
      %v3477 = vld [vmem:[%s489 + $0xdc] sm:$0x1]
      %v3478 = vld [vmem:[%s489 + $0xe4] sm:$0xf]
      %v3479 = vld [vmem:[%s489 + $0xe8] sm:$0xf]
      %v3480 = vld [vmem:[%s489 + $0xec] sm:$0x1]
      %v3481 = vld [vmem:[%s489 + $0xf4] sm:$0xf]
      %v3482 = vld [vmem:[%s489 + $0xf8] sm:$0xf]
      %v3483 = vld [vmem:[%s489 + $0xfc] sm:$0x1]
      %v3485 = vshrl.u32 %v3436, 16
      %v3487 = vrot.slane %v3485, 4
      %v3488 = vshll.u32 %v3436, 16
      %v3490 = vrot.slane %v3488, 5
      %v3491 = vor.u32 %v3487, %v3490
      %v3492 = vrot.slane %v3491, 4
      %v3494 = vshll.u32 %v3437, 16
      %v3496 = vrot.slane %v3494, 5
      %v3497 = vsel %vm1653, %v3492, %v3496
      %v3498 = vshrl.u32 %v3437, 16
      %v3500 = vrot.slane %v3498, 4
      %v3501 = vor.u32 %v3500, %v3496
      %v3502 = vrot.slane %v3501, 4
      %v3504 = vshll.u32 %v3438, 16
      %v3506 = vrot.slane %v3504, 5
      %v3507 = vsel %vm1653, %v3502, %v3506
      %v3509 = vshrl.u32 %v3439, 16
      %v3511 = vrot.slane %v3509, 4
      %v3512 = vshll.u32 %v3439, 16
      %v3514 = vrot.slane %v3512, 5
      %v3515 = vor.u32 %v3511, %v3514
      %v3516 = vrot.slane %v3515, 4
      %v3518 = vshll.u32 %v3440, 16
      %v3520 = vrot.slane %v3518, 5
      %v3521 = vsel %vm1653, %v3516, %v3520
      %v3522 = vshrl.u32 %v3440, 16
      %v3524 = vrot.slane %v3522, 4
      %v3525 = vor.u32 %v3524, %v3520
      %v3526 = vrot.slane %v3525, 4
      %v3528 = vshll.u32 %v3441, 16
      %v3530 = vrot.slane %v3528, 5
      %v3531 = vsel %vm1653, %v3526, %v3530
      %v3533 = vshrl.u32 %v3442, 16
      %v3535 = vrot.slane %v3533, 4
      %v3536 = vshll.u32 %v3442, 16
      %v3538 = vrot.slane %v3536, 5
      %v3539 = vor.u32 %v3535, %v3538
      %v3540 = vrot.slane %v3539, 4
      %v3542 = vshll.u32 %v3443, 16
      %v3544 = vrot.slane %v3542, 5
      %v3545 = vsel %vm1653, %v3540, %v3544
      %v3546 = vshrl.u32 %v3443, 16
      %v3548 = vrot.slane %v3546, 4
      %v3549 = vor.u32 %v3548, %v3544
      %v3550 = vrot.slane %v3549, 4
      %v3552 = vshll.u32 %v3444, 16
      %v3554 = vrot.slane %v3552, 5
      %v3555 = vsel %vm1653, %v3550, %v3554
      %v3557 = vshrl.u32 %v3445, 16
      %v3559 = vrot.slane %v3557, 4
      %v3560 = vshll.u32 %v3445, 16
      %v3562 = vrot.slane %v3560, 5
      %v3563 = vor.u32 %v3559, %v3562
      %v3564 = vrot.slane %v3563, 4
      %v3566 = vshll.u32 %v3446, 16
      %v3568 = vrot.slane %v3566, 5
      %v3569 = vsel %vm1653, %v3564, %v3568
      %v3570 = vshrl.u32 %v3446, 16
      %v3572 = vrot.slane %v3570, 4
      %v3573 = vor.u32 %v3572, %v3568
      %v3574 = vrot.slane %v3573, 4
      %v3576 = vshll.u32 %v3447, 16
      %v3578 = vrot.slane %v3576, 5
      %v3579 = vsel %vm1653, %v3574, %v3578
      %v3581 = vshrl.u32 %v3448, 16
      %v3583 = vrot.slane %v3581, 4
      %v3584 = vshll.u32 %v3448, 16
      %v3586 = vrot.slane %v3584, 5
      %v3587 = vor.u32 %v3583, %v3586
      %v3588 = vrot.slane %v3587, 4
      %v3590 = vshll.u32 %v3449, 16
      %v3592 = vrot.slane %v3590, 5
      %v3593 = vsel %vm1653, %v3588, %v3592
      %v3594 = vshrl.u32 %v3449, 16
      %v3596 = vrot.slane %v3594, 4
      %v3597 = vor.u32 %v3596, %v3592
      %v3598 = vrot.slane %v3597, 4
      %v3600 = vshll.u32 %v3450, 16
      %v3602 = vrot.slane %v3600, 5
      %v3603 = vsel %vm1653, %v3598, %v3602
      %v3605 = vshrl.u32 %v3451, 16
      %v3607 = vrot.slane %v3605, 4
      %v3608 = vshll.u32 %v3451, 16
      %v3610 = vrot.slane %v3608, 5
      %v3611 = vor.u32 %v3607, %v3610
      %v3612 = vrot.slane %v3611, 4
      %v3614 = vshll.u32 %v3452, 16
      %v3616 = vrot.slane %v3614, 5
      %v3617 = vsel %vm1653, %v3612, %v3616
      %v3618 = vshrl.u32 %v3452, 16
      %v3620 = vrot.slane %v3618, 4
      %v3621 = vor.u32 %v3620, %v3616
      %v3622 = vrot.slane %v3621, 4
      %v3624 = vshll.u32 %v3453, 16
      %v3626 = vrot.slane %v3624, 5
      %v3627 = vsel %vm1653, %v3622, %v3626
      %v3629 = vshrl.u32 %v3454, 16
      %v3631 = vrot.slane %v3629, 4
      %v3632 = vshll.u32 %v3454, 16
      %v3634 = vrot.slane %v3632, 5
      %v3635 = vor.u32 %v3631, %v3634
      %v3636 = vrot.slane %v3635, 4
      %v3638 = vshll.u32 %v3455, 16
      %v3640 = vrot.slane %v3638, 5
      %v3641 = vsel %vm1653, %v3636, %v3640
      %v3642 = vshrl.u32 %v3455, 16
      %v3644 = vrot.slane %v3642, 4
      %v3645 = vor.u32 %v3644, %v3640
      %v3646 = vrot.slane %v3645, 4
      %v3648 = vshll.u32 %v3456, 16
      %v3650 = vrot.slane %v3648, 5
      %v3651 = vsel %vm1653, %v3646, %v3650
      %v3653 = vshrl.u32 %v3457, 16
      %v3655 = vrot.slane %v3653, 4
      %v3656 = vshll.u32 %v3457, 16
      %v3658 = vrot.slane %v3656, 5
      %v3659 = vor.u32 %v3655, %v3658
      %v3660 = vrot.slane %v3659, 4
      %v3662 = vshll.u32 %v3458, 16
      %v3664 = vrot.slane %v3662, 5
      %v3665 = vsel %vm1653, %v3660, %v3664
      %v3666 = vshrl.u32 %v3458, 16
      %v3668 = vrot.slane %v3666, 4
      %v3669 = vor.u32 %v3668, %v3664
      %v3670 = vrot.slane %v3669, 4
      %v3672 = vshll.u32 %v3459, 16
      %v3674 = vrot.slane %v3672, 5
      %v3675 = vsel %vm1653, %v3670, %v3674
      %v3677 = vshrl.u32 %v3460, 16
      %v3679 = vrot.slane %v3677, 4
      %v3680 = vshll.u32 %v3460, 16
      %v3682 = vrot.slane %v3680, 5
      %v3683 = vor.u32 %v3679, %v3682
      %v3684 = vrot.slane %v3683, 4
      %v3686 = vshll.u32 %v3461, 16
      %v3688 = vrot.slane %v3686, 5
      %v3689 = vsel %vm1653, %v3684, %v3688
      %v3690 = vshrl.u32 %v3461, 16
      %v3692 = vrot.slane %v3690, 4
      %v3693 = vor.u32 %v3692, %v3688
      %v3694 = vrot.slane %v3693, 4
      %v3696 = vshll.u32 %v3462, 16
      %v3698 = vrot.slane %v3696, 5
      %v3699 = vsel %vm1653, %v3694, %v3698
      %v3701 = vshrl.u32 %v3463, 16
      %v3703 = vrot.slane %v3701, 4
      %v3704 = vshll.u32 %v3463, 16
      %v3706 = vrot.slane %v3704, 5
      %v3707 = vor.u32 %v3703, %v3706
      %v3708 = vrot.slane %v3707, 4
      %v3710 = vshll.u32 %v3464, 16
      %v3712 = vrot.slane %v3710, 5
      %v3713 = vsel %vm1653, %v3708, %v3712
      %v3714 = vshrl.u32 %v3464, 16
      %v3716 = vrot.slane %v3714, 4
      %v3717 = vor.u32 %v3716, %v3712
      %v3718 = vrot.slane %v3717, 4
      %v3720 = vshll.u32 %v3465, 16
      %v3722 = vrot.slane %v3720, 5
      %v3723 = vsel %vm1653, %v3718, %v3722
      %v3725 = vshrl.u32 %v3466, 16
      %v3727 = vrot.slane %v3725, 4
      %v3728 = vshll.u32 %v3466, 16
      %v3730 = vrot.slane %v3728, 5
      %v3731 = vor.u32 %v3727, %v3730
      %v3732 = vrot.slane %v3731, 4
      %v3734 = vshll.u32 %v3467, 16
      %v3736 = vrot.slane %v3734, 5
      %v3737 = vsel %vm1653, %v3732, %v3736
      %v3738 = vshrl.u32 %v3467, 16
      %v3740 = vrot.slane %v3738, 4
      %v3741 = vor.u32 %v3740, %v3736
      %v3742 = vrot.slane %v3741, 4
      %v3744 = vshll.u32 %v3468, 16
      %v3746 = vrot.slane %v3744, 5
      %v3747 = vsel %vm1653, %v3742, %v3746
      %v3749 = vshrl.u32 %v3469, 16
      %v3751 = vrot.slane %v3749, 4
      %v3752 = vshll.u32 %v3469, 16
      %v3754 = vrot.slane %v3752, 5
      %v3755 = vor.u32 %v3751, %v3754
      %v3756 = vrot.slane %v3755, 4
      %v3758 = vshll.u32 %v3470, 16
      %v3760 = vrot.slane %v3758, 5
      %v3761 = vsel %vm1653, %v3756, %v3760
      %v3762 = vshrl.u32 %v3470, 16
      %v3764 = vrot.slane %v3762, 4
      %v3765 = vor.u32 %v3764, %v3760
      %v3766 = vrot.slane %v3765, 4
      %v3768 = vshll.u32 %v3471, 16
      %v3770 = vrot.slane %v3768, 5
      %v3771 = vsel %vm1653, %v3766, %v3770
      %v3773 = vshrl.u32 %v3472, 16
      %v3775 = vrot.slane %v3773, 4
      %v3776 = vshll.u32 %v3472, 16
      %v3778 = vrot.slane %v3776, 5
      %v3779 = vor.u32 %v3775, %v3778
      %v3780 = vrot.slane %v3779, 4
      %v3782 = vshll.u32 %v3473, 16
      %v3784 = vrot.slane %v3782, 5
      %v3785 = vsel %vm1653, %v3780, %v3784
      %v3786 = vshrl.u32 %v3473, 16
      %v3788 = vrot.slane %v3786, 4
      %v3789 = vor.u32 %v3788, %v3784
      %v3790 = vrot.slane %v3789, 4
      %v3792 = vshll.u32 %v3474, 16
      %v3794 = vrot.slane %v3792, 5
      %v3795 = vsel %vm1653, %v3790, %v3794
      %v3797 = vshrl.u32 %v3475, 16
      %v3799 = vrot.slane %v3797, 4
      %v3800 = vshll.u32 %v3475, 16
      %v3802 = vrot.slane %v3800, 5
      %v3803 = vor.u32 %v3799, %v3802
      %v3804 = vrot.slane %v3803, 4
      %v3806 = vshll.u32 %v3476, 16
      %v3808 = vrot.slane %v3806, 5
      %v3809 = vsel %vm1653, %v3804, %v3808
      %v3810 = vshrl.u32 %v3476, 16
      %v3812 = vrot.slane %v3810, 4
      %v3813 = vor.u32 %v3812, %v3808
      %v3814 = vrot.slane %v3813, 4
      %v3816 = vshll.u32 %v3477, 16
      %v3818 = vrot.slane %v3816, 5
      %v3819 = vsel %vm1653, %v3814, %v3818
      %v3821 = vshrl.u32 %v3478, 16
      %v3823 = vrot.slane %v3821, 4
      %v3824 = vshll.u32 %v3478, 16
      %v3826 = vrot.slane %v3824, 5
      %v3827 = vor.u32 %v3823, %v3826
      %v3828 = vrot.slane %v3827, 4
      %v3830 = vshll.u32 %v3479, 16
      %v3832 = vrot.slane %v3830, 5
      %v3833 = vsel %vm1653, %v3828, %v3832
      %v3834 = vshrl.u32 %v3479, 16
      %v3836 = vrot.slane %v3834, 4
      %v3837 = vor.u32 %v3836, %v3832
      %v3838 = vrot.slane %v3837, 4
      %v3840 = vshll.u32 %v3480, 16
      %v3842 = vrot.slane %v3840, 5
      %v3843 = vsel %vm1653, %v3838, %v3842
      %v3845 = vshrl.u32 %v3481, 16
      %v3847 = vrot.slane %v3845, 4
      %v3848 = vshll.u32 %v3481, 16
      %v3850 = vrot.slane %v3848, 5
      %v3851 = vor.u32 %v3847, %v3850
      %v3852 = vrot.slane %v3851, 4
      %v3854 = vshll.u32 %v3482, 16
      %v3856 = vrot.slane %v3854, 5
      %v3857 = vsel %vm1653, %v3852, %v3856
      %v3858 = vshrl.u32 %v3482, 16
      %v3860 = vrot.slane %v3858, 4
      %v3861 = vor.u32 %v3860, %v3856
      %v3862 = vrot.slane %v3861, 4
      %v3864 = vshll.u32 %v3483, 16
      %v3866 = vrot.slane %v3864, 5
      %v3867 = vsel %vm1653, %v3862, %v3866
      %s3868 = scalar_lea.vmem %s1, 320
      %v3869 = vld [vmem:[%s3868] sm:$0xf]
      %v3870 = vld [vmem:[%s3868 + $0x4] sm:$0xf]
      %v3871 = vld [vmem:[%s3868 + $0x8] sm:$0xf]
      %v3872 = vld [vmem:[%s3868 + $0xc] sm:$0xf]
      %v3873 = vld [vmem:[%s3868 + $0x10] sm:$0xf]
      %v3874 = vld [vmem:[%s3868 + $0x14] sm:$0xf]
      %v3875 = vld [vmem:[%s3868 + $0x18] sm:$0xf]
      %v3876 = vld [vmem:[%s3868 + $0x1c] sm:$0xf]
      %v3877 = vld [vmem:[%s3868 + $0x20] sm:$0xf]
      %v3878 = vld [vmem:[%s3868 + $0x24] sm:$0xf]
      %v3879 = vld [vmem:[%s3868 + $0x28] sm:$0xf]
      %v3880 = vld [vmem:[%s3868 + $0x2c] sm:$0xf]
      %v3881 = vld [vmem:[%s3868 + $0x30] sm:$0xf]
      %v3882 = vld [vmem:[%s3868 + $0x34] sm:$0xf]
      %v3883 = vld [vmem:[%s3868 + $0x38] sm:$0xf]
      %v3884 = vld [vmem:[%s3868 + $0x3c] sm:$0xf]
      %v3885 = vunpack.c.l.b16 %v3497
      %v3886 = vunpack.c.l.b16 %v3507
      %v3887 = vunpack.c.l.b16 %v3521
      %v3888 = vunpack.c.l.b16 %v3531
      %v3889 = vunpack.c.l.b16 %v3545
      %v3890 = vunpack.c.l.b16 %v3555
      %v3891 = vunpack.c.l.b16 %v3569
      %v3892 = vunpack.c.l.b16 %v3579
      %v3893 = vunpack.c.l.b16 %v3593
      %v3894 = vunpack.c.l.b16 %v3603
      %v3895 = vunpack.c.l.b16 %v3617
      %v3896 = vunpack.c.l.b16 %v3627
      %v3897 = vunpack.c.l.b16 %v3641
      %v3898 = vunpack.c.l.b16 %v3651
      %v3899 = vunpack.c.l.b16 %v3665
      %v3900 = vunpack.c.l.b16 %v3675
      %v3901 = vunpack.c.l.b16 %v3689
      %v3902 = vunpack.c.l.b16 %v3699
      %v3903 = vunpack.c.l.b16 %v3713
      %v3904 = vunpack.c.l.b16 %v3723
      %v3905 = vunpack.c.l.b16 %v3737
      %v3906 = vunpack.c.l.b16 %v3747
      %v3907 = vunpack.c.l.b16 %v3761
      %v3908 = vunpack.c.l.b16 %v3771
      %v3909 = vunpack.c.l.b16 %v3785
      %v3910 = vunpack.c.l.b16 %v3795
      %v3911 = vunpack.c.l.b16 %v3809
      %v3912 = vunpack.c.l.b16 %v3819
      %v3913 = vunpack.c.l.b16 %v3833
      %v3914 = vunpack.c.l.b16 %v3843
      %v3915 = vunpack.c.l.b16 %v3857
      %v3916 = vunpack.c.l.b16 %v3867
      %v3917 = vpack.c.b16 %v3886, %v3885
      %v3918 = vpack.c.b16 %v3888, %v3887
      %v3919 = vpack.c.b16 %v3890, %v3889
      %v3920 = vpack.c.b16 %v3892, %v3891
      %v3921 = vpack.c.b16 %v3894, %v3893
      %v3922 = vpack.c.b16 %v3896, %v3895
      %v3923 = vpack.c.b16 %v3898, %v3897
      %v3924 = vpack.c.b16 %v3900, %v3899
      %v3925 = vpack.c.b16 %v3902, %v3901
      %v3926 = vpack.c.b16 %v3904, %v3903
      %v3927 = vpack.c.b16 %v3906, %v3905
      %v3928 = vpack.c.b16 %v3908, %v3907
      %v3929 = vpack.c.b16 %v3910, %v3909
      %v3930 = vpack.c.b16 %v3912, %v3911
      %v3931 = vpack.c.b16 %v3914, %v3913
      %v3932 = vpack.c.b16 %v3916, %v3915
      %v3965 = vunpack.c.l.b16 %v3869
      %v3966 = vunpack.c.l.b16 %v3870
      %v3967 = vunpack.c.l.b16 %v3871
      %v3968 = vunpack.c.l.b16 %v3872
      %v3969 = vunpack.c.l.b16 %v3873
      %v3970 = vunpack.c.l.b16 %v3874
      %v3971 = vunpack.c.l.b16 %v3875
      %v3972 = vunpack.c.l.b16 %v3876
      %v3973 = vunpack.c.l.b16 %v3877
      %v3974 = vunpack.c.l.b16 %v3878
      %v3975 = vunpack.c.l.b16 %v3879
      %v3976 = vunpack.c.l.b16 %v3880
      %v3977 = vunpack.c.l.b16 %v3881
      %v3978 = vunpack.c.l.b16 %v3882
      %v3979 = vunpack.c.l.b16 %v3883
      %v3980 = vunpack.c.l.b16 %v3884
      %v3981 = vpack.c.b16 %v3966, %v3965
      %v3982 = vpack.c.b16 %v3968, %v3967
      %v3983 = vpack.c.b16 %v3970, %v3969
      %v3984 = vpack.c.b16 %v3972, %v3971
      %v3985 = vpack.c.b16 %v3974, %v3973
      %v3986 = vpack.c.b16 %v3976, %v3975
      %v3987 = vpack.c.b16 %v3978, %v3977
      %v3988 = vpack.c.b16 %v3980, %v3979
      %3997 = vmatprep.subr.bf16.mxu0 0
      %3998 = vmatpush1.bf16.msra.mxu0 %v3988
      %3999 = vmatprep.subr.bf16.mxu0 0
      %4000 = vmatpush1.bf16.msra.mxu0 %v3987
      %4001 = vmatprep.subr.bf16.mxu0 0
      %4002 = vmatpush1.bf16.msra.mxu0 %v3986
      %4003 = vmatprep.subr.bf16.mxu0 0
      %4004 = vmatpush1.bf16.msra.mxu0 %v3985
      %4005 = vmatprep.subr.bf16.mxu0 0
      %4006 = vmatpush1.bf16.msra.mxu0 %v3984
      %4007 = vmatprep.subr.bf16.mxu0 0
      %4008 = vmatpush1.bf16.msra.mxu0 %v3983
      %4009 = vmatprep.subr.bf16.mxu0 0
      %4010 = vmatpush1.bf16.msra.mxu0 %v3982
      %4011 = vmatprep.subr.bf16.mxu0 0
      %4012 = vmatpush1.bf16.msra.mxu0 %v3981
      %4013 = vmatprep.subr.bf16.mxu0 0
      %4014 = vmatpush2.bf16.msra.mxu0 0
      %4015 = vmatprep.subr.bf16.mxu0 0
      %4016 = vmatpush2.bf16.msra.mxu0 0
      %4017 = vmatprep.subr.bf16.mxu0 0
      %4018 = vmatpush2.bf16.msra.mxu0 0
      %4019 = vmatprep.subr.bf16.mxu0 0
      %4020 = vmatpush2.bf16.msra.mxu0 0
      %4021 = vmatprep.subr.bf16.mxu0 0
      %4022 = vmatpush2.bf16.msra.mxu0 0
      %4023 = vmatprep.subr.bf16.mxu0 0
      %4024 = vmatpush2.bf16.msra.mxu0 0
      %4025 = vmatprep.subr.bf16.mxu0 0
      %4026 = vmatpush2.bf16.msra.mxu0 0
      %4027 = vmatprep.subr.bf16.mxu0 0
      %4028 = vmatpush2.bf16.msra.mxu0 0
      %4029 = vmatprep.mubr.bf16.mxu0 0
      %4030 = vmatmul.mubr.bf16.gmra.mxu0 %v3917
      %v4031 = vpop.f32.mrf.mxu0
      %v4032 = vadd.f32 0.0, %v4031
      %v4033 = vpop.f32.mrf.mxu0
      %v4034 = vpop.f32.mrf.mxu0
      %v4035 = vadd.f32 0.0, %v4034
      %v4036 = vpop.f32.mrf.mxu0
      %4037 = vmatprep.mubr.bf16.mxu0 0
      %4038 = vmatmul.mubr.bf16.gmra.mxu0 %v3918
      %v4039 = vpop.f32.mrf.mxu0
      %v4040 = vadd.f32 0.0, %v4039
      %v4041 = vpop.f32.mrf.mxu0
      %v4042 = vpop.f32.mrf.mxu0
      %v4043 = vadd.f32 0.0, %v4042
      %v4044 = vpop.f32.mrf.mxu0
      %4045 = vmatprep.mubr.bf16.mxu0 0
      %4046 = vmatmul.mubr.bf16.gmra.mxu0 %v3919
      %v4047 = vpop.f32.mrf.mxu0
      %v4048 = vadd.f32 0.0, %v4047
      %v4049 = vpop.f32.mrf.mxu0
      %v4050 = vpop.f32.mrf.mxu0
      %v4051 = vadd.f32 0.0, %v4050
      %v4052 = vpop.f32.mrf.mxu0
      %4053 = vmatprep.mubr.bf16.mxu0 0
      %4054 = vmatmul.mubr.bf16.gmra.mxu0 %v3920
      %v4055 = vpop.f32.mrf.mxu0
      %v4056 = vadd.f32 0.0, %v4055
      %v4057 = vpop.f32.mrf.mxu0
      %v4058 = vpop.f32.mrf.mxu0
      %v4059 = vadd.f32 0.0, %v4058
      %v4060 = vpop.f32.mrf.mxu0
      %4061 = vmatprep.mubr.bf16.mxu0 0
      %4062 = vmatmul.mubr.bf16.gmra.mxu0 %v3921
      %v4063 = vpop.f32.mrf.mxu0
      %v4064 = vadd.f32 0.0, %v4063
      %v4065 = vpop.f32.mrf.mxu0
      %v4066 = vpop.f32.mrf.mxu0
      %v4067 = vadd.f32 0.0, %v4066
      %v4068 = vpop.f32.mrf.mxu0
      %4069 = vmatprep.mubr.bf16.mxu0 0
      %4070 = vmatmul.mubr.bf16.gmra.mxu0 %v3922
      %v4071 = vpop.f32.mrf.mxu0
      %v4072 = vadd.f32 0.0, %v4071
      %v4073 = vpop.f32.mrf.mxu0
      %v4074 = vpop.f32.mrf.mxu0
      %v4075 = vadd.f32 0.0, %v4074
      %v4076 = vpop.f32.mrf.mxu0
      %4077 = vmatprep.mubr.bf16.mxu0 0
      %4078 = vmatmul.mubr.bf16.gmra.mxu0 %v3923
      %v4079 = vpop.f32.mrf.mxu0
      %v4080 = vadd.f32 0.0, %v4079
      %v4081 = vpop.f32.mrf.mxu0
      %v4082 = vpop.f32.mrf.mxu0
      %v4083 = vadd.f32 0.0, %v4082
      %v4084 = vpop.f32.mrf.mxu0
      %4085 = vmatprep.mubr.bf16.mxu0 0
      %4086 = vmatmul.mubr.bf16.gmra.mxu0 %v3924
      %v4087 = vpop.f32.mrf.mxu0
      %v4088 = vadd.f32 0.0, %v4087
      %v4089 = vpop.f32.mrf.mxu0
      %v4090 = vpop.f32.mrf.mxu0
      %v4091 = vadd.f32 0.0, %v4090
      %v4092 = vpop.f32.mrf.mxu0
      %4093 = vmatprep.mubr.bf16.mxu0 0
      %4094 = vmatmul.mubr.bf16.gmra.mxu0 %v3925
      %v4095 = vpop.f32.mrf.mxu0
      %v4096 = vadd.f32 0.0, %v4095
      %v4097 = vpop.f32.mrf.mxu0
      %v4098 = vpop.f32.mrf.mxu0
      %v4099 = vadd.f32 0.0, %v4098
      %v4100 = vpop.f32.mrf.mxu0
      %4101 = vmatprep.mubr.bf16.mxu0 0
      %4102 = vmatmul.mubr.bf16.gmra.mxu0 %v3926
      %v4103 = vpop.f32.mrf.mxu0
      %v4104 = vadd.f32 0.0, %v4103
      %v4105 = vpop.f32.mrf.mxu0
      %v4106 = vpop.f32.mrf.mxu0
      %v4107 = vadd.f32 0.0, %v4106
      %v4108 = vpop.f32.mrf.mxu0
      %4109 = vmatprep.mubr.bf16.mxu0 0
      %4110 = vmatmul.mubr.bf16.gmra.mxu0 %v3927
      %v4111 = vpop.f32.mrf.mxu0
      %v4112 = vadd.f32 0.0, %v4111
      %v4113 = vpop.f32.mrf.mxu0
      %v4114 = vpop.f32.mrf.mxu0
      %v4115 = vadd.f32 0.0, %v4114
      %v4116 = vpop.f32.mrf.mxu0
      %4117 = vmatprep.mubr.bf16.mxu0 0
      %4118 = vmatmul.mubr.bf16.gmra.mxu0 %v3928
      %v4119 = vpop.f32.mrf.mxu0
      %v4120 = vadd.f32 0.0, %v4119
      %v4121 = vpop.f32.mrf.mxu0
      %v4122 = vpop.f32.mrf.mxu0
      %v4123 = vadd.f32 0.0, %v4122
      %v4124 = vpop.f32.mrf.mxu0
      %4125 = vmatprep.mubr.bf16.mxu0 0
      %4126 = vmatmul.mubr.bf16.gmra.mxu0 %v3929
      %v4127 = vpop.f32.mrf.mxu0
      %v4128 = vadd.f32 0.0, %v4127
      %v4129 = vpop.f32.mrf.mxu0
      %v4130 = vpop.f32.mrf.mxu0
      %v4131 = vadd.f32 0.0, %v4130
      %v4132 = vpop.f32.mrf.mxu0
      %4133 = vmatprep.mubr.bf16.mxu0 0
      %4134 = vmatmul.mubr.bf16.gmra.mxu0 %v3930
      %v4135 = vpop.f32.mrf.mxu0
      %v4136 = vadd.f32 0.0, %v4135
      %v4137 = vpop.f32.mrf.mxu0
      %v4138 = vpop.f32.mrf.mxu0
      %v4139 = vadd.f32 0.0, %v4138
      %v4140 = vpop.f32.mrf.mxu0
      %4141 = vmatprep.mubr.bf16.mxu0 0
      %4142 = vmatmul.mubr.bf16.gmra.mxu0 %v3931
      %v4143 = vpop.f32.mrf.mxu0
      %v4144 = vadd.f32 0.0, %v4143
      %v4145 = vpop.f32.mrf.mxu0
      %v4146 = vpop.f32.mrf.mxu0
      %v4147 = vadd.f32 0.0, %v4146
      %v4148 = vpop.f32.mrf.mxu0
      %4149 = vmatprep.mubr.bf16.mxu0 0
      %4150 = vmatmul.mubr.bf16.gmra.mxu0 %v3932
      %v4151 = vpop.f32.mrf.mxu0
      %v4152 = vadd.f32 0.0, %v4151
      %v4153 = vpop.f32.mrf.mxu0
      %v4154 = vpop.f32.mrf.mxu0
      %v4155 = vadd.f32 0.0, %v4154
      %v4156 = vpop.f32.mrf.mxu0
      %4157 = vdwg.mxu0
      %v4158 = vadd.f32 %v3404, %v4032
      %v4159 = vadd.f32 %v3405, %v4035
      %v4160 = vadd.f32 %v3406, %v4040
      %v4161 = vadd.f32 %v3407, %v4043
      %v4162 = vadd.f32 %v3408, %v4048
      %v4163 = vadd.f32 %v3409, %v4051
      %v4164 = vadd.f32 %v3410, %v4056
      %v4165 = vadd.f32 %v3411, %v4059
      %v4166 = vadd.f32 %v3412, %v4064
      %v4167 = vadd.f32 %v3413, %v4067
      %v4168 = vadd.f32 %v3414, %v4072
      %v4169 = vadd.f32 %v3415, %v4075
      %v4170 = vadd.f32 %v3416, %v4080
      %v4171 = vadd.f32 %v3417, %v4083
      %v4172 = vadd.f32 %v3418, %v4088
      %v4173 = vadd.f32 %v3419, %v4091
      %v4174 = vadd.f32 %v3420, %v4096
      %v4175 = vadd.f32 %v3421, %v4099
      %v4176 = vadd.f32 %v3422, %v4104
      %v4177 = vadd.f32 %v3423, %v4107
      %v4178 = vadd.f32 %v3424, %v4112
      %v4179 = vadd.f32 %v3425, %v4115
      %v4180 = vadd.f32 %v3426, %v4120
      %v4181 = vadd.f32 %v3427, %v4123
      %v4182 = vadd.f32 %v3428, %v4128
      %v4183 = vadd.f32 %v3429, %v4131
      %v4184 = vadd.f32 %v3430, %v4136
      %v4185 = vadd.f32 %v3431, %v4139
      %v4186 = vadd.f32 %v3432, %v4144
      %v4187 = vadd.f32 %v3433, %v4147
      %v4188 = vadd.f32 %v3434, %v4152
      %v4189 = vadd.f32 %v3435, %v4155
      %s4190 = sadd.s32 0, 2
      %s4191 = smul.u32 %s4190, 4
      %s4192 = smul.addr %s4191, 4
      %s4193 = scalar_lea.vmem [#allocation2], %s4192
      %v4194 = vld [vmem:[%s4193] sm:$0x8]
      %v4195 = vld [vmem:[%s4193 + $0x4] sm:$0xf]
      %v4196 = vld [vmem:[%s4193 + $0x8] sm:$0xf]
      %v4197 = vld [vmem:[%s4193 + $0x10] sm:$0x8]
      %v4198 = vld [vmem:[%s4193 + $0x14] sm:$0xf]
      %v4199 = vld [vmem:[%s4193 + $0x18] sm:$0xf]
      %v4200 = vld [vmem:[%s4193 + $0x20] sm:$0x8]
      %v4201 = vld [vmem:[%s4193 + $0x24] sm:$0xf]
      %v4202 = vld [vmem:[%s4193 + $0x28] sm:$0xf]
      %v4203 = vld [vmem:[%s4193 + $0x30] sm:$0x8]
      %v4204 = vld [vmem:[%s4193 + $0x34] sm:$0xf]
      %v4205 = vld [vmem:[%s4193 + $0x38] sm:$0xf]
      %v4206 = vld [vmem:[%s4193 + $0x40] sm:$0x8]
      %v4207 = vld [vmem:[%s4193 + $0x44] sm:$0xf]
      %v4208 = vld [vmem:[%s4193 + $0x48] sm:$0xf]
      %v4209 = vld [vmem:[%s4193 + $0x50] sm:$0x8]
      %v4210 = vld [vmem:[%s4193 + $0x54] sm:$0xf]
      %v4211 = vld [vmem:[%s4193 + $0x58] sm:$0xf]
      %v4212 = vld [vmem:[%s4193 + $0x60] sm:$0x8]
      %v4213 = vld [vmem:[%s4193 + $0x64] sm:$0xf]
      %v4214 = vld [vmem:[%s4193 + $0x68] sm:$0xf]
      %v4215 = vld [vmem:[%s4193 + $0x70] sm:$0x8]
      %v4216 = vld [vmem:[%s4193 + $0x74] sm:$0xf]
      %v4217 = vld [vmem:[%s4193 + $0x78] sm:$0xf]
      %v4218 = vld [vmem:[%s4193 + $0x80] sm:$0x8]
      %v4219 = vld [vmem:[%s4193 + $0x84] sm:$0xf]
      %v4220 = vld [vmem:[%s4193 + $0x88] sm:$0xf]
      %v4221 = vld [vmem:[%s4193 + $0x90] sm:$0x8]
      %v4222 = vld [vmem:[%s4193 + $0x94] sm:$0xf]
      %v4223 = vld [vmem:[%s4193 + $0x98] sm:$0xf]
      %v4224 = vld [vmem:[%s4193 + $0xa0] sm:$0x8]
      %v4225 = vld [vmem:[%s4193 + $0xa4] sm:$0xf]
      %v4226 = vld [vmem:[%s4193 + $0xa8] sm:$0xf]
      %v4227 = vld [vmem:[%s4193 + $0xb0] sm:$0x8]
      %v4228 = vld [vmem:[%s4193 + $0xb4] sm:$0xf]
      %v4229 = vld [vmem:[%s4193 + $0xb8] sm:$0xf]
      %v4230 = vld [vmem:[%s4193 + $0xc0] sm:$0x8]
      %v4231 = vld [vmem:[%s4193 + $0xc4] sm:$0xf]
      %v4232 = vld [vmem:[%s4193 + $0xc8] sm:$0xf]
      %v4233 = vld [vmem:[%s4193 + $0xd0] sm:$0x8]
      %v4234 = vld [vmem:[%s4193 + $0xd4] sm:$0xf]
      %v4235 = vld [vmem:[%s4193 + $0xd8] sm:$0xf]
      %v4236 = vld [vmem:[%s4193 + $0xe0] sm:$0x8]
      %v4237 = vld [vmem:[%s4193 + $0xe4] sm:$0xf]
      %v4238 = vld [vmem:[%s4193 + $0xe8] sm:$0xf]
      %v4239 = vld [vmem:[%s4193 + $0xf0] sm:$0x8]
      %v4240 = vld [vmem:[%s4193 + $0xf4] sm:$0xf]
      %v4241 = vld [vmem:[%s4193 + $0xf8] sm:$0xf]
      %v4243 = vshrl.u32 %v4194, 16
      %v4245 = vrot.slane %v4243, 7
      %v4246 = vrot.slane %v4245, 4
      %v4248 = vshrl.u32 %v4195, 16
      %v4250 = vrot.slane %v4248, 7
      %v4251 = vshll.u32 %v4195, 16
      %v4253 = vor.u32 %v4250, %v4251
      %v4254 = vsel %vm575, %v4246, %v4253
      %v4255 = vrot.slane %v4250, 4
      %v4257 = vshrl.u32 %v4196, 16
      %v4259 = vrot.slane %v4257, 7
      %v4260 = vshll.u32 %v4196, 16
      %v4262 = vor.u32 %v4259, %v4260
      %v4263 = vsel %vm575, %v4255, %v4262
      %v4265 = vshrl.u32 %v4197, 16
      %v4267 = vrot.slane %v4265, 7
      %v4268 = vrot.slane %v4267, 4
      %v4270 = vshrl.u32 %v4198, 16
      %v4272 = vrot.slane %v4270, 7
      %v4273 = vshll.u32 %v4198, 16
      %v4275 = vor.u32 %v4272, %v4273
      %v4276 = vsel %vm575, %v4268, %v4275
      %v4277 = vrot.slane %v4272, 4
      %v4279 = vshrl.u32 %v4199, 16
      %v4281 = vrot.slane %v4279, 7
      %v4282 = vshll.u32 %v4199, 16
      %v4284 = vor.u32 %v4281, %v4282
      %v4285 = vsel %vm575, %v4277, %v4284
      %v4287 = vshrl.u32 %v4200, 16
      %v4289 = vrot.slane %v4287, 7
      %v4290 = vrot.slane %v4289, 4
      %v4292 = vshrl.u32 %v4201, 16
      %v4294 = vrot.slane %v4292, 7
      %v4295 = vshll.u32 %v4201, 16
      %v4297 = vor.u32 %v4294, %v4295
      %v4298 = vsel %vm575, %v4290, %v4297
      %v4299 = vrot.slane %v4294, 4
      %v4301 = vshrl.u32 %v4202, 16
      %v4303 = vrot.slane %v4301, 7
      %v4304 = vshll.u32 %v4202, 16
      %v4306 = vor.u32 %v4303, %v4304
      %v4307 = vsel %vm575, %v4299, %v4306
      %v4309 = vshrl.u32 %v4203, 16
      %v4311 = vrot.slane %v4309, 7
      %v4312 = vrot.slane %v4311, 4
      %v4314 = vshrl.u32 %v4204, 16
      %v4316 = vrot.slane %v4314, 7
      %v4317 = vshll.u32 %v4204, 16
      %v4319 = vor.u32 %v4316, %v4317
      %v4320 = vsel %vm575, %v4312, %v4319
      %v4321 = vrot.slane %v4316, 4
      %v4323 = vshrl.u32 %v4205, 16
      %v4325 = vrot.slane %v4323, 7
      %v4326 = vshll.u32 %v4205, 16
      %v4328 = vor.u32 %v4325, %v4326
      %v4329 = vsel %vm575, %v4321, %v4328
      %v4331 = vshrl.u32 %v4206, 16
      %v4333 = vrot.slane %v4331, 7
      %v4334 = vrot.slane %v4333, 4
      %v4336 = vshrl.u32 %v4207, 16
      %v4338 = vrot.slane %v4336, 7
      %v4339 = vshll.u32 %v4207, 16
      %v4341 = vor.u32 %v4338, %v4339
      %v4342 = vsel %vm575, %v4334, %v4341
      %v4343 = vrot.slane %v4338, 4
      %v4345 = vshrl.u32 %v4208, 16
      %v4347 = vrot.slane %v4345, 7
      %v4348 = vshll.u32 %v4208, 16
      %v4350 = vor.u32 %v4347, %v4348
      %v4351 = vsel %vm575, %v4343, %v4350
      %v4353 = vshrl.u32 %v4209, 16
      %v4355 = vrot.slane %v4353, 7
      %v4356 = vrot.slane %v4355, 4
      %v4358 = vshrl.u32 %v4210, 16
      %v4360 = vrot.slane %v4358, 7
      %v4361 = vshll.u32 %v4210, 16
      %v4363 = vor.u32 %v4360, %v4361
      %v4364 = vsel %vm575, %v4356, %v4363
      %v4365 = vrot.slane %v4360, 4
      %v4367 = vshrl.u32 %v4211, 16
      %v4369 = vrot.slane %v4367, 7
      %v4370 = vshll.u32 %v4211, 16
      %v4372 = vor.u32 %v4369, %v4370
      %v4373 = vsel %vm575, %v4365, %v4372
      %v4375 = vshrl.u32 %v4212, 16
      %v4377 = vrot.slane %v4375, 7
      %v4378 = vrot.slane %v4377, 4
      %v4380 = vshrl.u32 %v4213, 16
      %v4382 = vrot.slane %v4380, 7
      %v4383 = vshll.u32 %v4213, 16
      %v4385 = vor.u32 %v4382, %v4383
      %v4386 = vsel %vm575, %v4378, %v4385
      %v4387 = vrot.slane %v4382, 4
      %v4389 = vshrl.u32 %v4214, 16
      %v4391 = vrot.slane %v4389, 7
      %v4392 = vshll.u32 %v4214, 16
      %v4394 = vor.u32 %v4391, %v4392
      %v4395 = vsel %vm575, %v4387, %v4394
      %v4397 = vshrl.u32 %v4215, 16
      %v4399 = vrot.slane %v4397, 7
      %v4400 = vrot.slane %v4399, 4
      %v4402 = vshrl.u32 %v4216, 16
      %v4404 = vrot.slane %v4402, 7
      %v4405 = vshll.u32 %v4216, 16
      %v4407 = vor.u32 %v4404, %v4405
      %v4408 = vsel %vm575, %v4400, %v4407
      %v4409 = vrot.slane %v4404, 4
      %v4411 = vshrl.u32 %v4217, 16
      %v4413 = vrot.slane %v4411, 7
      %v4414 = vshll.u32 %v4217, 16
      %v4416 = vor.u32 %v4413, %v4414
      %v4417 = vsel %vm575, %v4409, %v4416
      %v4419 = vshrl.u32 %v4218, 16
      %v4421 = vrot.slane %v4419, 7
      %v4422 = vrot.slane %v4421, 4
      %v4424 = vshrl.u32 %v4219, 16
      %v4426 = vrot.slane %v4424, 7
      %v4427 = vshll.u32 %v4219, 16
      %v4429 = vor.u32 %v4426, %v4427
      %v4430 = vsel %vm575, %v4422, %v4429
      %v4431 = vrot.slane %v4426, 4
      %v4433 = vshrl.u32 %v4220, 16
      %v4435 = vrot.slane %v4433, 7
      %v4436 = vshll.u32 %v4220, 16
      %v4438 = vor.u32 %v4435, %v4436
      %v4439 = vsel %vm575, %v4431, %v4438
      %v4441 = vshrl.u32 %v4221, 16
      %v4443 = vrot.slane %v4441, 7
      %v4444 = vrot.slane %v4443, 4
      %v4446 = vshrl.u32 %v4222, 16
      %v4448 = vrot.slane %v4446, 7
      %v4449 = vshll.u32 %v4222, 16
      %v4451 = vor.u32 %v4448, %v4449
      %v4452 = vsel %vm575, %v4444, %v4451
      %v4453 = vrot.slane %v4448, 4
      %v4455 = vshrl.u32 %v4223, 16
      %v4457 = vrot.slane %v4455, 7
      %v4458 = vshll.u32 %v4223, 16
      %v4460 = vor.u32 %v4457, %v4458
      %v4461 = vsel %vm575, %v4453, %v4460
      %v4463 = vshrl.u32 %v4224, 16
      %v4465 = vrot.slane %v4463, 7
      %v4466 = vrot.slane %v4465, 4
      %v4468 = vshrl.u32 %v4225, 16
      %v4470 = vrot.slane %v4468, 7
      %v4471 = vshll.u32 %v4225, 16
      %v4473 = vor.u32 %v4470, %v4471
      %v4474 = vsel %vm575, %v4466, %v4473
      %v4475 = vrot.slane %v4470, 4
      %v4477 = vshrl.u32 %v4226, 16
      %v4479 = vrot.slane %v4477, 7
      %v4480 = vshll.u32 %v4226, 16
      %v4482 = vor.u32 %v4479, %v4480
      %v4483 = vsel %vm575, %v4475, %v4482
      %v4485 = vshrl.u32 %v4227, 16
      %v4487 = vrot.slane %v4485, 7
      %v4488 = vrot.slane %v4487, 4
      %v4490 = vshrl.u32 %v4228, 16
      %v4492 = vrot.slane %v4490, 7
      %v4493 = vshll.u32 %v4228, 16
      %v4495 = vor.u32 %v4492, %v4493
      %v4496 = vsel %vm575, %v4488, %v4495
      %v4497 = vrot.slane %v4492, 4
      %v4499 = vshrl.u32 %v4229, 16
      %v4501 = vrot.slane %v4499, 7
      %v4502 = vshll.u32 %v4229, 16
      %v4504 = vor.u32 %v4501, %v4502
      %v4505 = vsel %vm575, %v4497, %v4504
      %v4507 = vshrl.u32 %v4230, 16
      %v4509 = vrot.slane %v4507, 7
      %v4510 = vrot.slane %v4509, 4
      %v4512 = vshrl.u32 %v4231, 16
      %v4514 = vrot.slane %v4512, 7
      %v4515 = vshll.u32 %v4231, 16
      %v4517 = vor.u32 %v4514, %v4515
      %v4518 = vsel %vm575, %v4510, %v4517
      %v4519 = vrot.slane %v4514, 4
      %v4521 = vshrl.u32 %v4232, 16
      %v4523 = vrot.slane %v4521, 7
      %v4524 = vshll.u32 %v4232, 16
      %v4526 = vor.u32 %v4523, %v4524
      %v4527 = vsel %vm575, %v4519, %v4526
      %v4529 = vshrl.u32 %v4233, 16
      %v4531 = vrot.slane %v4529, 7
      %v4532 = vrot.slane %v4531, 4
      %v4534 = vshrl.u32 %v4234, 16
      %v4536 = vrot.slane %v4534, 7
      %v4537 = vshll.u32 %v4234, 16
      %v4539 = vor.u32 %v4536, %v4537
      %v4540 = vsel %vm575, %v4532, %v4539
      %v4541 = vrot.slane %v4536, 4
      %v4543 = vshrl.u32 %v4235, 16
      %v4545 = vrot.slane %v4543, 7
      %v4546 = vshll.u32 %v4235, 16
      %v4548 = vor.u32 %v4545, %v4546
      %v4549 = vsel %vm575, %v4541, %v4548
      %v4551 = vshrl.u32 %v4236, 16
      %v4553 = vrot.slane %v4551, 7
      %v4554 = vrot.slane %v4553, 4
      %v4556 = vshrl.u32 %v4237, 16
      %v4558 = vrot.slane %v4556, 7
      %v4559 = vshll.u32 %v4237, 16
      %v4561 = vor.u32 %v4558, %v4559
      %v4562 = vsel %vm575, %v4554, %v4561
      %v4563 = vrot.slane %v4558, 4
      %v4565 = vshrl.u32 %v4238, 16
      %v4567 = vrot.slane %v4565, 7
      %v4568 = vshll.u32 %v4238, 16
      %v4570 = vor.u32 %v4567, %v4568
      %v4571 = vsel %vm575, %v4563, %v4570
      %v4573 = vshrl.u32 %v4239, 16
      %v4575 = vrot.slane %v4573, 7
      %v4576 = vrot.slane %v4575, 4
      %v4578 = vshrl.u32 %v4240, 16
      %v4580 = vrot.slane %v4578, 7
      %v4581 = vshll.u32 %v4240, 16
      %v4583 = vor.u32 %v4580, %v4581
      %v4584 = vsel %vm575, %v4576, %v4583
      %v4585 = vrot.slane %v4580, 4
      %v4587 = vshrl.u32 %v4241, 16
      %v4589 = vrot.slane %v4587, 7
      %v4590 = vshll.u32 %v4241, 16
      %v4592 = vor.u32 %v4589, %v4590
      %v4593 = vsel %vm575, %v4585, %v4592
      %s4594 = scalar_lea.vmem %s1, 384
      %v4595 = vld [vmem:[%s4594] sm:$0xf]
      %v4596 = vld [vmem:[%s4594 + $0x4] sm:$0xf]
      %v4597 = vld [vmem:[%s4594 + $0x8] sm:$0xf]
      %v4598 = vld [vmem:[%s4594 + $0xc] sm:$0xf]
      %v4599 = vld [vmem:[%s4594 + $0x10] sm:$0xf]
      %v4600 = vld [vmem:[%s4594 + $0x14] sm:$0xf]
      %v4601 = vld [vmem:[%s4594 + $0x18] sm:$0xf]
      %v4602 = vld [vmem:[%s4594 + $0x1c] sm:$0xf]
      %v4603 = vld [vmem:[%s4594 + $0x20] sm:$0xf]
      %v4604 = vld [vmem:[%s4594 + $0x24] sm:$0xf]
      %v4605 = vld [vmem:[%s4594 + $0x28] sm:$0xf]
      %v4606 = vld [vmem:[%s4594 + $0x2c] sm:$0xf]
      %v4607 = vld [vmem:[%s4594 + $0x30] sm:$0xf]
      %v4608 = vld [vmem:[%s4594 + $0x34] sm:$0xf]
      %v4609 = vld [vmem:[%s4594 + $0x38] sm:$0xf]
      %v4610 = vld [vmem:[%s4594 + $0x3c] sm:$0xf]
      %v4611 = vunpack.c.l.b16 %v4254
      %v4612 = vunpack.c.l.b16 %v4263
      %v4613 = vunpack.c.l.b16 %v4276
      %v4614 = vunpack.c.l.b16 %v4285
      %v4615 = vunpack.c.l.b16 %v4298
      %v4616 = vunpack.c.l.b16 %v4307
      %v4617 = vunpack.c.l.b16 %v4320
      %v4618 = vunpack.c.l.b16 %v4329
      %v4619 = vunpack.c.l.b16 %v4342
      %v4620 = vunpack.c.l.b16 %v4351
      %v4621 = vunpack.c.l.b16 %v4364
      %v4622 = vunpack.c.l.b16 %v4373
      %v4623 = vunpack.c.l.b16 %v4386
      %v4624 = vunpack.c.l.b16 %v4395
      %v4625 = vunpack.c.l.b16 %v4408
      %v4626 = vunpack.c.l.b16 %v4417
      %v4627 = vunpack.c.l.b16 %v4430
      %v4628 = vunpack.c.l.b16 %v4439
      %v4629 = vunpack.c.l.b16 %v4452
      %v4630 = vunpack.c.l.b16 %v4461
      %v4631 = vunpack.c.l.b16 %v4474
      %v4632 = vunpack.c.l.b16 %v4483
      %v4633 = vunpack.c.l.b16 %v4496
      %v4634 = vunpack.c.l.b16 %v4505
      %v4635 = vunpack.c.l.b16 %v4518
      %v4636 = vunpack.c.l.b16 %v4527
      %v4637 = vunpack.c.l.b16 %v4540
      %v4638 = vunpack.c.l.b16 %v4549
      %v4639 = vunpack.c.l.b16 %v4562
      %v4640 = vunpack.c.l.b16 %v4571
      %v4641 = vunpack.c.l.b16 %v4584
      %v4642 = vunpack.c.l.b16 %v4593
      %v4643 = vpack.c.b16 %v4612, %v4611
      %v4644 = vpack.c.b16 %v4614, %v4613
      %v4645 = vpack.c.b16 %v4616, %v4615
      %v4646 = vpack.c.b16 %v4618, %v4617
      %v4647 = vpack.c.b16 %v4620, %v4619
      %v4648 = vpack.c.b16 %v4622, %v4621
      %v4649 = vpack.c.b16 %v4624, %v4623
      %v4650 = vpack.c.b16 %v4626, %v4625
      %v4651 = vpack.c.b16 %v4628, %v4627
      %v4652 = vpack.c.b16 %v4630, %v4629
      %v4653 = vpack.c.b16 %v4632, %v4631
      %v4654 = vpack.c.b16 %v4634, %v4633
      %v4655 = vpack.c.b16 %v4636, %v4635
      %v4656 = vpack.c.b16 %v4638, %v4637
      %v4657 = vpack.c.b16 %v4640, %v4639
      %v4658 = vpack.c.b16 %v4642, %v4641
      %v4691 = vunpack.c.l.b16 %v4595
      %v4692 = vunpack.c.l.b16 %v4596
      %v4693 = vunpack.c.l.b16 %v4597
      %v4694 = vunpack.c.l.b16 %v4598
      %v4695 = vunpack.c.l.b16 %v4599
      %v4696 = vunpack.c.l.b16 %v4600
      %v4697 = vunpack.c.l.b16 %v4601
      %v4698 = vunpack.c.l.b16 %v4602
      %v4699 = vunpack.c.l.b16 %v4603
      %v4700 = vunpack.c.l.b16 %v4604
      %v4701 = vunpack.c.l.b16 %v4605
      %v4702 = vunpack.c.l.b16 %v4606
      %v4703 = vunpack.c.l.b16 %v4607
      %v4704 = vunpack.c.l.b16 %v4608
      %v4705 = vunpack.c.l.b16 %v4609
      %v4706 = vunpack.c.l.b16 %v4610
      %v4707 = vpack.c.b16 %v4692, %v4691
      %v4708 = vpack.c.b16 %v4694, %v4693
      %v4709 = vpack.c.b16 %v4696, %v4695
      %v4710 = vpack.c.b16 %v4698, %v4697
      %v4711 = vpack.c.b16 %v4700, %v4699
      %v4712 = vpack.c.b16 %v4702, %v4701
      %v4713 = vpack.c.b16 %v4704, %v4703
      %v4714 = vpack.c.b16 %v4706, %v4705
      %4723 = vmatprep.subr.bf16.mxu0 0
      %4724 = vmatpush1.bf16.msra.mxu0 %v4714
      %4725 = vmatprep.subr.bf16.mxu0 0
      %4726 = vmatpush1.bf16.msra.mxu0 %v4713
      %4727 = vmatprep.subr.bf16.mxu0 0
      %4728 = vmatpush1.bf16.msra.mxu0 %v4712
      %4729 = vmatprep.subr.bf16.mxu0 0
      %4730 = vmatpush1.bf16.msra.mxu0 %v4711
      %4731 = vmatprep.subr.bf16.mxu0 0
      %4732 = vmatpush1.bf16.msra.mxu0 %v4710
      %4733 = vmatprep.subr.bf16.mxu0 0
      %4734 = vmatpush1.bf16.msra.mxu0 %v4709
      %4735 = vmatprep.subr.bf16.mxu0 0
      %4736 = vmatpush1.bf16.msra.mxu0 %v4708
      %4737 = vmatprep.subr.bf16.mxu0 0
      %4738 = vmatpush1.bf16.msra.mxu0 %v4707
      %4739 = vmatprep.subr.bf16.mxu0 0
      %4740 = vmatpush2.bf16.msra.mxu0 0
      %4741 = vmatprep.subr.bf16.mxu0 0
      %4742 = vmatpush2.bf16.msra.mxu0 0
      %4743 = vmatprep.subr.bf16.mxu0 0
      %4744 = vmatpush2.bf16.msra.mxu0 0
      %4745 = vmatprep.subr.bf16.mxu0 0
      %4746 = vmatpush2.bf16.msra.mxu0 0
      %4747 = vmatprep.subr.bf16.mxu0 0
      %4748 = vmatpush2.bf16.msra.mxu0 0
      %4749 = vmatprep.subr.bf16.mxu0 0
      %4750 = vmatpush2.bf16.msra.mxu0 0
      %4751 = vmatprep.subr.bf16.mxu0 0
      %4752 = vmatpush2.bf16.msra.mxu0 0
      %4753 = vmatprep.subr.bf16.mxu0 0
      %4754 = vmatpush2.bf16.msra.mxu0 0
      %4755 = vmatprep.mubr.bf16.mxu0 0
      %4756 = vmatmul.mubr.bf16.gmra.mxu0 %v4643
      %v4757 = vpop.f32.mrf.mxu0
      %v4758 = vadd.f32 0.0, %v4757
      %v4759 = vpop.f32.mrf.mxu0
      %v4760 = vpop.f32.mrf.mxu0
      %v4761 = vadd.f32 0.0, %v4760
      %v4762 = vpop.f32.mrf.mxu0
      %4763 = vmatprep.mubr.bf16.mxu0 0
      %4764 = vmatmul.mubr.bf16.gmra.mxu0 %v4644
      %v4765 = vpop.f32.mrf.mxu0
      %v4766 = vadd.f32 0.0, %v4765
      %v4767 = vpop.f32.mrf.mxu0
      %v4768 = vpop.f32.mrf.mxu0
      %v4769 = vadd.f32 0.0, %v4768
      %v4770 = vpop.f32.mrf.mxu0
      %4771 = vmatprep.mubr.bf16.mxu0 0
      %4772 = vmatmul.mubr.bf16.gmra.mxu0 %v4645
      %v4773 = vpop.f32.mrf.mxu0
      %v4774 = vadd.f32 0.0, %v4773
      %v4775 = vpop.f32.mrf.mxu0
      %v4776 = vpop.f32.mrf.mxu0
      %v4777 = vadd.f32 0.0, %v4776
      %v4778 = vpop.f32.mrf.mxu0
      %4779 = vmatprep.mubr.bf16.mxu0 0
      %4780 = vmatmul.mubr.bf16.gmra.mxu0 %v4646
      %v4781 = vpop.f32.mrf.mxu0
      %v4782 = vadd.f32 0.0, %v4781
      %v4783 = vpop.f32.mrf.mxu0
      %v4784 = vpop.f32.mrf.mxu0
      %v4785 = vadd.f32 0.0, %v4784
      %v4786 = vpop.f32.mrf.mxu0
      %4787 = vmatprep.mubr.bf16.mxu0 0
      %4788 = vmatmul.mubr.bf16.gmra.mxu0 %v4647
      %v4789 = vpop.f32.mrf.mxu0
      %v4790 = vadd.f32 0.0, %v4789
      %v4791 = vpop.f32.mrf.mxu0
      %v4792 = vpop.f32.mrf.mxu0
      %v4793 = vadd.f32 0.0, %v4792
      %v4794 = vpop.f32.mrf.mxu0
      %4795 = vmatprep.mubr.bf16.mxu0 0
      %4796 = vmatmul.mubr.bf16.gmra.mxu0 %v4648
      %v4797 = vpop.f32.mrf.mxu0
      %v4798 = vadd.f32 0.0, %v4797
      %v4799 = vpop.f32.mrf.mxu0
      %v4800 = vpop.f32.mrf.mxu0
      %v4801 = vadd.f32 0.0, %v4800
      %v4802 = vpop.f32.mrf.mxu0
      %4803 = vmatprep.mubr.bf16.mxu0 0
      %4804 = vmatmul.mubr.bf16.gmra.mxu0 %v4649
      %v4805 = vpop.f32.mrf.mxu0
      %v4806 = vadd.f32 0.0, %v4805
      %v4807 = vpop.f32.mrf.mxu0
      %v4808 = vpop.f32.mrf.mxu0
      %v4809 = vadd.f32 0.0, %v4808
      %v4810 = vpop.f32.mrf.mxu0
      %4811 = vmatprep.mubr.bf16.mxu0 0
      %4812 = vmatmul.mubr.bf16.gmra.mxu0 %v4650
      %v4813 = vpop.f32.mrf.mxu0
      %v4814 = vadd.f32 0.0, %v4813
      %v4815 = vpop.f32.mrf.mxu0
      %v4816 = vpop.f32.mrf.mxu0
      %v4817 = vadd.f32 0.0, %v4816
      %v4818 = vpop.f32.mrf.mxu0
      %4819 = vmatprep.mubr.bf16.mxu0 0
      %4820 = vmatmul.mubr.bf16.gmra.mxu0 %v4651
      %v4821 = vpop.f32.mrf.mxu0
      %v4822 = vadd.f32 0.0, %v4821
      %v4823 = vpop.f32.mrf.mxu0
      %v4824 = vpop.f32.mrf.mxu0
      %v4825 = vadd.f32 0.0, %v4824
      %v4826 = vpop.f32.mrf.mxu0
      %4827 = vmatprep.mubr.bf16.mxu0 0
      %4828 = vmatmul.mubr.bf16.gmra.mxu0 %v4652
      %v4829 = vpop.f32.mrf.mxu0
      %v4830 = vadd.f32 0.0, %v4829
      %v4831 = vpop.f32.mrf.mxu0
      %v4832 = vpop.f32.mrf.mxu0
      %v4833 = vadd.f32 0.0, %v4832
      %v4834 = vpop.f32.mrf.mxu0
      %4835 = vmatprep.mubr.bf16.mxu0 0
      %4836 = vmatmul.mubr.bf16.gmra.mxu0 %v4653
      %v4837 = vpop.f32.mrf.mxu0
      %v4838 = vadd.f32 0.0, %v4837
      %v4839 = vpop.f32.mrf.mxu0
      %v4840 = vpop.f32.mrf.mxu0
      %v4841 = vadd.f32 0.0, %v4840
      %v4842 = vpop.f32.mrf.mxu0
      %4843 = vmatprep.mubr.bf16.mxu0 0
      %4844 = vmatmul.mubr.bf16.gmra.mxu0 %v4654
      %v4845 = vpop.f32.mrf.mxu0
      %v4846 = vadd.f32 0.0, %v4845
      %v4847 = vpop.f32.mrf.mxu0
      %v4848 = vpop.f32.mrf.mxu0
      %v4849 = vadd.f32 0.0, %v4848
      %v4850 = vpop.f32.mrf.mxu0
      %4851 = vmatprep.mubr.bf16.mxu0 0
      %4852 = vmatmul.mubr.bf16.gmra.mxu0 %v4655
      %v4853 = vpop.f32.mrf.mxu0
      %v4854 = vadd.f32 0.0, %v4853
      %v4855 = vpop.f32.mrf.mxu0
      %v4856 = vpop.f32.mrf.mxu0
      %v4857 = vadd.f32 0.0, %v4856
      %v4858 = vpop.f32.mrf.mxu0
      %4859 = vmatprep.mubr.bf16.mxu0 0
      %4860 = vmatmul.mubr.bf16.gmra.mxu0 %v4656
      %v4861 = vpop.f32.mrf.mxu0
      %v4862 = vadd.f32 0.0, %v4861
      %v4863 = vpop.f32.mrf.mxu0
      %v4864 = vpop.f32.mrf.mxu0
      %v4865 = vadd.f32 0.0, %v4864
      %v4866 = vpop.f32.mrf.mxu0
      %4867 = vmatprep.mubr.bf16.mxu0 0
      %4868 = vmatmul.mubr.bf16.gmra.mxu0 %v4657
      %v4869 = vpop.f32.mrf.mxu0
      %v4870 = vadd.f32 0.0, %v4869
      %v4871 = vpop.f32.mrf.mxu0
      %v4872 = vpop.f32.mrf.mxu0
      %v4873 = vadd.f32 0.0, %v4872
      %v4874 = vpop.f32.mrf.mxu0
      %4875 = vmatprep.mubr.bf16.mxu0 0
      %4876 = vmatmul.mubr.bf16.gmra.mxu0 %v4658
      %v4877 = vpop.f32.mrf.mxu0
      %v4878 = vadd.f32 0.0, %v4877
      %v4879 = vpop.f32.mrf.mxu0
      %v4880 = vpop.f32.mrf.mxu0
      %v4881 = vadd.f32 0.0, %v4880
      %v4882 = vpop.f32.mrf.mxu0
      %4883 = vdwg.mxu0
      %v4884 = vadd.f32 %v4158, %v4758
      %v4885 = vadd.f32 %v4159, %v4761
      %v4886 = vadd.f32 %v4160, %v4766
      %v4887 = vadd.f32 %v4161, %v4769
      %v4888 = vadd.f32 %v4162, %v4774
      %v4889 = vadd.f32 %v4163, %v4777
      %v4890 = vadd.f32 %v4164, %v4782
      %v4891 = vadd.f32 %v4165, %v4785
      %v4892 = vadd.f32 %v4166, %v4790
      %v4893 = vadd.f32 %v4167, %v4793
      %v4894 = vadd.f32 %v4168, %v4798
      %v4895 = vadd.f32 %v4169, %v4801
      %v4896 = vadd.f32 %v4170, %v4806
      %v4897 = vadd.f32 %v4171, %v4809
      %v4898 = vadd.f32 %v4172, %v4814
      %v4899 = vadd.f32 %v4173, %v4817
      %v4900 = vadd.f32 %v4174, %v4822
      %v4901 = vadd.f32 %v4175, %v4825
      %v4902 = vadd.f32 %v4176, %v4830
      %v4903 = vadd.f32 %v4177, %v4833
      %v4904 = vadd.f32 %v4178, %v4838
      %v4905 = vadd.f32 %v4179, %v4841
      %v4906 = vadd.f32 %v4180, %v4846
      %v4907 = vadd.f32 %v4181, %v4849
      %v4908 = vadd.f32 %v4182, %v4854
      %v4909 = vadd.f32 %v4183, %v4857
      %v4910 = vadd.f32 %v4184, %v4862
      %v4911 = vadd.f32 %v4185, %v4865
      %v4912 = vadd.f32 %v4186, %v4870
      %v4913 = vadd.f32 %v4187, %v4873
      %v4914 = vadd.f32 %v4188, %v4878
      %v4915 = vadd.f32 %v4189, %v4881
      %s4916 = scalar_lea.vmem %s1, 448
      %v4917 = vld [vmem:[%s4916] sm:$0xf]
      %v4918 = vld [vmem:[%s4916 + $0x4] sm:$0xf]
      %v4919 = vld [vmem:[%s4916 + $0x8] sm:$0xf]
      %v4920 = vld [vmem:[%s4916 + $0xc] sm:$0xf]
      %v4921 = vld [vmem:[%s4916 + $0x10] sm:$0xf]
      %v4922 = vld [vmem:[%s4916 + $0x14] sm:$0xf]
      %v4923 = vld [vmem:[%s4916 + $0x18] sm:$0xf]
      %v4924 = vld [vmem:[%s4916 + $0x1c] sm:$0xf]
      %v4925 = vld [vmem:[%s4916 + $0x20] sm:$0xf]
      %v4926 = vld [vmem:[%s4916 + $0x24] sm:$0xf]
      %v4927 = vld [vmem:[%s4916 + $0x28] sm:$0xf]
      %v4928 = vld [vmem:[%s4916 + $0x2c] sm:$0xf]
      %v4929 = vld [vmem:[%s4916 + $0x30] sm:$0xf]
      %v4930 = vld [vmem:[%s4916 + $0x34] sm:$0xf]
      %v4931 = vld [vmem:[%s4916 + $0x38] sm:$0xf]
      %v4932 = vld [vmem:[%s4916 + $0x3c] sm:$0xf]
      %v4965 = vunpack.c.l.b16 %v4195
      %v4966 = vunpack.c.l.b16 %v4196
      %v4967 = vunpack.c.l.b16 %v4198
      %v4968 = vunpack.c.l.b16 %v4199
      %v4969 = vunpack.c.l.b16 %v4201
      %v4970 = vunpack.c.l.b16 %v4202
      %v4971 = vunpack.c.l.b16 %v4204
      %v4972 = vunpack.c.l.b16 %v4205
      %v4973 = vunpack.c.l.b16 %v4207
      %v4974 = vunpack.c.l.b16 %v4208
      %v4975 = vunpack.c.l.b16 %v4210
      %v4976 = vunpack.c.l.b16 %v4211
      %v4977 = vunpack.c.l.b16 %v4213
      %v4978 = vunpack.c.l.b16 %v4214
      %v4979 = vunpack.c.l.b16 %v4216
      %v4980 = vunpack.c.l.b16 %v4217
      %v4981 = vunpack.c.l.b16 %v4219
      %v4982 = vunpack.c.l.b16 %v4220
      %v4983 = vunpack.c.l.b16 %v4222
      %v4984 = vunpack.c.l.b16 %v4223
      %v4985 = vunpack.c.l.b16 %v4225
      %v4986 = vunpack.c.l.b16 %v4226
      %v4987 = vunpack.c.l.b16 %v4228
      %v4988 = vunpack.c.l.b16 %v4229
      %v4989 = vunpack.c.l.b16 %v4231
      %v4990 = vunpack.c.l.b16 %v4232
      %v4991 = vunpack.c.l.b16 %v4234
      %v4992 = vunpack.c.l.b16 %v4235
      %v4993 = vunpack.c.l.b16 %v4237
      %v4994 = vunpack.c.l.b16 %v4238
      %v4995 = vunpack.c.l.b16 %v4240
      %v4996 = vunpack.c.l.b16 %v4241
      %v4997 = vpack.c.b16 %v4966, %v4965
      %v4998 = vpack.c.b16 %v4968, %v4967
      %v4999 = vpack.c.b16 %v4970, %v4969
      %v5000 = vpack.c.b16 %v4972, %v4971
      %v5001 = vpack.c.b16 %v4974, %v4973
      %v5002 = vpack.c.b16 %v4976, %v4975
      %v5003 = vpack.c.b16 %v4978, %v4977
      %v5004 = vpack.c.b16 %v4980, %v4979
      %v5005 = vpack.c.b16 %v4982, %v4981
      %v5006 = vpack.c.b16 %v4984, %v4983
      %v5007 = vpack.c.b16 %v4986, %v4985
      %v5008 = vpack.c.b16 %v4988, %v4987
      %v5009 = vpack.c.b16 %v4990, %v4989
      %v5010 = vpack.c.b16 %v4992, %v4991
      %v5011 = vpack.c.b16 %v4994, %v4993
      %v5012 = vpack.c.b16 %v4996, %v4995
      %v5045 = vunpack.c.l.b16 %v4917
      %v5046 = vunpack.c.l.b16 %v4918
      %v5047 = vunpack.c.l.b16 %v4919
      %v5048 = vunpack.c.l.b16 %v4920
      %v5049 = vunpack.c.l.b16 %v4921
      %v5050 = vunpack.c.l.b16 %v4922
      %v5051 = vunpack.c.l.b16 %v4923
      %v5052 = vunpack.c.l.b16 %v4924
      %v5053 = vunpack.c.l.b16 %v4925
      %v5054 = vunpack.c.l.b16 %v4926
      %v5055 = vunpack.c.l.b16 %v4927
      %v5056 = vunpack.c.l.b16 %v4928
      %v5057 = vunpack.c.l.b16 %v4929
      %v5058 = vunpack.c.l.b16 %v4930
      %v5059 = vunpack.c.l.b16 %v4931
      %v5060 = vunpack.c.l.b16 %v4932
      %v5061 = vpack.c.b16 %v5046, %v5045
      %v5062 = vpack.c.b16 %v5048, %v5047
      %v5063 = vpack.c.b16 %v5050, %v5049
      %v5064 = vpack.c.b16 %v5052, %v5051
      %v5065 = vpack.c.b16 %v5054, %v5053
      %v5066 = vpack.c.b16 %v5056, %v5055
      %v5067 = vpack.c.b16 %v5058, %v5057
      %v5068 = vpack.c.b16 %v5060, %v5059
      %5077 = vmatprep.subr.bf16.mxu0 0
      %5078 = vmatpush1.bf16.msra.mxu0 %v5068
      %5079 = vmatprep.subr.bf16.mxu0 0
      %5080 = vmatpush1.bf16.msra.mxu0 %v5067
      %5081 = vmatprep.subr.bf16.mxu0 0
      %5082 = vmatpush1.bf16.msra.mxu0 %v5066
      %5083 = vmatprep.subr.bf16.mxu0 0
      %5084 = vmatpush1.bf16.msra.mxu0 %v5065
      %5085 = vmatprep.subr.bf16.mxu0 0
      %5086 = vmatpush1.bf16.msra.mxu0 %v5064
      %5087 = vmatprep.subr.bf16.mxu0 0
      %5088 = vmatpush1.bf16.msra.mxu0 %v5063
      %5089 = vmatprep.subr.bf16.mxu0 0
      %5090 = vmatpush1.bf16.msra.mxu0 %v5062
      %5091 = vmatprep.subr.bf16.mxu0 0
      %5092 = vmatpush1.bf16.msra.mxu0 %v5061
      %5093 = vmatprep.subr.bf16.mxu0 0
      %5094 = vmatpush2.bf16.msra.mxu0 0
      %5095 = vmatprep.subr.bf16.mxu0 0
      %5096 = vmatpush2.bf16.msra.mxu0 0
      %5097 = vmatprep.subr.bf16.mxu0 0
      %5098 = vmatpush2.bf16.msra.mxu0 0
      %5099 = vmatprep.subr.bf16.mxu0 0
      %5100 = vmatpush2.bf16.msra.mxu0 0
      %5101 = vmatprep.subr.bf16.mxu0 0
      %5102 = vmatpush2.bf16.msra.mxu0 0
      %5103 = vmatprep.subr.bf16.mxu0 0
      %5104 = vmatpush2.bf16.msra.mxu0 0
      %5105 = vmatprep.subr.bf16.mxu0 0
      %5106 = vmatpush2.bf16.msra.mxu0 0
      %5107 = vmatprep.subr.bf16.mxu0 0
      %5108 = vmatpush2.bf16.msra.mxu0 0
      %5109 = vmatprep.mubr.bf16.mxu0 0
      %5110 = vmatmul.mubr.bf16.gmra.mxu0 %v4997
      %v5111 = vpop.f32.mrf.mxu0
      %v5112 = vadd.f32 0.0, %v5111
      %v5113 = vpop.f32.mrf.mxu0
      %v5114 = vpop.f32.mrf.mxu0
      %v5115 = vadd.f32 0.0, %v5114
      %v5116 = vpop.f32.mrf.mxu0
      %5117 = vmatprep.mubr.bf16.mxu0 0
      %5118 = vmatmul.mubr.bf16.gmra.mxu0 %v4998
      %v5119 = vpop.f32.mrf.mxu0
      %v5120 = vadd.f32 0.0, %v5119
      %v5121 = vpop.f32.mrf.mxu0
      %v5122 = vpop.f32.mrf.mxu0
      %v5123 = vadd.f32 0.0, %v5122
      %v5124 = vpop.f32.mrf.mxu0
      %5125 = vmatprep.mubr.bf16.mxu0 0
      %5126 = vmatmul.mubr.bf16.gmra.mxu0 %v4999
      %v5127 = vpop.f32.mrf.mxu0
      %v5128 = vadd.f32 0.0, %v5127
      %v5129 = vpop.f32.mrf.mxu0
      %v5130 = vpop.f32.mrf.mxu0
      %v5131 = vadd.f32 0.0, %v5130
      %v5132 = vpop.f32.mrf.mxu0
      %5133 = vmatprep.mubr.bf16.mxu0 0
      %5134 = vmatmul.mubr.bf16.gmra.mxu0 %v5000
      %v5135 = vpop.f32.mrf.mxu0
      %v5136 = vadd.f32 0.0, %v5135
      %v5137 = vpop.f32.mrf.mxu0
      %v5138 = vpop.f32.mrf.mxu0
      %v5139 = vadd.f32 0.0, %v5138
      %v5140 = vpop.f32.mrf.mxu0
      %5141 = vmatprep.mubr.bf16.mxu0 0
      %5142 = vmatmul.mubr.bf16.gmra.mxu0 %v5001
      %v5143 = vpop.f32.mrf.mxu0
      %v5144 = vadd.f32 0.0, %v5143
      %v5145 = vpop.f32.mrf.mxu0
      %v5146 = vpop.f32.mrf.mxu0
      %v5147 = vadd.f32 0.0, %v5146
      %v5148 = vpop.f32.mrf.mxu0
      %5149 = vmatprep.mubr.bf16.mxu0 0
      %5150 = vmatmul.mubr.bf16.gmra.mxu0 %v5002
      %v5151 = vpop.f32.mrf.mxu0
      %v5152 = vadd.f32 0.0, %v5151
      %v5153 = vpop.f32.mrf.mxu0
      %v5154 = vpop.f32.mrf.mxu0
      %v5155 = vadd.f32 0.0, %v5154
      %v5156 = vpop.f32.mrf.mxu0
      %5157 = vmatprep.mubr.bf16.mxu0 0
      %5158 = vmatmul.mubr.bf16.gmra.mxu0 %v5003
      %v5159 = vpop.f32.mrf.mxu0
      %v5160 = vadd.f32 0.0, %v5159
      %v5161 = vpop.f32.mrf.mxu0
      %v5162 = vpop.f32.mrf.mxu0
      %v5163 = vadd.f32 0.0, %v5162
      %v5164 = vpop.f32.mrf.mxu0
      %5165 = vmatprep.mubr.bf16.mxu0 0
      %5166 = vmatmul.mubr.bf16.gmra.mxu0 %v5004
      %v5167 = vpop.f32.mrf.mxu0
      %v5168 = vadd.f32 0.0, %v5167
      %v5169 = vpop.f32.mrf.mxu0
      %v5170 = vpop.f32.mrf.mxu0
      %v5171 = vadd.f32 0.0, %v5170
      %v5172 = vpop.f32.mrf.mxu0
      %5173 = vmatprep.mubr.bf16.mxu0 0
      %5174 = vmatmul.mubr.bf16.gmra.mxu0 %v5005
      %v5175 = vpop.f32.mrf.mxu0
      %v5176 = vadd.f32 0.0, %v5175
      %v5177 = vpop.f32.mrf.mxu0
      %v5178 = vpop.f32.mrf.mxu0
      %v5179 = vadd.f32 0.0, %v5178
      %v5180 = vpop.f32.mrf.mxu0
      %5181 = vmatprep.mubr.bf16.mxu0 0
      %5182 = vmatmul.mubr.bf16.gmra.mxu0 %v5006
      %v5183 = vpop.f32.mrf.mxu0
      %v5184 = vadd.f32 0.0, %v5183
      %v5185 = vpop.f32.mrf.mxu0
      %v5186 = vpop.f32.mrf.mxu0
      %v5187 = vadd.f32 0.0, %v5186
      %v5188 = vpop.f32.mrf.mxu0
      %5189 = vmatprep.mubr.bf16.mxu0 0
      %5190 = vmatmul.mubr.bf16.gmra.mxu0 %v5007
      %v5191 = vpop.f32.mrf.mxu0
      %v5192 = vadd.f32 0.0, %v5191
      %v5193 = vpop.f32.mrf.mxu0
      %v5194 = vpop.f32.mrf.mxu0
      %v5195 = vadd.f32 0.0, %v5194
      %v5196 = vpop.f32.mrf.mxu0
      %5197 = vmatprep.mubr.bf16.mxu0 0
      %5198 = vmatmul.mubr.bf16.gmra.mxu0 %v5008
      %v5199 = vpop.f32.mrf.mxu0
      %v5200 = vadd.f32 0.0, %v5199
      %v5201 = vpop.f32.mrf.mxu0
      %v5202 = vpop.f32.mrf.mxu0
      %v5203 = vadd.f32 0.0, %v5202
      %v5204 = vpop.f32.mrf.mxu0
      %5205 = vmatprep.mubr.bf16.mxu0 0
      %5206 = vmatmul.mubr.bf16.gmra.mxu0 %v5009
      %v5207 = vpop.f32.mrf.mxu0
      %v5208 = vadd.f32 0.0, %v5207
      %v5209 = vpop.f32.mrf.mxu0
      %v5210 = vpop.f32.mrf.mxu0
      %v5211 = vadd.f32 0.0, %v5210
      %v5212 = vpop.f32.mrf.mxu0
      %5213 = vmatprep.mubr.bf16.mxu0 0
      %5214 = vmatmul.mubr.bf16.gmra.mxu0 %v5010
      %v5215 = vpop.f32.mrf.mxu0
      %v5216 = vadd.f32 0.0, %v5215
      %v5217 = vpop.f32.mrf.mxu0
      %v5218 = vpop.f32.mrf.mxu0
      %v5219 = vadd.f32 0.0, %v5218
      %v5220 = vpop.f32.mrf.mxu0
      %5221 = vmatprep.mubr.bf16.mxu0 0
      %5222 = vmatmul.mubr.bf16.gmra.mxu0 %v5011
      %v5223 = vpop.f32.mrf.mxu0
      %v5224 = vadd.f32 0.0, %v5223
      %v5225 = vpop.f32.mrf.mxu0
      %v5226 = vpop.f32.mrf.mxu0
      %v5227 = vadd.f32 0.0, %v5226
      %v5228 = vpop.f32.mrf.mxu0
      %5229 = vmatprep.mubr.bf16.mxu0 0
      %5230 = vmatmul.mubr.bf16.gmra.mxu0 %v5012
      %v5231 = vpop.f32.mrf.mxu0
      %v5232 = vadd.f32 0.0, %v5231
      %v5233 = vpop.f32.mrf.mxu0
      %v5234 = vpop.f32.mrf.mxu0
      %v5235 = vadd.f32 0.0, %v5234
      %v5236 = vpop.f32.mrf.mxu0
      %5237 = vdwg.mxu0
      %v5238 = vadd.f32 %v4884, %v5112
      %v5239 = vadd.f32 %v4885, %v5115
      %v5240 = vadd.f32 %v4886, %v5120
      %v5241 = vadd.f32 %v4887, %v5123
      %v5242 = vadd.f32 %v4888, %v5128
      %v5243 = vadd.f32 %v4889, %v5131
      %v5244 = vadd.f32 %v4890, %v5136
      %v5245 = vadd.f32 %v4891, %v5139
      %v5246 = vadd.f32 %v4892, %v5144
      %v5247 = vadd.f32 %v4893, %v5147
      %v5248 = vadd.f32 %v4894, %v5152
      %v5249 = vadd.f32 %v4895, %v5155
      %v5250 = vadd.f32 %v4896, %v5160
      %v5251 = vadd.f32 %v4897, %v5163
      %v5252 = vadd.f32 %v4898, %v5168
      %v5253 = vadd.f32 %v4899, %v5171
      %v5254 = vadd.f32 %v4900, %v5176
      %v5255 = vadd.f32 %v4901, %v5179
      %v5256 = vadd.f32 %v4902, %v5184
      %v5257 = vadd.f32 %v4903, %v5187
      %v5258 = vadd.f32 %v4904, %v5192
      %v5259 = vadd.f32 %v4905, %v5195
      %v5260 = vadd.f32 %v4906, %v5200
      %v5261 = vadd.f32 %v4907, %v5203
      %v5262 = vadd.f32 %v4908, %v5208
      %v5263 = vadd.f32 %v4909, %v5211
      %v5264 = vadd.f32 %v4910, %v5216
      %v5265 = vadd.f32 %v4911, %v5219
      %v5266 = vadd.f32 %v4912, %v5224
      %v5267 = vadd.f32 %v4913, %v5227
      %v5268 = vadd.f32 %v4914, %v5232
      %v5269 = vadd.f32 %v4915, %v5235
      %v5270 = vld [vmem:[%s4193 + $0x4] sm:$0xf]
      %v5271 = vld [vmem:[%s4193 + $0x8] sm:$0xf]
      %v5272 = vld [vmem:[%s4193 + $0xc] sm:$0x1]
      %v5273 = vld [vmem:[%s4193 + $0x14] sm:$0xf]
      %v5274 = vld [vmem:[%s4193 + $0x18] sm:$0xf]
      %v5275 = vld [vmem:[%s4193 + $0x1c] sm:$0x1]
      %v5276 = vld [vmem:[%s4193 + $0x24] sm:$0xf]
      %v5277 = vld [vmem:[%s4193 + $0x28] sm:$0xf]
      %v5278 = vld [vmem:[%s4193 + $0x2c] sm:$0x1]
      %v5279 = vld [vmem:[%s4193 + $0x34] sm:$0xf]
      %v5280 = vld [vmem:[%s4193 + $0x38] sm:$0xf]
      %v5281 = vld [vmem:[%s4193 + $0x3c] sm:$0x1]
      %v5282 = vld [vmem:[%s4193 + $0x44] sm:$0xf]
      %v5283 = vld [vmem:[%s4193 + $0x48] sm:$0xf]
      %v5284 = vld [vmem:[%s4193 + $0x4c] sm:$0x1]
      %v5285 = vld [vmem:[%s4193 + $0x54] sm:$0xf]
      %v5286 = vld [vmem:[%s4193 + $0x58] sm:$0xf]
      %v5287 = vld [vmem:[%s4193 + $0x5c] sm:$0x1]
      %v5288 = vld [vmem:[%s4193 + $0x64] sm:$0xf]
      %v5289 = vld [vmem:[%s4193 + $0x68] sm:$0xf]
      %v5290 = vld [vmem:[%s4193 + $0x6c] sm:$0x1]
      %v5291 = vld [vmem:[%s4193 + $0x74] sm:$0xf]
      %v5292 = vld [vmem:[%s4193 + $0x78] sm:$0xf]
      %v5293 = vld [vmem:[%s4193 + $0x7c] sm:$0x1]
      %v5294 = vld [vmem:[%s4193 + $0x84] sm:$0xf]
      %v5295 = vld [vmem:[%s4193 + $0x88] sm:$0xf]
      %v5296 = vld [vmem:[%s4193 + $0x8c] sm:$0x1]
      %v5297 = vld [vmem:[%s4193 + $0x94] sm:$0xf]
      %v5298 = vld [vmem:[%s4193 + $0x98] sm:$0xf]
      %v5299 = vld [vmem:[%s4193 + $0x9c] sm:$0x1]
      %v5300 = vld [vmem:[%s4193 + $0xa4] sm:$0xf]
      %v5301 = vld [vmem:[%s4193 + $0xa8] sm:$0xf]
      %v5302 = vld [vmem:[%s4193 + $0xac] sm:$0x1]
      %v5303 = vld [vmem:[%s4193 + $0xb4] sm:$0xf]
      %v5304 = vld [vmem:[%s4193 + $0xb8] sm:$0xf]
      %v5305 = vld [vmem:[%s4193 + $0xbc] sm:$0x1]
      %v5306 = vld [vmem:[%s4193 + $0xc4] sm:$0xf]
      %v5307 = vld [vmem:[%s4193 + $0xc8] sm:$0xf]
      %v5308 = vld [vmem:[%s4193 + $0xcc] sm:$0x1]
      %v5309 = vld [vmem:[%s4193 + $0xd4] sm:$0xf]
      %v5310 = vld [vmem:[%s4193 + $0xd8] sm:$0xf]
      %v5311 = vld [vmem:[%s4193 + $0xdc] sm:$0x1]
      %v5312 = vld [vmem:[%s4193 + $0xe4] sm:$0xf]
      %v5313 = vld [vmem:[%s4193 + $0xe8] sm:$0xf]
      %v5314 = vld [vmem:[%s4193 + $0xec] sm:$0x1]
      %v5315 = vld [vmem:[%s4193 + $0xf4] sm:$0xf]
      %v5316 = vld [vmem:[%s4193 + $0xf8] sm:$0xf]
      %v5317 = vld [vmem:[%s4193 + $0xfc] sm:$0x1]
      %v5319 = vshrl.u32 %v5270, 16
      %v5321 = vrot.slane %v5319, 4
      %v5322 = vshll.u32 %v5270, 16
      %v5324 = vrot.slane %v5322, 5
      %v5325 = vor.u32 %v5321, %v5324
      %v5326 = vrot.slane %v5325, 4
      %v5328 = vshll.u32 %v5271, 16
      %v5330 = vrot.slane %v5328, 5
      %v5331 = vsel %vm1653, %v5326, %v5330
      %v5332 = vshrl.u32 %v5271, 16
      %v5334 = vrot.slane %v5332, 4
      %v5335 = vor.u32 %v5334, %v5330
      %v5336 = vrot.slane %v5335, 4
      %v5338 = vshll.u32 %v5272, 16
      %v5340 = vrot.slane %v5338, 5
      %v5341 = vsel %vm1653, %v5336, %v5340
      %v5343 = vshrl.u32 %v5273, 16
      %v5345 = vrot.slane %v5343, 4
      %v5346 = vshll.u32 %v5273, 16
      %v5348 = vrot.slane %v5346, 5
      %v5349 = vor.u32 %v5345, %v5348
      %v5350 = vrot.slane %v5349, 4
      %v5352 = vshll.u32 %v5274, 16
      %v5354 = vrot.slane %v5352, 5
      %v5355 = vsel %vm1653, %v5350, %v5354
      %v5356 = vshrl.u32 %v5274, 16
      %v5358 = vrot.slane %v5356, 4
      %v5359 = vor.u32 %v5358, %v5354
      %v5360 = vrot.slane %v5359, 4
      %v5362 = vshll.u32 %v5275, 16
      %v5364 = vrot.slane %v5362, 5
      %v5365 = vsel %vm1653, %v5360, %v5364
      %v5367 = vshrl.u32 %v5276, 16
      %v5369 = vrot.slane %v5367, 4
      %v5370 = vshll.u32 %v5276, 16
      %v5372 = vrot.slane %v5370, 5
      %v5373 = vor.u32 %v5369, %v5372
      %v5374 = vrot.slane %v5373, 4
      %v5376 = vshll.u32 %v5277, 16
      %v5378 = vrot.slane %v5376, 5
      %v5379 = vsel %vm1653, %v5374, %v5378
      %v5380 = vshrl.u32 %v5277, 16
      %v5382 = vrot.slane %v5380, 4
      %v5383 = vor.u32 %v5382, %v5378
      %v5384 = vrot.slane %v5383, 4
      %v5386 = vshll.u32 %v5278, 16
      %v5388 = vrot.slane %v5386, 5
      %v5389 = vsel %vm1653, %v5384, %v5388
      %v5391 = vshrl.u32 %v5279, 16
      %v5393 = vrot.slane %v5391, 4
      %v5394 = vshll.u32 %v5279, 16
      %v5396 = vrot.slane %v5394, 5
      %v5397 = vor.u32 %v5393, %v5396
      %v5398 = vrot.slane %v5397, 4
      %v5400 = vshll.u32 %v5280, 16
      %v5402 = vrot.slane %v5400, 5
      %v5403 = vsel %vm1653, %v5398, %v5402
      %v5404 = vshrl.u32 %v5280, 16
      %v5406 = vrot.slane %v5404, 4
      %v5407 = vor.u32 %v5406, %v5402
      %v5408 = vrot.slane %v5407, 4
      %v5410 = vshll.u32 %v5281, 16
      %v5412 = vrot.slane %v5410, 5
      %v5413 = vsel %vm1653, %v5408, %v5412
      %v5415 = vshrl.u32 %v5282, 16
      %v5417 = vrot.slane %v5415, 4
      %v5418 = vshll.u32 %v5282, 16
      %v5420 = vrot.slane %v5418, 5
      %v5421 = vor.u32 %v5417, %v5420
      %v5422 = vrot.slane %v5421, 4
      %v5424 = vshll.u32 %v5283, 16
      %v5426 = vrot.slane %v5424, 5
      %v5427 = vsel %vm1653, %v5422, %v5426
      %v5428 = vshrl.u32 %v5283, 16
      %v5430 = vrot.slane %v5428, 4
      %v5431 = vor.u32 %v5430, %v5426
      %v5432 = vrot.slane %v5431, 4
      %v5434 = vshll.u32 %v5284, 16
      %v5436 = vrot.slane %v5434, 5
      %v5437 = vsel %vm1653, %v5432, %v5436
      %v5439 = vshrl.u32 %v5285, 16
      %v5441 = vrot.slane %v5439, 4
      %v5442 = vshll.u32 %v5285, 16
      %v5444 = vrot.slane %v5442, 5
      %v5445 = vor.u32 %v5441, %v5444
      %v5446 = vrot.slane %v5445, 4
      %v5448 = vshll.u32 %v5286, 16
      %v5450 = vrot.slane %v5448, 5
      %v5451 = vsel %vm1653, %v5446, %v5450
      %v5452 = vshrl.u32 %v5286, 16
      %v5454 = vrot.slane %v5452, 4
      %v5455 = vor.u32 %v5454, %v5450
      %v5456 = vrot.slane %v5455, 4
      %v5458 = vshll.u32 %v5287, 16
      %v5460 = vrot.slane %v5458, 5
      %v5461 = vsel %vm1653, %v5456, %v5460
      %v5463 = vshrl.u32 %v5288, 16
      %v5465 = vrot.slane %v5463, 4
      %v5466 = vshll.u32 %v5288, 16
      %v5468 = vrot.slane %v5466, 5
      %v5469 = vor.u32 %v5465, %v5468
      %v5470 = vrot.slane %v5469, 4
      %v5472 = vshll.u32 %v5289, 16
      %v5474 = vrot.slane %v5472, 5
      %v5475 = vsel %vm1653, %v5470, %v5474
      %v5476 = vshrl.u32 %v5289, 16
      %v5478 = vrot.slane %v5476, 4
      %v5479 = vor.u32 %v5478, %v5474
      %v5480 = vrot.slane %v5479, 4
      %v5482 = vshll.u32 %v5290, 16
      %v5484 = vrot.slane %v5482, 5
      %v5485 = vsel %vm1653, %v5480, %v5484
      %v5487 = vshrl.u32 %v5291, 16
      %v5489 = vrot.slane %v5487, 4
      %v5490 = vshll.u32 %v5291, 16
      %v5492 = vrot.slane %v5490, 5
      %v5493 = vor.u32 %v5489, %v5492
      %v5494 = vrot.slane %v5493, 4
      %v5496 = vshll.u32 %v5292, 16
      %v5498 = vrot.slane %v5496, 5
      %v5499 = vsel %vm1653, %v5494, %v5498
      %v5500 = vshrl.u32 %v5292, 16
      %v5502 = vrot.slane %v5500, 4
      %v5503 = vor.u32 %v5502, %v5498
      %v5504 = vrot.slane %v5503, 4
      %v5506 = vshll.u32 %v5293, 16
      %v5508 = vrot.slane %v5506, 5
      %v5509 = vsel %vm1653, %v5504, %v5508
      %v5511 = vshrl.u32 %v5294, 16
      %v5513 = vrot.slane %v5511, 4
      %v5514 = vshll.u32 %v5294, 16
      %v5516 = vrot.slane %v5514, 5
      %v5517 = vor.u32 %v5513, %v5516
      %v5518 = vrot.slane %v5517, 4
      %v5520 = vshll.u32 %v5295, 16
      %v5522 = vrot.slane %v5520, 5
      %v5523 = vsel %vm1653, %v5518, %v5522
      %v5524 = vshrl.u32 %v5295, 16
      %v5526 = vrot.slane %v5524, 4
      %v5527 = vor.u32 %v5526, %v5522
      %v5528 = vrot.slane %v5527, 4
      %v5530 = vshll.u32 %v5296, 16
      %v5532 = vrot.slane %v5530, 5
      %v5533 = vsel %vm1653, %v5528, %v5532
      %v5535 = vshrl.u32 %v5297, 16
      %v5537 = vrot.slane %v5535, 4
      %v5538 = vshll.u32 %v5297, 16
      %v5540 = vrot.slane %v5538, 5
      %v5541 = vor.u32 %v5537, %v5540
      %v5542 = vrot.slane %v5541, 4
      %v5544 = vshll.u32 %v5298, 16
      %v5546 = vrot.slane %v5544, 5
      %v5547 = vsel %vm1653, %v5542, %v5546
      %v5548 = vshrl.u32 %v5298, 16
      %v5550 = vrot.slane %v5548, 4
      %v5551 = vor.u32 %v5550, %v5546
      %v5552 = vrot.slane %v5551, 4
      %v5554 = vshll.u32 %v5299, 16
      %v5556 = vrot.slane %v5554, 5
      %v5557 = vsel %vm1653, %v5552, %v5556
      %v5559 = vshrl.u32 %v5300, 16
      %v5561 = vrot.slane %v5559, 4
      %v5562 = vshll.u32 %v5300, 16
      %v5564 = vrot.slane %v5562, 5
      %v5565 = vor.u32 %v5561, %v5564
      %v5566 = vrot.slane %v5565, 4
      %v5568 = vshll.u32 %v5301, 16
      %v5570 = vrot.slane %v5568, 5
      %v5571 = vsel %vm1653, %v5566, %v5570
      %v5572 = vshrl.u32 %v5301, 16
      %v5574 = vrot.slane %v5572, 4
      %v5575 = vor.u32 %v5574, %v5570
      %v5576 = vrot.slane %v5575, 4
      %v5578 = vshll.u32 %v5302, 16
      %v5580 = vrot.slane %v5578, 5
      %v5581 = vsel %vm1653, %v5576, %v5580
      %v5583 = vshrl.u32 %v5303, 16
      %v5585 = vrot.slane %v5583, 4
      %v5586 = vshll.u32 %v5303, 16
      %v5588 = vrot.slane %v5586, 5
      %v5589 = vor.u32 %v5585, %v5588
      %v5590 = vrot.slane %v5589, 4
      %v5592 = vshll.u32 %v5304, 16
      %v5594 = vrot.slane %v5592, 5
      %v5595 = vsel %vm1653, %v5590, %v5594
      %v5596 = vshrl.u32 %v5304, 16
      %v5598 = vrot.slane %v5596, 4
      %v5599 = vor.u32 %v5598, %v5594
      %v5600 = vrot.slane %v5599, 4
      %v5602 = vshll.u32 %v5305, 16
      %v5604 = vrot.slane %v5602, 5
      %v5605 = vsel %vm1653, %v5600, %v5604
      %v5607 = vshrl.u32 %v5306, 16
      %v5609 = vrot.slane %v5607, 4
      %v5610 = vshll.u32 %v5306, 16
      %v5612 = vrot.slane %v5610, 5
      %v5613 = vor.u32 %v5609, %v5612
      %v5614 = vrot.slane %v5613, 4
      %v5616 = vshll.u32 %v5307, 16
      %v5618 = vrot.slane %v5616, 5
      %v5619 = vsel %vm1653, %v5614, %v5618
      %v5620 = vshrl.u32 %v5307, 16
      %v5622 = vrot.slane %v5620, 4
      %v5623 = vor.u32 %v5622, %v5618
      %v5624 = vrot.slane %v5623, 4
      %v5626 = vshll.u32 %v5308, 16
      %v5628 = vrot.slane %v5626, 5
      %v5629 = vsel %vm1653, %v5624, %v5628
      %v5631 = vshrl.u32 %v5309, 16
      %v5633 = vrot.slane %v5631, 4
      %v5634 = vshll.u32 %v5309, 16
      %v5636 = vrot.slane %v5634, 5
      %v5637 = vor.u32 %v5633, %v5636
      %v5638 = vrot.slane %v5637, 4
      %v5640 = vshll.u32 %v5310, 16
      %v5642 = vrot.slane %v5640, 5
      %v5643 = vsel %vm1653, %v5638, %v5642
      %v5644 = vshrl.u32 %v5310, 16
      %v5646 = vrot.slane %v5644, 4
      %v5647 = vor.u32 %v5646, %v5642
      %v5648 = vrot.slane %v5647, 4
      %v5650 = vshll.u32 %v5311, 16
      %v5652 = vrot.slane %v5650, 5
      %v5653 = vsel %vm1653, %v5648, %v5652
      %v5655 = vshrl.u32 %v5312, 16
      %v5657 = vrot.slane %v5655, 4
      %v5658 = vshll.u32 %v5312, 16
      %v5660 = vrot.slane %v5658, 5
      %v5661 = vor.u32 %v5657, %v5660
      %v5662 = vrot.slane %v5661, 4
      %v5664 = vshll.u32 %v5313, 16
      %v5666 = vrot.slane %v5664, 5
      %v5667 = vsel %vm1653, %v5662, %v5666
      %v5668 = vshrl.u32 %v5313, 16
      %v5670 = vrot.slane %v5668, 4
      %v5671 = vor.u32 %v5670, %v5666
      %v5672 = vrot.slane %v5671, 4
      %v5674 = vshll.u32 %v5314, 16
      %v5676 = vrot.slane %v5674, 5
      %v5677 = vsel %vm1653, %v5672, %v5676
      %v5679 = vshrl.u32 %v5315, 16
      %v5681 = vrot.slane %v5679, 4
      %v5682 = vshll.u32 %v5315, 16
      %v5684 = vrot.slane %v5682, 5
      %v5685 = vor.u32 %v5681, %v5684
      %v5686 = vrot.slane %v5685, 4
      %v5688 = vshll.u32 %v5316, 16
      %v5690 = vrot.slane %v5688, 5
      %v5691 = vsel %vm1653, %v5686, %v5690
      %v5692 = vshrl.u32 %v5316, 16
      %v5694 = vrot.slane %v5692, 4
      %v5695 = vor.u32 %v5694, %v5690
      %v5696 = vrot.slane %v5695, 4
      %v5698 = vshll.u32 %v5317, 16
      %v5700 = vrot.slane %v5698, 5
      %v5701 = vsel %vm1653, %v5696, %v5700
      %s5702 = scalar_lea.vmem %s1, 512
      %v5703 = vld [vmem:[%s5702] sm:$0xf]
      %v5704 = vld [vmem:[%s5702 + $0x4] sm:$0xf]
      %v5705 = vld [vmem:[%s5702 + $0x8] sm:$0xf]
      %v5706 = vld [vmem:[%s5702 + $0xc] sm:$0xf]
      %v5707 = vld [vmem:[%s5702 + $0x10] sm:$0xf]
      %v5708 = vld [vmem:[%s5702 + $0x14] sm:$0xf]
      %v5709 = vld [vmem:[%s5702 + $0x18] sm:$0xf]
      %v5710 = vld [vmem:[%s5702 + $0x1c] sm:$0xf]
      %v5711 = vld [vmem:[%s5702 + $0x20] sm:$0xf]
      %v5712 = vld [vmem:[%s5702 + $0x24] sm:$0xf]
      %v5713 = vld [vmem:[%s5702 + $0x28] sm:$0xf]
      %v5714 = vld [vmem:[%s5702 + $0x2c] sm:$0xf]
      %v5715 = vld [vmem:[%s5702 + $0x30] sm:$0xf]
      %v5716 = vld [vmem:[%s5702 + $0x34] sm:$0xf]
      %v5717 = vld [vmem:[%s5702 + $0x38] sm:$0xf]
      %v5718 = vld [vmem:[%s5702 + $0x3c] sm:$0xf]
      %v5719 = vunpack.c.l.b16 %v5331
      %v5720 = vunpack.c.l.b16 %v5341
      %v5721 = vunpack.c.l.b16 %v5355
      %v5722 = vunpack.c.l.b16 %v5365
      %v5723 = vunpack.c.l.b16 %v5379
      %v5724 = vunpack.c.l.b16 %v5389
      %v5725 = vunpack.c.l.b16 %v5403
      %v5726 = vunpack.c.l.b16 %v5413
      %v5727 = vunpack.c.l.b16 %v5427
      %v5728 = vunpack.c.l.b16 %v5437
      %v5729 = vunpack.c.l.b16 %v5451
      %v5730 = vunpack.c.l.b16 %v5461
      %v5731 = vunpack.c.l.b16 %v5475
      %v5732 = vunpack.c.l.b16 %v5485
      %v5733 = vunpack.c.l.b16 %v5499
      %v5734 = vunpack.c.l.b16 %v5509
      %v5735 = vunpack.c.l.b16 %v5523
      %v5736 = vunpack.c.l.b16 %v5533
      %v5737 = vunpack.c.l.b16 %v5547
      %v5738 = vunpack.c.l.b16 %v5557
      %v5739 = vunpack.c.l.b16 %v5571
      %v5740 = vunpack.c.l.b16 %v5581
      %v5741 = vunpack.c.l.b16 %v5595
      %v5742 = vunpack.c.l.b16 %v5605
      %v5743 = vunpack.c.l.b16 %v5619
      %v5744 = vunpack.c.l.b16 %v5629
      %v5745 = vunpack.c.l.b16 %v5643
      %v5746 = vunpack.c.l.b16 %v5653
      %v5747 = vunpack.c.l.b16 %v5667
      %v5748 = vunpack.c.l.b16 %v5677
      %v5749 = vunpack.c.l.b16 %v5691
      %v5750 = vunpack.c.l.b16 %v5701
      %v5751 = vpack.c.b16 %v5720, %v5719
      %v5752 = vpack.c.b16 %v5722, %v5721
      %v5753 = vpack.c.b16 %v5724, %v5723
      %v5754 = vpack.c.b16 %v5726, %v5725
      %v5755 = vpack.c.b16 %v5728, %v5727
      %v5756 = vpack.c.b16 %v5730, %v5729
      %v5757 = vpack.c.b16 %v5732, %v5731
      %v5758 = vpack.c.b16 %v5734, %v5733
      %v5759 = vpack.c.b16 %v5736, %v5735
      %v5760 = vpack.c.b16 %v5738, %v5737
      %v5761 = vpack.c.b16 %v5740, %v5739
      %v5762 = vpack.c.b16 %v5742, %v5741
      %v5763 = vpack.c.b16 %v5744, %v5743
      %v5764 = vpack.c.b16 %v5746, %v5745
      %v5765 = vpack.c.b16 %v5748, %v5747
      %v5766 = vpack.c.b16 %v5750, %v5749
      %v5799 = vunpack.c.l.b16 %v5703
      %v5800 = vunpack.c.l.b16 %v5704
      %v5801 = vunpack.c.l.b16 %v5705
      %v5802 = vunpack.c.l.b16 %v5706
      %v5803 = vunpack.c.l.b16 %v5707
      %v5804 = vunpack.c.l.b16 %v5708
      %v5805 = vunpack.c.l.b16 %v5709
      %v5806 = vunpack.c.l.b16 %v5710
      %v5807 = vunpack.c.l.b16 %v5711
      %v5808 = vunpack.c.l.b16 %v5712
      %v5809 = vunpack.c.l.b16 %v5713
      %v5810 = vunpack.c.l.b16 %v5714
      %v5811 = vunpack.c.l.b16 %v5715
      %v5812 = vunpack.c.l.b16 %v5716
      %v5813 = vunpack.c.l.b16 %v5717
      %v5814 = vunpack.c.l.b16 %v5718
      %v5815 = vpack.c.b16 %v5800, %v5799
      %v5816 = vpack.c.b16 %v5802, %v5801
      %v5817 = vpack.c.b16 %v5804, %v5803
      %v5818 = vpack.c.b16 %v5806, %v5805
      %v5819 = vpack.c.b16 %v5808, %v5807
      %v5820 = vpack.c.b16 %v5810, %v5809
      %v5821 = vpack.c.b16 %v5812, %v5811
      %v5822 = vpack.c.b16 %v5814, %v5813
      %5831 = vmatprep.subr.bf16.mxu0 0
      %5832 = vmatpush1.bf16.msra.mxu0 %v5822
      %5833 = vmatprep.subr.bf16.mxu0 0
      %5834 = vmatpush1.bf16.msra.mxu0 %v5821
      %5835 = vmatprep.subr.bf16.mxu0 0
      %5836 = vmatpush1.bf16.msra.mxu0 %v5820
      %5837 = vmatprep.subr.bf16.mxu0 0
      %5838 = vmatpush1.bf16.msra.mxu0 %v5819
      %5839 = vmatprep.subr.bf16.mxu0 0
      %5840 = vmatpush1.bf16.msra.mxu0 %v5818
      %5841 = vmatprep.subr.bf16.mxu0 0
      %5842 = vmatpush1.bf16.msra.mxu0 %v5817
      %5843 = vmatprep.subr.bf16.mxu0 0
      %5844 = vmatpush1.bf16.msra.mxu0 %v5816
      %5845 = vmatprep.subr.bf16.mxu0 0
      %5846 = vmatpush1.bf16.msra.mxu0 %v5815
      %5847 = vmatprep.subr.bf16.mxu0 0
      %5848 = vmatpush2.bf16.msra.mxu0 0
      %5849 = vmatprep.subr.bf16.mxu0 0
      %5850 = vmatpush2.bf16.msra.mxu0 0
      %5851 = vmatprep.subr.bf16.mxu0 0
      %5852 = vmatpush2.bf16.msra.mxu0 0
      %5853 = vmatprep.subr.bf16.mxu0 0
      %5854 = vmatpush2.bf16.msra.mxu0 0
      %5855 = vmatprep.subr.bf16.mxu0 0
      %5856 = vmatpush2.bf16.msra.mxu0 0
      %5857 = vmatprep.subr.bf16.mxu0 0
      %5858 = vmatpush2.bf16.msra.mxu0 0
      %5859 = vmatprep.subr.bf16.mxu0 0
      %5860 = vmatpush2.bf16.msra.mxu0 0
      %5861 = vmatprep.subr.bf16.mxu0 0
      %5862 = vmatpush2.bf16.msra.mxu0 0
      %5863 = vmatprep.mubr.bf16.mxu0 0
      %5864 = vmatmul.mubr.bf16.gmra.mxu0 %v5751
      %v5865 = vpop.f32.mrf.mxu0
      %v5866 = vadd.f32 0.0, %v5865
      %v5867 = vpop.f32.mrf.mxu0
      %v5868 = vpop.f32.mrf.mxu0
      %v5869 = vadd.f32 0.0, %v5868
      %v5870 = vpop.f32.mrf.mxu0
      %5871 = vmatprep.mubr.bf16.mxu0 0
      %5872 = vmatmul.mubr.bf16.gmra.mxu0 %v5752
      %v5873 = vpop.f32.mrf.mxu0
      %v5874 = vadd.f32 0.0, %v5873
      %v5875 = vpop.f32.mrf.mxu0
      %v5876 = vpop.f32.mrf.mxu0
      %v5877 = vadd.f32 0.0, %v5876
      %v5878 = vpop.f32.mrf.mxu0
      %5879 = vmatprep.mubr.bf16.mxu0 0
      %5880 = vmatmul.mubr.bf16.gmra.mxu0 %v5753
      %v5881 = vpop.f32.mrf.mxu0
      %v5882 = vadd.f32 0.0, %v5881
      %v5883 = vpop.f32.mrf.mxu0
      %v5884 = vpop.f32.mrf.mxu0
      %v5885 = vadd.f32 0.0, %v5884
      %v5886 = vpop.f32.mrf.mxu0
      %5887 = vmatprep.mubr.bf16.mxu0 0
      %5888 = vmatmul.mubr.bf16.gmra.mxu0 %v5754
      %v5889 = vpop.f32.mrf.mxu0
      %v5890 = vadd.f32 0.0, %v5889
      %v5891 = vpop.f32.mrf.mxu0
      %v5892 = vpop.f32.mrf.mxu0
      %v5893 = vadd.f32 0.0, %v5892
      %v5894 = vpop.f32.mrf.mxu0
      %5895 = vmatprep.mubr.bf16.mxu0 0
      %5896 = vmatmul.mubr.bf16.gmra.mxu0 %v5755
      %v5897 = vpop.f32.mrf.mxu0
      %v5898 = vadd.f32 0.0, %v5897
      %v5899 = vpop.f32.mrf.mxu0
      %v5900 = vpop.f32.mrf.mxu0
      %v5901 = vadd.f32 0.0, %v5900
      %v5902 = vpop.f32.mrf.mxu0
      %5903 = vmatprep.mubr.bf16.mxu0 0
      %5904 = vmatmul.mubr.bf16.gmra.mxu0 %v5756
      %v5905 = vpop.f32.mrf.mxu0
      %v5906 = vadd.f32 0.0, %v5905
      %v5907 = vpop.f32.mrf.mxu0
      %v5908 = vpop.f32.mrf.mxu0
      %v5909 = vadd.f32 0.0, %v5908
      %v5910 = vpop.f32.mrf.mxu0
      %5911 = vmatprep.mubr.bf16.mxu0 0
      %5912 = vmatmul.mubr.bf16.gmra.mxu0 %v5757
      %v5913 = vpop.f32.mrf.mxu0
      %v5914 = vadd.f32 0.0, %v5913
      %v5915 = vpop.f32.mrf.mxu0
      %v5916 = vpop.f32.mrf.mxu0
      %v5917 = vadd.f32 0.0, %v5916
      %v5918 = vpop.f32.mrf.mxu0
      %5919 = vmatprep.mubr.bf16.mxu0 0
      %5920 = vmatmul.mubr.bf16.gmra.mxu0 %v5758
      %v5921 = vpop.f32.mrf.mxu0
      %v5922 = vadd.f32 0.0, %v5921
      %v5923 = vpop.f32.mrf.mxu0
      %v5924 = vpop.f32.mrf.mxu0
      %v5925 = vadd.f32 0.0, %v5924
      %v5926 = vpop.f32.mrf.mxu0
      %5927 = vmatprep.mubr.bf16.mxu0 0
      %5928 = vmatmul.mubr.bf16.gmra.mxu0 %v5759
      %v5929 = vpop.f32.mrf.mxu0
      %v5930 = vadd.f32 0.0, %v5929
      %v5931 = vpop.f32.mrf.mxu0
      %v5932 = vpop.f32.mrf.mxu0
      %v5933 = vadd.f32 0.0, %v5932
      %v5934 = vpop.f32.mrf.mxu0
      %5935 = vmatprep.mubr.bf16.mxu0 0
      %5936 = vmatmul.mubr.bf16.gmra.mxu0 %v5760
      %v5937 = vpop.f32.mrf.mxu0
      %v5938 = vadd.f32 0.0, %v5937
      %v5939 = vpop.f32.mrf.mxu0
      %v5940 = vpop.f32.mrf.mxu0
      %v5941 = vadd.f32 0.0, %v5940
      %v5942 = vpop.f32.mrf.mxu0
      %5943 = vmatprep.mubr.bf16.mxu0 0
      %5944 = vmatmul.mubr.bf16.gmra.mxu0 %v5761
      %v5945 = vpop.f32.mrf.mxu0
      %v5946 = vadd.f32 0.0, %v5945
      %v5947 = vpop.f32.mrf.mxu0
      %v5948 = vpop.f32.mrf.mxu0
      %v5949 = vadd.f32 0.0, %v5948
      %v5950 = vpop.f32.mrf.mxu0
      %5951 = vmatprep.mubr.bf16.mxu0 0
      %5952 = vmatmul.mubr.bf16.gmra.mxu0 %v5762
      %v5953 = vpop.f32.mrf.mxu0
      %v5954 = vadd.f32 0.0, %v5953
      %v5955 = vpop.f32.mrf.mxu0
      %v5956 = vpop.f32.mrf.mxu0
      %v5957 = vadd.f32 0.0, %v5956
      %v5958 = vpop.f32.mrf.mxu0
      %5959 = vmatprep.mubr.bf16.mxu0 0
      %5960 = vmatmul.mubr.bf16.gmra.mxu0 %v5763
      %v5961 = vpop.f32.mrf.mxu0
      %v5962 = vadd.f32 0.0, %v5961
      %v5963 = vpop.f32.mrf.mxu0
      %v5964 = vpop.f32.mrf.mxu0
      %v5965 = vadd.f32 0.0, %v5964
      %v5966 = vpop.f32.mrf.mxu0
      %5967 = vmatprep.mubr.bf16.mxu0 0
      %5968 = vmatmul.mubr.bf16.gmra.mxu0 %v5764
      %v5969 = vpop.f32.mrf.mxu0
      %v5970 = vadd.f32 0.0, %v5969
      %v5971 = vpop.f32.mrf.mxu0
      %v5972 = vpop.f32.mrf.mxu0
      %v5973 = vadd.f32 0.0, %v5972
      %v5974 = vpop.f32.mrf.mxu0
      %5975 = vmatprep.mubr.bf16.mxu0 0
      %5976 = vmatmul.mubr.bf16.gmra.mxu0 %v5765
      %v5977 = vpop.f32.mrf.mxu0
      %v5978 = vadd.f32 0.0, %v5977
      %v5979 = vpop.f32.mrf.mxu0
      %v5980 = vpop.f32.mrf.mxu0
      %v5981 = vadd.f32 0.0, %v5980
      %v5982 = vpop.f32.mrf.mxu0
      %5983 = vmatprep.mubr.bf16.mxu0 0
      %5984 = vmatmul.mubr.bf16.gmra.mxu0 %v5766
      %v5985 = vpop.f32.mrf.mxu0
      %v5986 = vadd.f32 0.0, %v5985
      %v5987 = vpop.f32.mrf.mxu0
      %v5988 = vpop.f32.mrf.mxu0
      %v5989 = vadd.f32 0.0, %v5988
      %v5990 = vpop.f32.mrf.mxu0
      %5991 = vdwg.mxu0
      %v5992 = vadd.f32 %v5238, %v5866
      %v5993 = vadd.f32 %v5239, %v5869
      %v5994 = vadd.f32 %v5240, %v5874
      %v5995 = vadd.f32 %v5241, %v5877
      %v5996 = vadd.f32 %v5242, %v5882
      %v5997 = vadd.f32 %v5243, %v5885
      %v5998 = vadd.f32 %v5244, %v5890
      %v5999 = vadd.f32 %v5245, %v5893
      %v6000 = vadd.f32 %v5246, %v5898
      %v6001 = vadd.f32 %v5247, %v5901
      %v6002 = vadd.f32 %v5248, %v5906
      %v6003 = vadd.f32 %v5249, %v5909
      %v6004 = vadd.f32 %v5250, %v5914
      %v6005 = vadd.f32 %v5251, %v5917
      %v6006 = vadd.f32 %v5252, %v5922
      %v6007 = vadd.f32 %v5253, %v5925
      %v6008 = vadd.f32 %v5254, %v5930
      %v6009 = vadd.f32 %v5255, %v5933
      %v6010 = vadd.f32 %v5256, %v5938
      %v6011 = vadd.f32 %v5257, %v5941
      %v6012 = vadd.f32 %v5258, %v5946
      %v6013 = vadd.f32 %v5259, %v5949
      %v6014 = vadd.f32 %v5260, %v5954
      %v6015 = vadd.f32 %v5261, %v5957
      %v6016 = vadd.f32 %v5262, %v5962
      %v6017 = vadd.f32 %v5263, %v5965
      %v6018 = vadd.f32 %v5264, %v5970
      %v6019 = vadd.f32 %v5265, %v5973
      %v6020 = vadd.f32 %v5266, %v5978
      %v6021 = vadd.f32 %v5267, %v5981
      %v6022 = vadd.f32 %v5268, %v5986
      %v6023 = vadd.f32 %v5269, %v5989
      %v6024 = vmax.f32 %v5992, 0.0
      %v6025 = vmax.f32 %v5993, 0.0
      %v6026 = vmax.f32 %v5994, 0.0
      %v6027 = vmax.f32 %v5995, 0.0
      %v6028 = vmax.f32 %v5996, 0.0
      %v6029 = vmax.f32 %v5997, 0.0
      %v6030 = vmax.f32 %v5998, 0.0
      %v6031 = vmax.f32 %v5999, 0.0
      %v6032 = vmax.f32 %v6000, 0.0
      %v6033 = vmax.f32 %v6001, 0.0
      %v6034 = vmax.f32 %v6002, 0.0
      %v6035 = vmax.f32 %v6003, 0.0
      %v6036 = vmax.f32 %v6004, 0.0
      %v6037 = vmax.f32 %v6005, 0.0
      %v6038 = vmax.f32 %v6006, 0.0
      %v6039 = vmax.f32 %v6007, 0.0
      %v6040 = vmax.f32 %v6008, 0.0
      %v6041 = vmax.f32 %v6009, 0.0
      %v6042 = vmax.f32 %v6010, 0.0
      %v6043 = vmax.f32 %v6011, 0.0
      %v6044 = vmax.f32 %v6012, 0.0
      %v6045 = vmax.f32 %v6013, 0.0
      %v6046 = vmax.f32 %v6014, 0.0
      %v6047 = vmax.f32 %v6015, 0.0
      %v6048 = vmax.f32 %v6016, 0.0
      %v6049 = vmax.f32 %v6017, 0.0
      %v6050 = vmax.f32 %v6018, 0.0
      %v6051 = vmax.f32 %v6019, 0.0
      %v6052 = vmax.f32 %v6020, 0.0
      %v6053 = vmax.f32 %v6021, 0.0
      %v6054 = vmax.f32 %v6022, 0.0
      %v6055 = vmax.f32 %v6023, 0.0
      %v6056 = vpack.c.bf16 %v6025, %v6024
      %v6057 = vpack.c.bf16 %v6027, %v6026
      %v6058 = vpack.c.bf16 %v6029, %v6028
      %v6059 = vpack.c.bf16 %v6031, %v6030
      %v6060 = vpack.c.bf16 %v6033, %v6032
      %v6061 = vpack.c.bf16 %v6035, %v6034
      %v6062 = vpack.c.bf16 %v6037, %v6036
      %v6063 = vpack.c.bf16 %v6039, %v6038
      %v6064 = vpack.c.bf16 %v6041, %v6040
      %v6065 = vpack.c.bf16 %v6043, %v6042
      %v6066 = vpack.c.bf16 %v6045, %v6044
      %v6067 = vpack.c.bf16 %v6047, %v6046
      %v6068 = vpack.c.bf16 %v6049, %v6048
      %v6069 = vpack.c.bf16 %v6051, %v6050
      %v6070 = vpack.c.bf16 %v6053, %v6052
      %v6071 = vpack.c.bf16 %v6055, %v6054
      %v6088 = vunpack.c.l.b16 %v6056
      %v6089 = vunpack.c.h.b16 %v6056
      %v6090 = vunpack.c.l.b16 %v6057
      %v6091 = vunpack.c.h.b16 %v6057
      %v6092 = vunpack.c.l.b16 %v6058
      %v6093 = vunpack.c.h.b16 %v6058
      %v6094 = vunpack.c.l.b16 %v6059
      %v6095 = vunpack.c.h.b16 %v6059
      %v6096 = vunpack.c.l.b16 %v6060
      %v6097 = vunpack.c.h.b16 %v6060
      %v6098 = vunpack.c.l.b16 %v6061
      %v6099 = vunpack.c.h.b16 %v6061
      %v6100 = vunpack.c.l.b16 %v6062
      %v6101 = vunpack.c.h.b16 %v6062
      %v6102 = vunpack.c.l.b16 %v6063
      %v6103 = vunpack.c.h.b16 %v6063
      %v6104 = vunpack.c.l.b16 %v6064
      %v6105 = vunpack.c.h.b16 %v6064
      %v6106 = vunpack.c.l.b16 %v6065
      %v6107 = vunpack.c.h.b16 %v6065
      %v6108 = vunpack.c.l.b16 %v6066
      %v6109 = vunpack.c.h.b16 %v6066
      %v6110 = vunpack.c.l.b16 %v6067
      %v6111 = vunpack.c.h.b16 %v6067
      %v6112 = vunpack.c.l.b16 %v6068
      %v6113 = vunpack.c.h.b16 %v6068
      %v6114 = vunpack.c.l.b16 %v6069
      %v6115 = vunpack.c.h.b16 %v6069
      %v6116 = vunpack.c.l.b16 %v6070
      %v6117 = vunpack.c.h.b16 %v6070
      %v6118 = vunpack.c.l.b16 %v6071
      %v6119 = vunpack.c.h.b16 %v6071
      %v6120 = vpack.c.b16 %v6088, %v6088
      %v6121 = vpack.c.b16 %v6089, %v6089
      %v6122 = vpack.c.b16 %v6090, %v6090
      %v6123 = vpack.c.b16 %v6091, %v6091
      %v6124 = vpack.c.b16 %v6092, %v6092
      %v6125 = vpack.c.b16 %v6093, %v6093
      %v6126 = vpack.c.b16 %v6094, %v6094
      %v6127 = vpack.c.b16 %v6095, %v6095
      %v6128 = vpack.c.b16 %v6096, %v6096
      %v6129 = vpack.c.b16 %v6097, %v6097
      %v6130 = vpack.c.b16 %v6098, %v6098
      %v6131 = vpack.c.b16 %v6099, %v6099
      %v6132 = vpack.c.b16 %v6100, %v6100
      %v6133 = vpack.c.b16 %v6101, %v6101
      %v6134 = vpack.c.b16 %v6102, %v6102
      %v6135 = vpack.c.b16 %v6103, %v6103
      %v6136 = vpack.c.b16 %v6104, %v6104
      %v6137 = vpack.c.b16 %v6105, %v6105
      %v6138 = vpack.c.b16 %v6106, %v6106
      %v6139 = vpack.c.b16 %v6107, %v6107
      %v6140 = vpack.c.b16 %v6108, %v6108
      %v6141 = vpack.c.b16 %v6109, %v6109
      %v6142 = vpack.c.b16 %v6110, %v6110
      %v6143 = vpack.c.b16 %v6111, %v6111
      %v6144 = vpack.c.b16 %v6112, %v6112
      %v6145 = vpack.c.b16 %v6113, %v6113
      %v6146 = vpack.c.b16 %v6114, %v6114
      %v6147 = vpack.c.b16 %v6115, %v6115
      %v6148 = vpack.c.b16 %v6116, %v6116
      %v6149 = vpack.c.b16 %v6117, %v6117
      %v6150 = vpack.c.b16 %v6118, %v6118
      %v6151 = vpack.c.b16 %v6119, %v6119
      %s6184 = smul.addr %s487, 4
      %s6185 = scalar_lea.vmem [#allocation3], %s6184
      %6186 = vst [vmem:[%s6185 + $0x4] sm:$0xf] %v6120
      %6187 = vst [vmem:[%s6185 + $0x8] sm:$0xf] %v6121
      %6188 = vst [vmem:[%s6185 + $0x14] sm:$0xf] %v6122
      %6189 = vst [vmem:[%s6185 + $0x18] sm:$0xf] %v6123
      %6190 = vst [vmem:[%s6185 + $0x24] sm:$0xf] %v6124
      %6191 = vst [vmem:[%s6185 + $0x28] sm:$0xf] %v6125
      %6192 = vst [vmem:[%s6185 + $0x34] sm:$0xf] %v6126
      %6193 = vst [vmem:[%s6185 + $0x38] sm:$0xf] %v6127
      %6194 = vst [vmem:[%s6185 + $0x44] sm:$0xf] %v6128
      %6195 = vst [vmem:[%s6185 + $0x48] sm:$0xf] %v6129
      %6196 = vst [vmem:[%s6185 + $0x54] sm:$0xf] %v6130
      %6197 = vst [vmem:[%s6185 + $0x58] sm:$0xf] %v6131
      %6198 = vst [vmem:[%s6185 + $0x64] sm:$0xf] %v6132
      %6199 = vst [vmem:[%s6185 + $0x68] sm:$0xf] %v6133
      %6200 = vst [vmem:[%s6185 + $0x74] sm:$0xf] %v6134
      %6201 = vst [vmem:[%s6185 + $0x78] sm:$0xf] %v6135
      %6202 = vst [vmem:[%s6185 + $0x84] sm:$0xf] %v6136
      %6203 = vst [vmem:[%s6185 + $0x88] sm:$0xf] %v6137
      %6204 = vst [vmem:[%s6185 + $0x94] sm:$0xf] %v6138
      %6205 = vst [vmem:[%s6185 + $0x98] sm:$0xf] %v6139
      %6206 = vst [vmem:[%s6185 + $0xa4] sm:$0xf] %v6140
      %6207 = vst [vmem:[%s6185 + $0xa8] sm:$0xf] %v6141
      %6208 = vst [vmem:[%s6185 + $0xb4] sm:$0xf] %v6142
      %6209 = vst [vmem:[%s6185 + $0xb8] sm:$0xf] %v6143
      %6210 = vst [vmem:[%s6185 + $0xc4] sm:$0xf] %v6144
      %6211 = vst [vmem:[%s6185 + $0xc8] sm:$0xf] %v6145
      %6212 = vst [vmem:[%s6185 + $0xd4] sm:$0xf] %v6146
      %6213 = vst [vmem:[%s6185 + $0xd8] sm:$0xf] %v6147
      %6214 = vst [vmem:[%s6185 + $0xe4] sm:$0xf] %v6148
      %6215 = vst [vmem:[%s6185 + $0xe8] sm:$0xf] %v6149
      %6216 = vst [vmem:[%s6185 + $0xf4] sm:$0xf] %v6150
      %6217 = vst [vmem:[%s6185 + $0xf8] sm:$0xf] %v6151
      %s6218 = smul.addr %s522, 4
      %s6219 = scalar_lea.vmem [#allocation3], %s6218
      %v6220 = vld [vmem:[%s6219] sm:$0x8]
      %v6221 = vld [vmem:[%s6219 + $0x4] sm:$0xf]
      %v6222 = vld [vmem:[%s6219 + $0x8] sm:$0xf]
      %v6223 = vld [vmem:[%s6219 + $0x10] sm:$0x8]
      %v6224 = vld [vmem:[%s6219 + $0x14] sm:$0xf]
      %v6225 = vld [vmem:[%s6219 + $0x18] sm:$0xf]
      %v6226 = vld [vmem:[%s6219 + $0x20] sm:$0x8]
      %v6227 = vld [vmem:[%s6219 + $0x24] sm:$0xf]
      %v6228 = vld [vmem:[%s6219 + $0x28] sm:$0xf]
      %v6229 = vld [vmem:[%s6219 + $0x30] sm:$0x8]
      %v6230 = vld [vmem:[%s6219 + $0x34] sm:$0xf]
      %v6231 = vld [vmem:[%s6219 + $0x38] sm:$0xf]
      %v6232 = vld [vmem:[%s6219 + $0x40] sm:$0x8]
      %v6233 = vld [vmem:[%s6219 + $0x44] sm:$0xf]
      %v6234 = vld [vmem:[%s6219 + $0x48] sm:$0xf]
      %v6235 = vld [vmem:[%s6219 + $0x50] sm:$0x8]
      %v6236 = vld [vmem:[%s6219 + $0x54] sm:$0xf]
      %v6237 = vld [vmem:[%s6219 + $0x58] sm:$0xf]
      %v6238 = vld [vmem:[%s6219 + $0x60] sm:$0x8]
      %v6239 = vld [vmem:[%s6219 + $0x64] sm:$0xf]
      %v6240 = vld [vmem:[%s6219 + $0x68] sm:$0xf]
      %v6241 = vld [vmem:[%s6219 + $0x70] sm:$0x8]
      %v6242 = vld [vmem:[%s6219 + $0x74] sm:$0xf]
      %v6243 = vld [vmem:[%s6219 + $0x78] sm:$0xf]
      %v6244 = vld [vmem:[%s6219 + $0x80] sm:$0x8]
      %v6245 = vld [vmem:[%s6219 + $0x84] sm:$0xf]
      %v6246 = vld [vmem:[%s6219 + $0x88] sm:$0xf]
      %v6247 = vld [vmem:[%s6219 + $0x90] sm:$0x8]
      %v6248 = vld [vmem:[%s6219 + $0x94] sm:$0xf]
      %v6249 = vld [vmem:[%s6219 + $0x98] sm:$0xf]
      %v6250 = vld [vmem:[%s6219 + $0xa0] sm:$0x8]
      %v6251 = vld [vmem:[%s6219 + $0xa4] sm:$0xf]
      %v6252 = vld [vmem:[%s6219 + $0xa8] sm:$0xf]
      %v6253 = vld [vmem:[%s6219 + $0xb0] sm:$0x8]
      %v6254 = vld [vmem:[%s6219 + $0xb4] sm:$0xf]
      %v6255 = vld [vmem:[%s6219 + $0xb8] sm:$0xf]
      %v6256 = vld [vmem:[%s6219 + $0xc0] sm:$0x8]
      %v6257 = vld [vmem:[%s6219 + $0xc4] sm:$0xf]
      %v6258 = vld [vmem:[%s6219 + $0xc8] sm:$0xf]
      %v6259 = vld [vmem:[%s6219 + $0xd0] sm:$0x8]
      %v6260 = vld [vmem:[%s6219 + $0xd4] sm:$0xf]
      %v6261 = vld [vmem:[%s6219 + $0xd8] sm:$0xf]
      %v6262 = vld [vmem:[%s6219 + $0xe0] sm:$0x8]
      %v6263 = vld [vmem:[%s6219 + $0xe4] sm:$0xf]
      %v6264 = vld [vmem:[%s6219 + $0xe8] sm:$0xf]
      %v6265 = vld [vmem:[%s6219 + $0xf0] sm:$0x8]
      %v6266 = vld [vmem:[%s6219 + $0xf4] sm:$0xf]
      %v6267 = vld [vmem:[%s6219 + $0xf8] sm:$0xf]
      %v6269 = vshrl.u32 %v6220, 16
      %v6271 = vrot.slane %v6269, 7
      %v6272 = vrot.slane %v6271, 4
      %v6274 = vshrl.u32 %v6221, 16
      %v6276 = vrot.slane %v6274, 7
      %v6277 = vshll.u32 %v6221, 16
      %v6279 = vor.u32 %v6276, %v6277
      %v6280 = vsel %vm575, %v6272, %v6279
      %v6281 = vrot.slane %v6276, 4
      %v6283 = vshrl.u32 %v6222, 16
      %v6285 = vrot.slane %v6283, 7
      %v6286 = vshll.u32 %v6222, 16
      %v6288 = vor.u32 %v6285, %v6286
      %v6289 = vsel %vm575, %v6281, %v6288
      %v6291 = vshrl.u32 %v6223, 16
      %v6293 = vrot.slane %v6291, 7
      %v6294 = vrot.slane %v6293, 4
      %v6296 = vshrl.u32 %v6224, 16
      %v6298 = vrot.slane %v6296, 7
      %v6299 = vshll.u32 %v6224, 16
      %v6301 = vor.u32 %v6298, %v6299
      %v6302 = vsel %vm575, %v6294, %v6301
      %v6303 = vrot.slane %v6298, 4
      %v6305 = vshrl.u32 %v6225, 16
      %v6307 = vrot.slane %v6305, 7
      %v6308 = vshll.u32 %v6225, 16
      %v6310 = vor.u32 %v6307, %v6308
      %v6311 = vsel %vm575, %v6303, %v6310
      %v6313 = vshrl.u32 %v6226, 16
      %v6315 = vrot.slane %v6313, 7
      %v6316 = vrot.slane %v6315, 4
      %v6318 = vshrl.u32 %v6227, 16
      %v6320 = vrot.slane %v6318, 7
      %v6321 = vshll.u32 %v6227, 16
      %v6323 = vor.u32 %v6320, %v6321
      %v6324 = vsel %vm575, %v6316, %v6323
      %v6325 = vrot.slane %v6320, 4
      %v6327 = vshrl.u32 %v6228, 16
      %v6329 = vrot.slane %v6327, 7
      %v6330 = vshll.u32 %v6228, 16
      %v6332 = vor.u32 %v6329, %v6330
      %v6333 = vsel %vm575, %v6325, %v6332
      %v6335 = vshrl.u32 %v6229, 16
      %v6337 = vrot.slane %v6335, 7
      %v6338 = vrot.slane %v6337, 4
      %v6340 = vshrl.u32 %v6230, 16
      %v6342 = vrot.slane %v6340, 7
      %v6343 = vshll.u32 %v6230, 16
      %v6345 = vor.u32 %v6342, %v6343
      %v6346 = vsel %vm575, %v6338, %v6345
      %v6347 = vrot.slane %v6342, 4
      %v6349 = vshrl.u32 %v6231, 16
      %v6351 = vrot.slane %v6349, 7
      %v6352 = vshll.u32 %v6231, 16
      %v6354 = vor.u32 %v6351, %v6352
      %v6355 = vsel %vm575, %v6347, %v6354
      %v6357 = vshrl.u32 %v6232, 16
      %v6359 = vrot.slane %v6357, 7
      %v6360 = vrot.slane %v6359, 4
      %v6362 = vshrl.u32 %v6233, 16
      %v6364 = vrot.slane %v6362, 7
      %v6365 = vshll.u32 %v6233, 16
      %v6367 = vor.u32 %v6364, %v6365
      %v6368 = vsel %vm575, %v6360, %v6367
      %v6369 = vrot.slane %v6364, 4
      %v6371 = vshrl.u32 %v6234, 16
      %v6373 = vrot.slane %v6371, 7
      %v6374 = vshll.u32 %v6234, 16
      %v6376 = vor.u32 %v6373, %v6374
      %v6377 = vsel %vm575, %v6369, %v6376
      %v6379 = vshrl.u32 %v6235, 16
      %v6381 = vrot.slane %v6379, 7
      %v6382 = vrot.slane %v6381, 4
      %v6384 = vshrl.u32 %v6236, 16
      %v6386 = vrot.slane %v6384, 7
      %v6387 = vshll.u32 %v6236, 16
      %v6389 = vor.u32 %v6386, %v6387
      %v6390 = vsel %vm575, %v6382, %v6389
      %v6391 = vrot.slane %v6386, 4
      %v6393 = vshrl.u32 %v6237, 16
      %v6395 = vrot.slane %v6393, 7
      %v6396 = vshll.u32 %v6237, 16
      %v6398 = vor.u32 %v6395, %v6396
      %v6399 = vsel %vm575, %v6391, %v6398
      %v6401 = vshrl.u32 %v6238, 16
      %v6403 = vrot.slane %v6401, 7
      %v6404 = vrot.slane %v6403, 4
      %v6406 = vshrl.u32 %v6239, 16
      %v6408 = vrot.slane %v6406, 7
      %v6409 = vshll.u32 %v6239, 16
      %v6411 = vor.u32 %v6408, %v6409
      %v6412 = vsel %vm575, %v6404, %v6411
      %v6413 = vrot.slane %v6408, 4
      %v6415 = vshrl.u32 %v6240, 16
      %v6417 = vrot.slane %v6415, 7
      %v6418 = vshll.u32 %v6240, 16
      %v6420 = vor.u32 %v6417, %v6418
      %v6421 = vsel %vm575, %v6413, %v6420
      %v6423 = vshrl.u32 %v6241, 16
      %v6425 = vrot.slane %v6423, 7
      %v6426 = vrot.slane %v6425, 4
      %v6428 = vshrl.u32 %v6242, 16
      %v6430 = vrot.slane %v6428, 7
      %v6431 = vshll.u32 %v6242, 16
      %v6433 = vor.u32 %v6430, %v6431
      %v6434 = vsel %vm575, %v6426, %v6433
      %v6435 = vrot.slane %v6430, 4
      %v6437 = vshrl.u32 %v6243, 16
      %v6439 = vrot.slane %v6437, 7
      %v6440 = vshll.u32 %v6243, 16
      %v6442 = vor.u32 %v6439, %v6440
      %v6443 = vsel %vm575, %v6435, %v6442
      %v6445 = vshrl.u32 %v6244, 16
      %v6447 = vrot.slane %v6445, 7
      %v6448 = vrot.slane %v6447, 4
      %v6450 = vshrl.u32 %v6245, 16
      %v6452 = vrot.slane %v6450, 7
      %v6453 = vshll.u32 %v6245, 16
      %v6455 = vor.u32 %v6452, %v6453
      %v6456 = vsel %vm575, %v6448, %v6455
      %v6457 = vrot.slane %v6452, 4
      %v6459 = vshrl.u32 %v6246, 16
      %v6461 = vrot.slane %v6459, 7
      %v6462 = vshll.u32 %v6246, 16
      %v6464 = vor.u32 %v6461, %v6462
      %v6465 = vsel %vm575, %v6457, %v6464
      %v6467 = vshrl.u32 %v6247, 16
      %v6469 = vrot.slane %v6467, 7
      %v6470 = vrot.slane %v6469, 4
      %v6472 = vshrl.u32 %v6248, 16
      %v6474 = vrot.slane %v6472, 7
      %v6475 = vshll.u32 %v6248, 16
      %v6477 = vor.u32 %v6474, %v6475
      %v6478 = vsel %vm575, %v6470, %v6477
      %v6479 = vrot.slane %v6474, 4
      %v6481 = vshrl.u32 %v6249, 16
      %v6483 = vrot.slane %v6481, 7
      %v6484 = vshll.u32 %v6249, 16
      %v6486 = vor.u32 %v6483, %v6484
      %v6487 = vsel %vm575, %v6479, %v6486
      %v6489 = vshrl.u32 %v6250, 16
      %v6491 = vrot.slane %v6489, 7
      %v6492 = vrot.slane %v6491, 4
      %v6494 = vshrl.u32 %v6251, 16
      %v6496 = vrot.slane %v6494, 7
      %v6497 = vshll.u32 %v6251, 16
      %v6499 = vor.u32 %v6496, %v6497
      %v6500 = vsel %vm575, %v6492, %v6499
      %v6501 = vrot.slane %v6496, 4
      %v6503 = vshrl.u32 %v6252, 16
      %v6505 = vrot.slane %v6503, 7
      %v6506 = vshll.u32 %v6252, 16
      %v6508 = vor.u32 %v6505, %v6506
      %v6509 = vsel %vm575, %v6501, %v6508
      %v6511 = vshrl.u32 %v6253, 16
      %v6513 = vrot.slane %v6511, 7
      %v6514 = vrot.slane %v6513, 4
      %v6516 = vshrl.u32 %v6254, 16
      %v6518 = vrot.slane %v6516, 7
      %v6519 = vshll.u32 %v6254, 16
      %v6521 = vor.u32 %v6518, %v6519
      %v6522 = vsel %vm575, %v6514, %v6521
      %v6523 = vrot.slane %v6518, 4
      %v6525 = vshrl.u32 %v6255, 16
      %v6527 = vrot.slane %v6525, 7
      %v6528 = vshll.u32 %v6255, 16
      %v6530 = vor.u32 %v6527, %v6528
      %v6531 = vsel %vm575, %v6523, %v6530
      %v6533 = vshrl.u32 %v6256, 16
      %v6535 = vrot.slane %v6533, 7
      %v6536 = vrot.slane %v6535, 4
      %v6538 = vshrl.u32 %v6257, 16
      %v6540 = vrot.slane %v6538, 7
      %v6541 = vshll.u32 %v6257, 16
      %v6543 = vor.u32 %v6540, %v6541
      %v6544 = vsel %vm575, %v6536, %v6543
      %v6545 = vrot.slane %v6540, 4
      %v6547 = vshrl.u32 %v6258, 16
      %v6549 = vrot.slane %v6547, 7
      %v6550 = vshll.u32 %v6258, 16
      %v6552 = vor.u32 %v6549, %v6550
      %v6553 = vsel %vm575, %v6545, %v6552
      %v6555 = vshrl.u32 %v6259, 16
      %v6557 = vrot.slane %v6555, 7
      %v6558 = vrot.slane %v6557, 4
      %v6560 = vshrl.u32 %v6260, 16
      %v6562 = vrot.slane %v6560, 7
      %v6563 = vshll.u32 %v6260, 16
      %v6565 = vor.u32 %v6562, %v6563
      %v6566 = vsel %vm575, %v6558, %v6565
      %v6567 = vrot.slane %v6562, 4
      %v6569 = vshrl.u32 %v6261, 16
      %v6571 = vrot.slane %v6569, 7
      %v6572 = vshll.u32 %v6261, 16
      %v6574 = vor.u32 %v6571, %v6572
      %v6575 = vsel %vm575, %v6567, %v6574
      %v6577 = vshrl.u32 %v6262, 16
      %v6579 = vrot.slane %v6577, 7
      %v6580 = vrot.slane %v6579, 4
      %v6582 = vshrl.u32 %v6263, 16
      %v6584 = vrot.slane %v6582, 7
      %v6585 = vshll.u32 %v6263, 16
      %v6587 = vor.u32 %v6584, %v6585
      %v6588 = vsel %vm575, %v6580, %v6587
      %v6589 = vrot.slane %v6584, 4
      %v6591 = vshrl.u32 %v6264, 16
      %v6593 = vrot.slane %v6591, 7
      %v6594 = vshll.u32 %v6264, 16
      %v6596 = vor.u32 %v6593, %v6594
      %v6597 = vsel %vm575, %v6589, %v6596
      %v6599 = vshrl.u32 %v6265, 16
      %v6601 = vrot.slane %v6599, 7
      %v6602 = vrot.slane %v6601, 4
      %v6604 = vshrl.u32 %v6266, 16
      %v6606 = vrot.slane %v6604, 7
      %v6607 = vshll.u32 %v6266, 16
      %v6609 = vor.u32 %v6606, %v6607
      %v6610 = vsel %vm575, %v6602, %v6609
      %v6611 = vrot.slane %v6606, 4
      %v6613 = vshrl.u32 %v6267, 16
      %v6615 = vrot.slane %v6613, 7
      %v6616 = vshll.u32 %v6267, 16
      %v6618 = vor.u32 %v6615, %v6616
      %v6619 = vsel %vm575, %v6611, %v6618
      %v6620 = vld [vmem:[%s3] sm:$0xf]
      %v6621 = vld [vmem:[%s3 + $0x4] sm:$0xf]
      %v6622 = vld [vmem:[%s3 + $0x8] sm:$0xf]
      %v6623 = vld [vmem:[%s3 + $0xc] sm:$0xf]
      %v6624 = vld [vmem:[%s3 + $0x10] sm:$0xf]
      %v6625 = vld [vmem:[%s3 + $0x14] sm:$0xf]
      %v6626 = vld [vmem:[%s3 + $0x18] sm:$0xf]
      %v6627 = vld [vmem:[%s3 + $0x1c] sm:$0xf]
      %v6628 = vld [vmem:[%s3 + $0x20] sm:$0xf]
      %v6629 = vld [vmem:[%s3 + $0x24] sm:$0xf]
      %v6630 = vld [vmem:[%s3 + $0x28] sm:$0xf]
      %v6631 = vld [vmem:[%s3 + $0x2c] sm:$0xf]
      %v6632 = vld [vmem:[%s3 + $0x30] sm:$0xf]
      %v6633 = vld [vmem:[%s3 + $0x34] sm:$0xf]
      %v6634 = vld [vmem:[%s3 + $0x38] sm:$0xf]
      %v6635 = vld [vmem:[%s3 + $0x3c] sm:$0xf]
      %v6636 = vunpack.c.l.b16 %v6280
      %v6637 = vunpack.c.l.b16 %v6289
      %v6638 = vunpack.c.l.b16 %v6302
      %v6639 = vunpack.c.l.b16 %v6311
      %v6640 = vunpack.c.l.b16 %v6324
      %v6641 = vunpack.c.l.b16 %v6333
      %v6642 = vunpack.c.l.b16 %v6346
      %v6643 = vunpack.c.l.b16 %v6355
      %v6644 = vunpack.c.l.b16 %v6368
      %v6645 = vunpack.c.l.b16 %v6377
      %v6646 = vunpack.c.l.b16 %v6390
      %v6647 = vunpack.c.l.b16 %v6399
      %v6648 = vunpack.c.l.b16 %v6412
      %v6649 = vunpack.c.l.b16 %v6421
      %v6650 = vunpack.c.l.b16 %v6434
      %v6651 = vunpack.c.l.b16 %v6443
      %v6652 = vunpack.c.l.b16 %v6456
      %v6653 = vunpack.c.l.b16 %v6465
      %v6654 = vunpack.c.l.b16 %v6478
      %v6655 = vunpack.c.l.b16 %v6487
      %v6656 = vunpack.c.l.b16 %v6500
      %v6657 = vunpack.c.l.b16 %v6509
      %v6658 = vunpack.c.l.b16 %v6522
      %v6659 = vunpack.c.l.b16 %v6531
      %v6660 = vunpack.c.l.b16 %v6544
      %v6661 = vunpack.c.l.b16 %v6553
      %v6662 = vunpack.c.l.b16 %v6566
      %v6663 = vunpack.c.l.b16 %v6575
      %v6664 = vunpack.c.l.b16 %v6588
      %v6665 = vunpack.c.l.b16 %v6597
      %v6666 = vunpack.c.l.b16 %v6610
      %v6667 = vunpack.c.l.b16 %v6619
      %v6668 = vpack.c.b16 %v6637, %v6636
      %v6669 = vpack.c.b16 %v6639, %v6638
      %v6670 = vpack.c.b16 %v6641, %v6640
      %v6671 = vpack.c.b16 %v6643, %v6642
      %v6672 = vpack.c.b16 %v6645, %v6644
      %v6673 = vpack.c.b16 %v6647, %v6646
      %v6674 = vpack.c.b16 %v6649, %v6648
      %v6675 = vpack.c.b16 %v6651, %v6650
      %v6676 = vpack.c.b16 %v6653, %v6652
      %v6677 = vpack.c.b16 %v6655, %v6654
      %v6678 = vpack.c.b16 %v6657, %v6656
      %v6679 = vpack.c.b16 %v6659, %v6658
      %v6680 = vpack.c.b16 %v6661, %v6660
      %v6681 = vpack.c.b16 %v6663, %v6662
      %v6682 = vpack.c.b16 %v6665, %v6664
      %v6683 = vpack.c.b16 %v6667, %v6666
      %v6716 = vunpack.c.l.b16 %v6620
      %v6717 = vunpack.c.l.b16 %v6621
      %v6718 = vunpack.c.l.b16 %v6622
      %v6719 = vunpack.c.l.b16 %v6623
      %v6720 = vunpack.c.l.b16 %v6624
      %v6721 = vunpack.c.l.b16 %v6625
      %v6722 = vunpack.c.l.b16 %v6626
      %v6723 = vunpack.c.l.b16 %v6627
      %v6724 = vunpack.c.l.b16 %v6628
      %v6725 = vunpack.c.l.b16 %v6629
      %v6726 = vunpack.c.l.b16 %v6630
      %v6727 = vunpack.c.l.b16 %v6631
      %v6728 = vunpack.c.l.b16 %v6632
      %v6729 = vunpack.c.l.b16 %v6633
      %v6730 = vunpack.c.l.b16 %v6634
      %v6731 = vunpack.c.l.b16 %v6635
      %v6732 = vpack.c.b16 %v6717, %v6716
      %v6733 = vpack.c.b16 %v6719, %v6718
      %v6734 = vpack.c.b16 %v6721, %v6720
      %v6735 = vpack.c.b16 %v6723, %v6722
      %v6736 = vpack.c.b16 %v6725, %v6724
      %v6737 = vpack.c.b16 %v6727, %v6726
      %v6738 = vpack.c.b16 %v6729, %v6728
      %v6739 = vpack.c.b16 %v6731, %v6730
      %6748 = vmatprep.subr.bf16.mxu0 0
      %6749 = vmatpush1.bf16.msra.mxu0 %v6739
      %6750 = vmatprep.subr.bf16.mxu0 0
      %6751 = vmatpush1.bf16.msra.mxu0 %v6738
      %6752 = vmatprep.subr.bf16.mxu0 0
      %6753 = vmatpush1.bf16.msra.mxu0 %v6737
      %6754 = vmatprep.subr.bf16.mxu0 0
      %6755 = vmatpush1.bf16.msra.mxu0 %v6736
      %6756 = vmatprep.subr.bf16.mxu0 0
      %6757 = vmatpush1.bf16.msra.mxu0 %v6735
      %6758 = vmatprep.subr.bf16.mxu0 0
      %6759 = vmatpush1.bf16.msra.mxu0 %v6734
      %6760 = vmatprep.subr.bf16.mxu0 0
      %6761 = vmatpush1.bf16.msra.mxu0 %v6733
      %6762 = vmatprep.subr.bf16.mxu0 0
      %6763 = vmatpush1.bf16.msra.mxu0 %v6732
      %6764 = vmatprep.subr.bf16.mxu0 0
      %6765 = vmatpush2.bf16.msra.mxu0 0
      %6766 = vmatprep.subr.bf16.mxu0 0
      %6767 = vmatpush2.bf16.msra.mxu0 0
      %6768 = vmatprep.subr.bf16.mxu0 0
      %6769 = vmatpush2.bf16.msra.mxu0 0
      %6770 = vmatprep.subr.bf16.mxu0 0
      %6771 = vmatpush2.bf16.msra.mxu0 0
      %6772 = vmatprep.subr.bf16.mxu0 0
      %6773 = vmatpush2.bf16.msra.mxu0 0
      %6774 = vmatprep.subr.bf16.mxu0 0
      %6775 = vmatpush2.bf16.msra.mxu0 0
      %6776 = vmatprep.subr.bf16.mxu0 0
      %6777 = vmatpush2.bf16.msra.mxu0 0
      %6778 = vmatprep.subr.bf16.mxu0 0
      %6779 = vmatpush2.bf16.msra.mxu0 0
      %6780 = vmatprep.mubr.bf16.mxu0 0
      %6781 = vmatmul.mubr.bf16.gmra.mxu0 %v6668
      %v6782 = vpop.f32.mrf.mxu0
      %v6783 = vadd.f32 0.0, %v6782
      %v6784 = vpop.f32.mrf.mxu0
      %v6785 = vpop.f32.mrf.mxu0
      %v6786 = vadd.f32 0.0, %v6785
      %v6787 = vpop.f32.mrf.mxu0
      %6788 = vmatprep.mubr.bf16.mxu0 0
      %6789 = vmatmul.mubr.bf16.gmra.mxu0 %v6669
      %v6790 = vpop.f32.mrf.mxu0
      %v6791 = vadd.f32 0.0, %v6790
      %v6792 = vpop.f32.mrf.mxu0
      %v6793 = vpop.f32.mrf.mxu0
      %v6794 = vadd.f32 0.0, %v6793
      %v6795 = vpop.f32.mrf.mxu0
      %6796 = vmatprep.mubr.bf16.mxu0 0
      %6797 = vmatmul.mubr.bf16.gmra.mxu0 %v6670
      %v6798 = vpop.f32.mrf.mxu0
      %v6799 = vadd.f32 0.0, %v6798
      %v6800 = vpop.f32.mrf.mxu0
      %v6801 = vpop.f32.mrf.mxu0
      %v6802 = vadd.f32 0.0, %v6801
      %v6803 = vpop.f32.mrf.mxu0
      %6804 = vmatprep.mubr.bf16.mxu0 0
      %6805 = vmatmul.mubr.bf16.gmra.mxu0 %v6671
      %v6806 = vpop.f32.mrf.mxu0
      %v6807 = vadd.f32 0.0, %v6806
      %v6808 = vpop.f32.mrf.mxu0
      %v6809 = vpop.f32.mrf.mxu0
      %v6810 = vadd.f32 0.0, %v6809
      %v6811 = vpop.f32.mrf.mxu0
      %6812 = vmatprep.mubr.bf16.mxu0 0
      %6813 = vmatmul.mubr.bf16.gmra.mxu0 %v6672
      %v6814 = vpop.f32.mrf.mxu0
      %v6815 = vadd.f32 0.0, %v6814
      %v6816 = vpop.f32.mrf.mxu0
      %v6817 = vpop.f32.mrf.mxu0
      %v6818 = vadd.f32 0.0, %v6817
      %v6819 = vpop.f32.mrf.mxu0
      %6820 = vmatprep.mubr.bf16.mxu0 0
      %6821 = vmatmul.mubr.bf16.gmra.mxu0 %v6673
      %v6822 = vpop.f32.mrf.mxu0
      %v6823 = vadd.f32 0.0, %v6822
      %v6824 = vpop.f32.mrf.mxu0
      %v6825 = vpop.f32.mrf.mxu0
      %v6826 = vadd.f32 0.0, %v6825
      %v6827 = vpop.f32.mrf.mxu0
      %6828 = vmatprep.mubr.bf16.mxu0 0
      %6829 = vmatmul.mubr.bf16.gmra.mxu0 %v6674
      %v6830 = vpop.f32.mrf.mxu0
      %v6831 = vadd.f32 0.0, %v6830
      %v6832 = vpop.f32.mrf.mxu0
      %v6833 = vpop.f32.mrf.mxu0
      %v6834 = vadd.f32 0.0, %v6833
      %v6835 = vpop.f32.mrf.mxu0
      %6836 = vmatprep.mubr.bf16.mxu0 0
      %6837 = vmatmul.mubr.bf16.gmra.mxu0 %v6675
      %v6838 = vpop.f32.mrf.mxu0
      %v6839 = vadd.f32 0.0, %v6838
      %v6840 = vpop.f32.mrf.mxu0
      %v6841 = vpop.f32.mrf.mxu0
      %v6842 = vadd.f32 0.0, %v6841
      %v6843 = vpop.f32.mrf.mxu0
      %6844 = vmatprep.mubr.bf16.mxu0 0
      %6845 = vmatmul.mubr.bf16.gmra.mxu0 %v6676
      %v6846 = vpop.f32.mrf.mxu0
      %v6847 = vadd.f32 0.0, %v6846
      %v6848 = vpop.f32.mrf.mxu0
      %v6849 = vpop.f32.mrf.mxu0
      %v6850 = vadd.f32 0.0, %v6849
      %v6851 = vpop.f32.mrf.mxu0
      %6852 = vmatprep.mubr.bf16.mxu0 0
      %6853 = vmatmul.mubr.bf16.gmra.mxu0 %v6677
      %v6854 = vpop.f32.mrf.mxu0
      %v6855 = vadd.f32 0.0, %v6854
      %v6856 = vpop.f32.mrf.mxu0
      %v6857 = vpop.f32.mrf.mxu0
      %v6858 = vadd.f32 0.0, %v6857
      %v6859 = vpop.f32.mrf.mxu0
      %6860 = vmatprep.mubr.bf16.mxu0 0
      %6861 = vmatmul.mubr.bf16.gmra.mxu0 %v6678
      %v6862 = vpop.f32.mrf.mxu0
      %v6863 = vadd.f32 0.0, %v6862
      %v6864 = vpop.f32.mrf.mxu0
      %v6865 = vpop.f32.mrf.mxu0
      %v6866 = vadd.f32 0.0, %v6865
      %v6867 = vpop.f32.mrf.mxu0
      %6868 = vmatprep.mubr.bf16.mxu0 0
      %6869 = vmatmul.mubr.bf16.gmra.mxu0 %v6679
      %v6870 = vpop.f32.mrf.mxu0
      %v6871 = vadd.f32 0.0, %v6870
      %v6872 = vpop.f32.mrf.mxu0
      %v6873 = vpop.f32.mrf.mxu0
      %v6874 = vadd.f32 0.0, %v6873
      %v6875 = vpop.f32.mrf.mxu0
      %6876 = vmatprep.mubr.bf16.mxu0 0
      %6877 = vmatmul.mubr.bf16.gmra.mxu0 %v6680
      %v6878 = vpop.f32.mrf.mxu0
      %v6879 = vadd.f32 0.0, %v6878
      %v6880 = vpop.f32.mrf.mxu0
      %v6881 = vpop.f32.mrf.mxu0
      %v6882 = vadd.f32 0.0, %v6881
      %v6883 = vpop.f32.mrf.mxu0
      %6884 = vmatprep.mubr.bf16.mxu0 0
      %6885 = vmatmul.mubr.bf16.gmra.mxu0 %v6681
      %v6886 = vpop.f32.mrf.mxu0
      %v6887 = vadd.f32 0.0, %v6886
      %v6888 = vpop.f32.mrf.mxu0
      %v6889 = vpop.f32.mrf.mxu0
      %v6890 = vadd.f32 0.0, %v6889
      %v6891 = vpop.f32.mrf.mxu0
      %6892 = vmatprep.mubr.bf16.mxu0 0
      %6893 = vmatmul.mubr.bf16.gmra.mxu0 %v6682
      %v6894 = vpop.f32.mrf.mxu0
      %v6895 = vadd.f32 0.0, %v6894
      %v6896 = vpop.f32.mrf.mxu0
      %v6897 = vpop.f32.mrf.mxu0
      %v6898 = vadd.f32 0.0, %v6897
      %v6899 = vpop.f32.mrf.mxu0
      %6900 = vmatprep.mubr.bf16.mxu0 0
      %6901 = vmatmul.mubr.bf16.gmra.mxu0 %v6683
      %v6902 = vpop.f32.mrf.mxu0
      %v6903 = vadd.f32 0.0, %v6902
      %v6904 = vpop.f32.mrf.mxu0
      %v6905 = vpop.f32.mrf.mxu0
      %v6906 = vadd.f32 0.0, %v6905
      %v6907 = vpop.f32.mrf.mxu0
      %6908 = vdwg.mxu0
      %v6909 = vadd.f32 %v322, %v6783
      %v6910 = vadd.f32 %v322, %v6786
      %v6911 = vadd.f32 %v322, %v6791
      %v6912 = vadd.f32 %v322, %v6794
      %v6913 = vadd.f32 %v322, %v6799
      %v6914 = vadd.f32 %v322, %v6802
      %v6915 = vadd.f32 %v322, %v6807
      %v6916 = vadd.f32 %v322, %v6810
      %v6917 = vadd.f32 %v322, %v6815
      %v6918 = vadd.f32 %v322, %v6818
      %v6919 = vadd.f32 %v322, %v6823
      %v6920 = vadd.f32 %v322, %v6826
      %v6921 = vadd.f32 %v322, %v6831
      %v6922 = vadd.f32 %v322, %v6834
      %v6923 = vadd.f32 %v322, %v6839
      %v6924 = vadd.f32 %v322, %v6842
      %v6925 = vadd.f32 %v322, %v6847
      %v6926 = vadd.f32 %v322, %v6850
      %v6927 = vadd.f32 %v322, %v6855
      %v6928 = vadd.f32 %v322, %v6858
      %v6929 = vadd.f32 %v322, %v6863
      %v6930 = vadd.f32 %v322, %v6866
      %v6931 = vadd.f32 %v322, %v6871
      %v6932 = vadd.f32 %v322, %v6874
      %v6933 = vadd.f32 %v322, %v6879
      %v6934 = vadd.f32 %v322, %v6882
      %v6935 = vadd.f32 %v322, %v6887
      %v6936 = vadd.f32 %v322, %v6890
      %v6937 = vadd.f32 %v322, %v6895
      %v6938 = vadd.f32 %v322, %v6898
      %v6939 = vadd.f32 %v322, %v6903
      %v6940 = vadd.f32 %v322, %v6906
      %s6941 = scalar_lea.vmem %s3, 64
      %v6942 = vld [vmem:[%s6941] sm:$0xf]
      %v6943 = vld [vmem:[%s6941 + $0x4] sm:$0xf]
      %v6944 = vld [vmem:[%s6941 + $0x8] sm:$0xf]
      %v6945 = vld [vmem:[%s6941 + $0xc] sm:$0xf]
      %v6946 = vld [vmem:[%s6941 + $0x10] sm:$0xf]
      %v6947 = vld [vmem:[%s6941 + $0x14] sm:$0xf]
      %v6948 = vld [vmem:[%s6941 + $0x18] sm:$0xf]
      %v6949 = vld [vmem:[%s6941 + $0x1c] sm:$0xf]
      %v6950 = vld [vmem:[%s6941 + $0x20] sm:$0xf]
      %v6951 = vld [vmem:[%s6941 + $0x24] sm:$0xf]
      %v6952 = vld [vmem:[%s6941 + $0x28] sm:$0xf]
      %v6953 = vld [vmem:[%s6941 + $0x2c] sm:$0xf]
      %v6954 = vld [vmem:[%s6941 + $0x30] sm:$0xf]
      %v6955 = vld [vmem:[%s6941 + $0x34] sm:$0xf]
      %v6956 = vld [vmem:[%s6941 + $0x38] sm:$0xf]
      %v6957 = vld [vmem:[%s6941 + $0x3c] sm:$0xf]
      %v6990 = vunpack.c.l.b16 %v6221
      %v6991 = vunpack.c.l.b16 %v6222
      %v6992 = vunpack.c.l.b16 %v6224
      %v6993 = vunpack.c.l.b16 %v6225
      %v6994 = vunpack.c.l.b16 %v6227
      %v6995 = vunpack.c.l.b16 %v6228
      %v6996 = vunpack.c.l.b16 %v6230
      %v6997 = vunpack.c.l.b16 %v6231
      %v6998 = vunpack.c.l.b16 %v6233
      %v6999 = vunpack.c.l.b16 %v6234
      %v7000 = vunpack.c.l.b16 %v6236
      %v7001 = vunpack.c.l.b16 %v6237
      %v7002 = vunpack.c.l.b16 %v6239
      %v7003 = vunpack.c.l.b16 %v6240
      %v7004 = vunpack.c.l.b16 %v6242
      %v7005 = vunpack.c.l.b16 %v6243
      %v7006 = vunpack.c.l.b16 %v6245
      %v7007 = vunpack.c.l.b16 %v6246
      %v7008 = vunpack.c.l.b16 %v6248
      %v7009 = vunpack.c.l.b16 %v6249
      %v7010 = vunpack.c.l.b16 %v6251
      %v7011 = vunpack.c.l.b16 %v6252
      %v7012 = vunpack.c.l.b16 %v6254
      %v7013 = vunpack.c.l.b16 %v6255
      %v7014 = vunpack.c.l.b16 %v6257
      %v7015 = vunpack.c.l.b16 %v6258
      %v7016 = vunpack.c.l.b16 %v6260
      %v7017 = vunpack.c.l.b16 %v6261
      %v7018 = vunpack.c.l.b16 %v6263
      %v7019 = vunpack.c.l.b16 %v6264
      %v7020 = vunpack.c.l.b16 %v6266
      %v7021 = vunpack.c.l.b16 %v6267
      %v7022 = vpack.c.b16 %v6991, %v6990
      %v7023 = vpack.c.b16 %v6993, %v6992
      %v7024 = vpack.c.b16 %v6995, %v6994
      %v7025 = vpack.c.b16 %v6997, %v6996
      %v7026 = vpack.c.b16 %v6999, %v6998
      %v7027 = vpack.c.b16 %v7001, %v7000
      %v7028 = vpack.c.b16 %v7003, %v7002
      %v7029 = vpack.c.b16 %v7005, %v7004
      %v7030 = vpack.c.b16 %v7007, %v7006
      %v7031 = vpack.c.b16 %v7009, %v7008
      %v7032 = vpack.c.b16 %v7011, %v7010
      %v7033 = vpack.c.b16 %v7013, %v7012
      %v7034 = vpack.c.b16 %v7015, %v7014
      %v7035 = vpack.c.b16 %v7017, %v7016
      %v7036 = vpack.c.b16 %v7019, %v7018
      %v7037 = vpack.c.b16 %v7021, %v7020
      %v7070 = vunpack.c.l.b16 %v6942
      %v7071 = vunpack.c.l.b16 %v6943
      %v7072 = vunpack.c.l.b16 %v6944
      %v7073 = vunpack.c.l.b16 %v6945
      %v7074 = vunpack.c.l.b16 %v6946
      %v7075 = vunpack.c.l.b16 %v6947
      %v7076 = vunpack.c.l.b16 %v6948
      %v7077 = vunpack.c.l.b16 %v6949
      %v7078 = vunpack.c.l.b16 %v6950
      %v7079 = vunpack.c.l.b16 %v6951
      %v7080 = vunpack.c.l.b16 %v6952
      %v7081 = vunpack.c.l.b16 %v6953
      %v7082 = vunpack.c.l.b16 %v6954
      %v7083 = vunpack.c.l.b16 %v6955
      %v7084 = vunpack.c.l.b16 %v6956
      %v7085 = vunpack.c.l.b16 %v6957
      %v7086 = vpack.c.b16 %v7071, %v7070
      %v7087 = vpack.c.b16 %v7073, %v7072
      %v7088 = vpack.c.b16 %v7075, %v7074
      %v7089 = vpack.c.b16 %v7077, %v7076
      %v7090 = vpack.c.b16 %v7079, %v7078
      %v7091 = vpack.c.b16 %v7081, %v7080
      %v7092 = vpack.c.b16 %v7083, %v7082
      %v7093 = vpack.c.b16 %v7085, %v7084
      %7102 = vmatprep.subr.bf16.mxu0 0
      %7103 = vmatpush1.bf16.msra.mxu0 %v7093
      %7104 = vmatprep.subr.bf16.mxu0 0
      %7105 = vmatpush1.bf16.msra.mxu0 %v7092
      %7106 = vmatprep.subr.bf16.mxu0 0
      %7107 = vmatpush1.bf16.msra.mxu0 %v7091
      %7108 = vmatprep.subr.bf16.mxu0 0
      %7109 = vmatpush1.bf16.msra.mxu0 %v7090
      %7110 = vmatprep.subr.bf16.mxu0 0
      %7111 = vmatpush1.bf16.msra.mxu0 %v7089
      %7112 = vmatprep.subr.bf16.mxu0 0
      %7113 = vmatpush1.bf16.msra.mxu0 %v7088
      %7114 = vmatprep.subr.bf16.mxu0 0
      %7115 = vmatpush1.bf16.msra.mxu0 %v7087
      %7116 = vmatprep.subr.bf16.mxu0 0
      %7117 = vmatpush1.bf16.msra.mxu0 %v7086
      %7118 = vmatprep.subr.bf16.mxu0 0
      %7119 = vmatpush2.bf16.msra.mxu0 0
      %7120 = vmatprep.subr.bf16.mxu0 0
      %7121 = vmatpush2.bf16.msra.mxu0 0
      %7122 = vmatprep.subr.bf16.mxu0 0
      %7123 = vmatpush2.bf16.msra.mxu0 0
      %7124 = vmatprep.subr.bf16.mxu0 0
      %7125 = vmatpush2.bf16.msra.mxu0 0
      %7126 = vmatprep.subr.bf16.mxu0 0
      %7127 = vmatpush2.bf16.msra.mxu0 0
      %7128 = vmatprep.subr.bf16.mxu0 0
      %7129 = vmatpush2.bf16.msra.mxu0 0
      %7130 = vmatprep.subr.bf16.mxu0 0
      %7131 = vmatpush2.bf16.msra.mxu0 0
      %7132 = vmatprep.subr.bf16.mxu0 0
      %7133 = vmatpush2.bf16.msra.mxu0 0
      %7134 = vmatprep.mubr.bf16.mxu0 0
      %7135 = vmatmul.mubr.bf16.gmra.mxu0 %v7022
      %v7136 = vpop.f32.mrf.mxu0
      %v7137 = vadd.f32 0.0, %v7136
      %v7138 = vpop.f32.mrf.mxu0
      %v7139 = vpop.f32.mrf.mxu0
      %v7140 = vadd.f32 0.0, %v7139
      %v7141 = vpop.f32.mrf.mxu0
      %7142 = vmatprep.mubr.bf16.mxu0 0
      %7143 = vmatmul.mubr.bf16.gmra.mxu0 %v7023
      %v7144 = vpop.f32.mrf.mxu0
      %v7145 = vadd.f32 0.0, %v7144
      %v7146 = vpop.f32.mrf.mxu0
      %v7147 = vpop.f32.mrf.mxu0
      %v7148 = vadd.f32 0.0, %v7147
      %v7149 = vpop.f32.mrf.mxu0
      %7150 = vmatprep.mubr.bf16.mxu0 0
      %7151 = vmatmul.mubr.bf16.gmra.mxu0 %v7024
      %v7152 = vpop.f32.mrf.mxu0
      %v7153 = vadd.f32 0.0, %v7152
      %v7154 = vpop.f32.mrf.mxu0
      %v7155 = vpop.f32.mrf.mxu0
      %v7156 = vadd.f32 0.0, %v7155
      %v7157 = vpop.f32.mrf.mxu0
      %7158 = vmatprep.mubr.bf16.mxu0 0
      %7159 = vmatmul.mubr.bf16.gmra.mxu0 %v7025
      %v7160 = vpop.f32.mrf.mxu0
      %v7161 = vadd.f32 0.0, %v7160
      %v7162 = vpop.f32.mrf.mxu0
      %v7163 = vpop.f32.mrf.mxu0
      %v7164 = vadd.f32 0.0, %v7163
      %v7165 = vpop.f32.mrf.mxu0
      %7166 = vmatprep.mubr.bf16.mxu0 0
      %7167 = vmatmul.mubr.bf16.gmra.mxu0 %v7026
      %v7168 = vpop.f32.mrf.mxu0
      %v7169 = vadd.f32 0.0, %v7168
      %v7170 = vpop.f32.mrf.mxu0
      %v7171 = vpop.f32.mrf.mxu0
      %v7172 = vadd.f32 0.0, %v7171
      %v7173 = vpop.f32.mrf.mxu0
      %7174 = vmatprep.mubr.bf16.mxu0 0
      %7175 = vmatmul.mubr.bf16.gmra.mxu0 %v7027
      %v7176 = vpop.f32.mrf.mxu0
      %v7177 = vadd.f32 0.0, %v7176
      %v7178 = vpop.f32.mrf.mxu0
      %v7179 = vpop.f32.mrf.mxu0
      %v7180 = vadd.f32 0.0, %v7179
      %v7181 = vpop.f32.mrf.mxu0
      %7182 = vmatprep.mubr.bf16.mxu0 0
      %7183 = vmatmul.mubr.bf16.gmra.mxu0 %v7028
      %v7184 = vpop.f32.mrf.mxu0
      %v7185 = vadd.f32 0.0, %v7184
      %v7186 = vpop.f32.mrf.mxu0
      %v7187 = vpop.f32.mrf.mxu0
      %v7188 = vadd.f32 0.0, %v7187
      %v7189 = vpop.f32.mrf.mxu0
      %7190 = vmatprep.mubr.bf16.mxu0 0
      %7191 = vmatmul.mubr.bf16.gmra.mxu0 %v7029
      %v7192 = vpop.f32.mrf.mxu0
      %v7193 = vadd.f32 0.0, %v7192
      %v7194 = vpop.f32.mrf.mxu0
      %v7195 = vpop.f32.mrf.mxu0
      %v7196 = vadd.f32 0.0, %v7195
      %v7197 = vpop.f32.mrf.mxu0
      %7198 = vmatprep.mubr.bf16.mxu0 0
      %7199 = vmatmul.mubr.bf16.gmra.mxu0 %v7030
      %v7200 = vpop.f32.mrf.mxu0
      %v7201 = vadd.f32 0.0, %v7200
      %v7202 = vpop.f32.mrf.mxu0
      %v7203 = vpop.f32.mrf.mxu0
      %v7204 = vadd.f32 0.0, %v7203
      %v7205 = vpop.f32.mrf.mxu0
      %7206 = vmatprep.mubr.bf16.mxu0 0
      %7207 = vmatmul.mubr.bf16.gmra.mxu0 %v7031
      %v7208 = vpop.f32.mrf.mxu0
      %v7209 = vadd.f32 0.0, %v7208
      %v7210 = vpop.f32.mrf.mxu0
      %v7211 = vpop.f32.mrf.mxu0
      %v7212 = vadd.f32 0.0, %v7211
      %v7213 = vpop.f32.mrf.mxu0
      %7214 = vmatprep.mubr.bf16.mxu0 0
      %7215 = vmatmul.mubr.bf16.gmra.mxu0 %v7032
      %v7216 = vpop.f32.mrf.mxu0
      %v7217 = vadd.f32 0.0, %v7216
      %v7218 = vpop.f32.mrf.mxu0
      %v7219 = vpop.f32.mrf.mxu0
      %v7220 = vadd.f32 0.0, %v7219
      %v7221 = vpop.f32.mrf.mxu0
      %7222 = vmatprep.mubr.bf16.mxu0 0
      %7223 = vmatmul.mubr.bf16.gmra.mxu0 %v7033
      %v7224 = vpop.f32.mrf.mxu0
      %v7225 = vadd.f32 0.0, %v7224
      %v7226 = vpop.f32.mrf.mxu0
      %v7227 = vpop.f32.mrf.mxu0
      %v7228 = vadd.f32 0.0, %v7227
      %v7229 = vpop.f32.mrf.mxu0
      %7230 = vmatprep.mubr.bf16.mxu0 0
      %7231 = vmatmul.mubr.bf16.gmra.mxu0 %v7034
      %v7232 = vpop.f32.mrf.mxu0
      %v7233 = vadd.f32 0.0, %v7232
      %v7234 = vpop.f32.mrf.mxu0
      %v7235 = vpop.f32.mrf.mxu0
      %v7236 = vadd.f32 0.0, %v7235
      %v7237 = vpop.f32.mrf.mxu0
      %7238 = vmatprep.mubr.bf16.mxu0 0
      %7239 = vmatmul.mubr.bf16.gmra.mxu0 %v7035
      %v7240 = vpop.f32.mrf.mxu0
      %v7241 = vadd.f32 0.0, %v7240
      %v7242 = vpop.f32.mrf.mxu0
      %v7243 = vpop.f32.mrf.mxu0
      %v7244 = vadd.f32 0.0, %v7243
      %v7245 = vpop.f32.mrf.mxu0
      %7246 = vmatprep.mubr.bf16.mxu0 0
      %7247 = vmatmul.mubr.bf16.gmra.mxu0 %v7036
      %v7248 = vpop.f32.mrf.mxu0
      %v7249 = vadd.f32 0.0, %v7248
      %v7250 = vpop.f32.mrf.mxu0
      %v7251 = vpop.f32.mrf.mxu0
      %v7252 = vadd.f32 0.0, %v7251
      %v7253 = vpop.f32.mrf.mxu0
      %7254 = vmatprep.mubr.bf16.mxu0 0
      %7255 = vmatmul.mubr.bf16.gmra.mxu0 %v7037
      %v7256 = vpop.f32.mrf.mxu0
      %v7257 = vadd.f32 0.0, %v7256
      %v7258 = vpop.f32.mrf.mxu0
      %v7259 = vpop.f32.mrf.mxu0
      %v7260 = vadd.f32 0.0, %v7259
      %v7261 = vpop.f32.mrf.mxu0
      %7262 = vdwg.mxu0
      %v7263 = vadd.f32 %v6909, %v7137
      %v7264 = vadd.f32 %v6910, %v7140
      %v7265 = vadd.f32 %v6911, %v7145
      %v7266 = vadd.f32 %v6912, %v7148
      %v7267 = vadd.f32 %v6913, %v7153
      %v7268 = vadd.f32 %v6914, %v7156
      %v7269 = vadd.f32 %v6915, %v7161
      %v7270 = vadd.f32 %v6916, %v7164
      %v7271 = vadd.f32 %v6917, %v7169
      %v7272 = vadd.f32 %v6918, %v7172
      %v7273 = vadd.f32 %v6919, %v7177
      %v7274 = vadd.f32 %v6920, %v7180
      %v7275 = vadd.f32 %v6921, %v7185
      %v7276 = vadd.f32 %v6922, %v7188
      %v7277 = vadd.f32 %v6923, %v7193
      %v7278 = vadd.f32 %v6924, %v7196
      %v7279 = vadd.f32 %v6925, %v7201
      %v7280 = vadd.f32 %v6926, %v7204
      %v7281 = vadd.f32 %v6927, %v7209
      %v7282 = vadd.f32 %v6928, %v7212
      %v7283 = vadd.f32 %v6929, %v7217
      %v7284 = vadd.f32 %v6930, %v7220
      %v7285 = vadd.f32 %v6931, %v7225
      %v7286 = vadd.f32 %v6932, %v7228
      %v7287 = vadd.f32 %v6933, %v7233
      %v7288 = vadd.f32 %v6934, %v7236
      %v7289 = vadd.f32 %v6935, %v7241
      %v7290 = vadd.f32 %v6936, %v7244
      %v7291 = vadd.f32 %v6937, %v7249
      %v7292 = vadd.f32 %v6938, %v7252
      %v7293 = vadd.f32 %v6939, %v7257
      %v7294 = vadd.f32 %v6940, %v7260
      %v7295 = vld [vmem:[%s6219 + $0x4] sm:$0xf]
      %v7296 = vld [vmem:[%s6219 + $0x8] sm:$0xf]
      %v7297 = vld [vmem:[%s6219 + $0xc] sm:$0x1]
      %v7298 = vld [vmem:[%s6219 + $0x14] sm:$0xf]
      %v7299 = vld [vmem:[%s6219 + $0x18] sm:$0xf]
      %v7300 = vld [vmem:[%s6219 + $0x1c] sm:$0x1]
      %v7301 = vld [vmem:[%s6219 + $0x24] sm:$0xf]
      %v7302 = vld [vmem:[%s6219 + $0x28] sm:$0xf]
      %v7303 = vld [vmem:[%s6219 + $0x2c] sm:$0x1]
      %v7304 = vld [vmem:[%s6219 + $0x34] sm:$0xf]
      %v7305 = vld [vmem:[%s6219 + $0x38] sm:$0xf]
      %v7306 = vld [vmem:[%s6219 + $0x3c] sm:$0x1]
      %v7307 = vld [vmem:[%s6219 + $0x44] sm:$0xf]
      %v7308 = vld [vmem:[%s6219 + $0x48] sm:$0xf]
      %v7309 = vld [vmem:[%s6219 + $0x4c] sm:$0x1]
      %v7310 = vld [vmem:[%s6219 + $0x54] sm:$0xf]
      %v7311 = vld [vmem:[%s6219 + $0x58] sm:$0xf]
      %v7312 = vld [vmem:[%s6219 + $0x5c] sm:$0x1]
      %v7313 = vld [vmem:[%s6219 + $0x64] sm:$0xf]
      %v7314 = vld [vmem:[%s6219 + $0x68] sm:$0xf]
      %v7315 = vld [vmem:[%s6219 + $0x6c] sm:$0x1]
      %v7316 = vld [vmem:[%s6219 + $0x74] sm:$0xf]
      %v7317 = vld [vmem:[%s6219 + $0x78] sm:$0xf]
      %v7318 = vld [vmem:[%s6219 + $0x7c] sm:$0x1]
      %v7319 = vld [vmem:[%s6219 + $0x84] sm:$0xf]
      %v7320 = vld [vmem:[%s6219 + $0x88] sm:$0xf]
      %v7321 = vld [vmem:[%s6219 + $0x8c] sm:$0x1]
      %v7322 = vld [vmem:[%s6219 + $0x94] sm:$0xf]
      %v7323 = vld [vmem:[%s6219 + $0x98] sm:$0xf]
      %v7324 = vld [vmem:[%s6219 + $0x9c] sm:$0x1]
      %v7325 = vld [vmem:[%s6219 + $0xa4] sm:$0xf]
      %v7326 = vld [vmem:[%s6219 + $0xa8] sm:$0xf]
      %v7327 = vld [vmem:[%s6219 + $0xac] sm:$0x1]
      %v7328 = vld [vmem:[%s6219 + $0xb4] sm:$0xf]
      %v7329 = vld [vmem:[%s6219 + $0xb8] sm:$0xf]
      %v7330 = vld [vmem:[%s6219 + $0xbc] sm:$0x1]
      %v7331 = vld [vmem:[%s6219 + $0xc4] sm:$0xf]
      %v7332 = vld [vmem:[%s6219 + $0xc8] sm:$0xf]
      %v7333 = vld [vmem:[%s6219 + $0xcc] sm:$0x1]
      %v7334 = vld [vmem:[%s6219 + $0xd4] sm:$0xf]
      %v7335 = vld [vmem:[%s6219 + $0xd8] sm:$0xf]
      %v7336 = vld [vmem:[%s6219 + $0xdc] sm:$0x1]
      %v7337 = vld [vmem:[%s6219 + $0xe4] sm:$0xf]
      %v7338 = vld [vmem:[%s6219 + $0xe8] sm:$0xf]
      %v7339 = vld [vmem:[%s6219 + $0xec] sm:$0x1]
      %v7340 = vld [vmem:[%s6219 + $0xf4] sm:$0xf]
      %v7341 = vld [vmem:[%s6219 + $0xf8] sm:$0xf]
      %v7342 = vld [vmem:[%s6219 + $0xfc] sm:$0x1]
      %v7344 = vshrl.u32 %v7295, 16
      %v7346 = vrot.slane %v7344, 4
      %v7347 = vshll.u32 %v7295, 16
      %v7349 = vrot.slane %v7347, 5
      %v7350 = vor.u32 %v7346, %v7349
      %v7351 = vrot.slane %v7350, 4
      %v7353 = vshll.u32 %v7296, 16
      %v7355 = vrot.slane %v7353, 5
      %v7356 = vsel %vm1653, %v7351, %v7355
      %v7357 = vshrl.u32 %v7296, 16
      %v7359 = vrot.slane %v7357, 4
      %v7360 = vor.u32 %v7359, %v7355
      %v7361 = vrot.slane %v7360, 4
      %v7363 = vshll.u32 %v7297, 16
      %v7365 = vrot.slane %v7363, 5
      %v7366 = vsel %vm1653, %v7361, %v7365
      %v7368 = vshrl.u32 %v7298, 16
      %v7370 = vrot.slane %v7368, 4
      %v7371 = vshll.u32 %v7298, 16
      %v7373 = vrot.slane %v7371, 5
      %v7374 = vor.u32 %v7370, %v7373
      %v7375 = vrot.slane %v7374, 4
      %v7377 = vshll.u32 %v7299, 16
      %v7379 = vrot.slane %v7377, 5
      %v7380 = vsel %vm1653, %v7375, %v7379
      %v7381 = vshrl.u32 %v7299, 16
      %v7383 = vrot.slane %v7381, 4
      %v7384 = vor.u32 %v7383, %v7379
      %v7385 = vrot.slane %v7384, 4
      %v7387 = vshll.u32 %v7300, 16
      %v7389 = vrot.slane %v7387, 5
      %v7390 = vsel %vm1653, %v7385, %v7389
      %v7392 = vshrl.u32 %v7301, 16
      %v7394 = vrot.slane %v7392, 4
      %v7395 = vshll.u32 %v7301, 16
      %v7397 = vrot.slane %v7395, 5
      %v7398 = vor.u32 %v7394, %v7397
      %v7399 = vrot.slane %v7398, 4
      %v7401 = vshll.u32 %v7302, 16
      %v7403 = vrot.slane %v7401, 5
      %v7404 = vsel %vm1653, %v7399, %v7403
      %v7405 = vshrl.u32 %v7302, 16
      %v7407 = vrot.slane %v7405, 4
      %v7408 = vor.u32 %v7407, %v7403
      %v7409 = vrot.slane %v7408, 4
      %v7411 = vshll.u32 %v7303, 16
      %v7413 = vrot.slane %v7411, 5
      %v7414 = vsel %vm1653, %v7409, %v7413
      %v7416 = vshrl.u32 %v7304, 16
      %v7418 = vrot.slane %v7416, 4
      %v7419 = vshll.u32 %v7304, 16
      %v7421 = vrot.slane %v7419, 5
      %v7422 = vor.u32 %v7418, %v7421
      %v7423 = vrot.slane %v7422, 4
      %v7425 = vshll.u32 %v7305, 16
      %v7427 = vrot.slane %v7425, 5
      %v7428 = vsel %vm1653, %v7423, %v7427
      %v7429 = vshrl.u32 %v7305, 16
      %v7431 = vrot.slane %v7429, 4
      %v7432 = vor.u32 %v7431, %v7427
      %v7433 = vrot.slane %v7432, 4
      %v7435 = vshll.u32 %v7306, 16
      %v7437 = vrot.slane %v7435, 5
      %v7438 = vsel %vm1653, %v7433, %v7437
      %v7440 = vshrl.u32 %v7307, 16
      %v7442 = vrot.slane %v7440, 4
      %v7443 = vshll.u32 %v7307, 16
      %v7445 = vrot.slane %v7443, 5
      %v7446 = vor.u32 %v7442, %v7445
      %v7447 = vrot.slane %v7446, 4
      %v7449 = vshll.u32 %v7308, 16
      %v7451 = vrot.slane %v7449, 5
      %v7452 = vsel %vm1653, %v7447, %v7451
      %v7453 = vshrl.u32 %v7308, 16
      %v7455 = vrot.slane %v7453, 4
      %v7456 = vor.u32 %v7455, %v7451
      %v7457 = vrot.slane %v7456, 4
      %v7459 = vshll.u32 %v7309, 16
      %v7461 = vrot.slane %v7459, 5
      %v7462 = vsel %vm1653, %v7457, %v7461
      %v7464 = vshrl.u32 %v7310, 16
      %v7466 = vrot.slane %v7464, 4
      %v7467 = vshll.u32 %v7310, 16
      %v7469 = vrot.slane %v7467, 5
      %v7470 = vor.u32 %v7466, %v7469
      %v7471 = vrot.slane %v7470, 4
      %v7473 = vshll.u32 %v7311, 16
      %v7475 = vrot.slane %v7473, 5
      %v7476 = vsel %vm1653, %v7471, %v7475
      %v7477 = vshrl.u32 %v7311, 16
      %v7479 = vrot.slane %v7477, 4
      %v7480 = vor.u32 %v7479, %v7475
      %v7481 = vrot.slane %v7480, 4
      %v7483 = vshll.u32 %v7312, 16
      %v7485 = vrot.slane %v7483, 5
      %v7486 = vsel %vm1653, %v7481, %v7485
      %v7488 = vshrl.u32 %v7313, 16
      %v7490 = vrot.slane %v7488, 4
      %v7491 = vshll.u32 %v7313, 16
      %v7493 = vrot.slane %v7491, 5
      %v7494 = vor.u32 %v7490, %v7493
      %v7495 = vrot.slane %v7494, 4
      %v7497 = vshll.u32 %v7314, 16
      %v7499 = vrot.slane %v7497, 5
      %v7500 = vsel %vm1653, %v7495, %v7499
      %v7501 = vshrl.u32 %v7314, 16
      %v7503 = vrot.slane %v7501, 4
      %v7504 = vor.u32 %v7503, %v7499
      %v7505 = vrot.slane %v7504, 4
      %v7507 = vshll.u32 %v7315, 16
      %v7509 = vrot.slane %v7507, 5
      %v7510 = vsel %vm1653, %v7505, %v7509
      %v7512 = vshrl.u32 %v7316, 16
      %v7514 = vrot.slane %v7512, 4
      %v7515 = vshll.u32 %v7316, 16
      %v7517 = vrot.slane %v7515, 5
      %v7518 = vor.u32 %v7514, %v7517
      %v7519 = vrot.slane %v7518, 4
      %v7521 = vshll.u32 %v7317, 16
      %v7523 = vrot.slane %v7521, 5
      %v7524 = vsel %vm1653, %v7519, %v7523
      %v7525 = vshrl.u32 %v7317, 16
      %v7527 = vrot.slane %v7525, 4
      %v7528 = vor.u32 %v7527, %v7523
      %v7529 = vrot.slane %v7528, 4
      %v7531 = vshll.u32 %v7318, 16
      %v7533 = vrot.slane %v7531, 5
      %v7534 = vsel %vm1653, %v7529, %v7533
      %v7536 = vshrl.u32 %v7319, 16
      %v7538 = vrot.slane %v7536, 4
      %v7539 = vshll.u32 %v7319, 16
      %v7541 = vrot.slane %v7539, 5
      %v7542 = vor.u32 %v7538, %v7541
      %v7543 = vrot.slane %v7542, 4
      %v7545 = vshll.u32 %v7320, 16
      %v7547 = vrot.slane %v7545, 5
      %v7548 = vsel %vm1653, %v7543, %v7547
      %v7549 = vshrl.u32 %v7320, 16
      %v7551 = vrot.slane %v7549, 4
      %v7552 = vor.u32 %v7551, %v7547
      %v7553 = vrot.slane %v7552, 4
      %v7555 = vshll.u32 %v7321, 16
      %v7557 = vrot.slane %v7555, 5
      %v7558 = vsel %vm1653, %v7553, %v7557
      %v7560 = vshrl.u32 %v7322, 16
      %v7562 = vrot.slane %v7560, 4
      %v7563 = vshll.u32 %v7322, 16
      %v7565 = vrot.slane %v7563, 5
      %v7566 = vor.u32 %v7562, %v7565
      %v7567 = vrot.slane %v7566, 4
      %v7569 = vshll.u32 %v7323, 16
      %v7571 = vrot.slane %v7569, 5
      %v7572 = vsel %vm1653, %v7567, %v7571
      %v7573 = vshrl.u32 %v7323, 16
      %v7575 = vrot.slane %v7573, 4
      %v7576 = vor.u32 %v7575, %v7571
      %v7577 = vrot.slane %v7576, 4
      %v7579 = vshll.u32 %v7324, 16
      %v7581 = vrot.slane %v7579, 5
      %v7582 = vsel %vm1653, %v7577, %v7581
      %v7584 = vshrl.u32 %v7325, 16
      %v7586 = vrot.slane %v7584, 4
      %v7587 = vshll.u32 %v7325, 16
      %v7589 = vrot.slane %v7587, 5
      %v7590 = vor.u32 %v7586, %v7589
      %v7591 = vrot.slane %v7590, 4
      %v7593 = vshll.u32 %v7326, 16
      %v7595 = vrot.slane %v7593, 5
      %v7596 = vsel %vm1653, %v7591, %v7595
      %v7597 = vshrl.u32 %v7326, 16
      %v7599 = vrot.slane %v7597, 4
      %v7600 = vor.u32 %v7599, %v7595
      %v7601 = vrot.slane %v7600, 4
      %v7603 = vshll.u32 %v7327, 16
      %v7605 = vrot.slane %v7603, 5
      %v7606 = vsel %vm1653, %v7601, %v7605
      %v7608 = vshrl.u32 %v7328, 16
      %v7610 = vrot.slane %v7608, 4
      %v7611 = vshll.u32 %v7328, 16
      %v7613 = vrot.slane %v7611, 5
      %v7614 = vor.u32 %v7610, %v7613
      %v7615 = vrot.slane %v7614, 4
      %v7617 = vshll.u32 %v7329, 16
      %v7619 = vrot.slane %v7617, 5
      %v7620 = vsel %vm1653, %v7615, %v7619
      %v7621 = vshrl.u32 %v7329, 16
      %v7623 = vrot.slane %v7621, 4
      %v7624 = vor.u32 %v7623, %v7619
      %v7625 = vrot.slane %v7624, 4
      %v7627 = vshll.u32 %v7330, 16
      %v7629 = vrot.slane %v7627, 5
      %v7630 = vsel %vm1653, %v7625, %v7629
      %v7632 = vshrl.u32 %v7331, 16
      %v7634 = vrot.slane %v7632, 4
      %v7635 = vshll.u32 %v7331, 16
      %v7637 = vrot.slane %v7635, 5
      %v7638 = vor.u32 %v7634, %v7637
      %v7639 = vrot.slane %v7638, 4
      %v7641 = vshll.u32 %v7332, 16
      %v7643 = vrot.slane %v7641, 5
      %v7644 = vsel %vm1653, %v7639, %v7643
      %v7645 = vshrl.u32 %v7332, 16
      %v7647 = vrot.slane %v7645, 4
      %v7648 = vor.u32 %v7647, %v7643
      %v7649 = vrot.slane %v7648, 4
      %v7651 = vshll.u32 %v7333, 16
      %v7653 = vrot.slane %v7651, 5
      %v7654 = vsel %vm1653, %v7649, %v7653
      %v7656 = vshrl.u32 %v7334, 16
      %v7658 = vrot.slane %v7656, 4
      %v7659 = vshll.u32 %v7334, 16
      %v7661 = vrot.slane %v7659, 5
      %v7662 = vor.u32 %v7658, %v7661
      %v7663 = vrot.slane %v7662, 4
      %v7665 = vshll.u32 %v7335, 16
      %v7667 = vrot.slane %v7665, 5
      %v7668 = vsel %vm1653, %v7663, %v7667
      %v7669 = vshrl.u32 %v7335, 16
      %v7671 = vrot.slane %v7669, 4
      %v7672 = vor.u32 %v7671, %v7667
      %v7673 = vrot.slane %v7672, 4
      %v7675 = vshll.u32 %v7336, 16
      %v7677 = vrot.slane %v7675, 5
      %v7678 = vsel %vm1653, %v7673, %v7677
      %v7680 = vshrl.u32 %v7337, 16
      %v7682 = vrot.slane %v7680, 4
      %v7683 = vshll.u32 %v7337, 16
      %v7685 = vrot.slane %v7683, 5
      %v7686 = vor.u32 %v7682, %v7685
      %v7687 = vrot.slane %v7686, 4
      %v7689 = vshll.u32 %v7338, 16
      %v7691 = vrot.slane %v7689, 5
      %v7692 = vsel %vm1653, %v7687, %v7691
      %v7693 = vshrl.u32 %v7338, 16
      %v7695 = vrot.slane %v7693, 4
      %v7696 = vor.u32 %v7695, %v7691
      %v7697 = vrot.slane %v7696, 4
      %v7699 = vshll.u32 %v7339, 16
      %v7701 = vrot.slane %v7699, 5
      %v7702 = vsel %vm1653, %v7697, %v7701
      %v7704 = vshrl.u32 %v7340, 16
      %v7706 = vrot.slane %v7704, 4
      %v7707 = vshll.u32 %v7340, 16
      %v7709 = vrot.slane %v7707, 5
      %v7710 = vor.u32 %v7706, %v7709
      %v7711 = vrot.slane %v7710, 4
      %v7713 = vshll.u32 %v7341, 16
      %v7715 = vrot.slane %v7713, 5
      %v7716 = vsel %vm1653, %v7711, %v7715
      %v7717 = vshrl.u32 %v7341, 16
      %v7719 = vrot.slane %v7717, 4
      %v7720 = vor.u32 %v7719, %v7715
      %v7721 = vrot.slane %v7720, 4
      %v7723 = vshll.u32 %v7342, 16
      %v7725 = vrot.slane %v7723, 5
      %v7726 = vsel %vm1653, %v7721, %v7725
      %s7727 = scalar_lea.vmem %s3, 128
      %v7728 = vld [vmem:[%s7727] sm:$0xf]
      %v7729 = vld [vmem:[%s7727 + $0x4] sm:$0xf]
      %v7730 = vld [vmem:[%s7727 + $0x8] sm:$0xf]
      %v7731 = vld [vmem:[%s7727 + $0xc] sm:$0xf]
      %v7732 = vld [vmem:[%s7727 + $0x10] sm:$0xf]
      %v7733 = vld [vmem:[%s7727 + $0x14] sm:$0xf]
      %v7734 = vld [vmem:[%s7727 + $0x18] sm:$0xf]
      %v7735 = vld [vmem:[%s7727 + $0x1c] sm:$0xf]
      %v7736 = vld [vmem:[%s7727 + $0x20] sm:$0xf]
      %v7737 = vld [vmem:[%s7727 + $0x24] sm:$0xf]
      %v7738 = vld [vmem:[%s7727 + $0x28] sm:$0xf]
      %v7739 = vld [vmem:[%s7727 + $0x2c] sm:$0xf]
      %v7740 = vld [vmem:[%s7727 + $0x30] sm:$0xf]
      %v7741 = vld [vmem:[%s7727 + $0x34] sm:$0xf]
      %v7742 = vld [vmem:[%s7727 + $0x38] sm:$0xf]
      %v7743 = vld [vmem:[%s7727 + $0x3c] sm:$0xf]
      %v7744 = vunpack.c.l.b16 %v7356
      %v7745 = vunpack.c.l.b16 %v7366
      %v7746 = vunpack.c.l.b16 %v7380
      %v7747 = vunpack.c.l.b16 %v7390
      %v7748 = vunpack.c.l.b16 %v7404
      %v7749 = vunpack.c.l.b16 %v7414
      %v7750 = vunpack.c.l.b16 %v7428
      %v7751 = vunpack.c.l.b16 %v7438
      %v7752 = vunpack.c.l.b16 %v7452
      %v7753 = vunpack.c.l.b16 %v7462
      %v7754 = vunpack.c.l.b16 %v7476
      %v7755 = vunpack.c.l.b16 %v7486
      %v7756 = vunpack.c.l.b16 %v7500
      %v7757 = vunpack.c.l.b16 %v7510
      %v7758 = vunpack.c.l.b16 %v7524
      %v7759 = vunpack.c.l.b16 %v7534
      %v7760 = vunpack.c.l.b16 %v7548
      %v7761 = vunpack.c.l.b16 %v7558
      %v7762 = vunpack.c.l.b16 %v7572
      %v7763 = vunpack.c.l.b16 %v7582
      %v7764 = vunpack.c.l.b16 %v7596
      %v7765 = vunpack.c.l.b16 %v7606
      %v7766 = vunpack.c.l.b16 %v7620
      %v7767 = vunpack.c.l.b16 %v7630
      %v7768 = vunpack.c.l.b16 %v7644
      %v7769 = vunpack.c.l.b16 %v7654
      %v7770 = vunpack.c.l.b16 %v7668
      %v7771 = vunpack.c.l.b16 %v7678
      %v7772 = vunpack.c.l.b16 %v7692
      %v7773 = vunpack.c.l.b16 %v7702
      %v7774 = vunpack.c.l.b16 %v7716
      %v7775 = vunpack.c.l.b16 %v7726
      %v7776 = vpack.c.b16 %v7745, %v7744
      %v7777 = vpack.c.b16 %v7747, %v7746
      %v7778 = vpack.c.b16 %v7749, %v7748
      %v7779 = vpack.c.b16 %v7751, %v7750
      %v7780 = vpack.c.b16 %v7753, %v7752
      %v7781 = vpack.c.b16 %v7755, %v7754
      %v7782 = vpack.c.b16 %v7757, %v7756
      %v7783 = vpack.c.b16 %v7759, %v7758
      %v7784 = vpack.c.b16 %v7761, %v7760
      %v7785 = vpack.c.b16 %v7763, %v7762
      %v7786 = vpack.c.b16 %v7765, %v7764
      %v7787 = vpack.c.b16 %v7767, %v7766
      %v7788 = vpack.c.b16 %v7769, %v7768
      %v7789 = vpack.c.b16 %v7771, %v7770
      %v7790 = vpack.c.b16 %v7773, %v7772
      %v7791 = vpack.c.b16 %v7775, %v7774
      %v7824 = vunpack.c.l.b16 %v7728
      %v7825 = vunpack.c.l.b16 %v7729
      %v7826 = vunpack.c.l.b16 %v7730
      %v7827 = vunpack.c.l.b16 %v7731
      %v7828 = vunpack.c.l.b16 %v7732
      %v7829 = vunpack.c.l.b16 %v7733
      %v7830 = vunpack.c.l.b16 %v7734
      %v7831 = vunpack.c.l.b16 %v7735
      %v7832 = vunpack.c.l.b16 %v7736
      %v7833 = vunpack.c.l.b16 %v7737
      %v7834 = vunpack.c.l.b16 %v7738
      %v7835 = vunpack.c.l.b16 %v7739
      %v7836 = vunpack.c.l.b16 %v7740
      %v7837 = vunpack.c.l.b16 %v7741
      %v7838 = vunpack.c.l.b16 %v7742
      %v7839 = vunpack.c.l.b16 %v7743
      %v7840 = vpack.c.b16 %v7825, %v7824
      %v7841 = vpack.c.b16 %v7827, %v7826
      %v7842 = vpack.c.b16 %v7829, %v7828
      %v7843 = vpack.c.b16 %v7831, %v7830
      %v7844 = vpack.c.b16 %v7833, %v7832
      %v7845 = vpack.c.b16 %v7835, %v7834
      %v7846 = vpack.c.b16 %v7837, %v7836
      %v7847 = vpack.c.b16 %v7839, %v7838
      %7856 = vmatprep.subr.bf16.mxu0 0
      %7857 = vmatpush1.bf16.msra.mxu0 %v7847
      %7858 = vmatprep.subr.bf16.mxu0 0
      %7859 = vmatpush1.bf16.msra.mxu0 %v7846
      %7860 = vmatprep.subr.bf16.mxu0 0
      %7861 = vmatpush1.bf16.msra.mxu0 %v7845
      %7862 = vmatprep.subr.bf16.mxu0 0
      %7863 = vmatpush1.bf16.msra.mxu0 %v7844
      %7864 = vmatprep.subr.bf16.mxu0 0
      %7865 = vmatpush1.bf16.msra.mxu0 %v7843
      %7866 = vmatprep.subr.bf16.mxu0 0
      %7867 = vmatpush1.bf16.msra.mxu0 %v7842
      %7868 = vmatprep.subr.bf16.mxu0 0
      %7869 = vmatpush1.bf16.msra.mxu0 %v7841
      %7870 = vmatprep.subr.bf16.mxu0 0
      %7871 = vmatpush1.bf16.msra.mxu0 %v7840
      %7872 = vmatprep.subr.bf16.mxu0 0
      %7873 = vmatpush2.bf16.msra.mxu0 0
      %7874 = vmatprep.subr.bf16.mxu0 0
      %7875 = vmatpush2.bf16.msra.mxu0 0
      %7876 = vmatprep.subr.bf16.mxu0 0
      %7877 = vmatpush2.bf16.msra.mxu0 0
      %7878 = vmatprep.subr.bf16.mxu0 0
      %7879 = vmatpush2.bf16.msra.mxu0 0
      %7880 = vmatprep.subr.bf16.mxu0 0
      %7881 = vmatpush2.bf16.msra.mxu0 0
      %7882 = vmatprep.subr.bf16.mxu0 0
      %7883 = vmatpush2.bf16.msra.mxu0 0
      %7884 = vmatprep.subr.bf16.mxu0 0
      %7885 = vmatpush2.bf16.msra.mxu0 0
      %7886 = vmatprep.subr.bf16.mxu0 0
      %7887 = vmatpush2.bf16.msra.mxu0 0
      %7888 = vmatprep.mubr.bf16.mxu0 0
      %7889 = vmatmul.mubr.bf16.gmra.mxu0 %v7776
      %v7890 = vpop.f32.mrf.mxu0
      %v7891 = vadd.f32 0.0, %v7890
      %v7892 = vpop.f32.mrf.mxu0
      %v7893 = vpop.f32.mrf.mxu0
      %v7894 = vadd.f32 0.0, %v7893
      %v7895 = vpop.f32.mrf.mxu0
      %7896 = vmatprep.mubr.bf16.mxu0 0
      %7897 = vmatmul.mubr.bf16.gmra.mxu0 %v7777
      %v7898 = vpop.f32.mrf.mxu0
      %v7899 = vadd.f32 0.0, %v7898
      %v7900 = vpop.f32.mrf.mxu0
      %v7901 = vpop.f32.mrf.mxu0
      %v7902 = vadd.f32 0.0, %v7901
      %v7903 = vpop.f32.mrf.mxu0
      %7904 = vmatprep.mubr.bf16.mxu0 0
      %7905 = vmatmul.mubr.bf16.gmra.mxu0 %v7778
      %v7906 = vpop.f32.mrf.mxu0
      %v7907 = vadd.f32 0.0, %v7906
      %v7908 = vpop.f32.mrf.mxu0
      %v7909 = vpop.f32.mrf.mxu0
      %v7910 = vadd.f32 0.0, %v7909
      %v7911 = vpop.f32.mrf.mxu0
      %7912 = vmatprep.mubr.bf16.mxu0 0
      %7913 = vmatmul.mubr.bf16.gmra.mxu0 %v7779
      %v7914 = vpop.f32.mrf.mxu0
      %v7915 = vadd.f32 0.0, %v7914
      %v7916 = vpop.f32.mrf.mxu0
      %v7917 = vpop.f32.mrf.mxu0
      %v7918 = vadd.f32 0.0, %v7917
      %v7919 = vpop.f32.mrf.mxu0
      %7920 = vmatprep.mubr.bf16.mxu0 0
      %7921 = vmatmul.mubr.bf16.gmra.mxu0 %v7780
      %v7922 = vpop.f32.mrf.mxu0
      %v7923 = vadd.f32 0.0, %v7922
      %v7924 = vpop.f32.mrf.mxu0
      %v7925 = vpop.f32.mrf.mxu0
      %v7926 = vadd.f32 0.0, %v7925
      %v7927 = vpop.f32.mrf.mxu0
      %7928 = vmatprep.mubr.bf16.mxu0 0
      %7929 = vmatmul.mubr.bf16.gmra.mxu0 %v7781
      %v7930 = vpop.f32.mrf.mxu0
      %v7931 = vadd.f32 0.0, %v7930
      %v7932 = vpop.f32.mrf.mxu0
      %v7933 = vpop.f32.mrf.mxu0
      %v7934 = vadd.f32 0.0, %v7933
      %v7935 = vpop.f32.mrf.mxu0
      %7936 = vmatprep.mubr.bf16.mxu0 0
      %7937 = vmatmul.mubr.bf16.gmra.mxu0 %v7782
      %v7938 = vpop.f32.mrf.mxu0
      %v7939 = vadd.f32 0.0, %v7938
      %v7940 = vpop.f32.mrf.mxu0
      %v7941 = vpop.f32.mrf.mxu0
      %v7942 = vadd.f32 0.0, %v7941
      %v7943 = vpop.f32.mrf.mxu0
      %7944 = vmatprep.mubr.bf16.mxu0 0
      %7945 = vmatmul.mubr.bf16.gmra.mxu0 %v7783
      %v7946 = vpop.f32.mrf.mxu0
      %v7947 = vadd.f32 0.0, %v7946
      %v7948 = vpop.f32.mrf.mxu0
      %v7949 = vpop.f32.mrf.mxu0
      %v7950 = vadd.f32 0.0, %v7949
      %v7951 = vpop.f32.mrf.mxu0
      %7952 = vmatprep.mubr.bf16.mxu0 0
      %7953 = vmatmul.mubr.bf16.gmra.mxu0 %v7784
      %v7954 = vpop.f32.mrf.mxu0
      %v7955 = vadd.f32 0.0, %v7954
      %v7956 = vpop.f32.mrf.mxu0
      %v7957 = vpop.f32.mrf.mxu0
      %v7958 = vadd.f32 0.0, %v7957
      %v7959 = vpop.f32.mrf.mxu0
      %7960 = vmatprep.mubr.bf16.mxu0 0
      %7961 = vmatmul.mubr.bf16.gmra.mxu0 %v7785
      %v7962 = vpop.f32.mrf.mxu0
      %v7963 = vadd.f32 0.0, %v7962
      %v7964 = vpop.f32.mrf.mxu0
      %v7965 = vpop.f32.mrf.mxu0
      %v7966 = vadd.f32 0.0, %v7965
      %v7967 = vpop.f32.mrf.mxu0
      %7968 = vmatprep.mubr.bf16.mxu0 0
      %7969 = vmatmul.mubr.bf16.gmra.mxu0 %v7786
      %v7970 = vpop.f32.mrf.mxu0
      %v7971 = vadd.f32 0.0, %v7970
      %v7972 = vpop.f32.mrf.mxu0
      %v7973 = vpop.f32.mrf.mxu0
      %v7974 = vadd.f32 0.0, %v7973
      %v7975 = vpop.f32.mrf.mxu0
      %7976 = vmatprep.mubr.bf16.mxu0 0
      %7977 = vmatmul.mubr.bf16.gmra.mxu0 %v7787
      %v7978 = vpop.f32.mrf.mxu0
      %v7979 = vadd.f32 0.0, %v7978
      %v7980 = vpop.f32.mrf.mxu0
      %v7981 = vpop.f32.mrf.mxu0
      %v7982 = vadd.f32 0.0, %v7981
      %v7983 = vpop.f32.mrf.mxu0
      %7984 = vmatprep.mubr.bf16.mxu0 0
      %7985 = vmatmul.mubr.bf16.gmra.mxu0 %v7788
      %v7986 = vpop.f32.mrf.mxu0
      %v7987 = vadd.f32 0.0, %v7986
      %v7988 = vpop.f32.mrf.mxu0
      %v7989 = vpop.f32.mrf.mxu0
      %v7990 = vadd.f32 0.0, %v7989
      %v7991 = vpop.f32.mrf.mxu0
      %7992 = vmatprep.mubr.bf16.mxu0 0
      %7993 = vmatmul.mubr.bf16.gmra.mxu0 %v7789
      %v7994 = vpop.f32.mrf.mxu0
      %v7995 = vadd.f32 0.0, %v7994
      %v7996 = vpop.f32.mrf.mxu0
      %v7997 = vpop.f32.mrf.mxu0
      %v7998 = vadd.f32 0.0, %v7997
      %v7999 = vpop.f32.mrf.mxu0
      %8000 = vmatprep.mubr.bf16.mxu0 0
      %8001 = vmatmul.mubr.bf16.gmra.mxu0 %v7790
      %v8002 = vpop.f32.mrf.mxu0
      %v8003 = vadd.f32 0.0, %v8002
      %v8004 = vpop.f32.mrf.mxu0
      %v8005 = vpop.f32.mrf.mxu0
      %v8006 = vadd.f32 0.0, %v8005
      %v8007 = vpop.f32.mrf.mxu0
      %8008 = vmatprep.mubr.bf16.mxu0 0
      %8009 = vmatmul.mubr.bf16.gmra.mxu0 %v7791
      %v8010 = vpop.f32.mrf.mxu0
      %v8011 = vadd.f32 0.0, %v8010
      %v8012 = vpop.f32.mrf.mxu0
      %v8013 = vpop.f32.mrf.mxu0
      %v8014 = vadd.f32 0.0, %v8013
      %v8015 = vpop.f32.mrf.mxu0
      %8016 = vdwg.mxu0
      %v8017 = vadd.f32 %v7263, %v7891
      %v8018 = vadd.f32 %v7264, %v7894
      %v8019 = vadd.f32 %v7265, %v7899
      %v8020 = vadd.f32 %v7266, %v7902
      %v8021 = vadd.f32 %v7267, %v7907
      %v8022 = vadd.f32 %v7268, %v7910
      %v8023 = vadd.f32 %v7269, %v7915
      %v8024 = vadd.f32 %v7270, %v7918
      %v8025 = vadd.f32 %v7271, %v7923
      %v8026 = vadd.f32 %v7272, %v7926
      %v8027 = vadd.f32 %v7273, %v7931
      %v8028 = vadd.f32 %v7274, %v7934
      %v8029 = vadd.f32 %v7275, %v7939
      %v8030 = vadd.f32 %v7276, %v7942
      %v8031 = vadd.f32 %v7277, %v7947
      %v8032 = vadd.f32 %v7278, %v7950
      %v8033 = vadd.f32 %v7279, %v7955
      %v8034 = vadd.f32 %v7280, %v7958
      %v8035 = vadd.f32 %v7281, %v7963
      %v8036 = vadd.f32 %v7282, %v7966
      %v8037 = vadd.f32 %v7283, %v7971
      %v8038 = vadd.f32 %v7284, %v7974
      %v8039 = vadd.f32 %v7285, %v7979
      %v8040 = vadd.f32 %v7286, %v7982
      %v8041 = vadd.f32 %v7287, %v7987
      %v8042 = vadd.f32 %v7288, %v7990
      %v8043 = vadd.f32 %v7289, %v7995
      %v8044 = vadd.f32 %v7290, %v7998
      %v8045 = vadd.f32 %v7291, %v8003
      %v8046 = vadd.f32 %v7292, %v8006
      %v8047 = vadd.f32 %v7293, %v8011
      %v8048 = vadd.f32 %v7294, %v8014
      %v8049 = vld [vmem:[%s6185] sm:$0x8]
      %v8050 = vld [vmem:[%s6185 + $0x4] sm:$0xf]
      %v8051 = vld [vmem:[%s6185 + $0x8] sm:$0xf]
      %v8052 = vld [vmem:[%s6185 + $0x10] sm:$0x8]
      %v8053 = vld [vmem:[%s6185 + $0x14] sm:$0xf]
      %v8054 = vld [vmem:[%s6185 + $0x18] sm:$0xf]
      %v8055 = vld [vmem:[%s6185 + $0x20] sm:$0x8]
      %v8056 = vld [vmem:[%s6185 + $0x24] sm:$0xf]
      %v8057 = vld [vmem:[%s6185 + $0x28] sm:$0xf]
      %v8058 = vld [vmem:[%s6185 + $0x30] sm:$0x8]
      %v8059 = vld [vmem:[%s6185 + $0x34] sm:$0xf]
      %v8060 = vld [vmem:[%s6185 + $0x38] sm:$0xf]
      %v8061 = vld [vmem:[%s6185 + $0x40] sm:$0x8]
      %v8062 = vld [vmem:[%s6185 + $0x44] sm:$0xf]
      %v8063 = vld [vmem:[%s6185 + $0x48] sm:$0xf]
      %v8064 = vld [vmem:[%s6185 + $0x50] sm:$0x8]
      %v8065 = vld [vmem:[%s6185 + $0x54] sm:$0xf]
      %v8066 = vld [vmem:[%s6185 + $0x58] sm:$0xf]
      %v8067 = vld [vmem:[%s6185 + $0x60] sm:$0x8]
      %v8068 = vld [vmem:[%s6185 + $0x64] sm:$0xf]
      %v8069 = vld [vmem:[%s6185 + $0x68] sm:$0xf]
      %v8070 = vld [vmem:[%s6185 + $0x70] sm:$0x8]
      %v8071 = vld [vmem:[%s6185 + $0x74] sm:$0xf]
      %v8072 = vld [vmem:[%s6185 + $0x78] sm:$0xf]
      %v8073 = vld [vmem:[%s6185 + $0x80] sm:$0x8]
      %v8074 = vld [vmem:[%s6185 + $0x84] sm:$0xf]
      %v8075 = vld [vmem:[%s6185 + $0x88] sm:$0xf]
      %v8076 = vld [vmem:[%s6185 + $0x90] sm:$0x8]
      %v8077 = vld [vmem:[%s6185 + $0x94] sm:$0xf]
      %v8078 = vld [vmem:[%s6185 + $0x98] sm:$0xf]
      %v8079 = vld [vmem:[%s6185 + $0xa0] sm:$0x8]
      %v8080 = vld [vmem:[%s6185 + $0xa4] sm:$0xf]
      %v8081 = vld [vmem:[%s6185 + $0xa8] sm:$0xf]
      %v8082 = vld [vmem:[%s6185 + $0xb0] sm:$0x8]
      %v8083 = vld [vmem:[%s6185 + $0xb4] sm:$0xf]
      %v8084 = vld [vmem:[%s6185 + $0xb8] sm:$0xf]
      %v8085 = vld [vmem:[%s6185 + $0xc0] sm:$0x8]
      %v8086 = vld [vmem:[%s6185 + $0xc4] sm:$0xf]
      %v8087 = vld [vmem:[%s6185 + $0xc8] sm:$0xf]
      %v8088 = vld [vmem:[%s6185 + $0xd0] sm:$0x8]
      %v8089 = vld [vmem:[%s6185 + $0xd4] sm:$0xf]
      %v8090 = vld [vmem:[%s6185 + $0xd8] sm:$0xf]
      %v8091 = vld [vmem:[%s6185 + $0xe0] sm:$0x8]
      %v8092 = vld [vmem:[%s6185 + $0xe4] sm:$0xf]
      %v8093 = vld [vmem:[%s6185 + $0xe8] sm:$0xf]
      %v8094 = vld [vmem:[%s6185 + $0xf0] sm:$0x8]
      %v8095 = vld [vmem:[%s6185 + $0xf4] sm:$0xf]
      %v8096 = vld [vmem:[%s6185 + $0xf8] sm:$0xf]
      %v8098 = vshrl.u32 %v8049, 16
      %v8100 = vrot.slane %v8098, 7
      %v8101 = vrot.slane %v8100, 4
      %v8103 = vshrl.u32 %v8050, 16
      %v8105 = vrot.slane %v8103, 7
      %v8106 = vshll.u32 %v8050, 16
      %v8108 = vor.u32 %v8105, %v8106
      %v8109 = vsel %vm575, %v8101, %v8108
      %v8110 = vrot.slane %v8105, 4
      %v8112 = vshrl.u32 %v8051, 16
      %v8114 = vrot.slane %v8112, 7
      %v8115 = vshll.u32 %v8051, 16
      %v8117 = vor.u32 %v8114, %v8115
      %v8118 = vsel %vm575, %v8110, %v8117
      %v8120 = vshrl.u32 %v8052, 16
      %v8122 = vrot.slane %v8120, 7
      %v8123 = vrot.slane %v8122, 4
      %v8125 = vshrl.u32 %v8053, 16
      %v8127 = vrot.slane %v8125, 7
      %v8128 = vshll.u32 %v8053, 16
      %v8130 = vor.u32 %v8127, %v8128
      %v8131 = vsel %vm575, %v8123, %v8130
      %v8132 = vrot.slane %v8127, 4
      %v8134 = vshrl.u32 %v8054, 16
      %v8136 = vrot.slane %v8134, 7
      %v8137 = vshll.u32 %v8054, 16
      %v8139 = vor.u32 %v8136, %v8137
      %v8140 = vsel %vm575, %v8132, %v8139
      %v8142 = vshrl.u32 %v8055, 16
      %v8144 = vrot.slane %v8142, 7
      %v8145 = vrot.slane %v8144, 4
      %v8147 = vshrl.u32 %v8056, 16
      %v8149 = vrot.slane %v8147, 7
      %v8150 = vshll.u32 %v8056, 16
      %v8152 = vor.u32 %v8149, %v8150
      %v8153 = vsel %vm575, %v8145, %v8152
      %v8154 = vrot.slane %v8149, 4
      %v8156 = vshrl.u32 %v8057, 16
      %v8158 = vrot.slane %v8156, 7
      %v8159 = vshll.u32 %v8057, 16
      %v8161 = vor.u32 %v8158, %v8159
      %v8162 = vsel %vm575, %v8154, %v8161
      %v8164 = vshrl.u32 %v8058, 16
      %v8166 = vrot.slane %v8164, 7
      %v8167 = vrot.slane %v8166, 4
      %v8169 = vshrl.u32 %v8059, 16
      %v8171 = vrot.slane %v8169, 7
      %v8172 = vshll.u32 %v8059, 16
      %v8174 = vor.u32 %v8171, %v8172
      %v8175 = vsel %vm575, %v8167, %v8174
      %v8176 = vrot.slane %v8171, 4
      %v8178 = vshrl.u32 %v8060, 16
      %v8180 = vrot.slane %v8178, 7
      %v8181 = vshll.u32 %v8060, 16
      %v8183 = vor.u32 %v8180, %v8181
      %v8184 = vsel %vm575, %v8176, %v8183
      %v8186 = vshrl.u32 %v8061, 16
      %v8188 = vrot.slane %v8186, 7
      %v8189 = vrot.slane %v8188, 4
      %v8191 = vshrl.u32 %v8062, 16
      %v8193 = vrot.slane %v8191, 7
      %v8194 = vshll.u32 %v8062, 16
      %v8196 = vor.u32 %v8193, %v8194
      %v8197 = vsel %vm575, %v8189, %v8196
      %v8198 = vrot.slane %v8193, 4
      %v8200 = vshrl.u32 %v8063, 16
      %v8202 = vrot.slane %v8200, 7
      %v8203 = vshll.u32 %v8063, 16
      %v8205 = vor.u32 %v8202, %v8203
      %v8206 = vsel %vm575, %v8198, %v8205
      %v8208 = vshrl.u32 %v8064, 16
      %v8210 = vrot.slane %v8208, 7
      %v8211 = vrot.slane %v8210, 4
      %v8213 = vshrl.u32 %v8065, 16
      %v8215 = vrot.slane %v8213, 7
      %v8216 = vshll.u32 %v8065, 16
      %v8218 = vor.u32 %v8215, %v8216
      %v8219 = vsel %vm575, %v8211, %v8218
      %v8220 = vrot.slane %v8215, 4
      %v8222 = vshrl.u32 %v8066, 16
      %v8224 = vrot.slane %v8222, 7
      %v8225 = vshll.u32 %v8066, 16
      %v8227 = vor.u32 %v8224, %v8225
      %v8228 = vsel %vm575, %v8220, %v8227
      %v8230 = vshrl.u32 %v8067, 16
      %v8232 = vrot.slane %v8230, 7
      %v8233 = vrot.slane %v8232, 4
      %v8235 = vshrl.u32 %v8068, 16
      %v8237 = vrot.slane %v8235, 7
      %v8238 = vshll.u32 %v8068, 16
      %v8240 = vor.u32 %v8237, %v8238
      %v8241 = vsel %vm575, %v8233, %v8240
      %v8242 = vrot.slane %v8237, 4
      %v8244 = vshrl.u32 %v8069, 16
      %v8246 = vrot.slane %v8244, 7
      %v8247 = vshll.u32 %v8069, 16
      %v8249 = vor.u32 %v8246, %v8247
      %v8250 = vsel %vm575, %v8242, %v8249
      %v8252 = vshrl.u32 %v8070, 16
      %v8254 = vrot.slane %v8252, 7
      %v8255 = vrot.slane %v8254, 4
      %v8257 = vshrl.u32 %v8071, 16
      %v8259 = vrot.slane %v8257, 7
      %v8260 = vshll.u32 %v8071, 16
      %v8262 = vor.u32 %v8259, %v8260
      %v8263 = vsel %vm575, %v8255, %v8262
      %v8264 = vrot.slane %v8259, 4
      %v8266 = vshrl.u32 %v8072, 16
      %v8268 = vrot.slane %v8266, 7
      %v8269 = vshll.u32 %v8072, 16
      %v8271 = vor.u32 %v8268, %v8269
      %v8272 = vsel %vm575, %v8264, %v8271
      %v8274 = vshrl.u32 %v8073, 16
      %v8276 = vrot.slane %v8274, 7
      %v8277 = vrot.slane %v8276, 4
      %v8279 = vshrl.u32 %v8074, 16
      %v8281 = vrot.slane %v8279, 7
      %v8282 = vshll.u32 %v8074, 16
      %v8284 = vor.u32 %v8281, %v8282
      %v8285 = vsel %vm575, %v8277, %v8284
      %v8286 = vrot.slane %v8281, 4
      %v8288 = vshrl.u32 %v8075, 16
      %v8290 = vrot.slane %v8288, 7
      %v8291 = vshll.u32 %v8075, 16
      %v8293 = vor.u32 %v8290, %v8291
      %v8294 = vsel %vm575, %v8286, %v8293
      %v8296 = vshrl.u32 %v8076, 16
      %v8298 = vrot.slane %v8296, 7
      %v8299 = vrot.slane %v8298, 4
      %v8301 = vshrl.u32 %v8077, 16
      %v8303 = vrot.slane %v8301, 7
      %v8304 = vshll.u32 %v8077, 16
      %v8306 = vor.u32 %v8303, %v8304
      %v8307 = vsel %vm575, %v8299, %v8306
      %v8308 = vrot.slane %v8303, 4
      %v8310 = vshrl.u32 %v8078, 16
      %v8312 = vrot.slane %v8310, 7
      %v8313 = vshll.u32 %v8078, 16
      %v8315 = vor.u32 %v8312, %v8313
      %v8316 = vsel %vm575, %v8308, %v8315
      %v8318 = vshrl.u32 %v8079, 16
      %v8320 = vrot.slane %v8318, 7
      %v8321 = vrot.slane %v8320, 4
      %v8323 = vshrl.u32 %v8080, 16
      %v8325 = vrot.slane %v8323, 7
      %v8326 = vshll.u32 %v8080, 16
      %v8328 = vor.u32 %v8325, %v8326
      %v8329 = vsel %vm575, %v8321, %v8328
      %v8330 = vrot.slane %v8325, 4
      %v8332 = vshrl.u32 %v8081, 16
      %v8334 = vrot.slane %v8332, 7
      %v8335 = vshll.u32 %v8081, 16
      %v8337 = vor.u32 %v8334, %v8335
      %v8338 = vsel %vm575, %v8330, %v8337
      %v8340 = vshrl.u32 %v8082, 16
      %v8342 = vrot.slane %v8340, 7
      %v8343 = vrot.slane %v8342, 4
      %v8345 = vshrl.u32 %v8083, 16
      %v8347 = vrot.slane %v8345, 7
      %v8348 = vshll.u32 %v8083, 16
      %v8350 = vor.u32 %v8347, %v8348
      %v8351 = vsel %vm575, %v8343, %v8350
      %v8352 = vrot.slane %v8347, 4
      %v8354 = vshrl.u32 %v8084, 16
      %v8356 = vrot.slane %v8354, 7
      %v8357 = vshll.u32 %v8084, 16
      %v8359 = vor.u32 %v8356, %v8357
      %v8360 = vsel %vm575, %v8352, %v8359
      %v8362 = vshrl.u32 %v8085, 16
      %v8364 = vrot.slane %v8362, 7
      %v8365 = vrot.slane %v8364, 4
      %v8367 = vshrl.u32 %v8086, 16
      %v8369 = vrot.slane %v8367, 7
      %v8370 = vshll.u32 %v8086, 16
      %v8372 = vor.u32 %v8369, %v8370
      %v8373 = vsel %vm575, %v8365, %v8372
      %v8374 = vrot.slane %v8369, 4
      %v8376 = vshrl.u32 %v8087, 16
      %v8378 = vrot.slane %v8376, 7
      %v8379 = vshll.u32 %v8087, 16
      %v8381 = vor.u32 %v8378, %v8379
      %v8382 = vsel %vm575, %v8374, %v8381
      %v8384 = vshrl.u32 %v8088, 16
      %v8386 = vrot.slane %v8384, 7
      %v8387 = vrot.slane %v8386, 4
      %v8389 = vshrl.u32 %v8089, 16
      %v8391 = vrot.slane %v8389, 7
      %v8392 = vshll.u32 %v8089, 16
      %v8394 = vor.u32 %v8391, %v8392
      %v8395 = vsel %vm575, %v8387, %v8394
      %v8396 = vrot.slane %v8391, 4
      %v8398 = vshrl.u32 %v8090, 16
      %v8400 = vrot.slane %v8398, 7
      %v8401 = vshll.u32 %v8090, 16
      %v8403 = vor.u32 %v8400, %v8401
      %v8404 = vsel %vm575, %v8396, %v8403
      %v8406 = vshrl.u32 %v8091, 16
      %v8408 = vrot.slane %v8406, 7
      %v8409 = vrot.slane %v8408, 4
      %v8411 = vshrl.u32 %v8092, 16
      %v8413 = vrot.slane %v8411, 7
      %v8414 = vshll.u32 %v8092, 16
      %v8416 = vor.u32 %v8413, %v8414
      %v8417 = vsel %vm575, %v8409, %v8416
      %v8418 = vrot.slane %v8413, 4
      %v8420 = vshrl.u32 %v8093, 16
      %v8422 = vrot.slane %v8420, 7
      %v8423 = vshll.u32 %v8093, 16
      %v8425 = vor.u32 %v8422, %v8423
      %v8426 = vsel %vm575, %v8418, %v8425
      %v8428 = vshrl.u32 %v8094, 16
      %v8430 = vrot.slane %v8428, 7
      %v8431 = vrot.slane %v8430, 4
      %v8433 = vshrl.u32 %v8095, 16
      %v8435 = vrot.slane %v8433, 7
      %v8436 = vshll.u32 %v8095, 16
      %v8438 = vor.u32 %v8435, %v8436
      %v8439 = vsel %vm575, %v8431, %v8438
      %v8440 = vrot.slane %v8435, 4
      %v8442 = vshrl.u32 %v8096, 16
      %v8444 = vrot.slane %v8442, 7
      %v8445 = vshll.u32 %v8096, 16
      %v8447 = vor.u32 %v8444, %v8445
      %v8448 = vsel %vm575, %v8440, %v8447
      %s8449 = scalar_lea.vmem %s3, 192
      %v8450 = vld [vmem:[%s8449] sm:$0xf]
      %v8451 = vld [vmem:[%s8449 + $0x4] sm:$0xf]
      %v8452 = vld [vmem:[%s8449 + $0x8] sm:$0xf]
      %v8453 = vld [vmem:[%s8449 + $0xc] sm:$0xf]
      %v8454 = vld [vmem:[%s8449 + $0x10] sm:$0xf]
      %v8455 = vld [vmem:[%s8449 + $0x14] sm:$0xf]
      %v8456 = vld [vmem:[%s8449 + $0x18] sm:$0xf]
      %v8457 = vld [vmem:[%s8449 + $0x1c] sm:$0xf]
      %v8458 = vld [vmem:[%s8449 + $0x20] sm:$0xf]
      %v8459 = vld [vmem:[%s8449 + $0x24] sm:$0xf]
      %v8460 = vld [vmem:[%s8449 + $0x28] sm:$0xf]
      %v8461 = vld [vmem:[%s8449 + $0x2c] sm:$0xf]
      %v8462 = vld [vmem:[%s8449 + $0x30] sm:$0xf]
      %v8463 = vld [vmem:[%s8449 + $0x34] sm:$0xf]
      %v8464 = vld [vmem:[%s8449 + $0x38] sm:$0xf]
      %v8465 = vld [vmem:[%s8449 + $0x3c] sm:$0xf]
      %v8466 = vunpack.c.l.b16 %v8109
      %v8467 = vunpack.c.l.b16 %v8118
      %v8468 = vunpack.c.l.b16 %v8131
      %v8469 = vunpack.c.l.b16 %v8140
      %v8470 = vunpack.c.l.b16 %v8153
      %v8471 = vunpack.c.l.b16 %v8162
      %v8472 = vunpack.c.l.b16 %v8175
      %v8473 = vunpack.c.l.b16 %v8184
      %v8474 = vunpack.c.l.b16 %v8197
      %v8475 = vunpack.c.l.b16 %v8206
      %v8476 = vunpack.c.l.b16 %v8219
      %v8477 = vunpack.c.l.b16 %v8228
      %v8478 = vunpack.c.l.b16 %v8241
      %v8479 = vunpack.c.l.b16 %v8250
      %v8480 = vunpack.c.l.b16 %v8263
      %v8481 = vunpack.c.l.b16 %v8272
      %v8482 = vunpack.c.l.b16 %v8285
      %v8483 = vunpack.c.l.b16 %v8294
      %v8484 = vunpack.c.l.b16 %v8307
      %v8485 = vunpack.c.l.b16 %v8316
      %v8486 = vunpack.c.l.b16 %v8329
      %v8487 = vunpack.c.l.b16 %v8338
      %v8488 = vunpack.c.l.b16 %v8351
      %v8489 = vunpack.c.l.b16 %v8360
      %v8490 = vunpack.c.l.b16 %v8373
      %v8491 = vunpack.c.l.b16 %v8382
      %v8492 = vunpack.c.l.b16 %v8395
      %v8493 = vunpack.c.l.b16 %v8404
      %v8494 = vunpack.c.l.b16 %v8417
      %v8495 = vunpack.c.l.b16 %v8426
      %v8496 = vunpack.c.l.b16 %v8439
      %v8497 = vunpack.c.l.b16 %v8448
      %v8498 = vpack.c.b16 %v8467, %v8466
      %v8499 = vpack.c.b16 %v8469, %v8468
      %v8500 = vpack.c.b16 %v8471, %v8470
      %v8501 = vpack.c.b16 %v8473, %v8472
      %v8502 = vpack.c.b16 %v8475, %v8474
      %v8503 = vpack.c.b16 %v8477, %v8476
      %v8504 = vpack.c.b16 %v8479, %v8478
      %v8505 = vpack.c.b16 %v8481, %v8480
      %v8506 = vpack.c.b16 %v8483, %v8482
      %v8507 = vpack.c.b16 %v8485, %v8484
      %v8508 = vpack.c.b16 %v8487, %v8486
      %v8509 = vpack.c.b16 %v8489, %v8488
      %v8510 = vpack.c.b16 %v8491, %v8490
      %v8511 = vpack.c.b16 %v8493, %v8492
      %v8512 = vpack.c.b16 %v8495, %v8494
      %v8513 = vpack.c.b16 %v8497, %v8496
      %v8546 = vunpack.c.l.b16 %v8450
      %v8547 = vunpack.c.l.b16 %v8451
      %v8548 = vunpack.c.l.b16 %v8452
      %v8549 = vunpack.c.l.b16 %v8453
      %v8550 = vunpack.c.l.b16 %v8454
      %v8551 = vunpack.c.l.b16 %v8455
      %v8552 = vunpack.c.l.b16 %v8456
      %v8553 = vunpack.c.l.b16 %v8457
      %v8554 = vunpack.c.l.b16 %v8458
      %v8555 = vunpack.c.l.b16 %v8459
      %v8556 = vunpack.c.l.b16 %v8460
      %v8557 = vunpack.c.l.b16 %v8461
      %v8558 = vunpack.c.l.b16 %v8462
      %v8559 = vunpack.c.l.b16 %v8463
      %v8560 = vunpack.c.l.b16 %v8464
      %v8561 = vunpack.c.l.b16 %v8465
      %v8562 = vpack.c.b16 %v8547, %v8546
      %v8563 = vpack.c.b16 %v8549, %v8548
      %v8564 = vpack.c.b16 %v8551, %v8550
      %v8565 = vpack.c.b16 %v8553, %v8552
      %v8566 = vpack.c.b16 %v8555, %v8554
      %v8567 = vpack.c.b16 %v8557, %v8556
      %v8568 = vpack.c.b16 %v8559, %v8558
      %v8569 = vpack.c.b16 %v8561, %v8560
      %8578 = vmatprep.subr.bf16.mxu0 0
      %8579 = vmatpush1.bf16.msra.mxu0 %v8569
      %8580 = vmatprep.subr.bf16.mxu0 0
      %8581 = vmatpush1.bf16.msra.mxu0 %v8568
      %8582 = vmatprep.subr.bf16.mxu0 0
      %8583 = vmatpush1.bf16.msra.mxu0 %v8567
      %8584 = vmatprep.subr.bf16.mxu0 0
      %8585 = vmatpush1.bf16.msra.mxu0 %v8566
      %8586 = vmatprep.subr.bf16.mxu0 0
      %8587 = vmatpush1.bf16.msra.mxu0 %v8565
      %8588 = vmatprep.subr.bf16.mxu0 0
      %8589 = vmatpush1.bf16.msra.mxu0 %v8564
      %8590 = vmatprep.subr.bf16.mxu0 0
      %8591 = vmatpush1.bf16.msra.mxu0 %v8563
      %8592 = vmatprep.subr.bf16.mxu0 0
      %8593 = vmatpush1.bf16.msra.mxu0 %v8562
      %8594 = vmatprep.subr.bf16.mxu0 0
      %8595 = vmatpush2.bf16.msra.mxu0 0
      %8596 = vmatprep.subr.bf16.mxu0 0
      %8597 = vmatpush2.bf16.msra.mxu0 0
      %8598 = vmatprep.subr.bf16.mxu0 0
      %8599 = vmatpush2.bf16.msra.mxu0 0
      %8600 = vmatprep.subr.bf16.mxu0 0
      %8601 = vmatpush2.bf16.msra.mxu0 0
      %8602 = vmatprep.subr.bf16.mxu0 0
      %8603 = vmatpush2.bf16.msra.mxu0 0
      %8604 = vmatprep.subr.bf16.mxu0 0
      %8605 = vmatpush2.bf16.msra.mxu0 0
      %8606 = vmatprep.subr.bf16.mxu0 0
      %8607 = vmatpush2.bf16.msra.mxu0 0
      %8608 = vmatprep.subr.bf16.mxu0 0
      %8609 = vmatpush2.bf16.msra.mxu0 0
      %8610 = vmatprep.mubr.bf16.mxu0 0
      %8611 = vmatmul.mubr.bf16.gmra.mxu0 %v8498
      %v8612 = vpop.f32.mrf.mxu0
      %v8613 = vadd.f32 0.0, %v8612
      %v8614 = vpop.f32.mrf.mxu0
      %v8615 = vpop.f32.mrf.mxu0
      %v8616 = vadd.f32 0.0, %v8615
      %v8617 = vpop.f32.mrf.mxu0
      %8618 = vmatprep.mubr.bf16.mxu0 0
      %8619 = vmatmul.mubr.bf16.gmra.mxu0 %v8499
      %v8620 = vpop.f32.mrf.mxu0
      %v8621 = vadd.f32 0.0, %v8620
      %v8622 = vpop.f32.mrf.mxu0
      %v8623 = vpop.f32.mrf.mxu0
      %v8624 = vadd.f32 0.0, %v8623
      %v8625 = vpop.f32.mrf.mxu0
      %8626 = vmatprep.mubr.bf16.mxu0 0
      %8627 = vmatmul.mubr.bf16.gmra.mxu0 %v8500
      %v8628 = vpop.f32.mrf.mxu0
      %v8629 = vadd.f32 0.0, %v8628
      %v8630 = vpop.f32.mrf.mxu0
      %v8631 = vpop.f32.mrf.mxu0
      %v8632 = vadd.f32 0.0, %v8631
      %v8633 = vpop.f32.mrf.mxu0
      %8634 = vmatprep.mubr.bf16.mxu0 0
      %8635 = vmatmul.mubr.bf16.gmra.mxu0 %v8501
      %v8636 = vpop.f32.mrf.mxu0
      %v8637 = vadd.f32 0.0, %v8636
      %v8638 = vpop.f32.mrf.mxu0
      %v8639 = vpop.f32.mrf.mxu0
      %v8640 = vadd.f32 0.0, %v8639
      %v8641 = vpop.f32.mrf.mxu0
      %8642 = vmatprep.mubr.bf16.mxu0 0
      %8643 = vmatmul.mubr.bf16.gmra.mxu0 %v8502
      %v8644 = vpop.f32.mrf.mxu0
      %v8645 = vadd.f32 0.0, %v8644
      %v8646 = vpop.f32.mrf.mxu0
      %v8647 = vpop.f32.mrf.mxu0
      %v8648 = vadd.f32 0.0, %v8647
      %v8649 = vpop.f32.mrf.mxu0
      %8650 = vmatprep.mubr.bf16.mxu0 0
      %8651 = vmatmul.mubr.bf16.gmra.mxu0 %v8503
      %v8652 = vpop.f32.mrf.mxu0
      %v8653 = vadd.f32 0.0, %v8652
      %v8654 = vpop.f32.mrf.mxu0
      %v8655 = vpop.f32.mrf.mxu0
      %v8656 = vadd.f32 0.0, %v8655
      %v8657 = vpop.f32.mrf.mxu0
      %8658 = vmatprep.mubr.bf16.mxu0 0
      %8659 = vmatmul.mubr.bf16.gmra.mxu0 %v8504
      %v8660 = vpop.f32.mrf.mxu0
      %v8661 = vadd.f32 0.0, %v8660
      %v8662 = vpop.f32.mrf.mxu0
      %v8663 = vpop.f32.mrf.mxu0
      %v8664 = vadd.f32 0.0, %v8663
      %v8665 = vpop.f32.mrf.mxu0
      %8666 = vmatprep.mubr.bf16.mxu0 0
      %8667 = vmatmul.mubr.bf16.gmra.mxu0 %v8505
      %v8668 = vpop.f32.mrf.mxu0
      %v8669 = vadd.f32 0.0, %v8668
      %v8670 = vpop.f32.mrf.mxu0
      %v8671 = vpop.f32.mrf.mxu0
      %v8672 = vadd.f32 0.0, %v8671
      %v8673 = vpop.f32.mrf.mxu0
      %8674 = vmatprep.mubr.bf16.mxu0 0
      %8675 = vmatmul.mubr.bf16.gmra.mxu0 %v8506
      %v8676 = vpop.f32.mrf.mxu0
      %v8677 = vadd.f32 0.0, %v8676
      %v8678 = vpop.f32.mrf.mxu0
      %v8679 = vpop.f32.mrf.mxu0
      %v8680 = vadd.f32 0.0, %v8679
      %v8681 = vpop.f32.mrf.mxu0
      %8682 = vmatprep.mubr.bf16.mxu0 0
      %8683 = vmatmul.mubr.bf16.gmra.mxu0 %v8507
      %v8684 = vpop.f32.mrf.mxu0
      %v8685 = vadd.f32 0.0, %v8684
      %v8686 = vpop.f32.mrf.mxu0
      %v8687 = vpop.f32.mrf.mxu0
      %v8688 = vadd.f32 0.0, %v8687
      %v8689 = vpop.f32.mrf.mxu0
      %8690 = vmatprep.mubr.bf16.mxu0 0
      %8691 = vmatmul.mubr.bf16.gmra.mxu0 %v8508
      %v8692 = vpop.f32.mrf.mxu0
      %v8693 = vadd.f32 0.0, %v8692
      %v8694 = vpop.f32.mrf.mxu0
      %v8695 = vpop.f32.mrf.mxu0
      %v8696 = vadd.f32 0.0, %v8695
      %v8697 = vpop.f32.mrf.mxu0
      %8698 = vmatprep.mubr.bf16.mxu0 0
      %8699 = vmatmul.mubr.bf16.gmra.mxu0 %v8509
      %v8700 = vpop.f32.mrf.mxu0
      %v8701 = vadd.f32 0.0, %v8700
      %v8702 = vpop.f32.mrf.mxu0
      %v8703 = vpop.f32.mrf.mxu0
      %v8704 = vadd.f32 0.0, %v8703
      %v8705 = vpop.f32.mrf.mxu0
      %8706 = vmatprep.mubr.bf16.mxu0 0
      %8707 = vmatmul.mubr.bf16.gmra.mxu0 %v8510
      %v8708 = vpop.f32.mrf.mxu0
      %v8709 = vadd.f32 0.0, %v8708
      %v8710 = vpop.f32.mrf.mxu0
      %v8711 = vpop.f32.mrf.mxu0
      %v8712 = vadd.f32 0.0, %v8711
      %v8713 = vpop.f32.mrf.mxu0
      %8714 = vmatprep.mubr.bf16.mxu0 0
      %8715 = vmatmul.mubr.bf16.gmra.mxu0 %v8511
      %v8716 = vpop.f32.mrf.mxu0
      %v8717 = vadd.f32 0.0, %v8716
      %v8718 = vpop.f32.mrf.mxu0
      %v8719 = vpop.f32.mrf.mxu0
      %v8720 = vadd.f32 0.0, %v8719
      %v8721 = vpop.f32.mrf.mxu0
      %8722 = vmatprep.mubr.bf16.mxu0 0
      %8723 = vmatmul.mubr.bf16.gmra.mxu0 %v8512
      %v8724 = vpop.f32.mrf.mxu0
      %v8725 = vadd.f32 0.0, %v8724
      %v8726 = vpop.f32.mrf.mxu0
      %v8727 = vpop.f32.mrf.mxu0
      %v8728 = vadd.f32 0.0, %v8727
      %v8729 = vpop.f32.mrf.mxu0
      %8730 = vmatprep.mubr.bf16.mxu0 0
      %8731 = vmatmul.mubr.bf16.gmra.mxu0 %v8513
      %v8732 = vpop.f32.mrf.mxu0
      %v8733 = vadd.f32 0.0, %v8732
      %v8734 = vpop.f32.mrf.mxu0
      %v8735 = vpop.f32.mrf.mxu0
      %v8736 = vadd.f32 0.0, %v8735
      %v8737 = vpop.f32.mrf.mxu0
      %8738 = vdwg.mxu0
      %v8739 = vadd.f32 %v8017, %v8613
      %v8740 = vadd.f32 %v8018, %v8616
      %v8741 = vadd.f32 %v8019, %v8621
      %v8742 = vadd.f32 %v8020, %v8624
      %v8743 = vadd.f32 %v8021, %v8629
      %v8744 = vadd.f32 %v8022, %v8632
      %v8745 = vadd.f32 %v8023, %v8637
      %v8746 = vadd.f32 %v8024, %v8640
      %v8747 = vadd.f32 %v8025, %v8645
      %v8748 = vadd.f32 %v8026, %v8648
      %v8749 = vadd.f32 %v8027, %v8653
      %v8750 = vadd.f32 %v8028, %v8656
      %v8751 = vadd.f32 %v8029, %v8661
      %v8752 = vadd.f32 %v8030, %v8664
      %v8753 = vadd.f32 %v8031, %v8669
      %v8754 = vadd.f32 %v8032, %v8672
      %v8755 = vadd.f32 %v8033, %v8677
      %v8756 = vadd.f32 %v8034, %v8680
      %v8757 = vadd.f32 %v8035, %v8685
      %v8758 = vadd.f32 %v8036, %v8688
      %v8759 = vadd.f32 %v8037, %v8693
      %v8760 = vadd.f32 %v8038, %v8696
      %v8761 = vadd.f32 %v8039, %v8701
      %v8762 = vadd.f32 %v8040, %v8704
      %v8763 = vadd.f32 %v8041, %v8709
      %v8764 = vadd.f32 %v8042, %v8712
      %v8765 = vadd.f32 %v8043, %v8717
      %v8766 = vadd.f32 %v8044, %v8720
      %v8767 = vadd.f32 %v8045, %v8725
      %v8768 = vadd.f32 %v8046, %v8728
      %v8769 = vadd.f32 %v8047, %v8733
      %v8770 = vadd.f32 %v8048, %v8736
      %s8771 = scalar_lea.vmem %s3, 256
      %v8772 = vld [vmem:[%s8771] sm:$0xf]
      %v8773 = vld [vmem:[%s8771 + $0x4] sm:$0xf]
      %v8774 = vld [vmem:[%s8771 + $0x8] sm:$0xf]
      %v8775 = vld [vmem:[%s8771 + $0xc] sm:$0xf]
      %v8776 = vld [vmem:[%s8771 + $0x10] sm:$0xf]
      %v8777 = vld [vmem:[%s8771 + $0x14] sm:$0xf]
      %v8778 = vld [vmem:[%s8771 + $0x18] sm:$0xf]
      %v8779 = vld [vmem:[%s8771 + $0x1c] sm:$0xf]
      %v8780 = vld [vmem:[%s8771 + $0x20] sm:$0xf]
      %v8781 = vld [vmem:[%s8771 + $0x24] sm:$0xf]
      %v8782 = vld [vmem:[%s8771 + $0x28] sm:$0xf]
      %v8783 = vld [vmem:[%s8771 + $0x2c] sm:$0xf]
      %v8784 = vld [vmem:[%s8771 + $0x30] sm:$0xf]
      %v8785 = vld [vmem:[%s8771 + $0x34] sm:$0xf]
      %v8786 = vld [vmem:[%s8771 + $0x38] sm:$0xf]
      %v8787 = vld [vmem:[%s8771 + $0x3c] sm:$0xf]
      %v8820 = vunpack.c.l.b16 %v8050
      %v8821 = vunpack.c.l.b16 %v8051
      %v8822 = vunpack.c.l.b16 %v8053
      %v8823 = vunpack.c.l.b16 %v8054
      %v8824 = vunpack.c.l.b16 %v8056
      %v8825 = vunpack.c.l.b16 %v8057
      %v8826 = vunpack.c.l.b16 %v8059
      %v8827 = vunpack.c.l.b16 %v8060
      %v8828 = vunpack.c.l.b16 %v8062
      %v8829 = vunpack.c.l.b16 %v8063
      %v8830 = vunpack.c.l.b16 %v8065
      %v8831 = vunpack.c.l.b16 %v8066
      %v8832 = vunpack.c.l.b16 %v8068
      %v8833 = vunpack.c.l.b16 %v8069
      %v8834 = vunpack.c.l.b16 %v8071
      %v8835 = vunpack.c.l.b16 %v8072
      %v8836 = vunpack.c.l.b16 %v8074
      %v8837 = vunpack.c.l.b16 %v8075
      %v8838 = vunpack.c.l.b16 %v8077
      %v8839 = vunpack.c.l.b16 %v8078
      %v8840 = vunpack.c.l.b16 %v8080
      %v8841 = vunpack.c.l.b16 %v8081
      %v8842 = vunpack.c.l.b16 %v8083
      %v8843 = vunpack.c.l.b16 %v8084
      %v8844 = vunpack.c.l.b16 %v8086
      %v8845 = vunpack.c.l.b16 %v8087
      %v8846 = vunpack.c.l.b16 %v8089
      %v8847 = vunpack.c.l.b16 %v8090
      %v8848 = vunpack.c.l.b16 %v8092
      %v8849 = vunpack.c.l.b16 %v8093
      %v8850 = vunpack.c.l.b16 %v8095
      %v8851 = vunpack.c.l.b16 %v8096
      %v8852 = vpack.c.b16 %v8821, %v8820
      %v8853 = vpack.c.b16 %v8823, %v8822
      %v8854 = vpack.c.b16 %v8825, %v8824
      %v8855 = vpack.c.b16 %v8827, %v8826
      %v8856 = vpack.c.b16 %v8829, %v8828
      %v8857 = vpack.c.b16 %v8831, %v8830
      %v8858 = vpack.c.b16 %v8833, %v8832
      %v8859 = vpack.c.b16 %v8835, %v8834
      %v8860 = vpack.c.b16 %v8837, %v8836
      %v8861 = vpack.c.b16 %v8839, %v8838
      %v8862 = vpack.c.b16 %v8841, %v8840
      %v8863 = vpack.c.b16 %v8843, %v8842
      %v8864 = vpack.c.b16 %v8845, %v8844
      %v8865 = vpack.c.b16 %v8847, %v8846
      %v8866 = vpack.c.b16 %v8849, %v8848
      %v8867 = vpack.c.b16 %v8851, %v8850
      %v8900 = vunpack.c.l.b16 %v8772
      %v8901 = vunpack.c.l.b16 %v8773
      %v8902 = vunpack.c.l.b16 %v8774
      %v8903 = vunpack.c.l.b16 %v8775
      %v8904 = vunpack.c.l.b16 %v8776
      %v8905 = vunpack.c.l.b16 %v8777
      %v8906 = vunpack.c.l.b16 %v8778
      %v8907 = vunpack.c.l.b16 %v8779
      %v8908 = vunpack.c.l.b16 %v8780
      %v8909 = vunpack.c.l.b16 %v8781
      %v8910 = vunpack.c.l.b16 %v8782
      %v8911 = vunpack.c.l.b16 %v8783
      %v8912 = vunpack.c.l.b16 %v8784
      %v8913 = vunpack.c.l.b16 %v8785
      %v8914 = vunpack.c.l.b16 %v8786
      %v8915 = vunpack.c.l.b16 %v8787
      %v8916 = vpack.c.b16 %v8901, %v8900
      %v8917 = vpack.c.b16 %v8903, %v8902
      %v8918 = vpack.c.b16 %v8905, %v8904
      %v8919 = vpack.c.b16 %v8907, %v8906
      %v8920 = vpack.c.b16 %v8909, %v8908
      %v8921 = vpack.c.b16 %v8911, %v8910
      %v8922 = vpack.c.b16 %v8913, %v8912
      %v8923 = vpack.c.b16 %v8915, %v8914
      %8932 = vmatprep.subr.bf16.mxu0 0
      %8933 = vmatpush1.bf16.msra.mxu0 %v8923
      %8934 = vmatprep.subr.bf16.mxu0 0
      %8935 = vmatpush1.bf16.msra.mxu0 %v8922
      %8936 = vmatprep.subr.bf16.mxu0 0
      %8937 = vmatpush1.bf16.msra.mxu0 %v8921
      %8938 = vmatprep.subr.bf16.mxu0 0
      %8939 = vmatpush1.bf16.msra.mxu0 %v8920
      %8940 = vmatprep.subr.bf16.mxu0 0
      %8941 = vmatpush1.bf16.msra.mxu0 %v8919
      %8942 = vmatprep.subr.bf16.mxu0 0
      %8943 = vmatpush1.bf16.msra.mxu0 %v8918
      %8944 = vmatprep.subr.bf16.mxu0 0
      %8945 = vmatpush1.bf16.msra.mxu0 %v8917
      %8946 = vmatprep.subr.bf16.mxu0 0
      %8947 = vmatpush1.bf16.msra.mxu0 %v8916
      %8948 = vmatprep.subr.bf16.mxu0 0
      %8949 = vmatpush2.bf16.msra.mxu0 0
      %8950 = vmatprep.subr.bf16.mxu0 0
      %8951 = vmatpush2.bf16.msra.mxu0 0
      %8952 = vmatprep.subr.bf16.mxu0 0
      %8953 = vmatpush2.bf16.msra.mxu0 0
      %8954 = vmatprep.subr.bf16.mxu0 0
      %8955 = vmatpush2.bf16.msra.mxu0 0
      %8956 = vmatprep.subr.bf16.mxu0 0
      %8957 = vmatpush2.bf16.msra.mxu0 0
      %8958 = vmatprep.subr.bf16.mxu0 0
      %8959 = vmatpush2.bf16.msra.mxu0 0
      %8960 = vmatprep.subr.bf16.mxu0 0
      %8961 = vmatpush2.bf16.msra.mxu0 0
      %8962 = vmatprep.subr.bf16.mxu0 0
      %8963 = vmatpush2.bf16.msra.mxu0 0
      %8964 = vmatprep.mubr.bf16.mxu0 0
      %8965 = vmatmul.mubr.bf16.gmra.mxu0 %v8852
      %v8966 = vpop.f32.mrf.mxu0
      %v8967 = vadd.f32 0.0, %v8966
      %v8968 = vpop.f32.mrf.mxu0
      %v8969 = vpop.f32.mrf.mxu0
      %v8970 = vadd.f32 0.0, %v8969
      %v8971 = vpop.f32.mrf.mxu0
      %8972 = vmatprep.mubr.bf16.mxu0 0
      %8973 = vmatmul.mubr.bf16.gmra.mxu0 %v8853
      %v8974 = vpop.f32.mrf.mxu0
      %v8975 = vadd.f32 0.0, %v8974
      %v8976 = vpop.f32.mrf.mxu0
      %v8977 = vpop.f32.mrf.mxu0
      %v8978 = vadd.f32 0.0, %v8977
      %v8979 = vpop.f32.mrf.mxu0
      %8980 = vmatprep.mubr.bf16.mxu0 0
      %8981 = vmatmul.mubr.bf16.gmra.mxu0 %v8854
      %v8982 = vpop.f32.mrf.mxu0
      %v8983 = vadd.f32 0.0, %v8982
      %v8984 = vpop.f32.mrf.mxu0
      %v8985 = vpop.f32.mrf.mxu0
      %v8986 = vadd.f32 0.0, %v8985
      %v8987 = vpop.f32.mrf.mxu0
      %8988 = vmatprep.mubr.bf16.mxu0 0
      %8989 = vmatmul.mubr.bf16.gmra.mxu0 %v8855
      %v8990 = vpop.f32.mrf.mxu0
      %v8991 = vadd.f32 0.0, %v8990
      %v8992 = vpop.f32.mrf.mxu0
      %v8993 = vpop.f32.mrf.mxu0
      %v8994 = vadd.f32 0.0, %v8993
      %v8995 = vpop.f32.mrf.mxu0
      %8996 = vmatprep.mubr.bf16.mxu0 0
      %8997 = vmatmul.mubr.bf16.gmra.mxu0 %v8856
      %v8998 = vpop.f32.mrf.mxu0
      %v8999 = vadd.f32 0.0, %v8998
      %v9000 = vpop.f32.mrf.mxu0
      %v9001 = vpop.f32.mrf.mxu0
      %v9002 = vadd.f32 0.0, %v9001
      %v9003 = vpop.f32.mrf.mxu0
      %9004 = vmatprep.mubr.bf16.mxu0 0
      %9005 = vmatmul.mubr.bf16.gmra.mxu0 %v8857
      %v9006 = vpop.f32.mrf.mxu0
      %v9007 = vadd.f32 0.0, %v9006
      %v9008 = vpop.f32.mrf.mxu0
      %v9009 = vpop.f32.mrf.mxu0
      %v9010 = vadd.f32 0.0, %v9009
      %v9011 = vpop.f32.mrf.mxu0
      %9012 = vmatprep.mubr.bf16.mxu0 0
      %9013 = vmatmul.mubr.bf16.gmra.mxu0 %v8858
      %v9014 = vpop.f32.mrf.mxu0
      %v9015 = vadd.f32 0.0, %v9014
      %v9016 = vpop.f32.mrf.mxu0
      %v9017 = vpop.f32.mrf.mxu0
      %v9018 = vadd.f32 0.0, %v9017
      %v9019 = vpop.f32.mrf.mxu0
      %9020 = vmatprep.mubr.bf16.mxu0 0
      %9021 = vmatmul.mubr.bf16.gmra.mxu0 %v8859
      %v9022 = vpop.f32.mrf.mxu0
      %v9023 = vadd.f32 0.0, %v9022
      %v9024 = vpop.f32.mrf.mxu0
      %v9025 = vpop.f32.mrf.mxu0
      %v9026 = vadd.f32 0.0, %v9025
      %v9027 = vpop.f32.mrf.mxu0
      %9028 = vmatprep.mubr.bf16.mxu0 0
      %9029 = vmatmul.mubr.bf16.gmra.mxu0 %v8860
      %v9030 = vpop.f32.mrf.mxu0
      %v9031 = vadd.f32 0.0, %v9030
      %v9032 = vpop.f32.mrf.mxu0
      %v9033 = vpop.f32.mrf.mxu0
      %v9034 = vadd.f32 0.0, %v9033
      %v9035 = vpop.f32.mrf.mxu0
      %9036 = vmatprep.mubr.bf16.mxu0 0
      %9037 = vmatmul.mubr.bf16.gmra.mxu0 %v8861
      %v9038 = vpop.f32.mrf.mxu0
      %v9039 = vadd.f32 0.0, %v9038
      %v9040 = vpop.f32.mrf.mxu0
      %v9041 = vpop.f32.mrf.mxu0
      %v9042 = vadd.f32 0.0, %v9041
      %v9043 = vpop.f32.mrf.mxu0
      %9044 = vmatprep.mubr.bf16.mxu0 0
      %9045 = vmatmul.mubr.bf16.gmra.mxu0 %v8862
      %v9046 = vpop.f32.mrf.mxu0
      %v9047 = vadd.f32 0.0, %v9046
      %v9048 = vpop.f32.mrf.mxu0
      %v9049 = vpop.f32.mrf.mxu0
      %v9050 = vadd.f32 0.0, %v9049
      %v9051 = vpop.f32.mrf.mxu0
      %9052 = vmatprep.mubr.bf16.mxu0 0
      %9053 = vmatmul.mubr.bf16.gmra.mxu0 %v8863
      %v9054 = vpop.f32.mrf.mxu0
      %v9055 = vadd.f32 0.0, %v9054
      %v9056 = vpop.f32.mrf.mxu0
      %v9057 = vpop.f32.mrf.mxu0
      %v9058 = vadd.f32 0.0, %v9057
      %v9059 = vpop.f32.mrf.mxu0
      %9060 = vmatprep.mubr.bf16.mxu0 0
      %9061 = vmatmul.mubr.bf16.gmra.mxu0 %v8864
      %v9062 = vpop.f32.mrf.mxu0
      %v9063 = vadd.f32 0.0, %v9062
      %v9064 = vpop.f32.mrf.mxu0
      %v9065 = vpop.f32.mrf.mxu0
      %v9066 = vadd.f32 0.0, %v9065
      %v9067 = vpop.f32.mrf.mxu0
      %9068 = vmatprep.mubr.bf16.mxu0 0
      %9069 = vmatmul.mubr.bf16.gmra.mxu0 %v8865
      %v9070 = vpop.f32.mrf.mxu0
      %v9071 = vadd.f32 0.0, %v9070
      %v9072 = vpop.f32.mrf.mxu0
      %v9073 = vpop.f32.mrf.mxu0
      %v9074 = vadd.f32 0.0, %v9073
      %v9075 = vpop.f32.mrf.mxu0
      %9076 = vmatprep.mubr.bf16.mxu0 0
      %9077 = vmatmul.mubr.bf16.gmra.mxu0 %v8866
      %v9078 = vpop.f32.mrf.mxu0
      %v9079 = vadd.f32 0.0, %v9078
      %v9080 = vpop.f32.mrf.mxu0
      %v9081 = vpop.f32.mrf.mxu0
      %v9082 = vadd.f32 0.0, %v9081
      %v9083 = vpop.f32.mrf.mxu0
      %9084 = vmatprep.mubr.bf16.mxu0 0
      %9085 = vmatmul.mubr.bf16.gmra.mxu0 %v8867
      %v9086 = vpop.f32.mrf.mxu0
      %v9087 = vadd.f32 0.0, %v9086
      %v9088 = vpop.f32.mrf.mxu0
      %v9089 = vpop.f32.mrf.mxu0
      %v9090 = vadd.f32 0.0, %v9089
      %v9091 = vpop.f32.mrf.mxu0
      %9092 = vdwg.mxu0
      %v9093 = vadd.f32 %v8739, %v8967
      %v9094 = vadd.f32 %v8740, %v8970
      %v9095 = vadd.f32 %v8741, %v8975
      %v9096 = vadd.f32 %v8742, %v8978
      %v9097 = vadd.f32 %v8743, %v8983
      %v9098 = vadd.f32 %v8744, %v8986
      %v9099 = vadd.f32 %v8745, %v8991
      %v9100 = vadd.f32 %v8746, %v8994
      %v9101 = vadd.f32 %v8747, %v8999
      %v9102 = vadd.f32 %v8748, %v9002
      %v9103 = vadd.f32 %v8749, %v9007
      %v9104 = vadd.f32 %v8750, %v9010
      %v9105 = vadd.f32 %v8751, %v9015
      %v9106 = vadd.f32 %v8752, %v9018
      %v9107 = vadd.f32 %v8753, %v9023
      %v9108 = vadd.f32 %v8754, %v9026
      %v9109 = vadd.f32 %v8755, %v9031
      %v9110 = vadd.f32 %v8756, %v9034
      %v9111 = vadd.f32 %v8757, %v9039
      %v9112 = vadd.f32 %v8758, %v9042
      %v9113 = vadd.f32 %v8759, %v9047
      %v9114 = vadd.f32 %v8760, %v9050
      %v9115 = vadd.f32 %v8761, %v9055
      %v9116 = vadd.f32 %v8762, %v9058
      %v9117 = vadd.f32 %v8763, %v9063
      %v9118 = vadd.f32 %v8764, %v9066
      %v9119 = vadd.f32 %v8765, %v9071
      %v9120 = vadd.f32 %v8766, %v9074
      %v9121 = vadd.f32 %v8767, %v9079
      %v9122 = vadd.f32 %v8768, %v9082
      %v9123 = vadd.f32 %v8769, %v9087
      %v9124 = vadd.f32 %v8770, %v9090
      %v9125 = vld [vmem:[%s6185 + $0x4] sm:$0xf]
      %v9126 = vld [vmem:[%s6185 + $0x8] sm:$0xf]
      %v9127 = vld [vmem:[%s6185 + $0xc] sm:$0x1]
      %v9128 = vld [vmem:[%s6185 + $0x14] sm:$0xf]
      %v9129 = vld [vmem:[%s6185 + $0x18] sm:$0xf]
      %v9130 = vld [vmem:[%s6185 + $0x1c] sm:$0x1]
      %v9131 = vld [vmem:[%s6185 + $0x24] sm:$0xf]
      %v9132 = vld [vmem:[%s6185 + $0x28] sm:$0xf]
      %v9133 = vld [vmem:[%s6185 + $0x2c] sm:$0x1]
      %v9134 = vld [vmem:[%s6185 + $0x34] sm:$0xf]
      %v9135 = vld [vmem:[%s6185 + $0x38] sm:$0xf]
      %v9136 = vld [vmem:[%s6185 + $0x3c] sm:$0x1]
      %v9137 = vld [vmem:[%s6185 + $0x44] sm:$0xf]
      %v9138 = vld [vmem:[%s6185 + $0x48] sm:$0xf]
      %v9139 = vld [vmem:[%s6185 + $0x4c] sm:$0x1]
      %v9140 = vld [vmem:[%s6185 + $0x54] sm:$0xf]
      %v9141 = vld [vmem:[%s6185 + $0x58] sm:$0xf]
      %v9142 = vld [vmem:[%s6185 + $0x5c] sm:$0x1]
      %v9143 = vld [vmem:[%s6185 + $0x64] sm:$0xf]
      %v9144 = vld [vmem:[%s6185 + $0x68] sm:$0xf]
      %v9145 = vld [vmem:[%s6185 + $0x6c] sm:$0x1]
      %v9146 = vld [vmem:[%s6185 + $0x74] sm:$0xf]
      %v9147 = vld [vmem:[%s6185 + $0x78] sm:$0xf]
      %v9148 = vld [vmem:[%s6185 + $0x7c] sm:$0x1]
      %v9149 = vld [vmem:[%s6185 + $0x84] sm:$0xf]
      %v9150 = vld [vmem:[%s6185 + $0x88] sm:$0xf]
      %v9151 = vld [vmem:[%s6185 + $0x8c] sm:$0x1]
      %v9152 = vld [vmem:[%s6185 + $0x94] sm:$0xf]
      %v9153 = vld [vmem:[%s6185 + $0x98] sm:$0xf]
      %v9154 = vld [vmem:[%s6185 + $0x9c] sm:$0x1]
      %v9155 = vld [vmem:[%s6185 + $0xa4] sm:$0xf]
      %v9156 = vld [vmem:[%s6185 + $0xa8] sm:$0xf]
      %v9157 = vld [vmem:[%s6185 + $0xac] sm:$0x1]
      %v9158 = vld [vmem:[%s6185 + $0xb4] sm:$0xf]
      %v9159 = vld [vmem:[%s6185 + $0xb8] sm:$0xf]
      %v9160 = vld [vmem:[%s6185 + $0xbc] sm:$0x1]
      %v9161 = vld [vmem:[%s6185 + $0xc4] sm:$0xf]
      %v9162 = vld [vmem:[%s6185 + $0xc8] sm:$0xf]
      %v9163 = vld [vmem:[%s6185 + $0xcc] sm:$0x1]
      %v9164 = vld [vmem:[%s6185 + $0xd4] sm:$0xf]
      %v9165 = vld [vmem:[%s6185 + $0xd8] sm:$0xf]
      %v9166 = vld [vmem:[%s6185 + $0xdc] sm:$0x1]
      %v9167 = vld [vmem:[%s6185 + $0xe4] sm:$0xf]
      %v9168 = vld [vmem:[%s6185 + $0xe8] sm:$0xf]
      %v9169 = vld [vmem:[%s6185 + $0xec] sm:$0x1]
      %v9170 = vld [vmem:[%s6185 + $0xf4] sm:$0xf]
      %v9171 = vld [vmem:[%s6185 + $0xf8] sm:$0xf]
      %v9172 = vld [vmem:[%s6185 + $0xfc] sm:$0x1]
      %v9174 = vshrl.u32 %v9125, 16
      %v9176 = vrot.slane %v9174, 4
      %v9177 = vshll.u32 %v9125, 16
      %v9179 = vrot.slane %v9177, 5
      %v9180 = vor.u32 %v9176, %v9179
      %v9181 = vrot.slane %v9180, 4
      %v9183 = vshll.u32 %v9126, 16
      %v9185 = vrot.slane %v9183, 5
      %v9186 = vsel %vm1653, %v9181, %v9185
      %v9187 = vshrl.u32 %v9126, 16
      %v9189 = vrot.slane %v9187, 4
      %v9190 = vor.u32 %v9189, %v9185
      %v9191 = vrot.slane %v9190, 4
      %v9193 = vshll.u32 %v9127, 16
      %v9195 = vrot.slane %v9193, 5
      %v9196 = vsel %vm1653, %v9191, %v9195
      %v9198 = vshrl.u32 %v9128, 16
      %v9200 = vrot.slane %v9198, 4
      %v9201 = vshll.u32 %v9128, 16
      %v9203 = vrot.slane %v9201, 5
      %v9204 = vor.u32 %v9200, %v9203
      %v9205 = vrot.slane %v9204, 4
      %v9207 = vshll.u32 %v9129, 16
      %v9209 = vrot.slane %v9207, 5
      %v9210 = vsel %vm1653, %v9205, %v9209
      %v9211 = vshrl.u32 %v9129, 16
      %v9213 = vrot.slane %v9211, 4
      %v9214 = vor.u32 %v9213, %v9209
      %v9215 = vrot.slane %v9214, 4
      %v9217 = vshll.u32 %v9130, 16
      %v9219 = vrot.slane %v9217, 5
      %v9220 = vsel %vm1653, %v9215, %v9219
      %v9222 = vshrl.u32 %v9131, 16
      %v9224 = vrot.slane %v9222, 4
      %v9225 = vshll.u32 %v9131, 16
      %v9227 = vrot.slane %v9225, 5
      %v9228 = vor.u32 %v9224, %v9227
      %v9229 = vrot.slane %v9228, 4
      %v9231 = vshll.u32 %v9132, 16
      %v9233 = vrot.slane %v9231, 5
      %v9234 = vsel %vm1653, %v9229, %v9233
      %v9235 = vshrl.u32 %v9132, 16
      %v9237 = vrot.slane %v9235, 4
      %v9238 = vor.u32 %v9237, %v9233
      %v9239 = vrot.slane %v9238, 4
      %v9241 = vshll.u32 %v9133, 16
      %v9243 = vrot.slane %v9241, 5
      %v9244 = vsel %vm1653, %v9239, %v9243
      %v9246 = vshrl.u32 %v9134, 16
      %v9248 = vrot.slane %v9246, 4
      %v9249 = vshll.u32 %v9134, 16
      %v9251 = vrot.slane %v9249, 5
      %v9252 = vor.u32 %v9248, %v9251
      %v9253 = vrot.slane %v9252, 4
      %v9255 = vshll.u32 %v9135, 16
      %v9257 = vrot.slane %v9255, 5
      %v9258 = vsel %vm1653, %v9253, %v9257
      %v9259 = vshrl.u32 %v9135, 16
      %v9261 = vrot.slane %v9259, 4
      %v9262 = vor.u32 %v9261, %v9257
      %v9263 = vrot.slane %v9262, 4
      %v9265 = vshll.u32 %v9136, 16
      %v9267 = vrot.slane %v9265, 5
      %v9268 = vsel %vm1653, %v9263, %v9267
      %v9270 = vshrl.u32 %v9137, 16
      %v9272 = vrot.slane %v9270, 4
      %v9273 = vshll.u32 %v9137, 16
      %v9275 = vrot.slane %v9273, 5
      %v9276 = vor.u32 %v9272, %v9275
      %v9277 = vrot.slane %v9276, 4
      %v9279 = vshll.u32 %v9138, 16
      %v9281 = vrot.slane %v9279, 5
      %v9282 = vsel %vm1653, %v9277, %v9281
      %v9283 = vshrl.u32 %v9138, 16
      %v9285 = vrot.slane %v9283, 4
      %v9286 = vor.u32 %v9285, %v9281
      %v9287 = vrot.slane %v9286, 4
      %v9289 = vshll.u32 %v9139, 16
      %v9291 = vrot.slane %v9289, 5
      %v9292 = vsel %vm1653, %v9287, %v9291
      %v9294 = vshrl.u32 %v9140, 16
      %v9296 = vrot.slane %v9294, 4
      %v9297 = vshll.u32 %v9140, 16
      %v9299 = vrot.slane %v9297, 5
      %v9300 = vor.u32 %v9296, %v9299
      %v9301 = vrot.slane %v9300, 4
      %v9303 = vshll.u32 %v9141, 16
      %v9305 = vrot.slane %v9303, 5
      %v9306 = vsel %vm1653, %v9301, %v9305
      %v9307 = vshrl.u32 %v9141, 16
      %v9309 = vrot.slane %v9307, 4
      %v9310 = vor.u32 %v9309, %v9305
      %v9311 = vrot.slane %v9310, 4
      %v9313 = vshll.u32 %v9142, 16
      %v9315 = vrot.slane %v9313, 5
      %v9316 = vsel %vm1653, %v9311, %v9315
      %v9318 = vshrl.u32 %v9143, 16
      %v9320 = vrot.slane %v9318, 4
      %v9321 = vshll.u32 %v9143, 16
      %v9323 = vrot.slane %v9321, 5
      %v9324 = vor.u32 %v9320, %v9323
      %v9325 = vrot.slane %v9324, 4
      %v9327 = vshll.u32 %v9144, 16
      %v9329 = vrot.slane %v9327, 5
      %v9330 = vsel %vm1653, %v9325, %v9329
      %v9331 = vshrl.u32 %v9144, 16
      %v9333 = vrot.slane %v9331, 4
      %v9334 = vor.u32 %v9333, %v9329
      %v9335 = vrot.slane %v9334, 4
      %v9337 = vshll.u32 %v9145, 16
      %v9339 = vrot.slane %v9337, 5
      %v9340 = vsel %vm1653, %v9335, %v9339
      %v9342 = vshrl.u32 %v9146, 16
      %v9344 = vrot.slane %v9342, 4
      %v9345 = vshll.u32 %v9146, 16
      %v9347 = vrot.slane %v9345, 5
      %v9348 = vor.u32 %v9344, %v9347
      %v9349 = vrot.slane %v9348, 4
      %v9351 = vshll.u32 %v9147, 16
      %v9353 = vrot.slane %v9351, 5
      %v9354 = vsel %vm1653, %v9349, %v9353
      %v9355 = vshrl.u32 %v9147, 16
      %v9357 = vrot.slane %v9355, 4
      %v9358 = vor.u32 %v9357, %v9353
      %v9359 = vrot.slane %v9358, 4
      %v9361 = vshll.u32 %v9148, 16
      %v9363 = vrot.slane %v9361, 5
      %v9364 = vsel %vm1653, %v9359, %v9363
      %v9366 = vshrl.u32 %v9149, 16
      %v9368 = vrot.slane %v9366, 4
      %v9369 = vshll.u32 %v9149, 16
      %v9371 = vrot.slane %v9369, 5
      %v9372 = vor.u32 %v9368, %v9371
      %v9373 = vrot.slane %v9372, 4
      %v9375 = vshll.u32 %v9150, 16
      %v9377 = vrot.slane %v9375, 5
      %v9378 = vsel %vm1653, %v9373, %v9377
      %v9379 = vshrl.u32 %v9150, 16
      %v9381 = vrot.slane %v9379, 4
      %v9382 = vor.u32 %v9381, %v9377
      %v9383 = vrot.slane %v9382, 4
      %v9385 = vshll.u32 %v9151, 16
      %v9387 = vrot.slane %v9385, 5
      %v9388 = vsel %vm1653, %v9383, %v9387
      %v9390 = vshrl.u32 %v9152, 16
      %v9392 = vrot.slane %v9390, 4
      %v9393 = vshll.u32 %v9152, 16
      %v9395 = vrot.slane %v9393, 5
      %v9396 = vor.u32 %v9392, %v9395
      %v9397 = vrot.slane %v9396, 4
      %v9399 = vshll.u32 %v9153, 16
      %v9401 = vrot.slane %v9399, 5
      %v9402 = vsel %vm1653, %v9397, %v9401
      %v9403 = vshrl.u32 %v9153, 16
      %v9405 = vrot.slane %v9403, 4
      %v9406 = vor.u32 %v9405, %v9401
      %v9407 = vrot.slane %v9406, 4
      %v9409 = vshll.u32 %v9154, 16
      %v9411 = vrot.slane %v9409, 5
      %v9412 = vsel %vm1653, %v9407, %v9411
      %v9414 = vshrl.u32 %v9155, 16
      %v9416 = vrot.slane %v9414, 4
      %v9417 = vshll.u32 %v9155, 16
      %v9419 = vrot.slane %v9417, 5
      %v9420 = vor.u32 %v9416, %v9419
      %v9421 = vrot.slane %v9420, 4
      %v9423 = vshll.u32 %v9156, 16
      %v9425 = vrot.slane %v9423, 5
      %v9426 = vsel %vm1653, %v9421, %v9425
      %v9427 = vshrl.u32 %v9156, 16
      %v9429 = vrot.slane %v9427, 4
      %v9430 = vor.u32 %v9429, %v9425
      %v9431 = vrot.slane %v9430, 4
      %v9433 = vshll.u32 %v9157, 16
      %v9435 = vrot.slane %v9433, 5
      %v9436 = vsel %vm1653, %v9431, %v9435
      %v9438 = vshrl.u32 %v9158, 16
      %v9440 = vrot.slane %v9438, 4
      %v9441 = vshll.u32 %v9158, 16
      %v9443 = vrot.slane %v9441, 5
      %v9444 = vor.u32 %v9440, %v9443
      %v9445 = vrot.slane %v9444, 4
      %v9447 = vshll.u32 %v9159, 16
      %v9449 = vrot.slane %v9447, 5
      %v9450 = vsel %vm1653, %v9445, %v9449
      %v9451 = vshrl.u32 %v9159, 16
      %v9453 = vrot.slane %v9451, 4
      %v9454 = vor.u32 %v9453, %v9449
      %v9455 = vrot.slane %v9454, 4
      %v9457 = vshll.u32 %v9160, 16
      %v9459 = vrot.slane %v9457, 5
      %v9460 = vsel %vm1653, %v9455, %v9459
      %v9462 = vshrl.u32 %v9161, 16
      %v9464 = vrot.slane %v9462, 4
      %v9465 = vshll.u32 %v9161, 16
      %v9467 = vrot.slane %v9465, 5
      %v9468 = vor.u32 %v9464, %v9467
      %v9469 = vrot.slane %v9468, 4
      %v9471 = vshll.u32 %v9162, 16
      %v9473 = vrot.slane %v9471, 5
      %v9474 = vsel %vm1653, %v9469, %v9473
      %v9475 = vshrl.u32 %v9162, 16
      %v9477 = vrot.slane %v9475, 4
      %v9478 = vor.u32 %v9477, %v9473
      %v9479 = vrot.slane %v9478, 4
      %v9481 = vshll.u32 %v9163, 16
      %v9483 = vrot.slane %v9481, 5
      %v9484 = vsel %vm1653, %v9479, %v9483
      %v9486 = vshrl.u32 %v9164, 16
      %v9488 = vrot.slane %v9486, 4
      %v9489 = vshll.u32 %v9164, 16
      %v9491 = vrot.slane %v9489, 5
      %v9492 = vor.u32 %v9488, %v9491
      %v9493 = vrot.slane %v9492, 4
      %v9495 = vshll.u32 %v9165, 16
      %v9497 = vrot.slane %v9495, 5
      %v9498 = vsel %vm1653, %v9493, %v9497
      %v9499 = vshrl.u32 %v9165, 16
      %v9501 = vrot.slane %v9499, 4
      %v9502 = vor.u32 %v9501, %v9497
      %v9503 = vrot.slane %v9502, 4
      %v9505 = vshll.u32 %v9166, 16
      %v9507 = vrot.slane %v9505, 5
      %v9508 = vsel %vm1653, %v9503, %v9507
      %v9510 = vshrl.u32 %v9167, 16
      %v9512 = vrot.slane %v9510, 4
      %v9513 = vshll.u32 %v9167, 16
      %v9515 = vrot.slane %v9513, 5
      %v9516 = vor.u32 %v9512, %v9515
      %v9517 = vrot.slane %v9516, 4
      %v9519 = vshll.u32 %v9168, 16
      %v9521 = vrot.slane %v9519, 5
      %v9522 = vsel %vm1653, %v9517, %v9521
      %v9523 = vshrl.u32 %v9168, 16
      %v9525 = vrot.slane %v9523, 4
      %v9526 = vor.u32 %v9525, %v9521
      %v9527 = vrot.slane %v9526, 4
      %v9529 = vshll.u32 %v9169, 16
      %v9531 = vrot.slane %v9529, 5
      %v9532 = vsel %vm1653, %v9527, %v9531
      %v9534 = vshrl.u32 %v9170, 16
      %v9536 = vrot.slane %v9534, 4
      %v9537 = vshll.u32 %v9170, 16
      %v9539 = vrot.slane %v9537, 5
      %v9540 = vor.u32 %v9536, %v9539
      %v9541 = vrot.slane %v9540, 4
      %v9543 = vshll.u32 %v9171, 16
      %v9545 = vrot.slane %v9543, 5
      %v9546 = vsel %vm1653, %v9541, %v9545
      %v9547 = vshrl.u32 %v9171, 16
      %v9549 = vrot.slane %v9547, 4
      %v9550 = vor.u32 %v9549, %v9545
      %v9551 = vrot.slane %v9550, 4
      %v9553 = vshll.u32 %v9172, 16
      %v9555 = vrot.slane %v9553, 5
      %v9556 = vsel %vm1653, %v9551, %v9555
      %s9557 = scalar_lea.vmem %s3, 320
      %v9558 = vld [vmem:[%s9557] sm:$0xf]
      %v9559 = vld [vmem:[%s9557 + $0x4] sm:$0xf]
      %v9560 = vld [vmem:[%s9557 + $0x8] sm:$0xf]
      %v9561 = vld [vmem:[%s9557 + $0xc] sm:$0xf]
      %v9562 = vld [vmem:[%s9557 + $0x10] sm:$0xf]
      %v9563 = vld [vmem:[%s9557 + $0x14] sm:$0xf]
      %v9564 = vld [vmem:[%s9557 + $0x18] sm:$0xf]
      %v9565 = vld [vmem:[%s9557 + $0x1c] sm:$0xf]
      %v9566 = vld [vmem:[%s9557 + $0x20] sm:$0xf]
      %v9567 = vld [vmem:[%s9557 + $0x24] sm:$0xf]
      %v9568 = vld [vmem:[%s9557 + $0x28] sm:$0xf]
      %v9569 = vld [vmem:[%s9557 + $0x2c] sm:$0xf]
      %v9570 = vld [vmem:[%s9557 + $0x30] sm:$0xf]
      %v9571 = vld [vmem:[%s9557 + $0x34] sm:$0xf]
      %v9572 = vld [vmem:[%s9557 + $0x38] sm:$0xf]
      %v9573 = vld [vmem:[%s9557 + $0x3c] sm:$0xf]
      %v9574 = vunpack.c.l.b16 %v9186
      %v9575 = vunpack.c.l.b16 %v9196
      %v9576 = vunpack.c.l.b16 %v9210
      %v9577 = vunpack.c.l.b16 %v9220
      %v9578 = vunpack.c.l.b16 %v9234
      %v9579 = vunpack.c.l.b16 %v9244
      %v9580 = vunpack.c.l.b16 %v9258
      %v9581 = vunpack.c.l.b16 %v9268
      %v9582 = vunpack.c.l.b16 %v9282
      %v9583 = vunpack.c.l.b16 %v9292
      %v9584 = vunpack.c.l.b16 %v9306
      %v9585 = vunpack.c.l.b16 %v9316
      %v9586 = vunpack.c.l.b16 %v9330
      %v9587 = vunpack.c.l.b16 %v9340
      %v9588 = vunpack.c.l.b16 %v9354
      %v9589 = vunpack.c.l.b16 %v9364
      %v9590 = vunpack.c.l.b16 %v9378
      %v9591 = vunpack.c.l.b16 %v9388
      %v9592 = vunpack.c.l.b16 %v9402
      %v9593 = vunpack.c.l.b16 %v9412
      %v9594 = vunpack.c.l.b16 %v9426
      %v9595 = vunpack.c.l.b16 %v9436
      %v9596 = vunpack.c.l.b16 %v9450
      %v9597 = vunpack.c.l.b16 %v9460
      %v9598 = vunpack.c.l.b16 %v9474
      %v9599 = vunpack.c.l.b16 %v9484
      %v9600 = vunpack.c.l.b16 %v9498
      %v9601 = vunpack.c.l.b16 %v9508
      %v9602 = vunpack.c.l.b16 %v9522
      %v9603 = vunpack.c.l.b16 %v9532
      %v9604 = vunpack.c.l.b16 %v9546
      %v9605 = vunpack.c.l.b16 %v9556
      %v9606 = vpack.c.b16 %v9575, %v9574
      %v9607 = vpack.c.b16 %v9577, %v9576
      %v9608 = vpack.c.b16 %v9579, %v9578
      %v9609 = vpack.c.b16 %v9581, %v9580
      %v9610 = vpack.c.b16 %v9583, %v9582
      %v9611 = vpack.c.b16 %v9585, %v9584
      %v9612 = vpack.c.b16 %v9587, %v9586
      %v9613 = vpack.c.b16 %v9589, %v9588
      %v9614 = vpack.c.b16 %v9591, %v9590
      %v9615 = vpack.c.b16 %v9593, %v9592
      %v9616 = vpack.c.b16 %v9595, %v9594
      %v9617 = vpack.c.b16 %v9597, %v9596
      %v9618 = vpack.c.b16 %v9599, %v9598
      %v9619 = vpack.c.b16 %v9601, %v9600
      %v9620 = vpack.c.b16 %v9603, %v9602
      %v9621 = vpack.c.b16 %v9605, %v9604
      %v9654 = vunpack.c.l.b16 %v9558
      %v9655 = vunpack.c.l.b16 %v9559
      %v9656 = vunpack.c.l.b16 %v9560
      %v9657 = vunpack.c.l.b16 %v9561
      %v9658 = vunpack.c.l.b16 %v9562
      %v9659 = vunpack.c.l.b16 %v9563
      %v9660 = vunpack.c.l.b16 %v9564
      %v9661 = vunpack.c.l.b16 %v9565
      %v9662 = vunpack.c.l.b16 %v9566
      %v9663 = vunpack.c.l.b16 %v9567
      %v9664 = vunpack.c.l.b16 %v9568
      %v9665 = vunpack.c.l.b16 %v9569
      %v9666 = vunpack.c.l.b16 %v9570
      %v9667 = vunpack.c.l.b16 %v9571
      %v9668 = vunpack.c.l.b16 %v9572
      %v9669 = vunpack.c.l.b16 %v9573
      %v9670 = vpack.c.b16 %v9655, %v9654
      %v9671 = vpack.c.b16 %v9657, %v9656
      %v9672 = vpack.c.b16 %v9659, %v9658
      %v9673 = vpack.c.b16 %v9661, %v9660
      %v9674 = vpack.c.b16 %v9663, %v9662
      %v9675 = vpack.c.b16 %v9665, %v9664
      %v9676 = vpack.c.b16 %v9667, %v9666
      %v9677 = vpack.c.b16 %v9669, %v9668
      %9686 = vmatprep.subr.bf16.mxu0 0
      %9687 = vmatpush1.bf16.msra.mxu0 %v9677
      %9688 = vmatprep.subr.bf16.mxu0 0
      %9689 = vmatpush1.bf16.msra.mxu0 %v9676
      %9690 = vmatprep.subr.bf16.mxu0 0
      %9691 = vmatpush1.bf16.msra.mxu0 %v9675
      %9692 = vmatprep.subr.bf16.mxu0 0
      %9693 = vmatpush1.bf16.msra.mxu0 %v9674
      %9694 = vmatprep.subr.bf16.mxu0 0
      %9695 = vmatpush1.bf16.msra.mxu0 %v9673
      %9696 = vmatprep.subr.bf16.mxu0 0
      %9697 = vmatpush1.bf16.msra.mxu0 %v9672
      %9698 = vmatprep.subr.bf16.mxu0 0
      %9699 = vmatpush1.bf16.msra.mxu0 %v9671
      %9700 = vmatprep.subr.bf16.mxu0 0
      %9701 = vmatpush1.bf16.msra.mxu0 %v9670
      %9702 = vmatprep.subr.bf16.mxu0 0
      %9703 = vmatpush2.bf16.msra.mxu0 0
      %9704 = vmatprep.subr.bf16.mxu0 0
      %9705 = vmatpush2.bf16.msra.mxu0 0
      %9706 = vmatprep.subr.bf16.mxu0 0
      %9707 = vmatpush2.bf16.msra.mxu0 0
      %9708 = vmatprep.subr.bf16.mxu0 0
      %9709 = vmatpush2.bf16.msra.mxu0 0
      %9710 = vmatprep.subr.bf16.mxu0 0
      %9711 = vmatpush2.bf16.msra.mxu0 0
      %9712 = vmatprep.subr.bf16.mxu0 0
      %9713 = vmatpush2.bf16.msra.mxu0 0
      %9714 = vmatprep.subr.bf16.mxu0 0
      %9715 = vmatpush2.bf16.msra.mxu0 0
      %9716 = vmatprep.subr.bf16.mxu0 0
      %9717 = vmatpush2.bf16.msra.mxu0 0
      %9718 = vmatprep.mubr.bf16.mxu0 0
      %9719 = vmatmul.mubr.bf16.gmra.mxu0 %v9606
      %v9720 = vpop.f32.mrf.mxu0
      %v9721 = vadd.f32 0.0, %v9720
      %v9722 = vpop.f32.mrf.mxu0
      %v9723 = vpop.f32.mrf.mxu0
      %v9724 = vadd.f32 0.0, %v9723
      %v9725 = vpop.f32.mrf.mxu0
      %9726 = vmatprep.mubr.bf16.mxu0 0
      %9727 = vmatmul.mubr.bf16.gmra.mxu0 %v9607
      %v9728 = vpop.f32.mrf.mxu0
      %v9729 = vadd.f32 0.0, %v9728
      %v9730 = vpop.f32.mrf.mxu0
      %v9731 = vpop.f32.mrf.mxu0
      %v9732 = vadd.f32 0.0, %v9731
      %v9733 = vpop.f32.mrf.mxu0
      %9734 = vmatprep.mubr.bf16.mxu0 0
      %9735 = vmatmul.mubr.bf16.gmra.mxu0 %v9608
      %v9736 = vpop.f32.mrf.mxu0
      %v9737 = vadd.f32 0.0, %v9736
      %v9738 = vpop.f32.mrf.mxu0
      %v9739 = vpop.f32.mrf.mxu0
      %v9740 = vadd.f32 0.0, %v9739
      %v9741 = vpop.f32.mrf.mxu0
      %9742 = vmatprep.mubr.bf16.mxu0 0
      %9743 = vmatmul.mubr.bf16.gmra.mxu0 %v9609
      %v9744 = vpop.f32.mrf.mxu0
      %v9745 = vadd.f32 0.0, %v9744
      %v9746 = vpop.f32.mrf.mxu0
      %v9747 = vpop.f32.mrf.mxu0
      %v9748 = vadd.f32 0.0, %v9747
      %v9749 = vpop.f32.mrf.mxu0
      %9750 = vmatprep.mubr.bf16.mxu0 0
      %9751 = vmatmul.mubr.bf16.gmra.mxu0 %v9610
      %v9752 = vpop.f32.mrf.mxu0
      %v9753 = vadd.f32 0.0, %v9752
      %v9754 = vpop.f32.mrf.mxu0
      %v9755 = vpop.f32.mrf.mxu0
      %v9756 = vadd.f32 0.0, %v9755
      %v9757 = vpop.f32.mrf.mxu0
      %9758 = vmatprep.mubr.bf16.mxu0 0
      %9759 = vmatmul.mubr.bf16.gmra.mxu0 %v9611
      %v9760 = vpop.f32.mrf.mxu0
      %v9761 = vadd.f32 0.0, %v9760
      %v9762 = vpop.f32.mrf.mxu0
      %v9763 = vpop.f32.mrf.mxu0
      %v9764 = vadd.f32 0.0, %v9763
      %v9765 = vpop.f32.mrf.mxu0
      %9766 = vmatprep.mubr.bf16.mxu0 0
      %9767 = vmatmul.mubr.bf16.gmra.mxu0 %v9612
      %v9768 = vpop.f32.mrf.mxu0
      %v9769 = vadd.f32 0.0, %v9768
      %v9770 = vpop.f32.mrf.mxu0
      %v9771 = vpop.f32.mrf.mxu0
      %v9772 = vadd.f32 0.0, %v9771
      %v9773 = vpop.f32.mrf.mxu0
      %9774 = vmatprep.mubr.bf16.mxu0 0
      %9775 = vmatmul.mubr.bf16.gmra.mxu0 %v9613
      %v9776 = vpop.f32.mrf.mxu0
      %v9777 = vadd.f32 0.0, %v9776
      %v9778 = vpop.f32.mrf.mxu0
      %v9779 = vpop.f32.mrf.mxu0
      %v9780 = vadd.f32 0.0, %v9779
      %v9781 = vpop.f32.mrf.mxu0
      %9782 = vmatprep.mubr.bf16.mxu0 0
      %9783 = vmatmul.mubr.bf16.gmra.mxu0 %v9614
      %v9784 = vpop.f32.mrf.mxu0
      %v9785 = vadd.f32 0.0, %v9784
      %v9786 = vpop.f32.mrf.mxu0
      %v9787 = vpop.f32.mrf.mxu0
      %v9788 = vadd.f32 0.0, %v9787
      %v9789 = vpop.f32.mrf.mxu0
      %9790 = vmatprep.mubr.bf16.mxu0 0
      %9791 = vmatmul.mubr.bf16.gmra.mxu0 %v9615
      %v9792 = vpop.f32.mrf.mxu0
      %v9793 = vadd.f32 0.0, %v9792
      %v9794 = vpop.f32.mrf.mxu0
      %v9795 = vpop.f32.mrf.mxu0
      %v9796 = vadd.f32 0.0, %v9795
      %v9797 = vpop.f32.mrf.mxu0
      %9798 = vmatprep.mubr.bf16.mxu0 0
      %9799 = vmatmul.mubr.bf16.gmra.mxu0 %v9616
      %v9800 = vpop.f32.mrf.mxu0
      %v9801 = vadd.f32 0.0, %v9800
      %v9802 = vpop.f32.mrf.mxu0
      %v9803 = vpop.f32.mrf.mxu0
      %v9804 = vadd.f32 0.0, %v9803
      %v9805 = vpop.f32.mrf.mxu0
      %9806 = vmatprep.mubr.bf16.mxu0 0
      %9807 = vmatmul.mubr.bf16.gmra.mxu0 %v9617
      %v9808 = vpop.f32.mrf.mxu0
      %v9809 = vadd.f32 0.0, %v9808
      %v9810 = vpop.f32.mrf.mxu0
      %v9811 = vpop.f32.mrf.mxu0
      %v9812 = vadd.f32 0.0, %v9811
      %v9813 = vpop.f32.mrf.mxu0
      %9814 = vmatprep.mubr.bf16.mxu0 0
      %9815 = vmatmul.mubr.bf16.gmra.mxu0 %v9618
      %v9816 = vpop.f32.mrf.mxu0
      %v9817 = vadd.f32 0.0, %v9816
      %v9818 = vpop.f32.mrf.mxu0
      %v9819 = vpop.f32.mrf.mxu0
      %v9820 = vadd.f32 0.0, %v9819
      %v9821 = vpop.f32.mrf.mxu0
      %9822 = vmatprep.mubr.bf16.mxu0 0
      %9823 = vmatmul.mubr.bf16.gmra.mxu0 %v9619
      %v9824 = vpop.f32.mrf.mxu0
      %v9825 = vadd.f32 0.0, %v9824
      %v9826 = vpop.f32.mrf.mxu0
      %v9827 = vpop.f32.mrf.mxu0
      %v9828 = vadd.f32 0.0, %v9827
      %v9829 = vpop.f32.mrf.mxu0
      %9830 = vmatprep.mubr.bf16.mxu0 0
      %9831 = vmatmul.mubr.bf16.gmra.mxu0 %v9620
      %v9832 = vpop.f32.mrf.mxu0
      %v9833 = vadd.f32 0.0, %v9832
      %v9834 = vpop.f32.mrf.mxu0
      %v9835 = vpop.f32.mrf.mxu0
      %v9836 = vadd.f32 0.0, %v9835
      %v9837 = vpop.f32.mrf.mxu0
      %9838 = vmatprep.mubr.bf16.mxu0 0
      %9839 = vmatmul.mubr.bf16.gmra.mxu0 %v9621
      %v9840 = vpop.f32.mrf.mxu0
      %v9841 = vadd.f32 0.0, %v9840
      %v9842 = vpop.f32.mrf.mxu0
      %v9843 = vpop.f32.mrf.mxu0
      %v9844 = vadd.f32 0.0, %v9843
      %v9845 = vpop.f32.mrf.mxu0
      %9846 = vdwg.mxu0
      %v9847 = vadd.f32 %v9093, %v9721
      %v9848 = vadd.f32 %v9094, %v9724
      %v9849 = vadd.f32 %v9095, %v9729
      %v9850 = vadd.f32 %v9096, %v9732
      %v9851 = vadd.f32 %v9097, %v9737
      %v9852 = vadd.f32 %v9098, %v9740
      %v9853 = vadd.f32 %v9099, %v9745
      %v9854 = vadd.f32 %v9100, %v9748
      %v9855 = vadd.f32 %v9101, %v9753
      %v9856 = vadd.f32 %v9102, %v9756
      %v9857 = vadd.f32 %v9103, %v9761
      %v9858 = vadd.f32 %v9104, %v9764
      %v9859 = vadd.f32 %v9105, %v9769
      %v9860 = vadd.f32 %v9106, %v9772
      %v9861 = vadd.f32 %v9107, %v9777
      %v9862 = vadd.f32 %v9108, %v9780
      %v9863 = vadd.f32 %v9109, %v9785
      %v9864 = vadd.f32 %v9110, %v9788
      %v9865 = vadd.f32 %v9111, %v9793
      %v9866 = vadd.f32 %v9112, %v9796
      %v9867 = vadd.f32 %v9113, %v9801
      %v9868 = vadd.f32 %v9114, %v9804
      %v9869 = vadd.f32 %v9115, %v9809
      %v9870 = vadd.f32 %v9116, %v9812
      %v9871 = vadd.f32 %v9117, %v9817
      %v9872 = vadd.f32 %v9118, %v9820
      %v9873 = vadd.f32 %v9119, %v9825
      %v9874 = vadd.f32 %v9120, %v9828
      %v9875 = vadd.f32 %v9121, %v9833
      %v9876 = vadd.f32 %v9122, %v9836
      %v9877 = vadd.f32 %v9123, %v9841
      %v9878 = vadd.f32 %v9124, %v9844
      %s9879 = smul.addr %s4191, 4
      %s9880 = scalar_lea.vmem [#allocation3], %s9879
      %v9881 = vld [vmem:[%s9880] sm:$0x8]
      %v9882 = vld [vmem:[%s9880 + $0x4] sm:$0xf]
      %v9883 = vld [vmem:[%s9880 + $0x8] sm:$0xf]
      %v9884 = vld [vmem:[%s9880 + $0x10] sm:$0x8]
      %v9885 = vld [vmem:[%s9880 + $0x14] sm:$0xf]
      %v9886 = vld [vmem:[%s9880 + $0x18] sm:$0xf]
      %v9887 = vld [vmem:[%s9880 + $0x20] sm:$0x8]
      %v9888 = vld [vmem:[%s9880 + $0x24] sm:$0xf]
      %v9889 = vld [vmem:[%s9880 + $0x28] sm:$0xf]
      %v9890 = vld [vmem:[%s9880 + $0x30] sm:$0x8]
      %v9891 = vld [vmem:[%s9880 + $0x34] sm:$0xf]
      %v9892 = vld [vmem:[%s9880 + $0x38] sm:$0xf]
      %v9893 = vld [vmem:[%s9880 + $0x40] sm:$0x8]
      %v9894 = vld [vmem:[%s9880 + $0x44] sm:$0xf]
      %v9895 = vld [vmem:[%s9880 + $0x48] sm:$0xf]
      %v9896 = vld [vmem:[%s9880 + $0x50] sm:$0x8]
      %v9897 = vld [vmem:[%s9880 + $0x54] sm:$0xf]
      %v9898 = vld [vmem:[%s9880 + $0x58] sm:$0xf]
      %v9899 = vld [vmem:[%s9880 + $0x60] sm:$0x8]
      %v9900 = vld [vmem:[%s9880 + $0x64] sm:$0xf]
      %v9901 = vld [vmem:[%s9880 + $0x68] sm:$0xf]
      %v9902 = vld [vmem:[%s9880 + $0x70] sm:$0x8]
      %v9903 = vld [vmem:[%s9880 + $0x74] sm:$0xf]
      %v9904 = vld [vmem:[%s9880 + $0x78] sm:$0xf]
      %v9905 = vld [vmem:[%s9880 + $0x80] sm:$0x8]
      %v9906 = vld [vmem:[%s9880 + $0x84] sm:$0xf]
      %v9907 = vld [vmem:[%s9880 + $0x88] sm:$0xf]
      %v9908 = vld [vmem:[%s9880 + $0x90] sm:$0x8]
      %v9909 = vld [vmem:[%s9880 + $0x94] sm:$0xf]
      %v9910 = vld [vmem:[%s9880 + $0x98] sm:$0xf]
      %v9911 = vld [vmem:[%s9880 + $0xa0] sm:$0x8]
      %v9912 = vld [vmem:[%s9880 + $0xa4] sm:$0xf]
      %v9913 = vld [vmem:[%s9880 + $0xa8] sm:$0xf]
      %v9914 = vld [vmem:[%s9880 + $0xb0] sm:$0x8]
      %v9915 = vld [vmem:[%s9880 + $0xb4] sm:$0xf]
      %v9916 = vld [vmem:[%s9880 + $0xb8] sm:$0xf]
      %v9917 = vld [vmem:[%s9880 + $0xc0] sm:$0x8]
      %v9918 = vld [vmem:[%s9880 + $0xc4] sm:$0xf]
      %v9919 = vld [vmem:[%s9880 + $0xc8] sm:$0xf]
      %v9920 = vld [vmem:[%s9880 + $0xd0] sm:$0x8]
      %v9921 = vld [vmem:[%s9880 + $0xd4] sm:$0xf]
      %v9922 = vld [vmem:[%s9880 + $0xd8] sm:$0xf]
      %v9923 = vld [vmem:[%s9880 + $0xe0] sm:$0x8]
      %v9924 = vld [vmem:[%s9880 + $0xe4] sm:$0xf]
      %v9925 = vld [vmem:[%s9880 + $0xe8] sm:$0xf]
      %v9926 = vld [vmem:[%s9880 + $0xf0] sm:$0x8]
      %v9927 = vld [vmem:[%s9880 + $0xf4] sm:$0xf]
      %v9928 = vld [vmem:[%s9880 + $0xf8] sm:$0xf]
      %v9930 = vshrl.u32 %v9881, 16
      %v9932 = vrot.slane %v9930, 7
      %v9933 = vrot.slane %v9932, 4
      %v9935 = vshrl.u32 %v9882, 16
      %v9937 = vrot.slane %v9935, 7
      %v9938 = vshll.u32 %v9882, 16
      %v9940 = vor.u32 %v9937, %v9938
      %v9941 = vsel %vm575, %v9933, %v9940
      %v9942 = vrot.slane %v9937, 4
      %v9944 = vshrl.u32 %v9883, 16
      %v9946 = vrot.slane %v9944, 7
      %v9947 = vshll.u32 %v9883, 16
      %v9949 = vor.u32 %v9946, %v9947
      %v9950 = vsel %vm575, %v9942, %v9949
      %v9952 = vshrl.u32 %v9884, 16
      %v9954 = vrot.slane %v9952, 7
      %v9955 = vrot.slane %v9954, 4
      %v9957 = vshrl.u32 %v9885, 16
      %v9959 = vrot.slane %v9957, 7
      %v9960 = vshll.u32 %v9885, 16
      %v9962 = vor.u32 %v9959, %v9960
      %v9963 = vsel %vm575, %v9955, %v9962
      %v9964 = vrot.slane %v9959, 4
      %v9966 = vshrl.u32 %v9886, 16
      %v9968 = vrot.slane %v9966, 7
      %v9969 = vshll.u32 %v9886, 16
      %v9971 = vor.u32 %v9968, %v9969
      %v9972 = vsel %vm575, %v9964, %v9971
      %v9974 = vshrl.u32 %v9887, 16
      %v9976 = vrot.slane %v9974, 7
      %v9977 = vrot.slane %v9976, 4
      %v9979 = vshrl.u32 %v9888, 16
      %v9981 = vrot.slane %v9979, 7
      %v9982 = vshll.u32 %v9888, 16
      %v9984 = vor.u32 %v9981, %v9982
      %v9985 = vsel %vm575, %v9977, %v9984
      %v9986 = vrot.slane %v9981, 4
      %v9988 = vshrl.u32 %v9889, 16
      %v9990 = vrot.slane %v9988, 7
      %v9991 = vshll.u32 %v9889, 16
      %v9993 = vor.u32 %v9990, %v9991
      %v9994 = vsel %vm575, %v9986, %v9993
      %v9996 = vshrl.u32 %v9890, 16
      %v9998 = vrot.slane %v9996, 7
      %v9999 = vrot.slane %v9998, 4
      %v10001 = vshrl.u32 %v9891, 16
      %v10003 = vrot.slane %v10001, 7
      %v10004 = vshll.u32 %v9891, 16
      %v10006 = vor.u32 %v10003, %v10004
      %v10007 = vsel %vm575, %v9999, %v10006
      %v10008 = vrot.slane %v10003, 4
      %v10010 = vshrl.u32 %v9892, 16
      %v10012 = vrot.slane %v10010, 7
      %v10013 = vshll.u32 %v9892, 16
      %v10015 = vor.u32 %v10012, %v10013
      %v10016 = vsel %vm575, %v10008, %v10015
      %v10018 = vshrl.u32 %v9893, 16
      %v10020 = vrot.slane %v10018, 7
      %v10021 = vrot.slane %v10020, 4
      %v10023 = vshrl.u32 %v9894, 16
      %v10025 = vrot.slane %v10023, 7
      %v10026 = vshll.u32 %v9894, 16
      %v10028 = vor.u32 %v10025, %v10026
      %v10029 = vsel %vm575, %v10021, %v10028
      %v10030 = vrot.slane %v10025, 4
      %v10032 = vshrl.u32 %v9895, 16
      %v10034 = vrot.slane %v10032, 7
      %v10035 = vshll.u32 %v9895, 16
      %v10037 = vor.u32 %v10034, %v10035
      %v10038 = vsel %vm575, %v10030, %v10037
      %v10040 = vshrl.u32 %v9896, 16
      %v10042 = vrot.slane %v10040, 7
      %v10043 = vrot.slane %v10042, 4
      %v10045 = vshrl.u32 %v9897, 16
      %v10047 = vrot.slane %v10045, 7
      %v10048 = vshll.u32 %v9897, 16
      %v10050 = vor.u32 %v10047, %v10048
      %v10051 = vsel %vm575, %v10043, %v10050
      %v10052 = vrot.slane %v10047, 4
      %v10054 = vshrl.u32 %v9898, 16
      %v10056 = vrot.slane %v10054, 7
      %v10057 = vshll.u32 %v9898, 16
      %v10059 = vor.u32 %v10056, %v10057
      %v10060 = vsel %vm575, %v10052, %v10059
      %v10062 = vshrl.u32 %v9899, 16
      %v10064 = vrot.slane %v10062, 7
      %v10065 = vrot.slane %v10064, 4
      %v10067 = vshrl.u32 %v9900, 16
      %v10069 = vrot.slane %v10067, 7
      %v10070 = vshll.u32 %v9900, 16
      %v10072 = vor.u32 %v10069, %v10070
      %v10073 = vsel %vm575, %v10065, %v10072
      %v10074 = vrot.slane %v10069, 4
      %v10076 = vshrl.u32 %v9901, 16
      %v10078 = vrot.slane %v10076, 7
      %v10079 = vshll.u32 %v9901, 16
      %v10081 = vor.u32 %v10078, %v10079
      %v10082 = vsel %vm575, %v10074, %v10081
      %v10084 = vshrl.u32 %v9902, 16
      %v10086 = vrot.slane %v10084, 7
      %v10087 = vrot.slane %v10086, 4
      %v10089 = vshrl.u32 %v9903, 16
      %v10091 = vrot.slane %v10089, 7
      %v10092 = vshll.u32 %v9903, 16
      %v10094 = vor.u32 %v10091, %v10092
      %v10095 = vsel %vm575, %v10087, %v10094
      %v10096 = vrot.slane %v10091, 4
      %v10098 = vshrl.u32 %v9904, 16
      %v10100 = vrot.slane %v10098, 7
      %v10101 = vshll.u32 %v9904, 16
      %v10103 = vor.u32 %v10100, %v10101
      %v10104 = vsel %vm575, %v10096, %v10103
      %v10106 = vshrl.u32 %v9905, 16
      %v10108 = vrot.slane %v10106, 7
      %v10109 = vrot.slane %v10108, 4
      %v10111 = vshrl.u32 %v9906, 16
      %v10113 = vrot.slane %v10111, 7
      %v10114 = vshll.u32 %v9906, 16
      %v10116 = vor.u32 %v10113, %v10114
      %v10117 = vsel %vm575, %v10109, %v10116
      %v10118 = vrot.slane %v10113, 4
      %v10120 = vshrl.u32 %v9907, 16
      %v10122 = vrot.slane %v10120, 7
      %v10123 = vshll.u32 %v9907, 16
      %v10125 = vor.u32 %v10122, %v10123
      %v10126 = vsel %vm575, %v10118, %v10125
      %v10128 = vshrl.u32 %v9908, 16
      %v10130 = vrot.slane %v10128, 7
      %v10131 = vrot.slane %v10130, 4
      %v10133 = vshrl.u32 %v9909, 16
      %v10135 = vrot.slane %v10133, 7
      %v10136 = vshll.u32 %v9909, 16
      %v10138 = vor.u32 %v10135, %v10136
      %v10139 = vsel %vm575, %v10131, %v10138
      %v10140 = vrot.slane %v10135, 4
      %v10142 = vshrl.u32 %v9910, 16
      %v10144 = vrot.slane %v10142, 7
      %v10145 = vshll.u32 %v9910, 16
      %v10147 = vor.u32 %v10144, %v10145
      %v10148 = vsel %vm575, %v10140, %v10147
      %v10150 = vshrl.u32 %v9911, 16
      %v10152 = vrot.slane %v10150, 7
      %v10153 = vrot.slane %v10152, 4
      %v10155 = vshrl.u32 %v9912, 16
      %v10157 = vrot.slane %v10155, 7
      %v10158 = vshll.u32 %v9912, 16
      %v10160 = vor.u32 %v10157, %v10158
      %v10161 = vsel %vm575, %v10153, %v10160
      %v10162 = vrot.slane %v10157, 4
      %v10164 = vshrl.u32 %v9913, 16
      %v10166 = vrot.slane %v10164, 7
      %v10167 = vshll.u32 %v9913, 16
      %v10169 = vor.u32 %v10166, %v10167
      %v10170 = vsel %vm575, %v10162, %v10169
      %v10172 = vshrl.u32 %v9914, 16
      %v10174 = vrot.slane %v10172, 7
      %v10175 = vrot.slane %v10174, 4
      %v10177 = vshrl.u32 %v9915, 16
      %v10179 = vrot.slane %v10177, 7
      %v10180 = vshll.u32 %v9915, 16
      %v10182 = vor.u32 %v10179, %v10180
      %v10183 = vsel %vm575, %v10175, %v10182
      %v10184 = vrot.slane %v10179, 4
      %v10186 = vshrl.u32 %v9916, 16
      %v10188 = vrot.slane %v10186, 7
      %v10189 = vshll.u32 %v9916, 16
      %v10191 = vor.u32 %v10188, %v10189
      %v10192 = vsel %vm575, %v10184, %v10191
      %v10194 = vshrl.u32 %v9917, 16
      %v10196 = vrot.slane %v10194, 7
      %v10197 = vrot.slane %v10196, 4
      %v10199 = vshrl.u32 %v9918, 16
      %v10201 = vrot.slane %v10199, 7
      %v10202 = vshll.u32 %v9918, 16
      %v10204 = vor.u32 %v10201, %v10202
      %v10205 = vsel %vm575, %v10197, %v10204
      %v10206 = vrot.slane %v10201, 4
      %v10208 = vshrl.u32 %v9919, 16
      %v10210 = vrot.slane %v10208, 7
      %v10211 = vshll.u32 %v9919, 16
      %v10213 = vor.u32 %v10210, %v10211
      %v10214 = vsel %vm575, %v10206, %v10213
      %v10216 = vshrl.u32 %v9920, 16
      %v10218 = vrot.slane %v10216, 7
      %v10219 = vrot.slane %v10218, 4
      %v10221 = vshrl.u32 %v9921, 16
      %v10223 = vrot.slane %v10221, 7
      %v10224 = vshll.u32 %v9921, 16
      %v10226 = vor.u32 %v10223, %v10224
      %v10227 = vsel %vm575, %v10219, %v10226
      %v10228 = vrot.slane %v10223, 4
      %v10230 = vshrl.u32 %v9922, 16
      %v10232 = vrot.slane %v10230, 7
      %v10233 = vshll.u32 %v9922, 16
      %v10235 = vor.u32 %v10232, %v10233
      %v10236 = vsel %vm575, %v10228, %v10235
      %v10238 = vshrl.u32 %v9923, 16
      %v10240 = vrot.slane %v10238, 7
      %v10241 = vrot.slane %v10240, 4
      %v10243 = vshrl.u32 %v9924, 16
      %v10245 = vrot.slane %v10243, 7
      %v10246 = vshll.u32 %v9924, 16
      %v10248 = vor.u32 %v10245, %v10246
      %v10249 = vsel %vm575, %v10241, %v10248
      %v10250 = vrot.slane %v10245, 4
      %v10252 = vshrl.u32 %v9925, 16
      %v10254 = vrot.slane %v10252, 7
      %v10255 = vshll.u32 %v9925, 16
      %v10257 = vor.u32 %v10254, %v10255
      %v10258 = vsel %vm575, %v10250, %v10257
      %v10260 = vshrl.u32 %v9926, 16
      %v10262 = vrot.slane %v10260, 7
      %v10263 = vrot.slane %v10262, 4
      %v10265 = vshrl.u32 %v9927, 16
      %v10267 = vrot.slane %v10265, 7
      %v10268 = vshll.u32 %v9927, 16
      %v10270 = vor.u32 %v10267, %v10268
      %v10271 = vsel %vm575, %v10263, %v10270
      %v10272 = vrot.slane %v10267, 4
      %v10274 = vshrl.u32 %v9928, 16
      %v10276 = vrot.slane %v10274, 7
      %v10277 = vshll.u32 %v9928, 16
      %v10279 = vor.u32 %v10276, %v10277
      %v10280 = vsel %vm575, %v10272, %v10279
      %s10281 = scalar_lea.vmem %s3, 384
      %v10282 = vld [vmem:[%s10281] sm:$0xf]
      %v10283 = vld [vmem:[%s10281 + $0x4] sm:$0xf]
      %v10284 = vld [vmem:[%s10281 + $0x8] sm:$0xf]
      %v10285 = vld [vmem:[%s10281 + $0xc] sm:$0xf]
      %v10286 = vld [vmem:[%s10281 + $0x10] sm:$0xf]
      %v10287 = vld [vmem:[%s10281 + $0x14] sm:$0xf]
      %v10288 = vld [vmem:[%s10281 + $0x18] sm:$0xf]
      %v10289 = vld [vmem:[%s10281 + $0x1c] sm:$0xf]
      %v10290 = vld [vmem:[%s10281 + $0x20] sm:$0xf]
      %v10291 = vld [vmem:[%s10281 + $0x24] sm:$0xf]
      %v10292 = vld [vmem:[%s10281 + $0x28] sm:$0xf]
      %v10293 = vld [vmem:[%s10281 + $0x2c] sm:$0xf]
      %v10294 = vld [vmem:[%s10281 + $0x30] sm:$0xf]
      %v10295 = vld [vmem:[%s10281 + $0x34] sm:$0xf]
      %v10296 = vld [vmem:[%s10281 + $0x38] sm:$0xf]
      %v10297 = vld [vmem:[%s10281 + $0x3c] sm:$0xf]
      %v10298 = vunpack.c.l.b16 %v9941
      %v10299 = vunpack.c.l.b16 %v9950
      %v10300 = vunpack.c.l.b16 %v9963
      %v10301 = vunpack.c.l.b16 %v9972
      %v10302 = vunpack.c.l.b16 %v9985
      %v10303 = vunpack.c.l.b16 %v9994
      %v10304 = vunpack.c.l.b16 %v10007
      %v10305 = vunpack.c.l.b16 %v10016
      %v10306 = vunpack.c.l.b16 %v10029
      %v10307 = vunpack.c.l.b16 %v10038
      %v10308 = vunpack.c.l.b16 %v10051
      %v10309 = vunpack.c.l.b16 %v10060
      %v10310 = vunpack.c.l.b16 %v10073
      %v10311 = vunpack.c.l.b16 %v10082
      %v10312 = vunpack.c.l.b16 %v10095
      %v10313 = vunpack.c.l.b16 %v10104
      %v10314 = vunpack.c.l.b16 %v10117
      %v10315 = vunpack.c.l.b16 %v10126
      %v10316 = vunpack.c.l.b16 %v10139
      %v10317 = vunpack.c.l.b16 %v10148
      %v10318 = vunpack.c.l.b16 %v10161
      %v10319 = vunpack.c.l.b16 %v10170
      %v10320 = vunpack.c.l.b16 %v10183
      %v10321 = vunpack.c.l.b16 %v10192
      %v10322 = vunpack.c.l.b16 %v10205
      %v10323 = vunpack.c.l.b16 %v10214
      %v10324 = vunpack.c.l.b16 %v10227
      %v10325 = vunpack.c.l.b16 %v10236
      %v10326 = vunpack.c.l.b16 %v10249
      %v10327 = vunpack.c.l.b16 %v10258
      %v10328 = vunpack.c.l.b16 %v10271
      %v10329 = vunpack.c.l.b16 %v10280
      %v10330 = vpack.c.b16 %v10299, %v10298
      %v10331 = vpack.c.b16 %v10301, %v10300
      %v10332 = vpack.c.b16 %v10303, %v10302
      %v10333 = vpack.c.b16 %v10305, %v10304
      %v10334 = vpack.c.b16 %v10307, %v10306
      %v10335 = vpack.c.b16 %v10309, %v10308
      %v10336 = vpack.c.b16 %v10311, %v10310
      %v10337 = vpack.c.b16 %v10313, %v10312
      %v10338 = vpack.c.b16 %v10315, %v10314
      %v10339 = vpack.c.b16 %v10317, %v10316
      %v10340 = vpack.c.b16 %v10319, %v10318
      %v10341 = vpack.c.b16 %v10321, %v10320
      %v10342 = vpack.c.b16 %v10323, %v10322
      %v10343 = vpack.c.b16 %v10325, %v10324
      %v10344 = vpack.c.b16 %v10327, %v10326
      %v10345 = vpack.c.b16 %v10329, %v10328
      %v10378 = vunpack.c.l.b16 %v10282
      %v10379 = vunpack.c.l.b16 %v10283
      %v10380 = vunpack.c.l.b16 %v10284
      %v10381 = vunpack.c.l.b16 %v10285
      %v10382 = vunpack.c.l.b16 %v10286
      %v10383 = vunpack.c.l.b16 %v10287
      %v10384 = vunpack.c.l.b16 %v10288
      %v10385 = vunpack.c.l.b16 %v10289
      %v10386 = vunpack.c.l.b16 %v10290
      %v10387 = vunpack.c.l.b16 %v10291
      %v10388 = vunpack.c.l.b16 %v10292
      %v10389 = vunpack.c.l.b16 %v10293
      %v10390 = vunpack.c.l.b16 %v10294
      %v10391 = vunpack.c.l.b16 %v10295
      %v10392 = vunpack.c.l.b16 %v10296
      %v10393 = vunpack.c.l.b16 %v10297
      %v10394 = vpack.c.b16 %v10379, %v10378
      %v10395 = vpack.c.b16 %v10381, %v10380
      %v10396 = vpack.c.b16 %v10383, %v10382
      %v10397 = vpack.c.b16 %v10385, %v10384
      %v10398 = vpack.c.b16 %v10387, %v10386
      %v10399 = vpack.c.b16 %v10389, %v10388
      %v10400 = vpack.c.b16 %v10391, %v10390
      %v10401 = vpack.c.b16 %v10393, %v10392
      %10410 = vmatprep.subr.bf16.mxu0 0
      %10411 = vmatpush1.bf16.msra.mxu0 %v10401
      %10412 = vmatprep.subr.bf16.mxu0 0
      %10413 = vmatpush1.bf16.msra.mxu0 %v10400
      %10414 = vmatprep.subr.bf16.mxu0 0
      %10415 = vmatpush1.bf16.msra.mxu0 %v10399
      %10416 = vmatprep.subr.bf16.mxu0 0
      %10417 = vmatpush1.bf16.msra.mxu0 %v10398
      %10418 = vmatprep.subr.bf16.mxu0 0
      %10419 = vmatpush1.bf16.msra.mxu0 %v10397
      %10420 = vmatprep.subr.bf16.mxu0 0
      %10421 = vmatpush1.bf16.msra.mxu0 %v10396
      %10422 = vmatprep.subr.bf16.mxu0 0
      %10423 = vmatpush1.bf16.msra.mxu0 %v10395
      %10424 = vmatprep.subr.bf16.mxu0 0
      %10425 = vmatpush1.bf16.msra.mxu0 %v10394
      %10426 = vmatprep.subr.bf16.mxu0 0
      %10427 = vmatpush2.bf16.msra.mxu0 0
      %10428 = vmatprep.subr.bf16.mxu0 0
      %10429 = vmatpush2.bf16.msra.mxu0 0
      %10430 = vmatprep.subr.bf16.mxu0 0
      %10431 = vmatpush2.bf16.msra.mxu0 0
      %10432 = vmatprep.subr.bf16.mxu0 0
      %10433 = vmatpush2.bf16.msra.mxu0 0
      %10434 = vmatprep.subr.bf16.mxu0 0
      %10435 = vmatpush2.bf16.msra.mxu0 0
      %10436 = vmatprep.subr.bf16.mxu0 0
      %10437 = vmatpush2.bf16.msra.mxu0 0
      %10438 = vmatprep.subr.bf16.mxu0 0
      %10439 = vmatpush2.bf16.msra.mxu0 0
      %10440 = vmatprep.subr.bf16.mxu0 0
      %10441 = vmatpush2.bf16.msra.mxu0 0
      %10442 = vmatprep.mubr.bf16.mxu0 0
      %10443 = vmatmul.mubr.bf16.gmra.mxu0 %v10330
      %v10444 = vpop.f32.mrf.mxu0
      %v10445 = vadd.f32 0.0, %v10444
      %v10446 = vpop.f32.mrf.mxu0
      %v10447 = vpop.f32.mrf.mxu0
      %v10448 = vadd.f32 0.0, %v10447
      %v10449 = vpop.f32.mrf.mxu0
      %10450 = vmatprep.mubr.bf16.mxu0 0
      %10451 = vmatmul.mubr.bf16.gmra.mxu0 %v10331
      %v10452 = vpop.f32.mrf.mxu0
      %v10453 = vadd.f32 0.0, %v10452
      %v10454 = vpop.f32.mrf.mxu0
      %v10455 = vpop.f32.mrf.mxu0
      %v10456 = vadd.f32 0.0, %v10455
      %v10457 = vpop.f32.mrf.mxu0
      %10458 = vmatprep.mubr.bf16.mxu0 0
      %10459 = vmatmul.mubr.bf16.gmra.mxu0 %v10332
      %v10460 = vpop.f32.mrf.mxu0
      %v10461 = vadd.f32 0.0, %v10460
      %v10462 = vpop.f32.mrf.mxu0
      %v10463 = vpop.f32.mrf.mxu0
      %v10464 = vadd.f32 0.0, %v10463
      %v10465 = vpop.f32.mrf.mxu0
      %10466 = vmatprep.mubr.bf16.mxu0 0
      %10467 = vmatmul.mubr.bf16.gmra.mxu0 %v10333
      %v10468 = vpop.f32.mrf.mxu0
      %v10469 = vadd.f32 0.0, %v10468
      %v10470 = vpop.f32.mrf.mxu0
      %v10471 = vpop.f32.mrf.mxu0
      %v10472 = vadd.f32 0.0, %v10471
      %v10473 = vpop.f32.mrf.mxu0
      %10474 = vmatprep.mubr.bf16.mxu0 0
      %10475 = vmatmul.mubr.bf16.gmra.mxu0 %v10334
      %v10476 = vpop.f32.mrf.mxu0
      %v10477 = vadd.f32 0.0, %v10476
      %v10478 = vpop.f32.mrf.mxu0
      %v10479 = vpop.f32.mrf.mxu0
      %v10480 = vadd.f32 0.0, %v10479
      %v10481 = vpop.f32.mrf.mxu0
      %10482 = vmatprep.mubr.bf16.mxu0 0
      %10483 = vmatmul.mubr.bf16.gmra.mxu0 %v10335
      %v10484 = vpop.f32.mrf.mxu0
      %v10485 = vadd.f32 0.0, %v10484
      %v10486 = vpop.f32.mrf.mxu0
      %v10487 = vpop.f32.mrf.mxu0
      %v10488 = vadd.f32 0.0, %v10487
      %v10489 = vpop.f32.mrf.mxu0
      %10490 = vmatprep.mubr.bf16.mxu0 0
      %10491 = vmatmul.mubr.bf16.gmra.mxu0 %v10336
      %v10492 = vpop.f32.mrf.mxu0
      %v10493 = vadd.f32 0.0, %v10492
      %v10494 = vpop.f32.mrf.mxu0
      %v10495 = vpop.f32.mrf.mxu0
      %v10496 = vadd.f32 0.0, %v10495
      %v10497 = vpop.f32.mrf.mxu0
      %10498 = vmatprep.mubr.bf16.mxu0 0
      %10499 = vmatmul.mubr.bf16.gmra.mxu0 %v10337
      %v10500 = vpop.f32.mrf.mxu0
      %v10501 = vadd.f32 0.0, %v10500
      %v10502 = vpop.f32.mrf.mxu0
      %v10503 = vpop.f32.mrf.mxu0
      %v10504 = vadd.f32 0.0, %v10503
      %v10505 = vpop.f32.mrf.mxu0
      %10506 = vmatprep.mubr.bf16.mxu0 0
      %10507 = vmatmul.mubr.bf16.gmra.mxu0 %v10338
      %v10508 = vpop.f32.mrf.mxu0
      %v10509 = vadd.f32 0.0, %v10508
      %v10510 = vpop.f32.mrf.mxu0
      %v10511 = vpop.f32.mrf.mxu0
      %v10512 = vadd.f32 0.0, %v10511
      %v10513 = vpop.f32.mrf.mxu0
      %10514 = vmatprep.mubr.bf16.mxu0 0
      %10515 = vmatmul.mubr.bf16.gmra.mxu0 %v10339
      %v10516 = vpop.f32.mrf.mxu0
      %v10517 = vadd.f32 0.0, %v10516
      %v10518 = vpop.f32.mrf.mxu0
      %v10519 = vpop.f32.mrf.mxu0
      %v10520 = vadd.f32 0.0, %v10519
      %v10521 = vpop.f32.mrf.mxu0
      %10522 = vmatprep.mubr.bf16.mxu0 0
      %10523 = vmatmul.mubr.bf16.gmra.mxu0 %v10340
      %v10524 = vpop.f32.mrf.mxu0
      %v10525 = vadd.f32 0.0, %v10524
      %v10526 = vpop.f32.mrf.mxu0
      %v10527 = vpop.f32.mrf.mxu0
      %v10528 = vadd.f32 0.0, %v10527
      %v10529 = vpop.f32.mrf.mxu0
      %10530 = vmatprep.mubr.bf16.mxu0 0
      %10531 = vmatmul.mubr.bf16.gmra.mxu0 %v10341
      %v10532 = vpop.f32.mrf.mxu0
      %v10533 = vadd.f32 0.0, %v10532
      %v10534 = vpop.f32.mrf.mxu0
      %v10535 = vpop.f32.mrf.mxu0
      %v10536 = vadd.f32 0.0, %v10535
      %v10537 = vpop.f32.mrf.mxu0
      %10538 = vmatprep.mubr.bf16.mxu0 0
      %10539 = vmatmul.mubr.bf16.gmra.mxu0 %v10342
      %v10540 = vpop.f32.mrf.mxu0
      %v10541 = vadd.f32 0.0, %v10540
      %v10542 = vpop.f32.mrf.mxu0
      %v10543 = vpop.f32.mrf.mxu0
      %v10544 = vadd.f32 0.0, %v10543
      %v10545 = vpop.f32.mrf.mxu0
      %10546 = vmatprep.mubr.bf16.mxu0 0
      %10547 = vmatmul.mubr.bf16.gmra.mxu0 %v10343
      %v10548 = vpop.f32.mrf.mxu0
      %v10549 = vadd.f32 0.0, %v10548
      %v10550 = vpop.f32.mrf.mxu0
      %v10551 = vpop.f32.mrf.mxu0
      %v10552 = vadd.f32 0.0, %v10551
      %v10553 = vpop.f32.mrf.mxu0
      %10554 = vmatprep.mubr.bf16.mxu0 0
      %10555 = vmatmul.mubr.bf16.gmra.mxu0 %v10344
      %v10556 = vpop.f32.mrf.mxu0
      %v10557 = vadd.f32 0.0, %v10556
      %v10558 = vpop.f32.mrf.mxu0
      %v10559 = vpop.f32.mrf.mxu0
      %v10560 = vadd.f32 0.0, %v10559
      %v10561 = vpop.f32.mrf.mxu0
      %10562 = vmatprep.mubr.bf16.mxu0 0
      %10563 = vmatmul.mubr.bf16.gmra.mxu0 %v10345
      %v10564 = vpop.f32.mrf.mxu0
      %v10565 = vadd.f32 0.0, %v10564
      %v10566 = vpop.f32.mrf.mxu0
      %v10567 = vpop.f32.mrf.mxu0
      %v10568 = vadd.f32 0.0, %v10567
      %v10569 = vpop.f32.mrf.mxu0
      %10570 = vdwg.mxu0
      %v10571 = vadd.f32 %v9847, %v10445
      %v10572 = vadd.f32 %v9848, %v10448
      %v10573 = vadd.f32 %v9849, %v10453
      %v10574 = vadd.f32 %v9850, %v10456
      %v10575 = vadd.f32 %v9851, %v10461
      %v10576 = vadd.f32 %v9852, %v10464
      %v10577 = vadd.f32 %v9853, %v10469
      %v10578 = vadd.f32 %v9854, %v10472
      %v10579 = vadd.f32 %v9855, %v10477
      %v10580 = vadd.f32 %v9856, %v10480
      %v10581 = vadd.f32 %v9857, %v10485
      %v10582 = vadd.f32 %v9858, %v10488
      %v10583 = vadd.f32 %v9859, %v10493
      %v10584 = vadd.f32 %v9860, %v10496
      %v10585 = vadd.f32 %v9861, %v10501
      %v10586 = vadd.f32 %v9862, %v10504
      %v10587 = vadd.f32 %v9863, %v10509
      %v10588 = vadd.f32 %v9864, %v10512
      %v10589 = vadd.f32 %v9865, %v10517
      %v10590 = vadd.f32 %v9866, %v10520
      %v10591 = vadd.f32 %v9867, %v10525
      %v10592 = vadd.f32 %v9868, %v10528
      %v10593 = vadd.f32 %v9869, %v10533
      %v10594 = vadd.f32 %v9870, %v10536
      %v10595 = vadd.f32 %v9871, %v10541
      %v10596 = vadd.f32 %v9872, %v10544
      %v10597 = vadd.f32 %v9873, %v10549
      %v10598 = vadd.f32 %v9874, %v10552
      %v10599 = vadd.f32 %v9875, %v10557
      %v10600 = vadd.f32 %v9876, %v10560
      %v10601 = vadd.f32 %v9877, %v10565
      %v10602 = vadd.f32 %v9878, %v10568
      %s10603 = scalar_lea.vmem %s3, 448
      %v10604 = vld [vmem:[%s10603] sm:$0xf]
      %v10605 = vld [vmem:[%s10603 + $0x4] sm:$0xf]
      %v10606 = vld [vmem:[%s10603 + $0x8] sm:$0xf]
      %v10607 = vld [vmem:[%s10603 + $0xc] sm:$0xf]
      %v10608 = vld [vmem:[%s10603 + $0x10] sm:$0xf]
      %v10609 = vld [vmem:[%s10603 + $0x14] sm:$0xf]
      %v10610 = vld [vmem:[%s10603 + $0x18] sm:$0xf]
      %v10611 = vld [vmem:[%s10603 + $0x1c] sm:$0xf]
      %v10612 = vld [vmem:[%s10603 + $0x20] sm:$0xf]
      %v10613 = vld [vmem:[%s10603 + $0x24] sm:$0xf]
      %v10614 = vld [vmem:[%s10603 + $0x28] sm:$0xf]
      %v10615 = vld [vmem:[%s10603 + $0x2c] sm:$0xf]
      %v10616 = vld [vmem:[%s10603 + $0x30] sm:$0xf]
      %v10617 = vld [vmem:[%s10603 + $0x34] sm:$0xf]
      %v10618 = vld [vmem:[%s10603 + $0x38] sm:$0xf]
      %v10619 = vld [vmem:[%s10603 + $0x3c] sm:$0xf]
      %v10652 = vunpack.c.l.b16 %v9882
      %v10653 = vunpack.c.l.b16 %v9883
      %v10654 = vunpack.c.l.b16 %v9885
      %v10655 = vunpack.c.l.b16 %v9886
      %v10656 = vunpack.c.l.b16 %v9888
      %v10657 = vunpack.c.l.b16 %v9889
      %v10658 = vunpack.c.l.b16 %v9891
      %v10659 = vunpack.c.l.b16 %v9892
      %v10660 = vunpack.c.l.b16 %v9894
      %v10661 = vunpack.c.l.b16 %v9895
      %v10662 = vunpack.c.l.b16 %v9897
      %v10663 = vunpack.c.l.b16 %v9898
      %v10664 = vunpack.c.l.b16 %v9900
      %v10665 = vunpack.c.l.b16 %v9901
      %v10666 = vunpack.c.l.b16 %v9903
      %v10667 = vunpack.c.l.b16 %v9904
      %v10668 = vunpack.c.l.b16 %v9906
      %v10669 = vunpack.c.l.b16 %v9907
      %v10670 = vunpack.c.l.b16 %v9909
      %v10671 = vunpack.c.l.b16 %v9910
      %v10672 = vunpack.c.l.b16 %v9912
      %v10673 = vunpack.c.l.b16 %v9913
      %v10674 = vunpack.c.l.b16 %v9915
      %v10675 = vunpack.c.l.b16 %v9916
      %v10676 = vunpack.c.l.b16 %v9918
      %v10677 = vunpack.c.l.b16 %v9919
      %v10678 = vunpack.c.l.b16 %v9921
      %v10679 = vunpack.c.l.b16 %v9922
      %v10680 = vunpack.c.l.b16 %v9924
      %v10681 = vunpack.c.l.b16 %v9925
      %v10682 = vunpack.c.l.b16 %v9927
      %v10683 = vunpack.c.l.b16 %v9928
      %v10684 = vpack.c.b16 %v10653, %v10652
      %v10685 = vpack.c.b16 %v10655, %v10654
      %v10686 = vpack.c.b16 %v10657, %v10656
      %v10687 = vpack.c.b16 %v10659, %v10658
      %v10688 = vpack.c.b16 %v10661, %v10660
      %v10689 = vpack.c.b16 %v10663, %v10662
      %v10690 = vpack.c.b16 %v10665, %v10664
      %v10691 = vpack.c.b16 %v10667, %v10666
      %v10692 = vpack.c.b16 %v10669, %v10668
      %v10693 = vpack.c.b16 %v10671, %v10670
      %v10694 = vpack.c.b16 %v10673, %v10672
      %v10695 = vpack.c.b16 %v10675, %v10674
      %v10696 = vpack.c.b16 %v10677, %v10676
      %v10697 = vpack.c.b16 %v10679, %v10678
      %v10698 = vpack.c.b16 %v10681, %v10680
      %v10699 = vpack.c.b16 %v10683, %v10682
      %v10732 = vunpack.c.l.b16 %v10604
      %v10733 = vunpack.c.l.b16 %v10605
      %v10734 = vunpack.c.l.b16 %v10606
      %v10735 = vunpack.c.l.b16 %v10607
      %v10736 = vunpack.c.l.b16 %v10608
      %v10737 = vunpack.c.l.b16 %v10609
      %v10738 = vunpack.c.l.b16 %v10610
      %v10739 = vunpack.c.l.b16 %v10611
      %v10740 = vunpack.c.l.b16 %v10612
      %v10741 = vunpack.c.l.b16 %v10613
      %v10742 = vunpack.c.l.b16 %v10614
      %v10743 = vunpack.c.l.b16 %v10615
      %v10744 = vunpack.c.l.b16 %v10616
      %v10745 = vunpack.c.l.b16 %v10617
      %v10746 = vunpack.c.l.b16 %v10618
      %v10747 = vunpack.c.l.b16 %v10619
      %v10748 = vpack.c.b16 %v10733, %v10732
      %v10749 = vpack.c.b16 %v10735, %v10734
      %v10750 = vpack.c.b16 %v10737, %v10736
      %v10751 = vpack.c.b16 %v10739, %v10738
      %v10752 = vpack.c.b16 %v10741, %v10740
      %v10753 = vpack.c.b16 %v10743, %v10742
      %v10754 = vpack.c.b16 %v10745, %v10744
      %v10755 = vpack.c.b16 %v10747, %v10746
      %10764 = vmatprep.subr.bf16.mxu0 0
      %10765 = vmatpush1.bf16.msra.mxu0 %v10755
      %10766 = vmatprep.subr.bf16.mxu0 0
      %10767 = vmatpush1.bf16.msra.mxu0 %v10754
      %10768 = vmatprep.subr.bf16.mxu0 0
      %10769 = vmatpush1.bf16.msra.mxu0 %v10753
      %10770 = vmatprep.subr.bf16.mxu0 0
      %10771 = vmatpush1.bf16.msra.mxu0 %v10752
      %10772 = vmatprep.subr.bf16.mxu0 0
      %10773 = vmatpush1.bf16.msra.mxu0 %v10751
      %10774 = vmatprep.subr.bf16.mxu0 0
      %10775 = vmatpush1.bf16.msra.mxu0 %v10750
      %10776 = vmatprep.subr.bf16.mxu0 0
      %10777 = vmatpush1.bf16.msra.mxu0 %v10749
      %10778 = vmatprep.subr.bf16.mxu0 0
      %10779 = vmatpush1.bf16.msra.mxu0 %v10748
      %10780 = vmatprep.subr.bf16.mxu0 0
      %10781 = vmatpush2.bf16.msra.mxu0 0
      %10782 = vmatprep.subr.bf16.mxu0 0
      %10783 = vmatpush2.bf16.msra.mxu0 0
      %10784 = vmatprep.subr.bf16.mxu0 0
      %10785 = vmatpush2.bf16.msra.mxu0 0
      %10786 = vmatprep.subr.bf16.mxu0 0
      %10787 = vmatpush2.bf16.msra.mxu0 0
      %10788 = vmatprep.subr.bf16.mxu0 0
      %10789 = vmatpush2.bf16.msra.mxu0 0
      %10790 = vmatprep.subr.bf16.mxu0 0
      %10791 = vmatpush2.bf16.msra.mxu0 0
      %10792 = vmatprep.subr.bf16.mxu0 0
      %10793 = vmatpush2.bf16.msra.mxu0 0
      %10794 = vmatprep.subr.bf16.mxu0 0
      %10795 = vmatpush2.bf16.msra.mxu0 0
      %10796 = vmatprep.mubr.bf16.mxu0 0
      %10797 = vmatmul.mubr.bf16.gmra.mxu0 %v10684
      %v10798 = vpop.f32.mrf.mxu0
      %v10799 = vadd.f32 0.0, %v10798
      %v10800 = vpop.f32.mrf.mxu0
      %v10801 = vpop.f32.mrf.mxu0
      %v10802 = vadd.f32 0.0, %v10801
      %v10803 = vpop.f32.mrf.mxu0
      %10804 = vmatprep.mubr.bf16.mxu0 0
      %10805 = vmatmul.mubr.bf16.gmra.mxu0 %v10685
      %v10806 = vpop.f32.mrf.mxu0
      %v10807 = vadd.f32 0.0, %v10806
      %v10808 = vpop.f32.mrf.mxu0
      %v10809 = vpop.f32.mrf.mxu0
      %v10810 = vadd.f32 0.0, %v10809
      %v10811 = vpop.f32.mrf.mxu0
      %10812 = vmatprep.mubr.bf16.mxu0 0
      %10813 = vmatmul.mubr.bf16.gmra.mxu0 %v10686
      %v10814 = vpop.f32.mrf.mxu0
      %v10815 = vadd.f32 0.0, %v10814
      %v10816 = vpop.f32.mrf.mxu0
      %v10817 = vpop.f32.mrf.mxu0
      %v10818 = vadd.f32 0.0, %v10817
      %v10819 = vpop.f32.mrf.mxu0
      %10820 = vmatprep.mubr.bf16.mxu0 0
      %10821 = vmatmul.mubr.bf16.gmra.mxu0 %v10687
      %v10822 = vpop.f32.mrf.mxu0
      %v10823 = vadd.f32 0.0, %v10822
      %v10824 = vpop.f32.mrf.mxu0
      %v10825 = vpop.f32.mrf.mxu0
      %v10826 = vadd.f32 0.0, %v10825
      %v10827 = vpop.f32.mrf.mxu0
      %10828 = vmatprep.mubr.bf16.mxu0 0
      %10829 = vmatmul.mubr.bf16.gmra.mxu0 %v10688
      %v10830 = vpop.f32.mrf.mxu0
      %v10831 = vadd.f32 0.0, %v10830
      %v10832 = vpop.f32.mrf.mxu0
      %v10833 = vpop.f32.mrf.mxu0
      %v10834 = vadd.f32 0.0, %v10833
      %v10835 = vpop.f32.mrf.mxu0
      %10836 = vmatprep.mubr.bf16.mxu0 0
      %10837 = vmatmul.mubr.bf16.gmra.mxu0 %v10689
      %v10838 = vpop.f32.mrf.mxu0
      %v10839 = vadd.f32 0.0, %v10838
      %v10840 = vpop.f32.mrf.mxu0
      %v10841 = vpop.f32.mrf.mxu0
      %v10842 = vadd.f32 0.0, %v10841
      %v10843 = vpop.f32.mrf.mxu0
      %10844 = vmatprep.mubr.bf16.mxu0 0
      %10845 = vmatmul.mubr.bf16.gmra.mxu0 %v10690
      %v10846 = vpop.f32.mrf.mxu0
      %v10847 = vadd.f32 0.0, %v10846
      %v10848 = vpop.f32.mrf.mxu0
      %v10849 = vpop.f32.mrf.mxu0
      %v10850 = vadd.f32 0.0, %v10849
      %v10851 = vpop.f32.mrf.mxu0
      %10852 = vmatprep.mubr.bf16.mxu0 0
      %10853 = vmatmul.mubr.bf16.gmra.mxu0 %v10691
      %v10854 = vpop.f32.mrf.mxu0
      %v10855 = vadd.f32 0.0, %v10854
      %v10856 = vpop.f32.mrf.mxu0
      %v10857 = vpop.f32.mrf.mxu0
      %v10858 = vadd.f32 0.0, %v10857
      %v10859 = vpop.f32.mrf.mxu0
      %10860 = vmatprep.mubr.bf16.mxu0 0
      %10861 = vmatmul.mubr.bf16.gmra.mxu0 %v10692
      %v10862 = vpop.f32.mrf.mxu0
      %v10863 = vadd.f32 0.0, %v10862
      %v10864 = vpop.f32.mrf.mxu0
      %v10865 = vpop.f32.mrf.mxu0
      %v10866 = vadd.f32 0.0, %v10865
      %v10867 = vpop.f32.mrf.mxu0
      %10868 = vmatprep.mubr.bf16.mxu0 0
      %10869 = vmatmul.mubr.bf16.gmra.mxu0 %v10693
      %v10870 = vpop.f32.mrf.mxu0
      %v10871 = vadd.f32 0.0, %v10870
      %v10872 = vpop.f32.mrf.mxu0
      %v10873 = vpop.f32.mrf.mxu0
      %v10874 = vadd.f32 0.0, %v10873
      %v10875 = vpop.f32.mrf.mxu0
      %10876 = vmatprep.mubr.bf16.mxu0 0
      %10877 = vmatmul.mubr.bf16.gmra.mxu0 %v10694
      %v10878 = vpop.f32.mrf.mxu0
      %v10879 = vadd.f32 0.0, %v10878
      %v10880 = vpop.f32.mrf.mxu0
      %v10881 = vpop.f32.mrf.mxu0
      %v10882 = vadd.f32 0.0, %v10881
      %v10883 = vpop.f32.mrf.mxu0
      %10884 = vmatprep.mubr.bf16.mxu0 0
      %10885 = vmatmul.mubr.bf16.gmra.mxu0 %v10695
      %v10886 = vpop.f32.mrf.mxu0
      %v10887 = vadd.f32 0.0, %v10886
      %v10888 = vpop.f32.mrf.mxu0
      %v10889 = vpop.f32.mrf.mxu0
      %v10890 = vadd.f32 0.0, %v10889
      %v10891 = vpop.f32.mrf.mxu0
      %10892 = vmatprep.mubr.bf16.mxu0 0
      %10893 = vmatmul.mubr.bf16.gmra.mxu0 %v10696
      %v10894 = vpop.f32.mrf.mxu0
      %v10895 = vadd.f32 0.0, %v10894
      %v10896 = vpop.f32.mrf.mxu0
      %v10897 = vpop.f32.mrf.mxu0
      %v10898 = vadd.f32 0.0, %v10897
      %v10899 = vpop.f32.mrf.mxu0
      %10900 = vmatprep.mubr.bf16.mxu0 0
      %10901 = vmatmul.mubr.bf16.gmra.mxu0 %v10697
      %v10902 = vpop.f32.mrf.mxu0
      %v10903 = vadd.f32 0.0, %v10902
      %v10904 = vpop.f32.mrf.mxu0
      %v10905 = vpop.f32.mrf.mxu0
      %v10906 = vadd.f32 0.0, %v10905
      %v10907 = vpop.f32.mrf.mxu0
      %10908 = vmatprep.mubr.bf16.mxu0 0
      %10909 = vmatmul.mubr.bf16.gmra.mxu0 %v10698
      %v10910 = vpop.f32.mrf.mxu0
      %v10911 = vadd.f32 0.0, %v10910
      %v10912 = vpop.f32.mrf.mxu0
      %v10913 = vpop.f32.mrf.mxu0
      %v10914 = vadd.f32 0.0, %v10913
      %v10915 = vpop.f32.mrf.mxu0
      %10916 = vmatprep.mubr.bf16.mxu0 0
      %10917 = vmatmul.mubr.bf16.gmra.mxu0 %v10699
      %v10918 = vpop.f32.mrf.mxu0
      %v10919 = vadd.f32 0.0, %v10918
      %v10920 = vpop.f32.mrf.mxu0
      %v10921 = vpop.f32.mrf.mxu0
      %v10922 = vadd.f32 0.0, %v10921
      %v10923 = vpop.f32.mrf.mxu0
      %10924 = vdwg.mxu0
      %v10925 = vadd.f32 %v10571, %v10799
      %v10926 = vadd.f32 %v10572, %v10802
      %v10927 = vadd.f32 %v10573, %v10807
      %v10928 = vadd.f32 %v10574, %v10810
      %v10929 = vadd.f32 %v10575, %v10815
      %v10930 = vadd.f32 %v10576, %v10818
      %v10931 = vadd.f32 %v10577, %v10823
      %v10932 = vadd.f32 %v10578, %v10826
      %v10933 = vadd.f32 %v10579, %v10831
      %v10934 = vadd.f32 %v10580, %v10834
      %v10935 = vadd.f32 %v10581, %v10839
      %v10936 = vadd.f32 %v10582, %v10842
      %v10937 = vadd.f32 %v10583, %v10847
      %v10938 = vadd.f32 %v10584, %v10850
      %v10939 = vadd.f32 %v10585, %v10855
      %v10940 = vadd.f32 %v10586, %v10858
      %v10941 = vadd.f32 %v10587, %v10863
      %v10942 = vadd.f32 %v10588, %v10866
      %v10943 = vadd.f32 %v10589, %v10871
      %v10944 = vadd.f32 %v10590, %v10874
      %v10945 = vadd.f32 %v10591, %v10879
      %v10946 = vadd.f32 %v10592, %v10882
      %v10947 = vadd.f32 %v10593, %v10887
      %v10948 = vadd.f32 %v10594, %v10890
      %v10949 = vadd.f32 %v10595, %v10895
      %v10950 = vadd.f32 %v10596, %v10898
      %v10951 = vadd.f32 %v10597, %v10903
      %v10952 = vadd.f32 %v10598, %v10906
      %v10953 = vadd.f32 %v10599, %v10911
      %v10954 = vadd.f32 %v10600, %v10914
      %v10955 = vadd.f32 %v10601, %v10919
      %v10956 = vadd.f32 %v10602, %v10922
      %v10957 = vld [vmem:[%s9880 + $0x4] sm:$0xf]
      %v10958 = vld [vmem:[%s9880 + $0x8] sm:$0xf]
      %v10959 = vld [vmem:[%s9880 + $0xc] sm:$0x1]
      %v10960 = vld [vmem:[%s9880 + $0x14] sm:$0xf]
      %v10961 = vld [vmem:[%s9880 + $0x18] sm:$0xf]
      %v10962 = vld [vmem:[%s9880 + $0x1c] sm:$0x1]
      %v10963 = vld [vmem:[%s9880 + $0x24] sm:$0xf]
      %v10964 = vld [vmem:[%s9880 + $0x28] sm:$0xf]
      %v10965 = vld [vmem:[%s9880 + $0x2c] sm:$0x1]
      %v10966 = vld [vmem:[%s9880 + $0x34] sm:$0xf]
      %v10967 = vld [vmem:[%s9880 + $0x38] sm:$0xf]
      %v10968 = vld [vmem:[%s9880 + $0x3c] sm:$0x1]
      %v10969 = vld [vmem:[%s9880 + $0x44] sm:$0xf]
      %v10970 = vld [vmem:[%s9880 + $0x48] sm:$0xf]
      %v10971 = vld [vmem:[%s9880 + $0x4c] sm:$0x1]
      %v10972 = vld [vmem:[%s9880 + $0x54] sm:$0xf]
      %v10973 = vld [vmem:[%s9880 + $0x58] sm:$0xf]
      %v10974 = vld [vmem:[%s9880 + $0x5c] sm:$0x1]
      %v10975 = vld [vmem:[%s9880 + $0x64] sm:$0xf]
      %v10976 = vld [vmem:[%s9880 + $0x68] sm:$0xf]
      %v10977 = vld [vmem:[%s9880 + $0x6c] sm:$0x1]
      %v10978 = vld [vmem:[%s9880 + $0x74] sm:$0xf]
      %v10979 = vld [vmem:[%s9880 + $0x78] sm:$0xf]
      %v10980 = vld [vmem:[%s9880 + $0x7c] sm:$0x1]
      %v10981 = vld [vmem:[%s9880 + $0x84] sm:$0xf]
      %v10982 = vld [vmem:[%s9880 + $0x88] sm:$0xf]
      %v10983 = vld [vmem:[%s9880 + $0x8c] sm:$0x1]
      %v10984 = vld [vmem:[%s9880 + $0x94] sm:$0xf]
      %v10985 = vld [vmem:[%s9880 + $0x98] sm:$0xf]
      %v10986 = vld [vmem:[%s9880 + $0x9c] sm:$0x1]
      %v10987 = vld [vmem:[%s9880 + $0xa4] sm:$0xf]
      %v10988 = vld [vmem:[%s9880 + $0xa8] sm:$0xf]
      %v10989 = vld [vmem:[%s9880 + $0xac] sm:$0x1]
      %v10990 = vld [vmem:[%s9880 + $0xb4] sm:$0xf]
      %v10991 = vld [vmem:[%s9880 + $0xb8] sm:$0xf]
      %v10992 = vld [vmem:[%s9880 + $0xbc] sm:$0x1]
      %v10993 = vld [vmem:[%s9880 + $0xc4] sm:$0xf]
      %v10994 = vld [vmem:[%s9880 + $0xc8] sm:$0xf]
      %v10995 = vld [vmem:[%s9880 + $0xcc] sm:$0x1]
      %v10996 = vld [vmem:[%s9880 + $0xd4] sm:$0xf]
      %v10997 = vld [vmem:[%s9880 + $0xd8] sm:$0xf]
      %v10998 = vld [vmem:[%s9880 + $0xdc] sm:$0x1]
      %v10999 = vld [vmem:[%s9880 + $0xe4] sm:$0xf]
      %v11000 = vld [vmem:[%s9880 + $0xe8] sm:$0xf]
      %v11001 = vld [vmem:[%s9880 + $0xec] sm:$0x1]
      %v11002 = vld [vmem:[%s9880 + $0xf4] sm:$0xf]
      %v11003 = vld [vmem:[%s9880 + $0xf8] sm:$0xf]
      %v11004 = vld [vmem:[%s9880 + $0xfc] sm:$0x1]
      %v11006 = vshrl.u32 %v10957, 16
      %v11008 = vrot.slane %v11006, 4
      %v11009 = vshll.u32 %v10957, 16
      %v11011 = vrot.slane %v11009, 5
      %v11012 = vor.u32 %v11008, %v11011
      %v11013 = vrot.slane %v11012, 4
      %v11015 = vshll.u32 %v10958, 16
      %v11017 = vrot.slane %v11015, 5
      %v11018 = vsel %vm1653, %v11013, %v11017
      %v11019 = vshrl.u32 %v10958, 16
      %v11021 = vrot.slane %v11019, 4
      %v11022 = vor.u32 %v11021, %v11017
      %v11023 = vrot.slane %v11022, 4
      %v11025 = vshll.u32 %v10959, 16
      %v11027 = vrot.slane %v11025, 5
      %v11028 = vsel %vm1653, %v11023, %v11027
      %v11030 = vshrl.u32 %v10960, 16
      %v11032 = vrot.slane %v11030, 4
      %v11033 = vshll.u32 %v10960, 16
      %v11035 = vrot.slane %v11033, 5
      %v11036 = vor.u32 %v11032, %v11035
      %v11037 = vrot.slane %v11036, 4
      %v11039 = vshll.u32 %v10961, 16
      %v11041 = vrot.slane %v11039, 5
      %v11042 = vsel %vm1653, %v11037, %v11041
      %v11043 = vshrl.u32 %v10961, 16
      %v11045 = vrot.slane %v11043, 4
      %v11046 = vor.u32 %v11045, %v11041
      %v11047 = vrot.slane %v11046, 4
      %v11049 = vshll.u32 %v10962, 16
      %v11051 = vrot.slane %v11049, 5
      %v11052 = vsel %vm1653, %v11047, %v11051
      %v11054 = vshrl.u32 %v10963, 16
      %v11056 = vrot.slane %v11054, 4
      %v11057 = vshll.u32 %v10963, 16
      %v11059 = vrot.slane %v11057, 5
      %v11060 = vor.u32 %v11056, %v11059
      %v11061 = vrot.slane %v11060, 4
      %v11063 = vshll.u32 %v10964, 16
      %v11065 = vrot.slane %v11063, 5
      %v11066 = vsel %vm1653, %v11061, %v11065
      %v11067 = vshrl.u32 %v10964, 16
      %v11069 = vrot.slane %v11067, 4
      %v11070 = vor.u32 %v11069, %v11065
      %v11071 = vrot.slane %v11070, 4
      %v11073 = vshll.u32 %v10965, 16
      %v11075 = vrot.slane %v11073, 5
      %v11076 = vsel %vm1653, %v11071, %v11075
      %v11078 = vshrl.u32 %v10966, 16
      %v11080 = vrot.slane %v11078, 4
      %v11081 = vshll.u32 %v10966, 16
      %v11083 = vrot.slane %v11081, 5
      %v11084 = vor.u32 %v11080, %v11083
      %v11085 = vrot.slane %v11084, 4
      %v11087 = vshll.u32 %v10967, 16
      %v11089 = vrot.slane %v11087, 5
      %v11090 = vsel %vm1653, %v11085, %v11089
      %v11091 = vshrl.u32 %v10967, 16
      %v11093 = vrot.slane %v11091, 4
      %v11094 = vor.u32 %v11093, %v11089
      %v11095 = vrot.slane %v11094, 4
      %v11097 = vshll.u32 %v10968, 16
      %v11099 = vrot.slane %v11097, 5
      %v11100 = vsel %vm1653, %v11095, %v11099
      %v11102 = vshrl.u32 %v10969, 16
      %v11104 = vrot.slane %v11102, 4
      %v11105 = vshll.u32 %v10969, 16
      %v11107 = vrot.slane %v11105, 5
      %v11108 = vor.u32 %v11104, %v11107
      %v11109 = vrot.slane %v11108, 4
      %v11111 = vshll.u32 %v10970, 16
      %v11113 = vrot.slane %v11111, 5
      %v11114 = vsel %vm1653, %v11109, %v11113
      %v11115 = vshrl.u32 %v10970, 16
      %v11117 = vrot.slane %v11115, 4
      %v11118 = vor.u32 %v11117, %v11113
      %v11119 = vrot.slane %v11118, 4
      %v11121 = vshll.u32 %v10971, 16
      %v11123 = vrot.slane %v11121, 5
      %v11124 = vsel %vm1653, %v11119, %v11123
      %v11126 = vshrl.u32 %v10972, 16
      %v11128 = vrot.slane %v11126, 4
      %v11129 = vshll.u32 %v10972, 16
      %v11131 = vrot.slane %v11129, 5
      %v11132 = vor.u32 %v11128, %v11131
      %v11133 = vrot.slane %v11132, 4
      %v11135 = vshll.u32 %v10973, 16
      %v11137 = vrot.slane %v11135, 5
      %v11138 = vsel %vm1653, %v11133, %v11137
      %v11139 = vshrl.u32 %v10973, 16
      %v11141 = vrot.slane %v11139, 4
      %v11142 = vor.u32 %v11141, %v11137
      %v11143 = vrot.slane %v11142, 4
      %v11145 = vshll.u32 %v10974, 16
      %v11147 = vrot.slane %v11145, 5
      %v11148 = vsel %vm1653, %v11143, %v11147
      %v11150 = vshrl.u32 %v10975, 16
      %v11152 = vrot.slane %v11150, 4
      %v11153 = vshll.u32 %v10975, 16
      %v11155 = vrot.slane %v11153, 5
      %v11156 = vor.u32 %v11152, %v11155
      %v11157 = vrot.slane %v11156, 4
      %v11159 = vshll.u32 %v10976, 16
      %v11161 = vrot.slane %v11159, 5
      %v11162 = vsel %vm1653, %v11157, %v11161
      %v11163 = vshrl.u32 %v10976, 16
      %v11165 = vrot.slane %v11163, 4
      %v11166 = vor.u32 %v11165, %v11161
      %v11167 = vrot.slane %v11166, 4
      %v11169 = vshll.u32 %v10977, 16
      %v11171 = vrot.slane %v11169, 5
      %v11172 = vsel %vm1653, %v11167, %v11171
      %v11174 = vshrl.u32 %v10978, 16
      %v11176 = vrot.slane %v11174, 4
      %v11177 = vshll.u32 %v10978, 16
      %v11179 = vrot.slane %v11177, 5
      %v11180 = vor.u32 %v11176, %v11179
      %v11181 = vrot.slane %v11180, 4
      %v11183 = vshll.u32 %v10979, 16
      %v11185 = vrot.slane %v11183, 5
      %v11186 = vsel %vm1653, %v11181, %v11185
      %v11187 = vshrl.u32 %v10979, 16
      %v11189 = vrot.slane %v11187, 4
      %v11190 = vor.u32 %v11189, %v11185
      %v11191 = vrot.slane %v11190, 4
      %v11193 = vshll.u32 %v10980, 16
      %v11195 = vrot.slane %v11193, 5
      %v11196 = vsel %vm1653, %v11191, %v11195
      %v11198 = vshrl.u32 %v10981, 16
      %v11200 = vrot.slane %v11198, 4
      %v11201 = vshll.u32 %v10981, 16
      %v11203 = vrot.slane %v11201, 5
      %v11204 = vor.u32 %v11200, %v11203
      %v11205 = vrot.slane %v11204, 4
      %v11207 = vshll.u32 %v10982, 16
      %v11209 = vrot.slane %v11207, 5
      %v11210 = vsel %vm1653, %v11205, %v11209
      %v11211 = vshrl.u32 %v10982, 16
      %v11213 = vrot.slane %v11211, 4
      %v11214 = vor.u32 %v11213, %v11209
      %v11215 = vrot.slane %v11214, 4
      %v11217 = vshll.u32 %v10983, 16
      %v11219 = vrot.slane %v11217, 5
      %v11220 = vsel %vm1653, %v11215, %v11219
      %v11222 = vshrl.u32 %v10984, 16
      %v11224 = vrot.slane %v11222, 4
      %v11225 = vshll.u32 %v10984, 16
      %v11227 = vrot.slane %v11225, 5
      %v11228 = vor.u32 %v11224, %v11227
      %v11229 = vrot.slane %v11228, 4
      %v11231 = vshll.u32 %v10985, 16
      %v11233 = vrot.slane %v11231, 5
      %v11234 = vsel %vm1653, %v11229, %v11233
      %v11235 = vshrl.u32 %v10985, 16
      %v11237 = vrot.slane %v11235, 4
      %v11238 = vor.u32 %v11237, %v11233
      %v11239 = vrot.slane %v11238, 4
      %v11241 = vshll.u32 %v10986, 16
      %v11243 = vrot.slane %v11241, 5
      %v11244 = vsel %vm1653, %v11239, %v11243
      %v11246 = vshrl.u32 %v10987, 16
      %v11248 = vrot.slane %v11246, 4
      %v11249 = vshll.u32 %v10987, 16
      %v11251 = vrot.slane %v11249, 5
      %v11252 = vor.u32 %v11248, %v11251
      %v11253 = vrot.slane %v11252, 4
      %v11255 = vshll.u32 %v10988, 16
      %v11257 = vrot.slane %v11255, 5
      %v11258 = vsel %vm1653, %v11253, %v11257
      %v11259 = vshrl.u32 %v10988, 16
      %v11261 = vrot.slane %v11259, 4
      %v11262 = vor.u32 %v11261, %v11257
      %v11263 = vrot.slane %v11262, 4
      %v11265 = vshll.u32 %v10989, 16
      %v11267 = vrot.slane %v11265, 5
      %v11268 = vsel %vm1653, %v11263, %v11267
      %v11270 = vshrl.u32 %v10990, 16
      %v11272 = vrot.slane %v11270, 4
      %v11273 = vshll.u32 %v10990, 16
      %v11275 = vrot.slane %v11273, 5
      %v11276 = vor.u32 %v11272, %v11275
      %v11277 = vrot.slane %v11276, 4
      %v11279 = vshll.u32 %v10991, 16
      %v11281 = vrot.slane %v11279, 5
      %v11282 = vsel %vm1653, %v11277, %v11281
      %v11283 = vshrl.u32 %v10991, 16
      %v11285 = vrot.slane %v11283, 4
      %v11286 = vor.u32 %v11285, %v11281
      %v11287 = vrot.slane %v11286, 4
      %v11289 = vshll.u32 %v10992, 16
      %v11291 = vrot.slane %v11289, 5
      %v11292 = vsel %vm1653, %v11287, %v11291
      %v11294 = vshrl.u32 %v10993, 16
      %v11296 = vrot.slane %v11294, 4
      %v11297 = vshll.u32 %v10993, 16
      %v11299 = vrot.slane %v11297, 5
      %v11300 = vor.u32 %v11296, %v11299
      %v11301 = vrot.slane %v11300, 4
      %v11303 = vshll.u32 %v10994, 16
      %v11305 = vrot.slane %v11303, 5
      %v11306 = vsel %vm1653, %v11301, %v11305
      %v11307 = vshrl.u32 %v10994, 16
      %v11309 = vrot.slane %v11307, 4
      %v11310 = vor.u32 %v11309, %v11305
      %v11311 = vrot.slane %v11310, 4
      %v11313 = vshll.u32 %v10995, 16
      %v11315 = vrot.slane %v11313, 5
      %v11316 = vsel %vm1653, %v11311, %v11315
      %v11318 = vshrl.u32 %v10996, 16
      %v11320 = vrot.slane %v11318, 4
      %v11321 = vshll.u32 %v10996, 16
      %v11323 = vrot.slane %v11321, 5
      %v11324 = vor.u32 %v11320, %v11323
      %v11325 = vrot.slane %v11324, 4
      %v11327 = vshll.u32 %v10997, 16
      %v11329 = vrot.slane %v11327, 5
      %v11330 = vsel %vm1653, %v11325, %v11329
      %v11331 = vshrl.u32 %v10997, 16
      %v11333 = vrot.slane %v11331, 4
      %v11334 = vor.u32 %v11333, %v11329
      %v11335 = vrot.slane %v11334, 4
      %v11337 = vshll.u32 %v10998, 16
      %v11339 = vrot.slane %v11337, 5
      %v11340 = vsel %vm1653, %v11335, %v11339
      %v11342 = vshrl.u32 %v10999, 16
      %v11344 = vrot.slane %v11342, 4
      %v11345 = vshll.u32 %v10999, 16
      %v11347 = vrot.slane %v11345, 5
      %v11348 = vor.u32 %v11344, %v11347
      %v11349 = vrot.slane %v11348, 4
      %v11351 = vshll.u32 %v11000, 16
      %v11353 = vrot.slane %v11351, 5
      %v11354 = vsel %vm1653, %v11349, %v11353
      %v11355 = vshrl.u32 %v11000, 16
      %v11357 = vrot.slane %v11355, 4
      %v11358 = vor.u32 %v11357, %v11353
      %v11359 = vrot.slane %v11358, 4
      %v11361 = vshll.u32 %v11001, 16
      %v11363 = vrot.slane %v11361, 5
      %v11364 = vsel %vm1653, %v11359, %v11363
      %v11366 = vshrl.u32 %v11002, 16
      %v11368 = vrot.slane %v11366, 4
      %v11369 = vshll.u32 %v11002, 16
      %v11371 = vrot.slane %v11369, 5
      %v11372 = vor.u32 %v11368, %v11371
      %v11373 = vrot.slane %v11372, 4
      %v11375 = vshll.u32 %v11003, 16
      %v11377 = vrot.slane %v11375, 5
      %v11378 = vsel %vm1653, %v11373, %v11377
      %v11379 = vshrl.u32 %v11003, 16
      %v11381 = vrot.slane %v11379, 4
      %v11382 = vor.u32 %v11381, %v11377
      %v11383 = vrot.slane %v11382, 4
      %v11385 = vshll.u32 %v11004, 16
      %v11387 = vrot.slane %v11385, 5
      %v11388 = vsel %vm1653, %v11383, %v11387
      %s11389 = scalar_lea.vmem %s3, 512
      %v11390 = vld [vmem:[%s11389] sm:$0xf]
      %v11391 = vld [vmem:[%s11389 + $0x4] sm:$0xf]
      %v11392 = vld [vmem:[%s11389 + $0x8] sm:$0xf]
      %v11393 = vld [vmem:[%s11389 + $0xc] sm:$0xf]
      %v11394 = vld [vmem:[%s11389 + $0x10] sm:$0xf]
      %v11395 = vld [vmem:[%s11389 + $0x14] sm:$0xf]
      %v11396 = vld [vmem:[%s11389 + $0x18] sm:$0xf]
      %v11397 = vld [vmem:[%s11389 + $0x1c] sm:$0xf]
      %v11398 = vld [vmem:[%s11389 + $0x20] sm:$0xf]
      %v11399 = vld [vmem:[%s11389 + $0x24] sm:$0xf]
      %v11400 = vld [vmem:[%s11389 + $0x28] sm:$0xf]
      %v11401 = vld [vmem:[%s11389 + $0x2c] sm:$0xf]
      %v11402 = vld [vmem:[%s11389 + $0x30] sm:$0xf]
      %v11403 = vld [vmem:[%s11389 + $0x34] sm:$0xf]
      %v11404 = vld [vmem:[%s11389 + $0x38] sm:$0xf]
      %v11405 = vld [vmem:[%s11389 + $0x3c] sm:$0xf]
      %v11406 = vunpack.c.l.b16 %v11018
      %v11407 = vunpack.c.l.b16 %v11028
      %v11408 = vunpack.c.l.b16 %v11042
      %v11409 = vunpack.c.l.b16 %v11052
      %v11410 = vunpack.c.l.b16 %v11066
      %v11411 = vunpack.c.l.b16 %v11076
      %v11412 = vunpack.c.l.b16 %v11090
      %v11413 = vunpack.c.l.b16 %v11100
      %v11414 = vunpack.c.l.b16 %v11114
      %v11415 = vunpack.c.l.b16 %v11124
      %v11416 = vunpack.c.l.b16 %v11138
      %v11417 = vunpack.c.l.b16 %v11148
      %v11418 = vunpack.c.l.b16 %v11162
      %v11419 = vunpack.c.l.b16 %v11172
      %v11420 = vunpack.c.l.b16 %v11186
      %v11421 = vunpack.c.l.b16 %v11196
      %v11422 = vunpack.c.l.b16 %v11210
      %v11423 = vunpack.c.l.b16 %v11220
      %v11424 = vunpack.c.l.b16 %v11234
      %v11425 = vunpack.c.l.b16 %v11244
      %v11426 = vunpack.c.l.b16 %v11258
      %v11427 = vunpack.c.l.b16 %v11268
      %v11428 = vunpack.c.l.b16 %v11282
      %v11429 = vunpack.c.l.b16 %v11292
      %v11430 = vunpack.c.l.b16 %v11306
      %v11431 = vunpack.c.l.b16 %v11316
      %v11432 = vunpack.c.l.b16 %v11330
      %v11433 = vunpack.c.l.b16 %v11340
      %v11434 = vunpack.c.l.b16 %v11354
      %v11435 = vunpack.c.l.b16 %v11364
      %v11436 = vunpack.c.l.b16 %v11378
      %v11437 = vunpack.c.l.b16 %v11388
      %v11438 = vpack.c.b16 %v11407, %v11406
      %v11439 = vpack.c.b16 %v11409, %v11408
      %v11440 = vpack.c.b16 %v11411, %v11410
      %v11441 = vpack.c.b16 %v11413, %v11412
      %v11442 = vpack.c.b16 %v11415, %v11414
      %v11443 = vpack.c.b16 %v11417, %v11416
      %v11444 = vpack.c.b16 %v11419, %v11418
      %v11445 = vpack.c.b16 %v11421, %v11420
      %v11446 = vpack.c.b16 %v11423, %v11422
      %v11447 = vpack.c.b16 %v11425, %v11424
      %v11448 = vpack.c.b16 %v11427, %v11426
      %v11449 = vpack.c.b16 %v11429, %v11428
      %v11450 = vpack.c.b16 %v11431, %v11430
      %v11451 = vpack.c.b16 %v11433, %v11432
      %v11452 = vpack.c.b16 %v11435, %v11434
      %v11453 = vpack.c.b16 %v11437, %v11436
      %v11486 = vunpack.c.l.b16 %v11390
      %v11487 = vunpack.c.l.b16 %v11391
      %v11488 = vunpack.c.l.b16 %v11392
      %v11489 = vunpack.c.l.b16 %v11393
      %v11490 = vunpack.c.l.b16 %v11394
      %v11491 = vunpack.c.l.b16 %v11395
      %v11492 = vunpack.c.l.b16 %v11396
      %v11493 = vunpack.c.l.b16 %v11397
      %v11494 = vunpack.c.l.b16 %v11398
      %v11495 = vunpack.c.l.b16 %v11399
      %v11496 = vunpack.c.l.b16 %v11400
      %v11497 = vunpack.c.l.b16 %v11401
      %v11498 = vunpack.c.l.b16 %v11402
      %v11499 = vunpack.c.l.b16 %v11403
      %v11500 = vunpack.c.l.b16 %v11404
      %v11501 = vunpack.c.l.b16 %v11405
      %v11502 = vpack.c.b16 %v11487, %v11486
      %v11503 = vpack.c.b16 %v11489, %v11488
      %v11504 = vpack.c.b16 %v11491, %v11490
      %v11505 = vpack.c.b16 %v11493, %v11492
      %v11506 = vpack.c.b16 %v11495, %v11494
      %v11507 = vpack.c.b16 %v11497, %v11496
      %v11508 = vpack.c.b16 %v11499, %v11498
      %v11509 = vpack.c.b16 %v11501, %v11500
      %11518 = vmatprep.subr.bf16.mxu0 0
      %11519 = vmatpush1.bf16.msra.mxu0 %v11509
      %11520 = vmatprep.subr.bf16.mxu0 0
      %11521 = vmatpush1.bf16.msra.mxu0 %v11508
      %11522 = vmatprep.subr.bf16.mxu0 0
      %11523 = vmatpush1.bf16.msra.mxu0 %v11507
      %11524 = vmatprep.subr.bf16.mxu0 0
      %11525 = vmatpush1.bf16.msra.mxu0 %v11506
      %11526 = vmatprep.subr.bf16.mxu0 0
      %11527 = vmatpush1.bf16.msra.mxu0 %v11505
      %11528 = vmatprep.subr.bf16.mxu0 0
      %11529 = vmatpush1.bf16.msra.mxu0 %v11504
      %11530 = vmatprep.subr.bf16.mxu0 0
      %11531 = vmatpush1.bf16.msra.mxu0 %v11503
      %11532 = vmatprep.subr.bf16.mxu0 0
      %11533 = vmatpush1.bf16.msra.mxu0 %v11502
      %11534 = vmatprep.subr.bf16.mxu0 0
      %11535 = vmatpush2.bf16.msra.mxu0 0
      %11536 = vmatprep.subr.bf16.mxu0 0
      %11537 = vmatpush2.bf16.msra.mxu0 0
      %11538 = vmatprep.subr.bf16.mxu0 0
      %11539 = vmatpush2.bf16.msra.mxu0 0
      %11540 = vmatprep.subr.bf16.mxu0 0
      %11541 = vmatpush2.bf16.msra.mxu0 0
      %11542 = vmatprep.subr.bf16.mxu0 0
      %11543 = vmatpush2.bf16.msra.mxu0 0
      %11544 = vmatprep.subr.bf16.mxu0 0
      %11545 = vmatpush2.bf16.msra.mxu0 0
      %11546 = vmatprep.subr.bf16.mxu0 0
      %11547 = vmatpush2.bf16.msra.mxu0 0
      %11548 = vmatprep.subr.bf16.mxu0 0
      %11549 = vmatpush2.bf16.msra.mxu0 0
      %11550 = vmatprep.mubr.bf16.mxu0 0
      %11551 = vmatmul.mubr.bf16.gmra.mxu0 %v11438
      %v11552 = vpop.f32.mrf.mxu0
      %v11553 = vadd.f32 0.0, %v11552
      %v11554 = vpop.f32.mrf.mxu0
      %v11555 = vpop.f32.mrf.mxu0
      %v11556 = vadd.f32 0.0, %v11555
      %v11557 = vpop.f32.mrf.mxu0
      %11558 = vmatprep.mubr.bf16.mxu0 0
      %11559 = vmatmul.mubr.bf16.gmra.mxu0 %v11439
      %v11560 = vpop.f32.mrf.mxu0
      %v11561 = vadd.f32 0.0, %v11560
      %v11562 = vpop.f32.mrf.mxu0
      %v11563 = vpop.f32.mrf.mxu0
      %v11564 = vadd.f32 0.0, %v11563
      %v11565 = vpop.f32.mrf.mxu0
      %11566 = vmatprep.mubr.bf16.mxu0 0
      %11567 = vmatmul.mubr.bf16.gmra.mxu0 %v11440
      %v11568 = vpop.f32.mrf.mxu0
      %v11569 = vadd.f32 0.0, %v11568
      %v11570 = vpop.f32.mrf.mxu0
      %v11571 = vpop.f32.mrf.mxu0
      %v11572 = vadd.f32 0.0, %v11571
      %v11573 = vpop.f32.mrf.mxu0
      %11574 = vmatprep.mubr.bf16.mxu0 0
      %11575 = vmatmul.mubr.bf16.gmra.mxu0 %v11441
      %v11576 = vpop.f32.mrf.mxu0
      %v11577 = vadd.f32 0.0, %v11576
      %v11578 = vpop.f32.mrf.mxu0
      %v11579 = vpop.f32.mrf.mxu0
      %v11580 = vadd.f32 0.0, %v11579
      %v11581 = vpop.f32.mrf.mxu0
      %11582 = vmatprep.mubr.bf16.mxu0 0
      %11583 = vmatmul.mubr.bf16.gmra.mxu0 %v11442
      %v11584 = vpop.f32.mrf.mxu0
      %v11585 = vadd.f32 0.0, %v11584
      %v11586 = vpop.f32.mrf.mxu0
      %v11587 = vpop.f32.mrf.mxu0
      %v11588 = vadd.f32 0.0, %v11587
      %v11589 = vpop.f32.mrf.mxu0
      %11590 = vmatprep.mubr.bf16.mxu0 0
      %11591 = vmatmul.mubr.bf16.gmra.mxu0 %v11443
      %v11592 = vpop.f32.mrf.mxu0
      %v11593 = vadd.f32 0.0, %v11592
      %v11594 = vpop.f32.mrf.mxu0
      %v11595 = vpop.f32.mrf.mxu0
      %v11596 = vadd.f32 0.0, %v11595
      %v11597 = vpop.f32.mrf.mxu0
      %11598 = vmatprep.mubr.bf16.mxu0 0
      %11599 = vmatmul.mubr.bf16.gmra.mxu0 %v11444
      %v11600 = vpop.f32.mrf.mxu0
      %v11601 = vadd.f32 0.0, %v11600
      %v11602 = vpop.f32.mrf.mxu0
      %v11603 = vpop.f32.mrf.mxu0
      %v11604 = vadd.f32 0.0, %v11603
      %v11605 = vpop.f32.mrf.mxu0
      %11606 = vmatprep.mubr.bf16.mxu0 0
      %11607 = vmatmul.mubr.bf16.gmra.mxu0 %v11445
      %v11608 = vpop.f32.mrf.mxu0
      %v11609 = vadd.f32 0.0, %v11608
      %v11610 = vpop.f32.mrf.mxu0
      %v11611 = vpop.f32.mrf.mxu0
      %v11612 = vadd.f32 0.0, %v11611
      %v11613 = vpop.f32.mrf.mxu0
      %11614 = vmatprep.mubr.bf16.mxu0 0
      %11615 = vmatmul.mubr.bf16.gmra.mxu0 %v11446
      %v11616 = vpop.f32.mrf.mxu0
      %v11617 = vadd.f32 0.0, %v11616
      %v11618 = vpop.f32.mrf.mxu0
      %v11619 = vpop.f32.mrf.mxu0
      %v11620 = vadd.f32 0.0, %v11619
      %v11621 = vpop.f32.mrf.mxu0
      %11622 = vmatprep.mubr.bf16.mxu0 0
      %11623 = vmatmul.mubr.bf16.gmra.mxu0 %v11447
      %v11624 = vpop.f32.mrf.mxu0
      %v11625 = vadd.f32 0.0, %v11624
      %v11626 = vpop.f32.mrf.mxu0
      %v11627 = vpop.f32.mrf.mxu0
      %v11628 = vadd.f32 0.0, %v11627
      %v11629 = vpop.f32.mrf.mxu0
      %11630 = vmatprep.mubr.bf16.mxu0 0
      %11631 = vmatmul.mubr.bf16.gmra.mxu0 %v11448
      %v11632 = vpop.f32.mrf.mxu0
      %v11633 = vadd.f32 0.0, %v11632
      %v11634 = vpop.f32.mrf.mxu0
      %v11635 = vpop.f32.mrf.mxu0
      %v11636 = vadd.f32 0.0, %v11635
      %v11637 = vpop.f32.mrf.mxu0
      %11638 = vmatprep.mubr.bf16.mxu0 0
      %11639 = vmatmul.mubr.bf16.gmra.mxu0 %v11449
      %v11640 = vpop.f32.mrf.mxu0
      %v11641 = vadd.f32 0.0, %v11640
      %v11642 = vpop.f32.mrf.mxu0
      %v11643 = vpop.f32.mrf.mxu0
      %v11644 = vadd.f32 0.0, %v11643
      %v11645 = vpop.f32.mrf.mxu0
      %11646 = vmatprep.mubr.bf16.mxu0 0
      %11647 = vmatmul.mubr.bf16.gmra.mxu0 %v11450
      %v11648 = vpop.f32.mrf.mxu0
      %v11649 = vadd.f32 0.0, %v11648
      %v11650 = vpop.f32.mrf.mxu0
      %v11651 = vpop.f32.mrf.mxu0
      %v11652 = vadd.f32 0.0, %v11651
      %v11653 = vpop.f32.mrf.mxu0
      %11654 = vmatprep.mubr.bf16.mxu0 0
      %11655 = vmatmul.mubr.bf16.gmra.mxu0 %v11451
      %v11656 = vpop.f32.mrf.mxu0
      %v11657 = vadd.f32 0.0, %v11656
      %v11658 = vpop.f32.mrf.mxu0
      %v11659 = vpop.f32.mrf.mxu0
      %v11660 = vadd.f32 0.0, %v11659
      %v11661 = vpop.f32.mrf.mxu0
      %11662 = vmatprep.mubr.bf16.mxu0 0
      %11663 = vmatmul.mubr.bf16.gmra.mxu0 %v11452
      %v11664 = vpop.f32.mrf.mxu0
      %v11665 = vadd.f32 0.0, %v11664
      %v11666 = vpop.f32.mrf.mxu0
      %v11667 = vpop.f32.mrf.mxu0
      %v11668 = vadd.f32 0.0, %v11667
      %v11669 = vpop.f32.mrf.mxu0
      %11670 = vmatprep.mubr.bf16.mxu0 0
      %11671 = vmatmul.mubr.bf16.gmra.mxu0 %v11453
      %v11672 = vpop.f32.mrf.mxu0
      %v11673 = vadd.f32 0.0, %v11672
      %v11674 = vpop.f32.mrf.mxu0
      %v11675 = vpop.f32.mrf.mxu0
      %v11676 = vadd.f32 0.0, %v11675
      %v11677 = vpop.f32.mrf.mxu0
      %11678 = vdwg.mxu0
      %v11679 = vadd.f32 %v10925, %v11553
      %v11680 = vadd.f32 %v10926, %v11556
      %v11681 = vadd.f32 %v10927, %v11561
      %v11682 = vadd.f32 %v10928, %v11564
      %v11683 = vadd.f32 %v10929, %v11569
      %v11684 = vadd.f32 %v10930, %v11572
      %v11685 = vadd.f32 %v10931, %v11577
      %v11686 = vadd.f32 %v10932, %v11580
      %v11687 = vadd.f32 %v10933, %v11585
      %v11688 = vadd.f32 %v10934, %v11588
      %v11689 = vadd.f32 %v10935, %v11593
      %v11690 = vadd.f32 %v10936, %v11596
      %v11691 = vadd.f32 %v10937, %v11601
      %v11692 = vadd.f32 %v10938, %v11604
      %v11693 = vadd.f32 %v10939, %v11609
      %v11694 = vadd.f32 %v10940, %v11612
      %v11695 = vadd.f32 %v10941, %v11617
      %v11696 = vadd.f32 %v10942, %v11620
      %v11697 = vadd.f32 %v10943, %v11625
      %v11698 = vadd.f32 %v10944, %v11628
      %v11699 = vadd.f32 %v10945, %v11633
      %v11700 = vadd.f32 %v10946, %v11636
      %v11701 = vadd.f32 %v10947, %v11641
      %v11702 = vadd.f32 %v10948, %v11644
      %v11703 = vadd.f32 %v10949, %v11649
      %v11704 = vadd.f32 %v10950, %v11652
      %v11705 = vadd.f32 %v10951, %v11657
      %v11706 = vadd.f32 %v10952, %v11660
      %v11707 = vadd.f32 %v10953, %v11665
      %v11708 = vadd.f32 %v10954, %v11668
      %v11709 = vadd.f32 %v10955, %v11673
      %v11710 = vadd.f32 %v10956, %v11676
      %v11711 = vld [vmem:[%s325] sm:$0xff]
      %v11712 = vld [vmem:[%s325 + $0x8] sm:$0xff]
      %v11713 = vld [vmem:[%s325 + $0x10] sm:$0xff]
      %v11714 = vld [vmem:[%s325 + $0x18] sm:$0xff]
      %v11715 = vld [vmem:[%s325 + $0x20] sm:$0xff]
      %v11716 = vld [vmem:[%s325 + $0x28] sm:$0xff]
      %v11717 = vld [vmem:[%s325 + $0x30] sm:$0xff]
      %v11718 = vld [vmem:[%s325 + $0x38] sm:$0xff]
      %v11719 = vld [vmem:[%s325 + $0x40] sm:$0xff]
      %v11720 = vld [vmem:[%s325 + $0x48] sm:$0xff]
      %v11721 = vld [vmem:[%s325 + $0x50] sm:$0xff]
      %v11722 = vld [vmem:[%s325 + $0x58] sm:$0xff]
      %v11723 = vld [vmem:[%s325 + $0x60] sm:$0xff]
      %v11724 = vld [vmem:[%s325 + $0x68] sm:$0xff]
      %v11725 = vld [vmem:[%s325 + $0x70] sm:$0xff]
      %v11726 = vld [vmem:[%s325 + $0x78] sm:$0xff]
      %v11727 = vld [vmem:[%s325 + $0x80] sm:$0xff]
      %v11728 = vld [vmem:[%s325 + $0x88] sm:$0xff]
      %v11729 = vld [vmem:[%s325 + $0x90] sm:$0xff]
      %v11730 = vld [vmem:[%s325 + $0x98] sm:$0xff]
      %v11731 = vld [vmem:[%s325 + $0xa0] sm:$0xff]
      %v11732 = vld [vmem:[%s325 + $0xa8] sm:$0xff]
      %v11733 = vld [vmem:[%s325 + $0xb0] sm:$0xff]
      %v11734 = vld [vmem:[%s325 + $0xb8] sm:$0xff]
      %v11735 = vld [vmem:[%s325 + $0xc0] sm:$0xff]
      %v11736 = vld [vmem:[%s325 + $0xc8] sm:$0xff]
      %v11737 = vld [vmem:[%s325 + $0xd0] sm:$0xff]
      %v11738 = vld [vmem:[%s325 + $0xd8] sm:$0xff]
      %v11739 = vld [vmem:[%s325 + $0xe0] sm:$0xff]
      %v11740 = vld [vmem:[%s325 + $0xe8] sm:$0xff]
      %v11741 = vld [vmem:[%s325 + $0xf0] sm:$0xff]
      %v11742 = vld [vmem:[%s325 + $0xf8] sm:$0xff]
      %v11743 = vadd.f32 %v11679, %v11711
      %v11744 = vadd.f32 %v11680, %v11712
      %v11745 = vadd.f32 %v11681, %v11713
      %v11746 = vadd.f32 %v11682, %v11714
      %v11747 = vadd.f32 %v11683, %v11715
      %v11748 = vadd.f32 %v11684, %v11716
      %v11749 = vadd.f32 %v11685, %v11717
      %v11750 = vadd.f32 %v11686, %v11718
      %v11751 = vadd.f32 %v11687, %v11719
      %v11752 = vadd.f32 %v11688, %v11720
      %v11753 = vadd.f32 %v11689, %v11721
      %v11754 = vadd.f32 %v11690, %v11722
      %v11755 = vadd.f32 %v11691, %v11723
      %v11756 = vadd.f32 %v11692, %v11724
      %v11757 = vadd.f32 %v11693, %v11725
      %v11758 = vadd.f32 %v11694, %v11726
      %v11759 = vadd.f32 %v11695, %v11727
      %v11760 = vadd.f32 %v11696, %v11728
      %v11761 = vadd.f32 %v11697, %v11729
      %v11762 = vadd.f32 %v11698, %v11730
      %v11763 = vadd.f32 %v11699, %v11731
      %v11764 = vadd.f32 %v11700, %v11732
      %v11765 = vadd.f32 %v11701, %v11733
      %v11766 = vadd.f32 %v11702, %v11734
      %v11767 = vadd.f32 %v11703, %v11735
      %v11768 = vadd.f32 %v11704, %v11736
      %v11769 = vadd.f32 %v11705, %v11737
      %v11770 = vadd.f32 %v11706, %v11738
      %v11771 = vadd.f32 %v11707, %v11739
      %v11772 = vadd.f32 %v11708, %v11740
      %v11773 = vadd.f32 %v11709, %v11741
      %v11774 = vadd.f32 %v11710, %v11742
      %v11775 = vmax.f32 %v11743, 0.0
      %v11776 = vmax.f32 %v11744, 0.0
      %v11777 = vmax.f32 %v11745, 0.0
      %v11778 = vmax.f32 %v11746, 0.0
      %v11779 = vmax.f32 %v11747, 0.0
      %v11780 = vmax.f32 %v11748, 0.0
      %v11781 = vmax.f32 %v11749, 0.0
      %v11782 = vmax.f32 %v11750, 0.0
      %v11783 = vmax.f32 %v11751, 0.0
      %v11784 = vmax.f32 %v11752, 0.0
      %v11785 = vmax.f32 %v11753, 0.0
      %v11786 = vmax.f32 %v11754, 0.0
      %v11787 = vmax.f32 %v11755, 0.0
      %v11788 = vmax.f32 %v11756, 0.0
      %v11789 = vmax.f32 %v11757, 0.0
      %v11790 = vmax.f32 %v11758, 0.0
      %v11791 = vmax.f32 %v11759, 0.0
      %v11792 = vmax.f32 %v11760, 0.0
      %v11793 = vmax.f32 %v11761, 0.0
      %v11794 = vmax.f32 %v11762, 0.0
      %v11795 = vmax.f32 %v11763, 0.0
      %v11796 = vmax.f32 %v11764, 0.0
      %v11797 = vmax.f32 %v11765, 0.0
      %v11798 = vmax.f32 %v11766, 0.0
      %v11799 = vmax.f32 %v11767, 0.0
      %v11800 = vmax.f32 %v11768, 0.0
      %v11801 = vmax.f32 %v11769, 0.0
      %v11802 = vmax.f32 %v11770, 0.0
      %v11803 = vmax.f32 %v11771, 0.0
      %v11804 = vmax.f32 %v11772, 0.0
      %v11805 = vmax.f32 %v11773, 0.0
      %v11806 = vmax.f32 %v11774, 0.0
      %s11807 = scalar_lea.vmem %s224, %s324
      %11808 = vst [vmem:[%s11807] sm:$0xff] %v11775
      %11809 = vst [vmem:[%s11807 + $0x8] sm:$0xff] %v11776
      %11810 = vst [vmem:[%s11807 + $0x10] sm:$0xff] %v11777
      %11811 = vst [vmem:[%s11807 + $0x18] sm:$0xff] %v11778
      %11812 = vst [vmem:[%s11807 + $0x20] sm:$0xff] %v11779
      %11813 = vst [vmem:[%s11807 + $0x28] sm:$0xff] %v11780
      %11814 = vst [vmem:[%s11807 + $0x30] sm:$0xff] %v11781
      %11815 = vst [vmem:[%s11807 + $0x38] sm:$0xff] %v11782
      %11816 = vst [vmem:[%s11807 + $0x40] sm:$0xff] %v11783
      %11817 = vst [vmem:[%s11807 + $0x48] sm:$0xff] %v11784
      %11818 = vst [vmem:[%s11807 + $0x50] sm:$0xff] %v11785
      %11819 = vst [vmem:[%s11807 + $0x58] sm:$0xff] %v11786
      %11820 = vst [vmem:[%s11807 + $0x60] sm:$0xff] %v11787
      %11821 = vst [vmem:[%s11807 + $0x68] sm:$0xff] %v11788
      %11822 = vst [vmem:[%s11807 + $0x70] sm:$0xff] %v11789
      %11823 = vst [vmem:[%s11807 + $0x78] sm:$0xff] %v11790
      %11824 = vst [vmem:[%s11807 + $0x80] sm:$0xff] %v11791
      %11825 = vst [vmem:[%s11807 + $0x88] sm:$0xff] %v11792
      %11826 = vst [vmem:[%s11807 + $0x90] sm:$0xff] %v11793
      %11827 = vst [vmem:[%s11807 + $0x98] sm:$0xff] %v11794
      %11828 = vst [vmem:[%s11807 + $0xa0] sm:$0xff] %v11795
      %11829 = vst [vmem:[%s11807 + $0xa8] sm:$0xff] %v11796
      %11830 = vst [vmem:[%s11807 + $0xb0] sm:$0xff] %v11797
      %11831 = vst [vmem:[%s11807 + $0xb8] sm:$0xff] %v11798
      %11832 = vst [vmem:[%s11807 + $0xc0] sm:$0xff] %v11799
      %11833 = vst [vmem:[%s11807 + $0xc8] sm:$0xff] %v11800
      %11834 = vst [vmem:[%s11807 + $0xd0] sm:$0xff] %v11801
      %11835 = vst [vmem:[%s11807 + $0xd8] sm:$0xff] %v11802
      %11836 = vst [vmem:[%s11807 + $0xe0] sm:$0xff] %v11803
      %11837 = vst [vmem:[%s11807 + $0xe8] sm:$0xff] %v11804
      %11838 = vst [vmem:[%s11807 + $0xf0] sm:$0xff] %v11805
      %11839 = vst [vmem:[%s11807 + $0xf8] sm:$0xff] %v11806
      %p11840 = scmp.lt.s32.totalorder %s16, 1
      %s11841 = scalar_select %p11840, %s16, 1
      %s11842 = smul.addr %s11841, 32
      %s11843 = smul.addr %s11842, 8
      %s11844 = scalar_lea.vmem %s5, %s11843
      // Predicated region
      $region41: #{basic_block_forward.1} parent=39 // pred_check
        %p11845 = pneg %p144
      $region42: #{basic_block_forward.1} parent=39 // pred_check_branch
        %11847 = sbr.rel (%p11845) target = $region44
      $region43: #{basic_block_forward.1} parent=39 // pred_region
        _
      $region44: #{basic_block_forward.1} parent=39 // pred_fallthru
        _
    $region40: #{basic_block_forward.1} parent=5 // pred_fallthru
      _
    %p11848 = scmp.le.s32.totalorder 2, %s11
    // Predicated region
    $region45: #{basic_block_forward.1} parent=5 // pred_check
      %p11849 = pneg %p11848
    $region46: #{basic_block_forward.1} parent=5 // pred_check_branch
      %11851 = sbr.rel (%p11849) target = $region48
    $region47: #{basic_block_forward.1} parent=5 // pred_region
      %s11852 = ssub.s32 %s11, 2
      // Predicated region
      $region49: #{basic_block_forward.1} parent=47 // pred_check
        %p11853 = pneg %p150
      $region50: #{basic_block_forward.1} parent=47 // pred_check_branch
        %11855 = sbr.rel (%p11853) target = $region52
      $region51: #{basic_block_forward.1} parent=47 // pred_region
        %p11856 = scmp.lt.s32.totalorder %s17, 1
        %s11857 = scalar_select %p11856, %s17, 1
        %s11858 = smul.addr %s11857, 32
        %s11859 = smul.addr %s11858, 8
        %s11860 = scalar_lea.vmem %s5, %s11859
      $region52: #{basic_block_forward.1} parent=47 // pred_fallthru
        _
    $region48: #{basic_block_forward.1} parent=5 // pred_fallthru
      _
  $region6: #{basic_block_forward.1} parent=0 // loop_footer
    %s15 = sadd.s32 1, %s11
  $region7: #{basic_block_forward.1} parent=0 // loop_footer_branch
    %10 = sbr.rel target = $region3
  $region8: #{basic_block_forward.1} parent=0 // loop_exit
    _

</llo_original>
